<compile_context>
chip_gen: v7x
topology: tpu7x:2x2x1
jax: 0.10.0
libtpu: 0.0.40
codegen_flags: <defaults>
</compile_context>

<pallas_src>
from itertools import product

import jax
import jax.numpy as jnp
from jax import lax
from jax.experimental import pallas as pl
from jax.experimental.pallas import tpu as pltpu


_PAD_LEFT = 16   # left halo width along W (sublane axis); 16 keeps bf16 interior stores aligned


def _zero_halo(pad_ref):
    """Zero only the halo cells the 3x3 taps read (rows 0/H+1, cols _PAD_LEFT-1 / Wp-1)."""
    Hp, Wp, c = pad_ref.shape
    zrow = jnp.zeros((1, Wp, c), pad_ref.dtype)
    pad_ref[pl.ds(0, 1), :, :] = zrow
    pad_ref[pl.ds(Hp - 1, 1), :, :] = zrow
    zcol = jnp.zeros((Hp, 1, c), pad_ref.dtype)
    pad_ref[:, pl.ds(_PAD_LEFT - 1, 1), :] = zcol
    pad_ref[:, pl.ds(Wp - 1, 1), :] = zcol


# ------------------------------- wrapper + kernel --------------------------------- #

def decoder_conv3_pallas(x_nchw, indices_nchw, output_shape, params,
                         mxu_dtype=jnp.bfloat16, out_dtype=None):
    (w1, s1, b1), (w2, s2, b2), (w3, s3, b3) = params
    N, Cin, H, W = x_nchw.shape
    _, _, Ho, Wo = output_shape
    Cout = w3.shape[-1]
    K = 9 * Cin
    M = Ho * Wo
    Hp, Wp = Ho + 2, Wo + _PAD_LEFT + 1
    out_dtype = x_nchw.dtype if out_dtype is None else out_dtype   # bf16 halves writeback if ok

    use_im2col = Cin < 128       # small K: one K=9*Cin matmul; large Cin: 9 accumulating matmuls
    channel_major = Cout < 128   # lane-dense (Cout, Ho*Wo) store only when Cout underfills lanes

    # ---- MaxUnpool2d(2): vectorized 2x2 select + interleave (no scatter) ----
    # TODO(synk): move the unpool decode inside the kernel (read pooled x + indices, build the
    # unpooled plane directly in the padded VMEM scratch) to cut the full-resolution HBM
    # round-trip of the unpooled tensor.
    x_nhwc = jnp.transpose(x_nchw, (0, 2, 3, 1))                      # (N, H, W, Cin)
    idx_nhwc = jnp.transpose(indices_nchw, (0, 2, 3, 1))              # (N, H, W, Cin) int32
    dy = idx_nhwc // Wo - 2 * jnp.arange(H)[None, :, None, None]
    dx = idx_nhwc % Wo - 2 * jnp.arange(W)[None, None, :, None]
    xv = x_nhwc.astype(mxu_dtype)
    zero = jnp.zeros((), mxu_dtype)
    quad = [[jnp.where((dy == a) & (dx == b), xv, zero) for b in (0, 1)] for a in (0, 1)]
    up_nhwc = jnp.stack(
        [jnp.stack([quad[0][0], quad[0][1]], axis=3),
         jnp.stack([quad[1][0], quad[1][1]], axis=3)], axis=2,
    ).reshape(N, Ho, Wo, Cin)                                         # (N, Ho, Wo, Cin) bf16

    # ---- host-side weight prep: fold BN scale into the im2col weights (bf16) ----
    def wmat(w, s):    # (3,3,ci,co) HWIO, scale folded -> (9*ci, co) bf16
        return (w * s).reshape(9 * w.shape[2], w.shape[3]).astype(mxu_dtype)

    def row(v):
        return v.reshape(1, -1).astype(jnp.float32)

    def col(v):
        return v.reshape(-1, 1).astype(jnp.float32)

    w1m, w2m = wmat(w1, s1), wmat(w2, s2)
    if channel_major:
        w3m, b3m = wmat(w3, s3).T, col(b3)       # (Cout, K), (Cout, 1)
    else:
        w3m, b3m = wmat(w3, s3), row(b3)         # (K, Cout), (1, Cout)

    # ------------------------------- kernel body ------------------------------- #

    def tap(pad_ref, a, b):
        # one 3x3 tap as a (Ho*Wo, Cin) bf16 view of the padded activation scratch
        return pad_ref[pl.ds(a, Ho), pl.ds(_PAD_LEFT - 1 + b, Wo), :].reshape(M, Cin)

    def kernel(up_ref, w1_ref, b1_ref, w2_ref, b2_ref, w3_ref, b3_ref,
               out_ref, pad_a, pad_b, *col_scratch):
        col_ref = col_scratch[0] if use_im2col else None

        # halos are never written by any layer -> zero them once per image (done
        # unconditionally so it stays correct when the batch axis is split across TCs)
        _zero_halo(pad_a)
        _zero_halo(pad_b)

        def patches(pad_ref):
            # stage the 9 shifted taps into one (M, 9*Cin) bf16 patch matrix (no f32 copy)
            for k, (a, b) in enumerate(product(range(3), range(3))):
                col_ref[:, pl.ds(k * Cin, Cin)] = tap(pad_ref, a, b)
            return col_ref[...]

        def conv_rm(pad_ref, w_ref):
            # row-major conv -> (M, cout) f32
            if use_im2col:
                return jnp.dot(patches(pad_ref), w_ref[...],
                               preferred_element_type=jnp.float32)
            acc = jnp.zeros((M, w_ref.shape[1]), jnp.float32)
            for k, (a, b) in enumerate(product(range(3), range(3))):
                acc = acc + jnp.dot(tap(pad_ref, a, b), w_ref[pl.ds(k * Cin, Cin), :],
                                    preferred_element_type=jnp.float32)
            return acc

        def conv_cm(pad_ref, w_ref):
            # channel-major conv -> (cout, M) f32; lane-dense store when cout < 128.
            # (At real sizes Cout>=128 takes conv_rm, so any implicit transpose of the
            #  patch matrix here only ever happens on the small toy-size operand.)
            dn = (((1,), (1,)), ((), ()))
            if use_im2col:
                return lax.dot_general(w_ref[...], patches(pad_ref), dn,
                                       preferred_element_type=jnp.float32)
            acc = jnp.zeros((w_ref.shape[0], M), jnp.float32)
            for k, (a, b) in enumerate(product(range(3), range(3))):
                acc = acc + lax.dot_general(w_ref[:, pl.ds(k * Cin, Cin)],
                                            tap(pad_ref, a, b), dn,
                                            preferred_element_type=jnp.float32)
            return acc

        # layer 1 (BN scale already folded into the bf16 weights -> only shift + ReLU)
        pad_a[pl.ds(1, Ho), pl.ds(_PAD_LEFT, Wo), :] = up_ref[...].astype(pad_a.dtype)
        t1 = jnp.maximum(conv_rm(pad_a, w1_ref) + b1_ref[...], 0.0)

        # layer 2
        pad_b[pl.ds(1, Ho), pl.ds(_PAD_LEFT, Wo), :] = t1.reshape(Ho, Wo, Cin).astype(pad_b.dtype)
        t2 = jnp.maximum(conv_rm(pad_b, w2_ref) + b2_ref[...], 0.0)

        # layer 3
        pad_a[pl.ds(1, Ho), pl.ds(_PAD_LEFT, Wo), :] = t2.reshape(Ho, Wo, Cin).astype(pad_a.dtype)
        if channel_major:
            y3 = jnp.maximum(conv_cm(pad_a, w3_ref) + b3_ref[...], 0.0)   # (Cout, M)
        else:
            y3 = jnp.maximum(conv_rm(pad_a, w3_ref) + b3_ref[...], 0.0)   # (M, Cout)
        out_ref[...] = y3.astype(out_ref.dtype)

    # ------------------------------- specs / call ------------------------------- #

    scratch = [pltpu.VMEM((Hp, Wp, Cin), mxu_dtype),     # padded activations (ping), bf16
               pltpu.VMEM((Hp, Wp, Cin), mxu_dtype)]     # padded activations (pong), bf16
    if use_im2col:
        scratch.append(pltpu.VMEM((M, K), mxu_dtype))    # im2col staging buffer, bf16

    if channel_major:
        out_struct = jax.ShapeDtypeStruct((N, Cout, M), out_dtype)
        out_spec = pl.BlockSpec((None, Cout, M), lambda n: (n, 0, 0))
        w3_spec = pl.BlockSpec((Cout, K), lambda n: (0, 0))
        b3_spec = pl.BlockSpec((Cout, 1), lambda n: (0, 0))
    else:
        out_struct = jax.ShapeDtypeStruct((N, M, Cout), out_dtype)
        out_spec = pl.BlockSpec((None, M, Cout), lambda n: (n, 0, 0))
        w3_spec = pl.BlockSpec((K, Cout), lambda n: (0, 0))
        b3_spec = pl.BlockSpec((1, Cout), lambda n: (0, 0))

    grid_spec = pltpu.PrefetchScalarGridSpec(
        num_scalar_prefetch=0,
        grid=(N,),
        in_specs=[
            pl.BlockSpec((None, Ho, Wo, Cin), lambda n: (n, 0, 0, 0)),  # unpooled image (bf16)
            pl.BlockSpec((K, Cin), lambda n: (0, 0)),                   # w1 (scale folded)
            pl.BlockSpec((1, Cin), lambda n: (0, 0)),                   # shift1
            pl.BlockSpec((K, Cin), lambda n: (0, 0)),                   # w2
            pl.BlockSpec((1, Cin), lambda n: (0, 0)),                   # shift2
            w3_spec,                                                    # w3
            b3_spec,                                                    # shift3
        ],
        out_specs=out_spec,
        scratch_shapes=scratch,
    )

    # chip-aware VMEM budget: ~75% of physical (96 MiB on v5e/v6e, 48 MiB on v7x)
    try:
        vmem_cap = pltpu.get_tpu_info().vmem_capacity_bytes
    except Exception:
        vmem_cap = 64 * 1024 * 1024
    vmem_limit = int(min(100 * 1024 * 1024, (vmem_cap * 3) // 4))

    # TODO(synk): at real SegNet sizes (Cin>=256, 64x64 unpooled) add a second grid axis over
    # output-row strips (strip needs unpooled rows [r0-3, r0+tr+2]; recompute the 2-row halo
    # per conv layer) so pad/col scratch scales with the strip height and fits v7x's 64 MiB
    # VMEM, and put pipeline_mode=pl.Buffered(2..3) on the strip input spec.
    out = pl.pallas_call(
        kernel,
        out_shape=out_struct,
        grid_spec=grid_spec,
        compiler_params=pltpu.CompilerParams(
            dimension_semantics=("parallel",),            # batch axis shards across TCs on v7x
            vmem_limit_bytes=vmem_limit),
    )(up_nhwc, w1m, row(b1), w2m, row(b2), w3m, b3m)

    if channel_major:
        # kernel emitted channel-major (Cout, Ho*Wo): NCHW is a free reshape, no transpose.
        return out.reshape(N, Cout, Ho, Wo)
    # row-major path (Cout >= 128): lane-dense store; one XLA transpose back to NCHW.
    return jnp.transpose(out.reshape(N, Ho, Wo, Cout), (0, 3, 1, 2))


# ----------------------------- pure-JAX reference -------------------------- #

def max_unpool2x2(x_nchw, indices_nchw, output_shape):
    N, C, H, W = x_nchw.shape
    _, _, Ho, Wo = output_shape
    flat_idx = indices_nchw.reshape(N, C, H * W)
    flat_val = x_nchw.reshape(N, C, H * W)
    n_ix = jnp.arange(N)[:, None, None]
    c_ix = jnp.arange(C)[None, :, None]
    up = jnp.zeros((N, C, Ho * Wo), x_nchw.dtype).at[n_ix, c_ix, flat_idx].set(flat_val)
    return up.reshape(N, C, Ho, Wo)


def decoder_conv3_ref(x_nchw, indices_nchw, output_shape, params,
                      conv_dtype=jnp.float32, fold_scale=False):
    """Reference: unpool + 3x(conv3x3 'SAME' + folded-BN affine + ReLU).
    conv_dtype controls the conv operand precision; fold_scale=True folds the BN scale into
    the (rounded) conv weights to exactly match the kernel's bf16 operands."""
    y = jnp.transpose(max_unpool2x2(x_nchw, indices_nchw, output_shape), (0, 2, 3, 1))
    for (w, s, b) in params:
        wk = (w * s) if fold_scale else w
        yc = lax.conv_general_dilated(
            y.astype(conv_dtype), wk.astype(conv_dtype), window_strides=(1, 1),
            padding='SAME', dimension_numbers=('NHWC', 'HWIO', 'NHWC'),
            preferred_element_type=jnp.float32)
        y = jnp.maximum(yc + b if fold_scale else yc * s + b, 0.0)
    return jnp.transpose(y, (0, 3, 1, 2))


# -------------------------- deterministic params --------------------------- #

def make_params(key, cin, cout):
    """Conv weight (HWIO) + BN folded into per-channel scale/shift (eps=1e-5)."""
    def layer(k, ci, co):
        kw, kb, kg, kbe, km, kv = jax.random.split(k, 6)
        w = jax.random.normal(kw, (3, 3, ci, co), jnp.float32) * 0.1
        bias = jax.random.normal(kb, (co,), jnp.float32) * 0.05
        gamma = 1.0 + 0.1 * jax.random.normal(kg, (co,), jnp.float32)
        beta = 0.1 * jax.random.normal(kbe, (co,), jnp.float32)
        mean = 0.1 * jax.random.normal(km, (co,), jnp.float32)
        var = jnp.abs(jax.random.normal(kv, (co,), jnp.float32)) * 0.5 + 0.5
        scale = gamma / jnp.sqrt(var + 1e-5)
        shift = beta + (bias - mean) * scale
        return w, scale, shift

    k1, k2, k3 = jax.random.split(key, 3)
    return [layer(k1, cin, cin), layer(k2, cin, cin), layer(k3, cin, cout)]


# ---------------------------------- main ----------------------------------- #

if __name__ == "__main__":
    key = jax.random.PRNGKey(0)
    kx, kdy, kdx, kp = jax.random.split(key, 4)

    N, Cin, Cout, H, W = 2, 8, 8, 8, 8          # pooled input spatial = 8x8
    Ho, Wo = 2 * H, 2 * W                       # unpooled spatial = 16x16
    output_shape = (N, Cin, Ho, Wo)

    x = jax.random.normal(kx, (N, Cin, H, W), jnp.float32)

    # Valid MaxPool2d(2)-style indices: each pooled pixel points to one element
    # of its 2x2 window in the full-resolution plane (flat index over Ho*Wo).
    dy = jax.random.randint(kdy, (N, Cin, H, W), 0, 2)
    dx = jax.random.randint(kdx, (N, Cin, H, W), 0, 2)
    rows = jnp.arange(H)[None, None, :, None]
    cols = jnp.arange(W)[None, None, None, :]
    indices = ((2 * rows + dy) * Wo + (2 * cols + dx)).astype(jnp.int32)

    params = make_params(kp, Cin, Cout)

    out = decoder_conv3_pallas(x, indices, output_shape, params)
    out = jax.block_until_ready(out)
    assert out.shape == (N, Cout, Ho, Wo), out.shape

    # precision-matched reference (bf16 folded weights, f32 accumulation) -> tight check
    ref_bf16 = decoder_conv3_ref(x, indices, output_shape, params,
                                 conv_dtype=jnp.bfloat16, fold_scale=True)
    assert jnp.allclose(out, ref_bf16, atol=1e-2, rtol=1e-2)

    # full-f32 module semantics -> loose check (only bf16 rounding of operands differs)
    ref_f32 = decoder_conv3_ref(x, indices, output_shape, params, conv_dtype=jnp.float32)
    assert jnp.allclose(out, ref_f32, atol=5e-2, rtol=5e-2)

    print("KERNEL_OK")
</pallas_src>

<mosaic_0001>
module attributes {stable_mosaic.version = 11 : i64} {
  func.func @kernel(%arg0: i32, %arg1: memref<1x16x16x8xbf16, #tpu.memory_space<vmem>>, %arg2: memref<72x8xbf16, #tpu.memory_space<vmem>>, %arg3: memref<1x8xf32, #tpu.memory_space<vmem>>, %arg4: memref<72x8xbf16, #tpu.memory_space<vmem>>, %arg5: memref<1x8xf32, #tpu.memory_space<vmem>>, %arg6: memref<8x72xbf16, #tpu.memory_space<vmem>>, %arg7: memref<8x1xf32, #tpu.memory_space<vmem>>, %arg8: memref<1x8x256xf32, #tpu.memory_space<vmem>>, %arg9: memref<18x33x8xbf16, #tpu.memory_space<vmem>>, %arg10: memref<18x33x8xbf16, #tpu.memory_space<vmem>>, %arg11: memref<256x72xbf16, #tpu.memory_space<vmem>>) attributes {dimension_semantics = [#tpu.dimension_semantics<parallel>], iteration_bounds = array<i64: 2>, scalar_prefetch = 0 : i64, scratch_operands = 3 : i64, tpu.core_type = #tpu.core_type<tc>, window_params = [{transform_indices = @transform_0, window_bounds = array<i64: 1, 16, 16, 8>}, {pipeline_mode = #tpu.pipeline_mode<synchronous>, transform_indices = @transform_1, window_bounds = array<i64: 72, 8>}, {pipeline_mode = #tpu.pipeline_mode<synchronous>, transform_indices = @transform_2, window_bounds = array<i64: 1, 8>}, {pipeline_mode = #tpu.pipeline_mode<synchronous>, transform_indices = @transform_3, window_bounds = array<i64: 72, 8>}, {pipeline_mode = #tpu.pipeline_mode<synchronous>, transform_indices = @transform_4, window_bounds = array<i64: 1, 8>}, {pipeline_mode = #tpu.pipeline_mode<synchronous>, transform_indices = @transform_5, window_bounds = array<i64: 8, 72>}, {pipeline_mode = #tpu.pipeline_mode<synchronous>, transform_indices = @transform_6, window_bounds = array<i64: 8, 1>}, {transform_indices = @transform_7, window_bounds = array<i64: 1, 8, 256>}]} {
    %cst = arith.constant 0.000000e+00 : bf16
    %0 = vector.broadcast %cst : bf16 to vector<1x33x8xbf16>
    %c0 = arith.constant 0 : index
    %c0_0 = arith.constant 0 : index
    %c0_1 = arith.constant 0 : index
    %1 = vector.load %arg9[%c0, %c0_0, %c0_1] : memref<18x33x8xbf16, #tpu.memory_space<vmem>>, vector<1x33x8xbf16>
    tpu.vector_store %arg9[%c0, %c0_0, %c0_1], %0 {strides = array<i32>} : memref<18x33x8xbf16, #tpu.memory_space<vmem>>, vector<1x33x8xbf16>,
    %c17 = arith.constant 17 : index
    %c0_2 = arith.constant 0 : index
    %c0_3 = arith.constant 0 : index
    %2 = vector.load %arg9[%c17, %c0_2, %c0_3] : memref<18x33x8xbf16, #tpu.memory_space<vmem>>, vector<1x33x8xbf16>
    tpu.vector_store %arg9[%c17, %c0_2, %c0_3], %0 {strides = array<i32>} : memref<18x33x8xbf16, #tpu.memory_space<vmem>>, vector<1x33x8xbf16>,
    %cst_4 = arith.constant 0.000000e+00 : bf16
    %3 = vector.broadcast %cst_4 : bf16 to vector<18x1x8xbf16>
    %c0_5 = arith.constant 0 : index
    %c15 = arith.constant 15 : index
    %c0_6 = arith.constant 0 : index
    %4 = vector.load %arg9[%c0_5, %c15, %c0_6] : memref<18x33x8xbf16, #tpu.memory_space<vmem>>, vector<18x1x8xbf16>
    tpu.vector_store %arg9[%c0_5, %c15, %c0_6], %3 {strides = array<i32>} : memref<18x33x8xbf16, #tpu.memory_space<vmem>>, vector<18x1x8xbf16>,
    %c0_7 = arith.constant 0 : index
    %c32 = arith.constant 32 : index
    %c0_8 = arith.constant 0 : index
    %5 = vector.load %arg9[%c0_7, %c32, %c0_8] : memref<18x33x8xbf16, #tpu.memory_space<vmem>>, vector<18x1x8xbf16>
    tpu.vector_store %arg9[%c0_7, %c32, %c0_8], %3 {strides = array<i32>} : memref<18x33x8xbf16, #tpu.memory_space<vmem>>, vector<18x1x8xbf16>,
    %cst_9 = arith.constant 0.000000e+00 : bf16
    %6 = vector.broadcast %cst_9 : bf16 to vector<1x33x8xbf16>
    %c0_10 = arith.constant 0 : index
    %c0_11 = arith.constant 0 : index
    %c0_12 = arith.constant 0 : index
    %7 = vector.load %arg10[%c0_10, %c0_11, %c0_12] : memref<18x33x8xbf16, #tpu.memory_space<vmem>>, vector<1x33x8xbf16>
    tpu.vector_store %arg10[%c0_10, %c0_11, %c0_12], %6 {strides = array<i32>} : memref<18x33x8xbf16, #tpu.memory_space<vmem>>, vector<1x33x8xbf16>,
    %c17_13 = arith.constant 17 : index
    %c0_14 = arith.constant 0 : index
    %c0_15 = arith.constant 0 : index
    %8 = vector.load %arg10[%c17_13, %c0_14, %c0_15] : memref<18x33x8xbf16, #tpu.memory_space<vmem>>, vector<1x33x8xbf16>
    tpu.vector_store %arg10[%c17_13, %c0_14, %c0_15], %6 {strides = array<i32>} : memref<18x33x8xbf16, #tpu.memory_space<vmem>>, vector<1x33x8xbf16>,
    %cst_16 = arith.constant 0.000000e+00 : bf16
    %9 = vector.broadcast %cst_16 : bf16 to vector<18x1x8xbf16>
    %c0_17 = arith.constant 0 : index
    %c15_18 = arith.constant 15 : index
    %c0_19 = arith.constant 0 : index
    %10 = vector.load %arg10[%c0_17, %c15_18, %c0_19] : memref<18x33x8xbf16, #tpu.memory_space<vmem>>, vector<18x1x8xbf16>
    tpu.vector_store %arg10[%c0_17, %c15_18, %c0_19], %9 {strides = array<i32>} : memref<18x33x8xbf16, #tpu.memory_space<vmem>>, vector<18x1x8xbf16>,
    %c0_20 = arith.constant 0 : index
    %c32_21 = arith.constant 32 : index
    %c0_22 = arith.constant 0 : index
    %11 = vector.load %arg10[%c0_20, %c32_21, %c0_22] : memref<18x33x8xbf16, #tpu.memory_space<vmem>>, vector<18x1x8xbf16>
    tpu.vector_store %arg10[%c0_20, %c32_21, %c0_22], %9 {strides = array<i32>} : memref<18x33x8xbf16, #tpu.memory_space<vmem>>, vector<18x1x8xbf16>,
    %c0_23 = arith.constant 0 : index
    %c0_24 = arith.constant 0 : index
    %c0_25 = arith.constant 0 : index
    %c0_26 = arith.constant 0 : index
    %12 = vector.load %arg1[%c0_23, %c0_24, %c0_25, %c0_26] : memref<1x16x16x8xbf16, #tpu.memory_space<vmem>>, vector<1x16x16x8xbf16>
    %13 = vector.shape_cast %12 : vector<1x16x16x8xbf16> to vector<16x16x8xbf16>
    %c1 = arith.constant 1 : index
    %c16 = arith.constant 16 : index
    %c0_27 = arith.constant 0 : index
    %14 = vector.load %arg9[%c1, %c16, %c0_27] : memref<18x33x8xbf16, #tpu.memory_space<vmem>>, vector<16x16x8xbf16>
    tpu.vector_store %arg9[%c1, %c16, %c0_27], %13 {strides = array<i32>} : memref<18x33x8xbf16, #tpu.memory_space<vmem>>, vector<16x16x8xbf16>,
    %c0_28 = arith.constant 0 : index
    %c15_29 = arith.constant 15 : index
    %c0_30 = arith.constant 0 : index
    %15 = vector.load %arg9[%c0_28, %c15_29, %c0_30] : memref<18x33x8xbf16, #tpu.memory_space<vmem>>, vector<16x16x8xbf16>
    %16 = vector.shape_cast %15 : vector<16x16x8xbf16> to vector<256x8xbf16>
    %c0_31 = arith.constant 0 : index
    %c0_32 = arith.constant 0 : index
    %17 = vector.load %arg11[%c0_31, %c0_32] : memref<256x72xbf16, #tpu.memory_space<vmem>>, vector<256x8xbf16>
    tpu.vector_store %arg11[%c0_31, %c0_32], %16 {strides = array<i32>} : memref<256x72xbf16, #tpu.memory_space<vmem>>, vector<256x8xbf16>,
    %c0_33 = arith.constant 0 : index
    %c16_34 = arith.constant 16 : index
    %c0_35 = arith.constant 0 : index
    %18 = vector.load %arg9[%c0_33, %c16_34, %c0_35] : memref<18x33x8xbf16, #tpu.memory_space<vmem>>, vector<16x16x8xbf16>
    %19 = vector.shape_cast %18 : vector<16x16x8xbf16> to vector<256x8xbf16>
    %c0_36 = arith.constant 0 : index
    %c8 = arith.constant 8 : index
    %20 = vector.load %arg11[%c0_36, %c8] : memref<256x72xbf16, #tpu.memory_space<vmem>>, vector<256x8xbf16>
    tpu.vector_store %arg11[%c0_36, %c8], %19 {strides = array<i32>} : memref<256x72xbf16, #tpu.memory_space<vmem>>, vector<256x8xbf16>,
    %c0_37 = arith.constant 0 : index
    %c17_38 = arith.constant 17 : index
    %c0_39 = arith.constant 0 : index
    %21 = vector.load %arg9[%c0_37, %c17_38, %c0_39] : memref<18x33x8xbf16, #tpu.memory_space<vmem>>, vector<16x16x8xbf16>
    %22 = vector.shape_cast %21 : vector<16x16x8xbf16> to vector<256x8xbf16>
    %c0_40 = arith.constant 0 : index
    %c16_41 = arith.constant 16 : index
    %23 = vector.load %arg11[%c0_40, %c16_41] : memref<256x72xbf16, #tpu.memory_space<vmem>>, vector<256x8xbf16>
    tpu.vector_store %arg11[%c0_40, %c16_41], %22 {strides = array<i32>} : memref<256x72xbf16, #tpu.memory_space<vmem>>, vector<256x8xbf16>,
    %c1_42 = arith.constant 1 : index
    %c15_43 = arith.constant 15 : index
    %c0_44 = arith.constant 0 : index
    %24 = vector.load %arg9[%c1_42, %c15_43, %c0_44] : memref<18x33x8xbf16, #tpu.memory_space<vmem>>, vector<16x16x8xbf16>
    %25 = vector.shape_cast %24 : vector<16x16x8xbf16> to vector<256x8xbf16>
    %c0_45 = arith.constant 0 : index
    %c24 = arith.constant 24 : index
    %26 = vector.load %arg11[%c0_45, %c24] : memref<256x72xbf16, #tpu.memory_space<vmem>>, vector<256x8xbf16>
    tpu.vector_store %arg11[%c0_45, %c24], %25 {strides = array<i32>} : memref<256x72xbf16, #tpu.memory_space<vmem>>, vector<256x8xbf16>,
    %c1_46 = arith.constant 1 : index
    %c16_47 = arith.constant 16 : index
    %c0_48 = arith.constant 0 : index
    %27 = vector.load %arg9[%c1_46, %c16_47, %c0_48] : memref<18x33x8xbf16, #tpu.memory_space<vmem>>, vector<16x16x8xbf16>
    %28 = vector.shape_cast %27 : vector<16x16x8xbf16> to vector<256x8xbf16>
    %c0_49 = arith.constant 0 : index
    %c32_50 = arith.constant 32 : index
    %29 = vector.load %arg11[%c0_49, %c32_50] : memref<256x72xbf16, #tpu.memory_space<vmem>>, vector<256x8xbf16>
    tpu.vector_store %arg11[%c0_49, %c32_50], %28 {strides = array<i32>} : memref<256x72xbf16, #tpu.memory_space<vmem>>, vector<256x8xbf16>,
    %c1_51 = arith.constant 1 : index
    %c17_52 = arith.constant 17 : index
    %c0_53 = arith.constant 0 : index
    %30 = vector.load %arg9[%c1_51, %c17_52, %c0_53] : memref<18x33x8xbf16, #tpu.memory_space<vmem>>, vector<16x16x8xbf16>
    %31 = vector.shape_cast %30 : vector<16x16x8xbf16> to vector<256x8xbf16>
    %c0_54 = arith.constant 0 : index
    %c40 = arith.constant 40 : index
    %32 = vector.load %arg11[%c0_54, %c40] : memref<256x72xbf16, #tpu.memory_space<vmem>>, vector<256x8xbf16>
    tpu.vector_store %arg11[%c0_54, %c40], %31 {strides = array<i32>} : memref<256x72xbf16, #tpu.memory_space<vmem>>, vector<256x8xbf16>,
    %c2 = arith.constant 2 : index
    %c15_55 = arith.constant 15 : index
    %c0_56 = arith.constant 0 : index
    %33 = vector.load %arg9[%c2, %c15_55, %c0_56] : memref<18x33x8xbf16, #tpu.memory_space<vmem>>, vector<16x16x8xbf16>
    %34 = vector.shape_cast %33 : vector<16x16x8xbf16> to vector<256x8xbf16>
    %c0_57 = arith.constant 0 : index
    %c48 = arith.constant 48 : index
    %35 = vector.load %arg11[%c0_57, %c48] : memref<256x72xbf16, #tpu.memory_space<vmem>>, vector<256x8xbf16>
    tpu.vector_store %arg11[%c0_57, %c48], %34 {strides = array<i32>} : memref<256x72xbf16, #tpu.memory_space<vmem>>, vector<256x8xbf16>,
    %c2_58 = arith.constant 2 : index
    %c16_59 = arith.constant 16 : index
    %c0_60 = arith.constant 0 : index
    %36 = vector.load %arg9[%c2_58, %c16_59, %c0_60] : memref<18x33x8xbf16, #tpu.memory_space<vmem>>, vector<16x16x8xbf16>
    %37 = vector.shape_cast %36 : vector<16x16x8xbf16> to vector<256x8xbf16>
    %c0_61 = arith.constant 0 : index
    %c56 = arith.constant 56 : index
    %38 = vector.load %arg11[%c0_61, %c56] : memref<256x72xbf16, #tpu.memory_space<vmem>>, vector<256x8xbf16>
    tpu.vector_store %arg11[%c0_61, %c56], %37 {strides = array<i32>} : memref<256x72xbf16, #tpu.memory_space<vmem>>, vector<256x8xbf16>,
    %c2_62 = arith.constant 2 : index
    %c17_63 = arith.constant 17 : index
    %c0_64 = arith.constant 0 : index
    %39 = vector.load %arg9[%c2_62, %c17_63, %c0_64] : memref<18x33x8xbf16, #tpu.memory_space<vmem>>, vector<16x16x8xbf16>
    %40 = vector.shape_cast %39 : vector<16x16x8xbf16> to vector<256x8xbf16>
    %c0_65 = arith.constant 0 : index
    %c64 = arith.constant 64 : index
    %41 = vector.load %arg11[%c0_65, %c64] : memref<256x72xbf16, #tpu.memory_space<vmem>>, vector<256x8xbf16>
    tpu.vector_store %arg11[%c0_65, %c64], %40 {strides = array<i32>} : memref<256x72xbf16, #tpu.memory_space<vmem>>, vector<256x8xbf16>,
    %c0_66 = arith.constant 0 : index
    %c0_67 = arith.constant 0 : index
    %42 = vector.load %arg11[%c0_66, %c0_67] : memref<256x72xbf16, #tpu.memory_space<vmem>>, vector<256x72xbf16>
    %c0_68 = arith.constant 0 : index
    %c0_69 = arith.constant 0 : index
    %43 = vector.load %arg2[%c0_68, %c0_69] : memref<72x8xbf16, #tpu.memory_space<vmem>>, vector<72x8xbf16>
    %cst_70 = arith.constant dense<0.000000e+00> : vector<256x8xf32>
    %44 = tpu.matmul %42, %43, %cst_70 {dimension_numbers = #tpu.dot_dimension_numbers<[1], [0], [0], [1], [0, 0, 1, 1], [], []>} : vector<256x72xbf16>, vector<72x8xbf16>, vector<256x8xf32> -> vector<256x8xf32>
    %c0_71 = arith.constant 0 : index
    %c0_72 = arith.constant 0 : index
    %45 = vector.load %arg3[%c0_71, %c0_72] : memref<1x8xf32, #tpu.memory_space<vmem>>, vector<1x8xf32>
    %46 = vector.broadcast %45 : vector<1x8xf32> to vector<256x8xf32>
    %47 = arith.addf %44, %46 : vector<256x8xf32>
    %cst_73 = arith.constant 0.000000e+00 : f32
    %48 = vector.broadcast %cst_73 : f32 to vector<256x8xf32>
    %49 = arith.maximumf %47, %48 : vector<256x8xf32>
    %50 = vector.shape_cast %49 : vector<256x8xf32> to vector<16x16x8xf32>
    %51 = arith.truncf %50 : vector<16x16x8xf32> to vector<16x16x8xbf16>
    %c1_74 = arith.constant 1 : index
    %c16_75 = arith.constant 16 : index
    %c0_76 = arith.constant 0 : index
    %52 = vector.load %arg10[%c1_74, %c16_75, %c0_76] : memref<18x33x8xbf16, #tpu.memory_space<vmem>>, vector<16x16x8xbf16>
    tpu.vector_store %arg10[%c1_74, %c16_75, %c0_76], %51 {strides = array<i32>} : memref<18x33x8xbf16, #tpu.memory_space<vmem>>, vector<16x16x8xbf16>,
    %c0_77 = arith.constant 0 : index
    %c15_78 = arith.constant 15 : index
    %c0_79 = arith.constant 0 : index
    %53 = vector.load %arg10[%c0_77, %c15_78, %c0_79] : memref<18x33x8xbf16, #tpu.memory_space<vmem>>, vector<16x16x8xbf16>
    %54 = vector.shape_cast %53 : vector<16x16x8xbf16> to vector<256x8xbf16>
    %c0_80 = arith.constant 0 : index
    %c0_81 = arith.constant 0 : index
    %55 = vector.load %arg11[%c0_80, %c0_81] : memref<256x72xbf16, #tpu.memory_space<vmem>>, vector<256x8xbf16>
    tpu.vector_store %arg11[%c0_80, %c0_81], %54 {strides = array<i32>} : memref<256x72xbf16, #tpu.memory_space<vmem>>, vector<256x8xbf16>,
    %c0_82 = arith.constant 0 : index
    %c16_83 = arith.constant 16 : index
    %c0_84 = arith.constant 0 : index
    %56 = vector.load %arg10[%c0_82, %c16_83, %c0_84] : memref<18x33x8xbf16, #tpu.memory_space<vmem>>, vector<16x16x8xbf16>
    %57 = vector.shape_cast %56 : vector<16x16x8xbf16> to vector<256x8xbf16>
    %c0_85 = arith.constant 0 : index
    %c8_86 = arith.constant 8 : index
    %58 = vector.load %arg11[%c0_85, %c8_86] : memref<256x72xbf16, #tpu.memory_space<vmem>>, vector<256x8xbf16>
    tpu.vector_store %arg11[%c0_85, %c8_86], %57 {strides = array<i32>} : memref<256x72xbf16, #tpu.memory_space<vmem>>, vector<256x8xbf16>,
    %c0_87 = arith.constant 0 : index
    %c17_88 = arith.constant 17 : index
    %c0_89 = arith.constant 0 : index
    %59 = vector.load %arg10[%c0_87, %c17_88, %c0_89] : memref<18x33x8xbf16, #tpu.memory_space<vmem>>, vector<16x16x8xbf16>
    %60 = vector.shape_cast %59 : vector<16x16x8xbf16> to vector<256x8xbf16>
    %c0_90 = arith.constant 0 : index
    %c16_91 = arith.constant 16 : index
    %61 = vector.load %arg11[%c0_90, %c16_91] : memref<256x72xbf16, #tpu.memory_space<vmem>>, vector<256x8xbf16>
    tpu.vector_store %arg11[%c0_90, %c16_91], %60 {strides = array<i32>} : memref<256x72xbf16, #tpu.memory_space<vmem>>, vector<256x8xbf16>,
    %c1_92 = arith.constant 1 : index
    %c15_93 = arith.constant 15 : index
    %c0_94 = arith.constant 0 : index
    %62 = vector.load %arg10[%c1_92, %c15_93, %c0_94] : memref<18x33x8xbf16, #tpu.memory_space<vmem>>, vector<16x16x8xbf16>
    %63 = vector.shape_cast %62 : vector<16x16x8xbf16> to vector<256x8xbf16>
    %c0_95 = arith.constant 0 : index
    %c24_96 = arith.constant 24 : index
    %64 = vector.load %arg11[%c0_95, %c24_96] : memref<256x72xbf16, #tpu.memory_space<vmem>>, vector<256x8xbf16>
    tpu.vector_store %arg11[%c0_95, %c24_96], %63 {strides = array<i32>} : memref<256x72xbf16, #tpu.memory_space<vmem>>, vector<256x8xbf16>,
    %c1_97 = arith.constant 1 : index
    %c16_98 = arith.constant 16 : index
    %c0_99 = arith.constant 0 : index
    %65 = vector.load %arg10[%c1_97, %c16_98, %c0_99] : memref<18x33x8xbf16, #tpu.memory_space<vmem>>, vector<16x16x8xbf16>
    %66 = vector.shape_cast %65 : vector<16x16x8xbf16> to vector<256x8xbf16>
    %c0_100 = arith.constant 0 : index
    %c32_101 = arith.constant 32 : index
    %67 = vector.load %arg11[%c0_100, %c32_101] : memref<256x72xbf16, #tpu.memory_space<vmem>>, vector<256x8xbf16>
    tpu.vector_store %arg11[%c0_100, %c32_101], %66 {strides = array<i32>} : memref<256x72xbf16, #tpu.memory_space<vmem>>, vector<256x8xbf16>,
    %c1_102 = arith.constant 1 : index
    %c17_103 = arith.constant 17 : index
    %c0_104 = arith.constant 0 : index
    %68 = vector.load %arg10[%c1_102, %c17_103, %c0_104] : memref<18x33x8xbf16, #tpu.memory_space<vmem>>, vector<16x16x8xbf16>
    %69 = vector.shape_cast %68 : vector<16x16x8xbf16> to vector<256x8xbf16>
    %c0_105 = arith.constant 0 : index
    %c40_106 = arith.constant 40 : index
    %70 = vector.load %arg11[%c0_105, %c40_106] : memref<256x72xbf16, #tpu.memory_space<vmem>>, vector<256x8xbf16>
    tpu.vector_store %arg11[%c0_105, %c40_106], %69 {strides = array<i32>} : memref<256x72xbf16, #tpu.memory_space<vmem>>, vector<256x8xbf16>,
    %c2_107 = arith.constant 2 : index
    %c15_108 = arith.constant 15 : index
    %c0_109 = arith.constant 0 : index
    %71 = vector.load %arg10[%c2_107, %c15_108, %c0_109] : memref<18x33x8xbf16, #tpu.memory_space<vmem>>, vector<16x16x8xbf16>
    %72 = vector.shape_cast %71 : vector<16x16x8xbf16> to vector<256x8xbf16>
    %c0_110 = arith.constant 0 : index
    %c48_111 = arith.constant 48 : index
    %73 = vector.load %arg11[%c0_110, %c48_111] : memref<256x72xbf16, #tpu.memory_space<vmem>>, vector<256x8xbf16>
    tpu.vector_store %arg11[%c0_110, %c48_111], %72 {strides = array<i32>} : memref<256x72xbf16, #tpu.memory_space<vmem>>, vector<256x8xbf16>,
    %c2_112 = arith.constant 2 : index
    %c16_113 = arith.constant 16 : index
    %c0_114 = arith.constant 0 : index
    %74 = vector.load %arg10[%c2_112, %c16_113, %c0_114] : memref<18x33x8xbf16, #tpu.memory_space<vmem>>, vector<16x16x8xbf16>
    %75 = vector.shape_cast %74 : vector<16x16x8xbf16> to vector<256x8xbf16>
    %c0_115 = arith.constant 0 : index
    %c56_116 = arith.constant 56 : index
    %76 = vector.load %arg11[%c0_115, %c56_116] : memref<256x72xbf16, #tpu.memory_space<vmem>>, vector<256x8xbf16>
    tpu.vector_store %arg11[%c0_115, %c56_116], %75 {strides = array<i32>} : memref<256x72xbf16, #tpu.memory_space<vmem>>, vector<256x8xbf16>,
    %c2_117 = arith.constant 2 : index
    %c17_118 = arith.constant 17 : index
    %c0_119 = arith.constant 0 : index
    %77 = vector.load %arg10[%c2_117, %c17_118, %c0_119] : memref<18x33x8xbf16, #tpu.memory_space<vmem>>, vector<16x16x8xbf16>
    %78 = vector.shape_cast %77 : vector<16x16x8xbf16> to vector<256x8xbf16>
    %c0_120 = arith.constant 0 : index
    %c64_121 = arith.constant 64 : index
    %79 = vector.load %arg11[%c0_120, %c64_121] : memref<256x72xbf16, #tpu.memory_space<vmem>>, vector<256x8xbf16>
    tpu.vector_store %arg11[%c0_120, %c64_121], %78 {strides = array<i32>} : memref<256x72xbf16, #tpu.memory_space<vmem>>, vector<256x8xbf16>,
    %c0_122 = arith.constant 0 : index
    %c0_123 = arith.constant 0 : index
    %80 = vector.load %arg11[%c0_122, %c0_123] : memref<256x72xbf16, #tpu.memory_space<vmem>>, vector<256x72xbf16>
    %c0_124 = arith.constant 0 : index
    %c0_125 = arith.constant 0 : index
    %81 = vector.load %arg4[%c0_124, %c0_125] : memref<72x8xbf16, #tpu.memory_space<vmem>>, vector<72x8xbf16>
    %cst_126 = arith.constant dense<0.000000e+00> : vector<256x8xf32>
    %82 = tpu.matmul %80, %81, %cst_126 {dimension_numbers = #tpu.dot_dimension_numbers<[1], [0], [0], [1], [0, 0, 1, 1], [], []>} : vector<256x72xbf16>, vector<72x8xbf16>, vector<256x8xf32> -> vector<256x8xf32>
    %c0_127 = arith.constant 0 : index
    %c0_128 = arith.constant 0 : index
    %83 = vector.load %arg5[%c0_127, %c0_128] : memref<1x8xf32, #tpu.memory_space<vmem>>, vector<1x8xf32>
    %84 = vector.broadcast %83 : vector<1x8xf32> to vector<256x8xf32>
    %85 = arith.addf %82, %84 : vector<256x8xf32>
    %cst_129 = arith.constant 0.000000e+00 : f32
    %86 = vector.broadcast %cst_129 : f32 to vector<256x8xf32>
    %87 = arith.maximumf %85, %86 : vector<256x8xf32>
    %88 = vector.shape_cast %87 : vector<256x8xf32> to vector<16x16x8xf32>
    %89 = arith.truncf %88 : vector<16x16x8xf32> to vector<16x16x8xbf16>
    %c1_130 = arith.constant 1 : index
    %c16_131 = arith.constant 16 : index
    %c0_132 = arith.constant 0 : index
    %90 = vector.load %arg9[%c1_130, %c16_131, %c0_132] : memref<18x33x8xbf16, #tpu.memory_space<vmem>>, vector<16x16x8xbf16>
    tpu.vector_store %arg9[%c1_130, %c16_131, %c0_132], %89 {strides = array<i32>} : memref<18x33x8xbf16, #tpu.memory_space<vmem>>, vector<16x16x8xbf16>,
    %c0_133 = arith.constant 0 : index
    %c0_134 = arith.constant 0 : index
    %91 = vector.load %arg6[%c0_133, %c0_134] : memref<8x72xbf16, #tpu.memory_space<vmem>>, vector<8x72xbf16>
    %c0_135 = arith.constant 0 : index
    %c15_136 = arith.constant 15 : index
    %c0_137 = arith.constant 0 : index
    %92 = vector.load %arg9[%c0_135, %c15_136, %c0_137] : memref<18x33x8xbf16, #tpu.memory_space<vmem>>, vector<16x16x8xbf16>
    %93 = vector.shape_cast %92 : vector<16x16x8xbf16> to vector<256x8xbf16>
    %c0_138 = arith.constant 0 : index
    %c0_139 = arith.constant 0 : index
    %94 = vector.load %arg11[%c0_138, %c0_139] : memref<256x72xbf16, #tpu.memory_space<vmem>>, vector<256x8xbf16>
    tpu.vector_store %arg11[%c0_138, %c0_139], %93 {strides = array<i32>} : memref<256x72xbf16, #tpu.memory_space<vmem>>, vector<256x8xbf16>,
    %c0_140 = arith.constant 0 : index
    %c16_141 = arith.constant 16 : index
    %c0_142 = arith.constant 0 : index
    %95 = vector.load %arg9[%c0_140, %c16_141, %c0_142] : memref<18x33x8xbf16, #tpu.memory_space<vmem>>, vector<16x16x8xbf16>
    %96 = vector.shape_cast %95 : vector<16x16x8xbf16> to vector<256x8xbf16>
    %c0_143 = arith.constant 0 : index
    %c8_144 = arith.constant 8 : index
    %97 = vector.load %arg11[%c0_143, %c8_144] : memref<256x72xbf16, #tpu.memory_space<vmem>>, vector<256x8xbf16>
    tpu.vector_store %arg11[%c0_143, %c8_144], %96 {strides = array<i32>} : memref<256x72xbf16, #tpu.memory_space<vmem>>, vector<256x8xbf16>,
    %c0_145 = arith.constant 0 : index
    %c17_146 = arith.constant 17 : index
    %c0_147 = arith.constant 0 : index
    %98 = vector.load %arg9[%c0_145, %c17_146, %c0_147] : memref<18x33x8xbf16, #tpu.memory_space<vmem>>, vector<16x16x8xbf16>
    %99 = vector.shape_cast %98 : vector<16x16x8xbf16> to vector<256x8xbf16>
    %c0_148 = arith.constant 0 : index
    %c16_149 = arith.constant 16 : index
    %100 = vector.load %arg11[%c0_148, %c16_149] : memref<256x72xbf16, #tpu.memory_space<vmem>>, vector<256x8xbf16>
    tpu.vector_store %arg11[%c0_148, %c16_149], %99 {strides = array<i32>} : memref<256x72xbf16, #tpu.memory_space<vmem>>, vector<256x8xbf16>,
    %c1_150 = arith.constant 1 : index
    %c15_151 = arith.constant 15 : index
    %c0_152 = arith.constant 0 : index
    %101 = vector.load %arg9[%c1_150, %c15_151, %c0_152] : memref<18x33x8xbf16, #tpu.memory_space<vmem>>, vector<16x16x8xbf16>
    %102 = vector.shape_cast %101 : vector<16x16x8xbf16> to vector<256x8xbf16>
    %c0_153 = arith.constant 0 : index
    %c24_154 = arith.constant 24 : index
    %103 = vector.load %arg11[%c0_153, %c24_154] : memref<256x72xbf16, #tpu.memory_space<vmem>>, vector<256x8xbf16>
    tpu.vector_store %arg11[%c0_153, %c24_154], %102 {strides = array<i32>} : memref<256x72xbf16, #tpu.memory_space<vmem>>, vector<256x8xbf16>,
    %c1_155 = arith.constant 1 : index
    %c16_156 = arith.constant 16 : index
    %c0_157 = arith.constant 0 : index
    %104 = vector.load %arg9[%c1_155, %c16_156, %c0_157] : memref<18x33x8xbf16, #tpu.memory_space<vmem>>, vector<16x16x8xbf16>
    %105 = vector.shape_cast %104 : vector<16x16x8xbf16> to vector<256x8xbf16>
    %c0_158 = arith.constant 0 : index
    %c32_159 = arith.constant 32 : index
    %106 = vector.load %arg11[%c0_158, %c32_159] : memref<256x72xbf16, #tpu.memory_space<vmem>>, vector<256x8xbf16>
    tpu.vector_store %arg11[%c0_158, %c32_159], %105 {strides = array<i32>} : memref<256x72xbf16, #tpu.memory_space<vmem>>, vector<256x8xbf16>,
    %c1_160 = arith.constant 1 : index
    %c17_161 = arith.constant 17 : index
    %c0_162 = arith.constant 0 : index
    %107 = vector.load %arg9[%c1_160, %c17_161, %c0_162] : memref<18x33x8xbf16, #tpu.memory_space<vmem>>, vector<16x16x8xbf16>
    %108 = vector.shape_cast %107 : vector<16x16x8xbf16> to vector<256x8xbf16>
    %c0_163 = arith.constant 0 : index
    %c40_164 = arith.constant 40 : index
    %109 = vector.load %arg11[%c0_163, %c40_164] : memref<256x72xbf16, #tpu.memory_space<vmem>>, vector<256x8xbf16>
    tpu.vector_store %arg11[%c0_163, %c40_164], %108 {strides = array<i32>} : memref<256x72xbf16, #tpu.memory_space<vmem>>, vector<256x8xbf16>,
    %c2_165 = arith.constant 2 : index
    %c15_166 = arith.constant 15 : index
    %c0_167 = arith.constant 0 : index
    %110 = vector.load %arg9[%c2_165, %c15_166, %c0_167] : memref<18x33x8xbf16, #tpu.memory_space<vmem>>, vector<16x16x8xbf16>
    %111 = vector.shape_cast %110 : vector<16x16x8xbf16> to vector<256x8xbf16>
    %c0_168 = arith.constant 0 : index
    %c48_169 = arith.constant 48 : index
    %112 = vector.load %arg11[%c0_168, %c48_169] : memref<256x72xbf16, #tpu.memory_space<vmem>>, vector<256x8xbf16>
    tpu.vector_store %arg11[%c0_168, %c48_169], %111 {strides = array<i32>} : memref<256x72xbf16, #tpu.memory_space<vmem>>, vector<256x8xbf16>,
    %c2_170 = arith.constant 2 : index
    %c16_171 = arith.constant 16 : index
    %c0_172 = arith.constant 0 : index
    %113 = vector.load %arg9[%c2_170, %c16_171, %c0_172] : memref<18x33x8xbf16, #tpu.memory_space<vmem>>, vector<16x16x8xbf16>
    %114 = vector.shape_cast %113 : vector<16x16x8xbf16> to vector<256x8xbf16>
    %c0_173 = arith.constant 0 : index
    %c56_174 = arith.constant 56 : index
    %115 = vector.load %arg11[%c0_173, %c56_174] : memref<256x72xbf16, #tpu.memory_space<vmem>>, vector<256x8xbf16>
    tpu.vector_store %arg11[%c0_173, %c56_174], %114 {strides = array<i32>} : memref<256x72xbf16, #tpu.memory_space<vmem>>, vector<256x8xbf16>,
    %c2_175 = arith.constant 2 : index
    %c17_176 = arith.constant 17 : index
    %c0_177 = arith.constant 0 : index
    %116 = vector.load %arg9[%c2_175, %c17_176, %c0_177] : memref<18x33x8xbf16, #tpu.memory_space<vmem>>, vector<16x16x8xbf16>
    %117 = vector.shape_cast %116 : vector<16x16x8xbf16> to vector<256x8xbf16>
    %c0_178 = arith.constant 0 : index
    %c64_179 = arith.constant 64 : index
    %118 = vector.load %arg11[%c0_178, %c64_179] : memref<256x72xbf16, #tpu.memory_space<vmem>>, vector<256x8xbf16>
    tpu.vector_store %arg11[%c0_178, %c64_179], %117 {strides = array<i32>} : memref<256x72xbf16, #tpu.memory_space<vmem>>, vector<256x8xbf16>,
    %c0_180 = arith.constant 0 : index
    %c0_181 = arith.constant 0 : index
    %119 = vector.load %arg11[%c0_180, %c0_181] : memref<256x72xbf16, #tpu.memory_space<vmem>>, vector<256x72xbf16>
    %cst_182 = arith.constant dense<0.000000e+00> : vector<8x256xf32>
    %120 = tpu.matmul %91, %119, %cst_182 {dimension_numbers = #tpu.dot_dimension_numbers<[1], [1], [0], [0], [0, 0, 1, 0], [], []>} : vector<8x72xbf16>, vector<256x72xbf16>, vector<8x256xf32> -> vector<8x256xf32>
    %c0_183 = arith.constant 0 : index
    %c0_184 = arith.constant 0 : index
    %121 = vector.load %arg7[%c0_183, %c0_184] : memref<8x1xf32, #tpu.memory_space<vmem>>, vector<8x1xf32>
    %122 = vector.broadcast %121 : vector<8x1xf32> to vector<8x256xf32>
    %123 = arith.addf %120, %122 : vector<8x256xf32>
    %cst_185 = arith.constant 0.000000e+00 : f32
    %124 = vector.broadcast %cst_185 : f32 to vector<8x256xf32>
    %125 = arith.maximumf %123, %124 : vector<8x256xf32>
    %c0_186 = arith.constant 0 : index
    %c0_187 = arith.constant 0 : index
    %c0_188 = arith.constant 0 : index
    %126 = vector.load %arg8[%c0_186, %c0_187, %c0_188] : memref<1x8x256xf32, #tpu.memory_space<vmem>>, vector<1x8x256xf32>
    %127 = vector.shape_cast %126 : vector<1x8x256xf32> to vector<8x256xf32>
    %128 = vector.shape_cast %125 : vector<8x256xf32> to vector<1x8x256xf32>
    tpu.vector_store %arg8[%c0_186, %c0_187, %c0_188], %128 {strides = array<i32>} : memref<1x8x256xf32, #tpu.memory_space<vmem>>, vector<1x8x256xf32>,
    return
  }
  func.func @transform_0(%arg0: i32) -> (i32, i32, i32, i32) {
    %c0_i32 = arith.constant 0 : i32
    %c0_i32_0 = arith.constant 0 : i32
    %c0_i32_1 = arith.constant 0 : i32
    %c0_i32_2 = arith.constant 0 : i32
    return %arg0, %c0_i32, %c0_i32_0, %c0_i32_1 : i32, i32, i32, i32
  }
  func.func @transform_1(%arg0: i32) -> (i32, i32) {
    %c0_i32 = arith.constant 0 : i32
    %c0_i32_0 = arith.constant 0 : i32
    %c0_i32_1 = arith.constant 0 : i32
    return %c0_i32, %c0_i32_0 : i32, i32
  }
  func.func @transform_2(%arg0: i32) -> (i32, i32) {
    %c0_i32 = arith.constant 0 : i32
    %c0_i32_0 = arith.constant 0 : i32
    %c0_i32_1 = arith.constant 0 : i32
    return %c0_i32, %c0_i32_0 : i32, i32
  }
  func.func @transform_3(%arg0: i32) -> (i32, i32) {
    %c0_i32 = arith.constant 0 : i32
    %c0_i32_0 = arith.constant 0 : i32
    %c0_i32_1 = arith.constant 0 : i32
    return %c0_i32, %c0_i32_0 : i32, i32
  }
  func.func @transform_4(%arg0: i32) -> (i32, i32) {
    %c0_i32 = arith.constant 0 : i32
    %c0_i32_0 = arith.constant 0 : i32
    %c0_i32_1 = arith.constant 0 : i32
    return %c0_i32, %c0_i32_0 : i32, i32
  }
  func.func @transform_5(%arg0: i32) -> (i32, i32) {
    %c0_i32 = arith.constant 0 : i32
    %c0_i32_0 = arith.constant 0 : i32
    %c0_i32_1 = arith.constant 0 : i32
    return %c0_i32, %c0_i32_0 : i32, i32
  }
  func.func @transform_6(%arg0: i32) -> (i32, i32) {
    %c0_i32 = arith.constant 0 : i32
    %c0_i32_0 = arith.constant 0 : i32
    %c0_i32_1 = arith.constant 0 : i32
    return %c0_i32, %c0_i32_0 : i32, i32
  }
  func.func @transform_7(%arg0: i32) -> (i32, i32, i32) {
    %c0_i32 = arith.constant 0 : i32
    %c0_i32_0 = arith.constant 0 : i32
    %c0_i32_1 = arith.constant 0 : i32
    return %arg0, %c0_i32, %c0_i32_0 : i32, i32, i32
  }
}

</mosaic_0001>

<llo_original>
// kernel: tpu_custom_call.1
$region0: #{tpu_custom_call.1}
  #allocation0 [shape = 'u32[]', space=smem, size = 0x4, offset = 0x4, fixed_abs, tag = 'smem constant byte address 0x4 - core index']
  #allocation1 [shape = 'u32[144,128]{1,0:T(1,128)}', space=vmem, size = 0x12000, scoped, tag = 'internal scratch']
  #allocation2 [shape = 'bf16[18,33,8]{2,1,0:T(8,128)(2,1)}', space=vmem, size = 0x2d000, scoped, tag = 'scratch operand']
  #allocation3 [shape = 'bf16[18,33,8]{2,1,0:T(8,128)(2,1)}', space=vmem, size = 0x2d000, scoped, tag = 'scratch operand']
  #allocation4 [shape = 'bf16[256,72]{1,0:T(16,128)(2,1)}', space=vmem, size = 0x10000, scoped, tag = 'scratch operand']
  %s0 = inlined_call_operand.vmem [shape: bf16[2,16,16,8], index: 0, kind: input, shape index: {}]
  %s1 = inlined_call_operand.vmem [shape: bf16[72,8], index: 1, kind: input, shape index: {}]
  %s2 = inlined_call_operand.vmem [shape: f32[1,8], index: 2, kind: input, shape index: {}]
  %s3 = inlined_call_operand.vmem [shape: bf16[72,8], index: 3, kind: input, shape index: {}]
  %s4 = inlined_call_operand.vmem [shape: f32[1,8], index: 4, kind: input, shape index: {}]
  %s5 = inlined_call_operand.vmem [shape: bf16[8,72], index: 5, kind: input, shape index: {}]
  %s6 = inlined_call_operand.vmem [shape: f32[8,1], index: 6, kind: input, shape index: {}]
  %s7 = inlined_call_operand.hbm [shape: f32[2,8,256], index: 7, kind: output, shape index: {}]
  %s8 = sld [smem:[#allocation0]]
  $region61: #{tpu_custom_call.1} parent=0
    _
  %s10 = ssub.s32 1, %s8
  %s11 = scalar_select 0, %s10, %s8
  $region1: #{tpu_custom_call.1} parent=0
    #allocation5 [shape = 'u8[16384]{0}', space=vmem, size = 0x4000, scoped, tag = 'output window, operand 0']
    #allocation6 [shape = 's32[2]{0}', space=sflag, size = 0x8, scoped, tag = 'scoped memory for tpu_custom_call.1']
    %12 = vsyncpa [#allocation6], 0
    %s13 = scalar_lea.sflag [#allocation6], 1
    %14 = vsyncpa %s13, 0
    loop: start=0, step=1, limit=4
    $region2: #{tpu_custom_call.1} parent=1 // loop_pre_header
      _
    $region3: #{tpu_custom_call.1} parent=1 // loop_header
      %s16 = sphi 0, %s20
      %p17 = scmp.ge.s32.totalorder %s16, 4
      %s26 = sphi 0, %s28
      %s29 = sphi 0, %s26
      %s30 = sphi 0, %s29
      %s46 = sphi 0, %s30
      %s50 = sphi 0, %s50
      %s52 = sphi 0, %s50
      %s53 = sphi 0, %s52
      %s67 = sphi 0, %s53
      %s71 = sphi 0, %s71
      %s73 = sphi 0, %s71
      %s74 = sphi 0, %s73
      %s88 = sphi 0, %s74
      %s92 = sphi 0, %s92
      %s94 = sphi 0, %s92
      %s95 = sphi 0, %s94
      %s109 = sphi 0, %s95
      %s113 = sphi 0, %s113
      %s115 = sphi 0, %s113
      %s116 = sphi 0, %s115
      %s130 = sphi 0, %s116
      %s134 = sphi 0, %s134
      %s136 = sphi 0, %s134
      %s137 = sphi 0, %s136
      %s151 = sphi 0, %s137
      %s155 = sphi 0, %s155
      %s157 = sphi 0, %s155
      %s158 = sphi 0, %s157
      %s172 = sphi 0, %s158
      %s178 = sphi 0, %s180
      %s181 = sphi 0, %s178
      %s182 = sphi 0, %s181
      %s198 = sphi 0, %s182
    $region4: #{tpu_custom_call.1} parent=1 // loop_header_branch
      %19 = sbr.rel (%p17) target = $region8
    $region5: #{tpu_custom_call.1} parent=1 // loop_body
      %s21 = ssub.s32 %s16, 1
      %s22 = ssub.s32 %s16, 2
      %s23 = sadd.s32 %s16, 1
      %s24 = ssub.s32 %s16, %s23
      %p25 = scmp.eq.s32.totalorder %s24, 0
      %s27 = sadd.s32 %s26, 1
      %s28 = scalar_select %p25, %s26, %s27
      %p31 = pneg %p25
      %p32 = scmp.eq.s32.totalorder %s16, 1
      %p33 = por %p31, %p32
      %p34 = scmp.ne.s32.totalorder %s26, %s29
      %p35 = scmp.eq.s32.totalorder %s16, 0
      %p36 = por %p34, %p35
      %p37 = scmp.ne.s32.totalorder %s26, %s29
      %p38 = scmp.eq.s32.totalorder %s21, 1
      %p39 = por %p37, %p38
      %p40 = scmp.ne.s32.totalorder %s29, %s30
      %p41 = scmp.eq.s32.totalorder %s21, 0
      %p42 = por %p40, %p41
      %p43 = scmp.ne.s32.totalorder %s29, %s30
      %p44 = scmp.eq.s32.totalorder %s22, 1
      %p45 = por %p43, %p44
      %p47 = scmp.ne.s32.totalorder %s30, %s46
      %p48 = scmp.eq.s32.totalorder %s22, 0
      %p49 = por %p47, %p48
      %s51 = sadd.s32 %s50, 1
      %p54 = scmp.eq.s32.totalorder %s16, 1
      %p55 = scmp.ne.s32.totalorder %s50, %s52
      %p56 = scmp.eq.s32.totalorder %s16, 0
      %p57 = por %p55, %p56
      %p58 = scmp.ne.s32.totalorder %s50, %s52
      %p59 = scmp.eq.s32.totalorder %s21, 1
      %p60 = por %p58, %p59
      %p61 = scmp.ne.s32.totalorder %s52, %s53
      %p62 = scmp.eq.s32.totalorder %s21, 0
      %p63 = por %p61, %p62
      %p64 = scmp.ne.s32.totalorder %s52, %s53
      %p65 = scmp.eq.s32.totalorder %s22, 1
      %p66 = por %p64, %p65
      %p68 = scmp.ne.s32.totalorder %s53, %s67
      %p69 = scmp.eq.s32.totalorder %s22, 0
      %p70 = por %p68, %p69
      %s72 = sadd.s32 %s71, 1
      %p75 = scmp.eq.s32.totalorder %s16, 1
      %p76 = scmp.ne.s32.totalorder %s71, %s73
      %p77 = scmp.eq.s32.totalorder %s16, 0
      %p78 = por %p76, %p77
      %p79 = scmp.ne.s32.totalorder %s71, %s73
      %p80 = scmp.eq.s32.totalorder %s21, 1
      %p81 = por %p79, %p80
      %p82 = scmp.ne.s32.totalorder %s73, %s74
      %p83 = scmp.eq.s32.totalorder %s21, 0
      %p84 = por %p82, %p83
      %p85 = scmp.ne.s32.totalorder %s73, %s74
      %p86 = scmp.eq.s32.totalorder %s22, 1
      %p87 = por %p85, %p86
      %p89 = scmp.ne.s32.totalorder %s74, %s88
      %p90 = scmp.eq.s32.totalorder %s22, 0
      %p91 = por %p89, %p90
      %s93 = sadd.s32 %s92, 1
      %p96 = scmp.eq.s32.totalorder %s16, 1
      %p97 = scmp.ne.s32.totalorder %s92, %s94
      %p98 = scmp.eq.s32.totalorder %s16, 0
      %p99 = por %p97, %p98
      %p100 = scmp.ne.s32.totalorder %s92, %s94
      %p101 = scmp.eq.s32.totalorder %s21, 1
      %p102 = por %p100, %p101
      %p103 = scmp.ne.s32.totalorder %s94, %s95
      %p104 = scmp.eq.s32.totalorder %s21, 0
      %p105 = por %p103, %p104
      %p106 = scmp.ne.s32.totalorder %s94, %s95
      %p107 = scmp.eq.s32.totalorder %s22, 1
      %p108 = por %p106, %p107
      %p110 = scmp.ne.s32.totalorder %s95, %s109
      %p111 = scmp.eq.s32.totalorder %s22, 0
      %p112 = por %p110, %p111
      %s114 = sadd.s32 %s113, 1
      %p117 = scmp.eq.s32.totalorder %s16, 1
      %p118 = scmp.ne.s32.totalorder %s113, %s115
      %p119 = scmp.eq.s32.totalorder %s16, 0
      %p120 = por %p118, %p119
      %p121 = scmp.ne.s32.totalorder %s113, %s115
      %p122 = scmp.eq.s32.totalorder %s21, 1
      %p123 = por %p121, %p122
      %p124 = scmp.ne.s32.totalorder %s115, %s116
      %p125 = scmp.eq.s32.totalorder %s21, 0
      %p126 = por %p124, %p125
      %p127 = scmp.ne.s32.totalorder %s115, %s116
      %p128 = scmp.eq.s32.totalorder %s22, 1
      %p129 = por %p127, %p128
      %p131 = scmp.ne.s32.totalorder %s116, %s130
      %p132 = scmp.eq.s32.totalorder %s22, 0
      %p133 = por %p131, %p132
      %s135 = sadd.s32 %s134, 1
      %p138 = scmp.eq.s32.totalorder %s16, 1
      %p139 = scmp.ne.s32.totalorder %s134, %s136
      %p140 = scmp.eq.s32.totalorder %s16, 0
      %p141 = por %p139, %p140
      %p142 = scmp.ne.s32.totalorder %s134, %s136
      %p143 = scmp.eq.s32.totalorder %s21, 1
      %p144 = por %p142, %p143
      %p145 = scmp.ne.s32.totalorder %s136, %s137
      %p146 = scmp.eq.s32.totalorder %s21, 0
      %p147 = por %p145, %p146
      %p148 = scmp.ne.s32.totalorder %s136, %s137
      %p149 = scmp.eq.s32.totalorder %s22, 1
      %p150 = por %p148, %p149
      %p152 = scmp.ne.s32.totalorder %s137, %s151
      %p153 = scmp.eq.s32.totalorder %s22, 0
      %p154 = por %p152, %p153
      %s156 = sadd.s32 %s155, 1
      %p159 = scmp.eq.s32.totalorder %s16, 1
      %p160 = scmp.ne.s32.totalorder %s155, %s157
      %p161 = scmp.eq.s32.totalorder %s16, 0
      %p162 = por %p160, %p161
      %p163 = scmp.ne.s32.totalorder %s155, %s157
      %p164 = scmp.eq.s32.totalorder %s21, 1
      %p165 = por %p163, %p164
      %p166 = scmp.ne.s32.totalorder %s157, %s158
      %p167 = scmp.eq.s32.totalorder %s21, 0
      %p168 = por %p166, %p167
      %p169 = scmp.ne.s32.totalorder %s157, %s158
      %p170 = scmp.eq.s32.totalorder %s22, 1
      %p171 = por %p169, %p170
      %p173 = scmp.ne.s32.totalorder %s158, %s172
      %p174 = scmp.eq.s32.totalorder %s22, 0
      %p175 = por %p173, %p174
      %s176 = ssub.s32 %s16, %s23
      %p177 = scmp.eq.s32.totalorder %s176, 0
      %s179 = sadd.s32 %s178, 1
      %s180 = scalar_select %p177, %s178, %s179
      %p183 = pneg %p177
      %p184 = scmp.eq.s32.totalorder %s16, 1
      %p185 = por %p183, %p184
      %p186 = scmp.ne.s32.totalorder %s178, %s181
      %p187 = scmp.eq.s32.totalorder %s16, 0
      %p188 = por %p186, %p187
      %p189 = scmp.ne.s32.totalorder %s178, %s181
      %p190 = scmp.eq.s32.totalorder %s21, 1
      %p191 = por %p189, %p190
      %p192 = scmp.ne.s32.totalorder %s181, %s182
      %p193 = scmp.eq.s32.totalorder %s21, 0
      %p194 = por %p192, %p193
      %p195 = scmp.ne.s32.totalorder %s181, %s182
      %p196 = scmp.eq.s32.totalorder %s22, 1
      %p197 = por %p195, %p196
      %p199 = scmp.ne.s32.totalorder %s182, %s198
      %p200 = scmp.eq.s32.totalorder %s22, 0
      %p201 = por %p199, %p200
      %p202 = scmp.le.s32.totalorder 1, %s16
      %p203 = scmp.lt.s32.totalorder %s16, 3
      %p204 = pnand %p202, %p203
      %p205 = pneg %p204
      // Predicated region
      $region9: #{tpu_custom_call.1} parent=5 // pred_check
        _
      $region10: #{tpu_custom_call.1} parent=5 // pred_check_branch
        %207 = sbr.rel (%p204) target = $region12
      $region11: #{tpu_custom_call.1} parent=5 // pred_region
        %s208 = ssub.s32 %s16, 1
        // Predicated region
        $region13: #{tpu_custom_call.1} parent=11 // pred_check
          %p209 = pneg %p63
        $region14: #{tpu_custom_call.1} parent=11 // pred_check_branch
          %211 = sbr.rel (%p209) target = $region16
        $region15: #{tpu_custom_call.1} parent=11 // pred_region
          _
        $region16: #{tpu_custom_call.1} parent=11 // pred_fallthru
          _
        // Predicated region
        $region17: #{tpu_custom_call.1} parent=11 // pred_check
          %p212 = pneg %p84
        $region18: #{tpu_custom_call.1} parent=11 // pred_check_branch
          %214 = sbr.rel (%p212) target = $region20
        $region19: #{tpu_custom_call.1} parent=11 // pred_region
          _
        $region20: #{tpu_custom_call.1} parent=11 // pred_fallthru
          _
        // Predicated region
        $region21: #{tpu_custom_call.1} parent=11 // pred_check
          %p215 = pneg %p105
        $region22: #{tpu_custom_call.1} parent=11 // pred_check_branch
          %217 = sbr.rel (%p215) target = $region24
        $region23: #{tpu_custom_call.1} parent=11 // pred_region
          _
        $region24: #{tpu_custom_call.1} parent=11 // pred_fallthru
          _
        // Predicated region
        $region25: #{tpu_custom_call.1} parent=11 // pred_check
          %p218 = pneg %p126
        $region26: #{tpu_custom_call.1} parent=11 // pred_check_branch
          %220 = sbr.rel (%p218) target = $region28
        $region27: #{tpu_custom_call.1} parent=11 // pred_region
          _
        $region28: #{tpu_custom_call.1} parent=11 // pred_fallthru
          _
        // Predicated region
        $region29: #{tpu_custom_call.1} parent=11 // pred_check
          %p221 = pneg %p147
        $region30: #{tpu_custom_call.1} parent=11 // pred_check_branch
          %223 = sbr.rel (%p221) target = $region32
        $region31: #{tpu_custom_call.1} parent=11 // pred_region
          _
        $region32: #{tpu_custom_call.1} parent=11 // pred_fallthru
          _
        // Predicated region
        $region33: #{tpu_custom_call.1} parent=11 // pred_check
          %p224 = pneg %p168
        $region34: #{tpu_custom_call.1} parent=11 // pred_check_branch
          %226 = sbr.rel (%p224) target = $region36
        $region35: #{tpu_custom_call.1} parent=11 // pred_region
          _
        $region36: #{tpu_custom_call.1} parent=11 // pred_fallthru
          _
      $region12: #{tpu_custom_call.1} parent=5 // pred_fallthru
        _
      %p227 = scmp.lt.s32.totalorder %s16, 2
      // Predicated region
      $region37: #{tpu_custom_call.1} parent=5 // pred_check
        %p228 = pneg %p227
      $region38: #{tpu_custom_call.1} parent=5 // pred_check_branch
        %230 = sbr.rel (%p228) target = $region40
      $region39: #{tpu_custom_call.1} parent=5 // pred_region
        // Predicated region
        $region41: #{tpu_custom_call.1} parent=39 // pred_check
          %p231 = pneg %p36
        $region42: #{tpu_custom_call.1} parent=39 // pred_check_branch
          %233 = sbr.rel (%p231) target = $region44
        $region43: #{tpu_custom_call.1} parent=39 // pred_region
          %p234 = scmp.lt.s32.totalorder %s16, 1
          %s235 = scalar_select %p234, %s16, 1
          %s236 = smul.addr %s235, 32
          %s237 = smul.addr %s236, 4
          %s238 = scalar_lea.vmem %s0, %s237
        $region44: #{tpu_custom_call.1} parent=39 // pred_fallthru
          _
      $region40: #{tpu_custom_call.1} parent=5 // pred_fallthru
        _
      %p239 = scmp.le.s32.totalorder 1, %s16
      %p240 = scmp.lt.s32.totalorder %s16, 3
      %p241 = pnand %p239, %p240
      %p242 = pneg %p241
      // Predicated region
      $region45: #{tpu_custom_call.1} parent=5 // pred_check
        _
      $region46: #{tpu_custom_call.1} parent=5 // pred_check_branch
        %244 = sbr.rel (%p241) target = $region48
      $region47: #{tpu_custom_call.1} parent=5 // pred_region
        %s245 = ssub.s32 %s16, 1
        %p246 = scmp.lt.s32.totalorder %s21, 1
        %s247 = scalar_select %p246, %s21, 1
        %s248 = smul.addr %s247, 32
        %s249 = smul.addr %s248, 4
        %s250 = scalar_lea.vmem %s0, %s249
        %p251 = pneg %p42
        %p252 = pneg %p39
        %p253 = pneg %p63
        %p254 = pneg %p60
        %p255 = pneg %p84
        %p256 = pneg %p81
        %p257 = pneg %p105
        %p258 = pneg %p102
        %p259 = pneg %p126
        %p260 = pneg %p123
        %p261 = pneg %p147
        %p262 = pneg %p144
        %p263 = pneg %p168
        %p264 = pneg %p165
        %p265 = pneg %p194
        %p266 = pneg %p191
        %s267 = sand.u32 %s181, 1
        %s268 = scalar_lea.sflag [#allocation6], %s267
        %s269 = sand.u32 %s181, 1
        %s270 = smul.addr %s269, 16
        %s271 = scalar_lea.vmem [#allocation5], %s270
        %p272 = scmp.lt.s32.totalorder %s21, 1
        %s273 = scalar_select %p272, %s21, 1
        %s274 = smul.addr %s273, 32
        %s275 = smul.addr %s274, 4
        %s276 = scalar_lea.vmem %s0, %s275
        %vm278 = vcmask 60416
        %279 = vst.msk [vmem:[#allocation2] sm:$0xf] %vm278, 0
        %280 = vst.msk [vmem:[#allocation2 + $0x4] sm:$0xf] %vm278, 0
        %281 = vst.msk [vmem:[#allocation2 + $0x8] sm:$0xf] %vm278, 0
        %282 = vst.msk [vmem:[#allocation2 + $0xc] sm:$0xf] %vm278, 0
        %vm283 = vcmask 57344
        %vm284 = vsmask.f32 256
        %vm285 = vmand %vm283, %vm284
        %v286 = vld [vmem:[#allocation2 + $0x10] sm:$0x1]
        %v287 = vsel %vm285, 0, %v286
        %288 = vst [vmem:[#allocation2 + $0x10] sm:$0x1] %v287
        %s289 = scalar_lea.vmem [#allocation2], 340
        %290 = vst.msk [vmem:[%s289] sm:$0xf] %vm278, 0
        %291 = vst.msk [vmem:[%s289 + $0x4] sm:$0xf] %vm278, 0
        %292 = vst.msk [vmem:[%s289 + $0x8] sm:$0xf] %vm278, 0
        %293 = vst.msk [vmem:[%s289 + $0xc] sm:$0xf] %vm278, 0
        %v294 = vld [vmem:[%s289 + $0x10] sm:$0x1]
        %v295 = vsel %vm285, 0, %v294
        %296 = vst [vmem:[%s289 + $0x10] sm:$0x1] %v295
        %vm297 = vcmask 60419
        %vm298 = vsmask.f32 7950
        %vm299 = vmand %vm297, %vm298
        %v300 = vld [vmem:[#allocation2 + $0x4] sm:$0x8]
        %v301 = vsel %vm299, 0, %v300
        %302 = vst [vmem:[#allocation2 + $0x4] sm:$0x8] %v301
        %v303 = vld [vmem:[#allocation2 + $0x18] sm:$0x8]
        %v304 = vsel %vm299, 0, %v303
        %305 = vst [vmem:[#allocation2 + $0x18] sm:$0x8] %v304
        %v306 = vld [vmem:[#allocation2 + $0x2c] sm:$0x8]
        %v307 = vsel %vm299, 0, %v306
        %308 = vst [vmem:[#allocation2 + $0x2c] sm:$0x8] %v307
        %v309 = vld [vmem:[#allocation2 + $0x40] sm:$0x8]
        %v310 = vsel %vm299, 0, %v309
        %311 = vst [vmem:[#allocation2 + $0x40] sm:$0x8] %v310
        %v312 = vld [vmem:[#allocation2 + $0x54] sm:$0x8]
        %v313 = vsel %vm299, 0, %v312
        %314 = vst [vmem:[#allocation2 + $0x54] sm:$0x8] %v313
        %v315 = vld [vmem:[#allocation2 + $0x68] sm:$0x8]
        %v316 = vsel %vm299, 0, %v315
        %317 = vst [vmem:[#allocation2 + $0x68] sm:$0x8] %v316
        %v318 = vld [vmem:[#allocation2 + $0x7c] sm:$0x8]
        %v319 = vsel %vm299, 0, %v318
        %320 = vst [vmem:[#allocation2 + $0x7c] sm:$0x8] %v319
        %v321 = vld [vmem:[#allocation2 + $0x90] sm:$0x8]
        %v322 = vsel %vm299, 0, %v321
        %323 = vst [vmem:[#allocation2 + $0x90] sm:$0x8] %v322
        %v324 = vld [vmem:[#allocation2 + $0xa4] sm:$0x8]
        %v325 = vsel %vm299, 0, %v324
        %326 = vst [vmem:[#allocation2 + $0xa4] sm:$0x8] %v325
        %v327 = vld [vmem:[#allocation2 + $0xb8] sm:$0x8]
        %v328 = vsel %vm299, 0, %v327
        %329 = vst [vmem:[#allocation2 + $0xb8] sm:$0x8] %v328
        %v330 = vld [vmem:[#allocation2 + $0xcc] sm:$0x8]
        %v331 = vsel %vm299, 0, %v330
        %332 = vst [vmem:[#allocation2 + $0xcc] sm:$0x8] %v331
        %v333 = vld [vmem:[#allocation2 + $0xe0] sm:$0x8]
        %v334 = vsel %vm299, 0, %v333
        %335 = vst [vmem:[#allocation2 + $0xe0] sm:$0x8] %v334
        %v336 = vld [vmem:[#allocation2 + $0xf4] sm:$0x8]
        %v337 = vsel %vm299, 0, %v336
        %338 = vst [vmem:[#allocation2 + $0xf4] sm:$0x8] %v337
        %v339 = vld [vmem:[#allocation2 + $0x108] sm:$0x8]
        %v340 = vsel %vm299, 0, %v339
        %341 = vst [vmem:[#allocation2 + $0x108] sm:$0x8] %v340
        %v342 = vld [vmem:[#allocation2 + $0x11c] sm:$0x8]
        %v343 = vsel %vm299, 0, %v342
        %344 = vst [vmem:[#allocation2 + $0x11c] sm:$0x8] %v343
        %v345 = vld [vmem:[#allocation2 + $0x130] sm:$0x8]
        %v346 = vsel %vm299, 0, %v345
        %347 = vst [vmem:[#allocation2 + $0x130] sm:$0x8] %v346
        %v348 = vld [vmem:[#allocation2 + $0x144] sm:$0x8]
        %v349 = vsel %vm299, 0, %v348
        %350 = vst [vmem:[#allocation2 + $0x144] sm:$0x8] %v349
        %v351 = vld [vmem:[#allocation2 + $0x158] sm:$0x8]
        %v352 = vsel %vm299, 0, %v351
        %353 = vst [vmem:[#allocation2 + $0x158] sm:$0x8] %v352
        %v354 = vld [vmem:[#allocation2 + $0x10] sm:$0x1]
        %v355 = vsel %vm285, 0, %v354
        %356 = vst [vmem:[#allocation2 + $0x10] sm:$0x1] %v355
        %v357 = vld [vmem:[#allocation2 + $0x24] sm:$0x1]
        %v358 = vsel %vm285, 0, %v357
        %359 = vst [vmem:[#allocation2 + $0x24] sm:$0x1] %v358
        %v360 = vld [vmem:[#allocation2 + $0x38] sm:$0x1]
        %v361 = vsel %vm285, 0, %v360
        %362 = vst [vmem:[#allocation2 + $0x38] sm:$0x1] %v361
        %v363 = vld [vmem:[#allocation2 + $0x4c] sm:$0x1]
        %v364 = vsel %vm285, 0, %v363
        %365 = vst [vmem:[#allocation2 + $0x4c] sm:$0x1] %v364
        %v366 = vld [vmem:[#allocation2 + $0x60] sm:$0x1]
        %v367 = vsel %vm285, 0, %v366
        %368 = vst [vmem:[#allocation2 + $0x60] sm:$0x1] %v367
        %v369 = vld [vmem:[#allocation2 + $0x74] sm:$0x1]
        %v370 = vsel %vm285, 0, %v369
        %371 = vst [vmem:[#allocation2 + $0x74] sm:$0x1] %v370
        %v372 = vld [vmem:[#allocation2 + $0x88] sm:$0x1]
        %v373 = vsel %vm285, 0, %v372
        %374 = vst [vmem:[#allocation2 + $0x88] sm:$0x1] %v373
        %v375 = vld [vmem:[#allocation2 + $0x9c] sm:$0x1]
        %v376 = vsel %vm285, 0, %v375
        %377 = vst [vmem:[#allocation2 + $0x9c] sm:$0x1] %v376
        %v378 = vld [vmem:[#allocation2 + $0xb0] sm:$0x1]
        %v379 = vsel %vm285, 0, %v378
        %380 = vst [vmem:[#allocation2 + $0xb0] sm:$0x1] %v379
        %v381 = vld [vmem:[#allocation2 + $0xc4] sm:$0x1]
        %v382 = vsel %vm285, 0, %v381
        %383 = vst [vmem:[#allocation2 + $0xc4] sm:$0x1] %v382
        %v384 = vld [vmem:[#allocation2 + $0xd8] sm:$0x1]
        %v385 = vsel %vm285, 0, %v384
        %386 = vst [vmem:[#allocation2 + $0xd8] sm:$0x1] %v385
        %v387 = vld [vmem:[#allocation2 + $0xec] sm:$0x1]
        %v388 = vsel %vm285, 0, %v387
        %389 = vst [vmem:[#allocation2 + $0xec] sm:$0x1] %v388
        %v390 = vld [vmem:[#allocation2 + $0x100] sm:$0x1]
        %v391 = vsel %vm285, 0, %v390
        %392 = vst [vmem:[#allocation2 + $0x100] sm:$0x1] %v391
        %v393 = vld [vmem:[#allocation2 + $0x114] sm:$0x1]
        %v394 = vsel %vm285, 0, %v393
        %395 = vst [vmem:[#allocation2 + $0x114] sm:$0x1] %v394
        %v396 = vld [vmem:[#allocation2 + $0x128] sm:$0x1]
        %v397 = vsel %vm285, 0, %v396
        %398 = vst [vmem:[#allocation2 + $0x128] sm:$0x1] %v397
        %v399 = vld [vmem:[#allocation2 + $0x13c] sm:$0x1]
        %v400 = vsel %vm285, 0, %v399
        %401 = vst [vmem:[#allocation2 + $0x13c] sm:$0x1] %v400
        %v402 = vld [vmem:[#allocation2 + $0x150] sm:$0x1]
        %v403 = vsel %vm285, 0, %v402
        %404 = vst [vmem:[#allocation2 + $0x150] sm:$0x1] %v403
        %v405 = vld [vmem:[#allocation2 + $0x164] sm:$0x1]
        %v406 = vsel %vm285, 0, %v405
        %407 = vst [vmem:[#allocation2 + $0x164] sm:$0x1] %v406
        %408 = vst.msk [vmem:[#allocation3] sm:$0xf] %vm278, 0
        %409 = vst.msk [vmem:[#allocation3 + $0x4] sm:$0xf] %vm278, 0
        %410 = vst.msk [vmem:[#allocation3 + $0x8] sm:$0xf] %vm278, 0
        %411 = vst.msk [vmem:[#allocation3 + $0xc] sm:$0xf] %vm278, 0
        %v412 = vld [vmem:[#allocation3 + $0x10] sm:$0x1]
        %v413 = vsel %vm285, 0, %v412
        %414 = vst [vmem:[#allocation3 + $0x10] sm:$0x1] %v413
        %s415 = scalar_lea.vmem [#allocation3], 340
        %416 = vst.msk [vmem:[%s415] sm:$0xf] %vm278, 0
        %417 = vst.msk [vmem:[%s415 + $0x4] sm:$0xf] %vm278, 0
        %418 = vst.msk [vmem:[%s415 + $0x8] sm:$0xf] %vm278, 0
        %419 = vst.msk [vmem:[%s415 + $0xc] sm:$0xf] %vm278, 0
        %v420 = vld [vmem:[%s415 + $0x10] sm:$0x1]
        %v421 = vsel %vm285, 0, %v420
        %422 = vst [vmem:[%s415 + $0x10] sm:$0x1] %v421
        %v423 = vld [vmem:[#allocation3 + $0x4] sm:$0x8]
        %v424 = vsel %vm299, 0, %v423
        %425 = vst [vmem:[#allocation3 + $0x4] sm:$0x8] %v424
        %v426 = vld [vmem:[#allocation3 + $0x18] sm:$0x8]
        %v427 = vsel %vm299, 0, %v426
        %428 = vst [vmem:[#allocation3 + $0x18] sm:$0x8] %v427
        %v429 = vld [vmem:[#allocation3 + $0x2c] sm:$0x8]
        %v430 = vsel %vm299, 0, %v429
        %431 = vst [vmem:[#allocation3 + $0x2c] sm:$0x8] %v430
        %v432 = vld [vmem:[#allocation3 + $0x40] sm:$0x8]
        %v433 = vsel %vm299, 0, %v432
        %434 = vst [vmem:[#allocation3 + $0x40] sm:$0x8] %v433
        %v435 = vld [vmem:[#allocation3 + $0x54] sm:$0x8]
        %v436 = vsel %vm299, 0, %v435
        %437 = vst [vmem:[#allocation3 + $0x54] sm:$0x8] %v436
        %v438 = vld [vmem:[#allocation3 + $0x68] sm:$0x8]
        %v439 = vsel %vm299, 0, %v438
        %440 = vst [vmem:[#allocation3 + $0x68] sm:$0x8] %v439
        %v441 = vld [vmem:[#allocation3 + $0x7c] sm:$0x8]
        %v442 = vsel %vm299, 0, %v441
        %443 = vst [vmem:[#allocation3 + $0x7c] sm:$0x8] %v442
        %v444 = vld [vmem:[#allocation3 + $0x90] sm:$0x8]
        %v445 = vsel %vm299, 0, %v444
        %446 = vst [vmem:[#allocation3 + $0x90] sm:$0x8] %v445
        %v447 = vld [vmem:[#allocation3 + $0xa4] sm:$0x8]
        %v448 = vsel %vm299, 0, %v447
        %449 = vst [vmem:[#allocation3 + $0xa4] sm:$0x8] %v448
        %v450 = vld [vmem:[#allocation3 + $0xb8] sm:$0x8]
        %v451 = vsel %vm299, 0, %v450
        %452 = vst [vmem:[#allocation3 + $0xb8] sm:$0x8] %v451
        %v453 = vld [vmem:[#allocation3 + $0xcc] sm:$0x8]
        %v454 = vsel %vm299, 0, %v453
        %455 = vst [vmem:[#allocation3 + $0xcc] sm:$0x8] %v454
        %v456 = vld [vmem:[#allocation3 + $0xe0] sm:$0x8]
        %v457 = vsel %vm299, 0, %v456
        %458 = vst [vmem:[#allocation3 + $0xe0] sm:$0x8] %v457
        %v459 = vld [vmem:[#allocation3 + $0xf4] sm:$0x8]
        %v460 = vsel %vm299, 0, %v459
        %461 = vst [vmem:[#allocation3 + $0xf4] sm:$0x8] %v460
        %v462 = vld [vmem:[#allocation3 + $0x108] sm:$0x8]
        %v463 = vsel %vm299, 0, %v462
        %464 = vst [vmem:[#allocation3 + $0x108] sm:$0x8] %v463
        %v465 = vld [vmem:[#allocation3 + $0x11c] sm:$0x8]
        %v466 = vsel %vm299, 0, %v465
        %467 = vst [vmem:[#allocation3 + $0x11c] sm:$0x8] %v466
        %v468 = vld [vmem:[#allocation3 + $0x130] sm:$0x8]
        %v469 = vsel %vm299, 0, %v468
        %470 = vst [vmem:[#allocation3 + $0x130] sm:$0x8] %v469
        %v471 = vld [vmem:[#allocation3 + $0x144] sm:$0x8]
        %v472 = vsel %vm299, 0, %v471
        %473 = vst [vmem:[#allocation3 + $0x144] sm:$0x8] %v472
        %v474 = vld [vmem:[#allocation3 + $0x158] sm:$0x8]
        %v475 = vsel %vm299, 0, %v474
        %476 = vst [vmem:[#allocation3 + $0x158] sm:$0x8] %v475
        %v477 = vld [vmem:[#allocation3 + $0x10] sm:$0x1]
        %v478 = vsel %vm285, 0, %v477
        %479 = vst [vmem:[#allocation3 + $0x10] sm:$0x1] %v478
        %v480 = vld [vmem:[#allocation3 + $0x24] sm:$0x1]
        %v481 = vsel %vm285, 0, %v480
        %482 = vst [vmem:[#allocation3 + $0x24] sm:$0x1] %v481
        %v483 = vld [vmem:[#allocation3 + $0x38] sm:$0x1]
        %v484 = vsel %vm285, 0, %v483
        %485 = vst [vmem:[#allocation3 + $0x38] sm:$0x1] %v484
        %v486 = vld [vmem:[#allocation3 + $0x4c] sm:$0x1]
        %v487 = vsel %vm285, 0, %v486
        %488 = vst [vmem:[#allocation3 + $0x4c] sm:$0x1] %v487
        %v489 = vld [vmem:[#allocation3 + $0x60] sm:$0x1]
        %v490 = vsel %vm285, 0, %v489
        %491 = vst [vmem:[#allocation3 + $0x60] sm:$0x1] %v490
        %v492 = vld [vmem:[#allocation3 + $0x74] sm:$0x1]
        %v493 = vsel %vm285, 0, %v492
        %494 = vst [vmem:[#allocation3 + $0x74] sm:$0x1] %v493
        %v495 = vld [vmem:[#allocation3 + $0x88] sm:$0x1]
        %v496 = vsel %vm285, 0, %v495
        %497 = vst [vmem:[#allocation3 + $0x88] sm:$0x1] %v496
        %v498 = vld [vmem:[#allocation3 + $0x9c] sm:$0x1]
        %v499 = vsel %vm285, 0, %v498
        %500 = vst [vmem:[#allocation3 + $0x9c] sm:$0x1] %v499
        %v501 = vld [vmem:[#allocation3 + $0xb0] sm:$0x1]
        %v502 = vsel %vm285, 0, %v501
        %503 = vst [vmem:[#allocation3 + $0xb0] sm:$0x1] %v502
        %v504 = vld [vmem:[#allocation3 + $0xc4] sm:$0x1]
        %v505 = vsel %vm285, 0, %v504
        %506 = vst [vmem:[#allocation3 + $0xc4] sm:$0x1] %v505
        %v507 = vld [vmem:[#allocation3 + $0xd8] sm:$0x1]
        %v508 = vsel %vm285, 0, %v507
        %509 = vst [vmem:[#allocation3 + $0xd8] sm:$0x1] %v508
        %v510 = vld [vmem:[#allocation3 + $0xec] sm:$0x1]
        %v511 = vsel %vm285, 0, %v510
        %512 = vst [vmem:[#allocation3 + $0xec] sm:$0x1] %v511
        %v513 = vld [vmem:[#allocation3 + $0x100] sm:$0x1]
        %v514 = vsel %vm285, 0, %v513
        %515 = vst [vmem:[#allocation3 + $0x100] sm:$0x1] %v514
        %v516 = vld [vmem:[#allocation3 + $0x114] sm:$0x1]
        %v517 = vsel %vm285, 0, %v516
        %518 = vst [vmem:[#allocation3 + $0x114] sm:$0x1] %v517
        %v519 = vld [vmem:[#allocation3 + $0x128] sm:$0x1]
        %v520 = vsel %vm285, 0, %v519
        %521 = vst [vmem:[#allocation3 + $0x128] sm:$0x1] %v520
        %v522 = vld [vmem:[#allocation3 + $0x13c] sm:$0x1]
        %v523 = vsel %vm285, 0, %v522
        %524 = vst [vmem:[#allocation3 + $0x13c] sm:$0x1] %v523
        %v525 = vld [vmem:[#allocation3 + $0x150] sm:$0x1]
        %v526 = vsel %vm285, 0, %v525
        %527 = vst [vmem:[#allocation3 + $0x150] sm:$0x1] %v526
        %v528 = vld [vmem:[#allocation3 + $0x164] sm:$0x1]
        %v529 = vsel %vm285, 0, %v528
        %530 = vst [vmem:[#allocation3 + $0x164] sm:$0x1] %v529
        %v531 = vld [vmem:[%s276] sm:$0xf]
        %v532 = vld [vmem:[%s276 + $0x4] sm:$0xf]
        %v533 = vld [vmem:[%s276 + $0x8] sm:$0xf]
        %v534 = vld [vmem:[%s276 + $0xc] sm:$0xf]
        %v535 = vld [vmem:[%s276 + $0x10] sm:$0xf]
        %v536 = vld [vmem:[%s276 + $0x14] sm:$0xf]
        %v537 = vld [vmem:[%s276 + $0x18] sm:$0xf]
        %v538 = vld [vmem:[%s276 + $0x1c] sm:$0xf]
        %v539 = vld [vmem:[%s276 + $0x20] sm:$0xf]
        %v540 = vld [vmem:[%s276 + $0x24] sm:$0xf]
        %v541 = vld [vmem:[%s276 + $0x28] sm:$0xf]
        %v542 = vld [vmem:[%s276 + $0x2c] sm:$0xf]
        %v543 = vld [vmem:[%s276 + $0x30] sm:$0xf]
        %v544 = vld [vmem:[%s276 + $0x34] sm:$0xf]
        %v545 = vld [vmem:[%s276 + $0x38] sm:$0xf]
        %v546 = vld [vmem:[%s276 + $0x3c] sm:$0xf]
        %v547 = vld [vmem:[%s276 + $0x40] sm:$0xf]
        %v548 = vld [vmem:[%s276 + $0x44] sm:$0xf]
        %v549 = vld [vmem:[%s276 + $0x48] sm:$0xf]
        %v550 = vld [vmem:[%s276 + $0x4c] sm:$0xf]
        %v551 = vld [vmem:[%s276 + $0x50] sm:$0xf]
        %v552 = vld [vmem:[%s276 + $0x54] sm:$0xf]
        %v553 = vld [vmem:[%s276 + $0x58] sm:$0xf]
        %v554 = vld [vmem:[%s276 + $0x5c] sm:$0xf]
        %v555 = vld [vmem:[%s276 + $0x60] sm:$0xf]
        %v556 = vld [vmem:[%s276 + $0x64] sm:$0xf]
        %v557 = vld [vmem:[%s276 + $0x68] sm:$0xf]
        %v558 = vld [vmem:[%s276 + $0x6c] sm:$0xf]
        %v559 = vld [vmem:[%s276 + $0x70] sm:$0xf]
        %v560 = vld [vmem:[%s276 + $0x74] sm:$0xf]
        %v561 = vld [vmem:[%s276 + $0x78] sm:$0xf]
        %v562 = vld [vmem:[%s276 + $0x7c] sm:$0xf]
        %s563 = scalar_lea.vmem [#allocation2], 20
        %564 = vst.msk [vmem:[%s563 + $0x8] sm:$0xf] %vm278, %v531
        %565 = vst.msk [vmem:[%s563 + $0xc] sm:$0xf] %vm278, %v532
        %566 = vst.msk [vmem:[%s563 + $0x1c] sm:$0xf] %vm278, %v533
        %567 = vst.msk [vmem:[%s563 + $0x20] sm:$0xf] %vm278, %v534
        %568 = vst.msk [vmem:[%s563 + $0x30] sm:$0xf] %vm278, %v535
        %569 = vst.msk [vmem:[%s563 + $0x34] sm:$0xf] %vm278, %v536
        %570 = vst.msk [vmem:[%s563 + $0x44] sm:$0xf] %vm278, %v537
        %571 = vst.msk [vmem:[%s563 + $0x48] sm:$0xf] %vm278, %v538
        %572 = vst.msk [vmem:[%s563 + $0x58] sm:$0xf] %vm278, %v539
        %573 = vst.msk [vmem:[%s563 + $0x5c] sm:$0xf] %vm278, %v540
        %574 = vst.msk [vmem:[%s563 + $0x6c] sm:$0xf] %vm278, %v541
        %575 = vst.msk [vmem:[%s563 + $0x70] sm:$0xf] %vm278, %v542
        %576 = vst.msk [vmem:[%s563 + $0x80] sm:$0xf] %vm278, %v543
        %577 = vst.msk [vmem:[%s563 + $0x84] sm:$0xf] %vm278, %v544
        %578 = vst.msk [vmem:[%s563 + $0x94] sm:$0xf] %vm278, %v545
        %579 = vst.msk [vmem:[%s563 + $0x98] sm:$0xf] %vm278, %v546
        %580 = vst.msk [vmem:[%s563 + $0xa8] sm:$0xf] %vm278, %v547
        %581 = vst.msk [vmem:[%s563 + $0xac] sm:$0xf] %vm278, %v548
        %582 = vst.msk [vmem:[%s563 + $0xbc] sm:$0xf] %vm278, %v549
        %583 = vst.msk [vmem:[%s563 + $0xc0] sm:$0xf] %vm278, %v550
        %584 = vst.msk [vmem:[%s563 + $0xd0] sm:$0xf] %vm278, %v551
        %585 = vst.msk [vmem:[%s563 + $0xd4] sm:$0xf] %vm278, %v552
        %586 = vst.msk [vmem:[%s563 + $0xe4] sm:$0xf] %vm278, %v553
        %587 = vst.msk [vmem:[%s563 + $0xe8] sm:$0xf] %vm278, %v554
        %588 = vst.msk [vmem:[%s563 + $0xf8] sm:$0xf] %vm278, %v555
        %589 = vst.msk [vmem:[%s563 + $0xfc] sm:$0xf] %vm278, %v556
        %590 = vst.msk [vmem:[%s563 + $0x10c] sm:$0xf] %vm278, %v557
        %591 = vst.msk [vmem:[%s563 + $0x110] sm:$0xf] %vm278, %v558
        %592 = vst.msk [vmem:[%s563 + $0x120] sm:$0xf] %vm278, %v559
        %593 = vst.msk [vmem:[%s563 + $0x124] sm:$0xf] %vm278, %v560
        %594 = vst.msk [vmem:[%s563 + $0x134] sm:$0xf] %vm278, %v561
        %595 = vst.msk [vmem:[%s563 + $0x138] sm:$0xf] %vm278, %v562
        %v596 = vld [vmem:[#allocation2 + $0x4] sm:$0x8]
        %v597 = vld [vmem:[#allocation2 + $0x8] sm:$0xf]
        %v598 = vld [vmem:[#allocation2 + $0xc] sm:$0xf]
        %v599 = vld [vmem:[#allocation2 + $0x18] sm:$0x8]
        %v600 = vld [vmem:[#allocation2 + $0x1c] sm:$0xf]
        %v601 = vld [vmem:[#allocation2 + $0x20] sm:$0xf]
        %v602 = vld [vmem:[#allocation2 + $0x2c] sm:$0x8]
        %v603 = vld [vmem:[#allocation2 + $0x30] sm:$0xf]
        %v604 = vld [vmem:[#allocation2 + $0x34] sm:$0xf]
        %v605 = vld [vmem:[#allocation2 + $0x40] sm:$0x8]
        %v606 = vld [vmem:[#allocation2 + $0x44] sm:$0xf]
        %v607 = vld [vmem:[#allocation2 + $0x48] sm:$0xf]
        %v608 = vld [vmem:[#allocation2 + $0x54] sm:$0x8]
        %v609 = vld [vmem:[#allocation2 + $0x58] sm:$0xf]
        %v610 = vld [vmem:[#allocation2 + $0x5c] sm:$0xf]
        %v611 = vld [vmem:[#allocation2 + $0x68] sm:$0x8]
        %v612 = vld [vmem:[#allocation2 + $0x6c] sm:$0xf]
        %v613 = vld [vmem:[#allocation2 + $0x70] sm:$0xf]
        %v614 = vld [vmem:[#allocation2 + $0x7c] sm:$0x8]
        %v615 = vld [vmem:[#allocation2 + $0x80] sm:$0xf]
        %v616 = vld [vmem:[#allocation2 + $0x84] sm:$0xf]
        %v617 = vld [vmem:[#allocation2 + $0x90] sm:$0x8]
        %v618 = vld [vmem:[#allocation2 + $0x94] sm:$0xf]
        %v619 = vld [vmem:[#allocation2 + $0x98] sm:$0xf]
        %v620 = vld [vmem:[#allocation2 + $0xa4] sm:$0x8]
        %v621 = vld [vmem:[#allocation2 + $0xa8] sm:$0xf]
        %v622 = vld [vmem:[#allocation2 + $0xac] sm:$0xf]
        %v623 = vld [vmem:[#allocation2 + $0xb8] sm:$0x8]
        %v624 = vld [vmem:[#allocation2 + $0xbc] sm:$0xf]
        %v625 = vld [vmem:[#allocation2 + $0xc0] sm:$0xf]
        %v626 = vld [vmem:[#allocation2 + $0xcc] sm:$0x8]
        %v627 = vld [vmem:[#allocation2 + $0xd0] sm:$0xf]
        %v628 = vld [vmem:[#allocation2 + $0xd4] sm:$0xf]
        %v629 = vld [vmem:[#allocation2 + $0xe0] sm:$0x8]
        %v630 = vld [vmem:[#allocation2 + $0xe4] sm:$0xf]
        %v631 = vld [vmem:[#allocation2 + $0xe8] sm:$0xf]
        %v632 = vld [vmem:[#allocation2 + $0xf4] sm:$0x8]
        %v633 = vld [vmem:[#allocation2 + $0xf8] sm:$0xf]
        %v634 = vld [vmem:[#allocation2 + $0xfc] sm:$0xf]
        %v635 = vld [vmem:[#allocation2 + $0x108] sm:$0x8]
        %v636 = vld [vmem:[#allocation2 + $0x10c] sm:$0xf]
        %v637 = vld [vmem:[#allocation2 + $0x110] sm:$0xf]
        %v638 = vld [vmem:[#allocation2 + $0x11c] sm:$0x8]
        %v639 = vld [vmem:[#allocation2 + $0x120] sm:$0xf]
        %v640 = vld [vmem:[#allocation2 + $0x124] sm:$0xf]
        %v641 = vld [vmem:[#allocation2 + $0x130] sm:$0x8]
        %v642 = vld [vmem:[#allocation2 + $0x134] sm:$0xf]
        %v643 = vld [vmem:[#allocation2 + $0x138] sm:$0xf]
        %vm644 = vsmask.f32 4368
        %vm645 = vmor %vm284, %vm644
        %v647 = vshrl.u32 %v596, 16
        %v649 = vrot.slane %v647, 7
        %v650 = vrot.slane %v649, 4
        %v652 = vshrl.u32 %v597, 16
        %v654 = vrot.slane %v652, 7
        %v655 = vshll.u32 %v597, 16
        %v657 = vor.u32 %v654, %v655
        %v658 = vsel %vm645, %v650, %v657
        %v659 = vrot.slane %v654, 4
        %v661 = vshrl.u32 %v598, 16
        %v663 = vrot.slane %v661, 7
        %v664 = vshll.u32 %v598, 16
        %v666 = vor.u32 %v663, %v664
        %v667 = vsel %vm645, %v659, %v666
        %v669 = vshrl.u32 %v599, 16
        %v671 = vrot.slane %v669, 7
        %v672 = vrot.slane %v671, 4
        %v674 = vshrl.u32 %v600, 16
        %v676 = vrot.slane %v674, 7
        %v677 = vshll.u32 %v600, 16
        %v679 = vor.u32 %v676, %v677
        %v680 = vsel %vm645, %v672, %v679
        %v681 = vrot.slane %v676, 4
        %v683 = vshrl.u32 %v601, 16
        %v685 = vrot.slane %v683, 7
        %v686 = vshll.u32 %v601, 16
        %v688 = vor.u32 %v685, %v686
        %v689 = vsel %vm645, %v681, %v688
        %v691 = vshrl.u32 %v602, 16
        %v693 = vrot.slane %v691, 7
        %v694 = vrot.slane %v693, 4
        %v696 = vshrl.u32 %v603, 16
        %v698 = vrot.slane %v696, 7
        %v699 = vshll.u32 %v603, 16
        %v701 = vor.u32 %v698, %v699
        %v702 = vsel %vm645, %v694, %v701
        %v703 = vrot.slane %v698, 4
        %v705 = vshrl.u32 %v604, 16
        %v707 = vrot.slane %v705, 7
        %v708 = vshll.u32 %v604, 16
        %v710 = vor.u32 %v707, %v708
        %v711 = vsel %vm645, %v703, %v710
        %v713 = vshrl.u32 %v605, 16
        %v715 = vrot.slane %v713, 7
        %v716 = vrot.slane %v715, 4
        %v718 = vshrl.u32 %v606, 16
        %v720 = vrot.slane %v718, 7
        %v721 = vshll.u32 %v606, 16
        %v723 = vor.u32 %v720, %v721
        %v724 = vsel %vm645, %v716, %v723
        %v725 = vrot.slane %v720, 4
        %v727 = vshrl.u32 %v607, 16
        %v729 = vrot.slane %v727, 7
        %v730 = vshll.u32 %v607, 16
        %v732 = vor.u32 %v729, %v730
        %v733 = vsel %vm645, %v725, %v732
        %v735 = vshrl.u32 %v608, 16
        %v737 = vrot.slane %v735, 7
        %v738 = vrot.slane %v737, 4
        %v740 = vshrl.u32 %v609, 16
        %v742 = vrot.slane %v740, 7
        %v743 = vshll.u32 %v609, 16
        %v745 = vor.u32 %v742, %v743
        %v746 = vsel %vm645, %v738, %v745
        %v747 = vrot.slane %v742, 4
        %v749 = vshrl.u32 %v610, 16
        %v751 = vrot.slane %v749, 7
        %v752 = vshll.u32 %v610, 16
        %v754 = vor.u32 %v751, %v752
        %v755 = vsel %vm645, %v747, %v754
        %v757 = vshrl.u32 %v611, 16
        %v759 = vrot.slane %v757, 7
        %v760 = vrot.slane %v759, 4
        %v762 = vshrl.u32 %v612, 16
        %v764 = vrot.slane %v762, 7
        %v765 = vshll.u32 %v612, 16
        %v767 = vor.u32 %v764, %v765
        %v768 = vsel %vm645, %v760, %v767
        %v769 = vrot.slane %v764, 4
        %v771 = vshrl.u32 %v613, 16
        %v773 = vrot.slane %v771, 7
        %v774 = vshll.u32 %v613, 16
        %v776 = vor.u32 %v773, %v774
        %v777 = vsel %vm645, %v769, %v776
        %v779 = vshrl.u32 %v614, 16
        %v781 = vrot.slane %v779, 7
        %v782 = vrot.slane %v781, 4
        %v784 = vshrl.u32 %v615, 16
        %v786 = vrot.slane %v784, 7
        %v787 = vshll.u32 %v615, 16
        %v789 = vor.u32 %v786, %v787
        %v790 = vsel %vm645, %v782, %v789
        %v791 = vrot.slane %v786, 4
        %v793 = vshrl.u32 %v616, 16
        %v795 = vrot.slane %v793, 7
        %v796 = vshll.u32 %v616, 16
        %v798 = vor.u32 %v795, %v796
        %v799 = vsel %vm645, %v791, %v798
        %v801 = vshrl.u32 %v617, 16
        %v803 = vrot.slane %v801, 7
        %v804 = vrot.slane %v803, 4
        %v806 = vshrl.u32 %v618, 16
        %v808 = vrot.slane %v806, 7
        %v809 = vshll.u32 %v618, 16
        %v811 = vor.u32 %v808, %v809
        %v812 = vsel %vm645, %v804, %v811
        %v813 = vrot.slane %v808, 4
        %v815 = vshrl.u32 %v619, 16
        %v817 = vrot.slane %v815, 7
        %v818 = vshll.u32 %v619, 16
        %v820 = vor.u32 %v817, %v818
        %v821 = vsel %vm645, %v813, %v820
        %v823 = vshrl.u32 %v620, 16
        %v825 = vrot.slane %v823, 7
        %v826 = vrot.slane %v825, 4
        %v828 = vshrl.u32 %v621, 16
        %v830 = vrot.slane %v828, 7
        %v831 = vshll.u32 %v621, 16
        %v833 = vor.u32 %v830, %v831
        %v834 = vsel %vm645, %v826, %v833
        %v835 = vrot.slane %v830, 4
        %v837 = vshrl.u32 %v622, 16
        %v839 = vrot.slane %v837, 7
        %v840 = vshll.u32 %v622, 16
        %v842 = vor.u32 %v839, %v840
        %v843 = vsel %vm645, %v835, %v842
        %v845 = vshrl.u32 %v623, 16
        %v847 = vrot.slane %v845, 7
        %v848 = vrot.slane %v847, 4
        %v850 = vshrl.u32 %v624, 16
        %v852 = vrot.slane %v850, 7
        %v853 = vshll.u32 %v624, 16
        %v855 = vor.u32 %v852, %v853
        %v856 = vsel %vm645, %v848, %v855
        %v857 = vrot.slane %v852, 4
        %v859 = vshrl.u32 %v625, 16
        %v861 = vrot.slane %v859, 7
        %v862 = vshll.u32 %v625, 16
        %v864 = vor.u32 %v861, %v862
        %v865 = vsel %vm645, %v857, %v864
        %v867 = vshrl.u32 %v626, 16
        %v869 = vrot.slane %v867, 7
        %v870 = vrot.slane %v869, 4
        %v872 = vshrl.u32 %v627, 16
        %v874 = vrot.slane %v872, 7
        %v875 = vshll.u32 %v627, 16
        %v877 = vor.u32 %v874, %v875
        %v878 = vsel %vm645, %v870, %v877
        %v879 = vrot.slane %v874, 4
        %v881 = vshrl.u32 %v628, 16
        %v883 = vrot.slane %v881, 7
        %v884 = vshll.u32 %v628, 16
        %v886 = vor.u32 %v883, %v884
        %v887 = vsel %vm645, %v879, %v886
        %v889 = vshrl.u32 %v629, 16
        %v891 = vrot.slane %v889, 7
        %v892 = vrot.slane %v891, 4
        %v894 = vshrl.u32 %v630, 16
        %v896 = vrot.slane %v894, 7
        %v897 = vshll.u32 %v630, 16
        %v899 = vor.u32 %v896, %v897
        %v900 = vsel %vm645, %v892, %v899
        %v901 = vrot.slane %v896, 4
        %v903 = vshrl.u32 %v631, 16
        %v905 = vrot.slane %v903, 7
        %v906 = vshll.u32 %v631, 16
        %v908 = vor.u32 %v905, %v906
        %v909 = vsel %vm645, %v901, %v908
        %v911 = vshrl.u32 %v632, 16
        %v913 = vrot.slane %v911, 7
        %v914 = vrot.slane %v913, 4
        %v916 = vshrl.u32 %v633, 16
        %v918 = vrot.slane %v916, 7
        %v919 = vshll.u32 %v633, 16
        %v921 = vor.u32 %v918, %v919
        %v922 = vsel %vm645, %v914, %v921
        %v923 = vrot.slane %v918, 4
        %v925 = vshrl.u32 %v634, 16
        %v927 = vrot.slane %v925, 7
        %v928 = vshll.u32 %v634, 16
        %v930 = vor.u32 %v927, %v928
        %v931 = vsel %vm645, %v923, %v930
        %v933 = vshrl.u32 %v635, 16
        %v935 = vrot.slane %v933, 7
        %v936 = vrot.slane %v935, 4
        %v938 = vshrl.u32 %v636, 16
        %v940 = vrot.slane %v938, 7
        %v941 = vshll.u32 %v636, 16
        %v943 = vor.u32 %v940, %v941
        %v944 = vsel %vm645, %v936, %v943
        %v945 = vrot.slane %v940, 4
        %v947 = vshrl.u32 %v637, 16
        %v949 = vrot.slane %v947, 7
        %v950 = vshll.u32 %v637, 16
        %v952 = vor.u32 %v949, %v950
        %v953 = vsel %vm645, %v945, %v952
        %v955 = vshrl.u32 %v638, 16
        %v957 = vrot.slane %v955, 7
        %v958 = vrot.slane %v957, 4
        %v960 = vshrl.u32 %v639, 16
        %v962 = vrot.slane %v960, 7
        %v963 = vshll.u32 %v639, 16
        %v965 = vor.u32 %v962, %v963
        %v966 = vsel %vm645, %v958, %v965
        %v967 = vrot.slane %v962, 4
        %v969 = vshrl.u32 %v640, 16
        %v971 = vrot.slane %v969, 7
        %v972 = vshll.u32 %v640, 16
        %v974 = vor.u32 %v971, %v972
        %v975 = vsel %vm645, %v967, %v974
        %v977 = vshrl.u32 %v641, 16
        %v979 = vrot.slane %v977, 7
        %v980 = vrot.slane %v979, 4
        %v982 = vshrl.u32 %v642, 16
        %v984 = vrot.slane %v982, 7
        %v985 = vshll.u32 %v642, 16
        %v987 = vor.u32 %v984, %v985
        %v988 = vsel %vm645, %v980, %v987
        %v989 = vrot.slane %v984, 4
        %v991 = vshrl.u32 %v643, 16
        %v993 = vrot.slane %v991, 7
        %v994 = vshll.u32 %v643, 16
        %v996 = vor.u32 %v993, %v994
        %v997 = vsel %vm645, %v989, %v996
        %v998 = vunpack.c.l.b16 %v658
        %v999 = vunpack.c.l.b16 %v667
        %v1000 = vunpack.c.l.b16 %v680
        %v1001 = vunpack.c.l.b16 %v689
        %v1002 = vunpack.c.l.b16 %v702
        %v1003 = vunpack.c.l.b16 %v711
        %v1004 = vunpack.c.l.b16 %v724
        %v1005 = vunpack.c.l.b16 %v733
        %v1006 = vunpack.c.l.b16 %v746
        %v1007 = vunpack.c.l.b16 %v755
        %v1008 = vunpack.c.l.b16 %v768
        %v1009 = vunpack.c.l.b16 %v777
        %v1010 = vunpack.c.l.b16 %v790
        %v1011 = vunpack.c.l.b16 %v799
        %v1012 = vunpack.c.l.b16 %v812
        %v1013 = vunpack.c.l.b16 %v821
        %v1014 = vunpack.c.l.b16 %v834
        %v1015 = vunpack.c.l.b16 %v843
        %v1016 = vunpack.c.l.b16 %v856
        %v1017 = vunpack.c.l.b16 %v865
        %v1018 = vunpack.c.l.b16 %v878
        %v1019 = vunpack.c.l.b16 %v887
        %v1020 = vunpack.c.l.b16 %v900
        %v1021 = vunpack.c.l.b16 %v909
        %v1022 = vunpack.c.l.b16 %v922
        %v1023 = vunpack.c.l.b16 %v931
        %v1024 = vunpack.c.l.b16 %v944
        %v1025 = vunpack.c.l.b16 %v953
        %v1026 = vunpack.c.l.b16 %v966
        %v1027 = vunpack.c.l.b16 %v975
        %v1028 = vunpack.c.l.b16 %v988
        %v1029 = vunpack.c.l.b16 %v997
        %v1030 = vpack.c.b16 %v999, %v998
        %v1031 = vpack.c.b16 %v1001, %v1000
        %v1032 = vpack.c.b16 %v1003, %v1002
        %v1033 = vpack.c.b16 %v1005, %v1004
        %v1034 = vpack.c.b16 %v1007, %v1006
        %v1035 = vpack.c.b16 %v1009, %v1008
        %v1036 = vpack.c.b16 %v1011, %v1010
        %v1037 = vpack.c.b16 %v1013, %v1012
        %v1038 = vpack.c.b16 %v1015, %v1014
        %v1039 = vpack.c.b16 %v1017, %v1016
        %v1040 = vpack.c.b16 %v1019, %v1018
        %v1041 = vpack.c.b16 %v1021, %v1020
        %v1042 = vpack.c.b16 %v1023, %v1022
        %v1043 = vpack.c.b16 %v1025, %v1024
        %v1044 = vpack.c.b16 %v1027, %v1026
        %v1045 = vpack.c.b16 %v1029, %v1028
        %vm1062 = vcmask 64512
        %1063 = vst.msk [vmem:[#allocation4] sm:$0xff] %vm1062, %v1030
        %1064 = vst.msk [vmem:[#allocation4 + $0x8] sm:$0xff] %vm1062, %v1031
        %1065 = vst.msk [vmem:[#allocation4 + $0x10] sm:$0xff] %vm1062, %v1032
        %1066 = vst.msk [vmem:[#allocation4 + $0x18] sm:$0xff] %vm1062, %v1033
        %1067 = vst.msk [vmem:[#allocation4 + $0x20] sm:$0xff] %vm1062, %v1034
        %1068 = vst.msk [vmem:[#allocation4 + $0x28] sm:$0xff] %vm1062, %v1035
        %1069 = vst.msk [vmem:[#allocation4 + $0x30] sm:$0xff] %vm1062, %v1036
        %1070 = vst.msk [vmem:[#allocation4 + $0x38] sm:$0xff] %vm1062, %v1037
        %1071 = vst.msk [vmem:[#allocation4 + $0x40] sm:$0xff] %vm1062, %v1038
        %1072 = vst.msk [vmem:[#allocation4 + $0x48] sm:$0xff] %vm1062, %v1039
        %1073 = vst.msk [vmem:[#allocation4 + $0x50] sm:$0xff] %vm1062, %v1040
        %1074 = vst.msk [vmem:[#allocation4 + $0x58] sm:$0xff] %vm1062, %v1041
        %1075 = vst.msk [vmem:[#allocation4 + $0x60] sm:$0xff] %vm1062, %v1042
        %1076 = vst.msk [vmem:[#allocation4 + $0x68] sm:$0xff] %vm1062, %v1043
        %1077 = vst.msk [vmem:[#allocation4 + $0x70] sm:$0xff] %vm1062, %v1044
        %1078 = vst.msk [vmem:[#allocation4 + $0x78] sm:$0xff] %vm1062, %v1045
        %v1079 = vld [vmem:[#allocation2 + $0x8] sm:$0xf]
        %v1080 = vld [vmem:[#allocation2 + $0xc] sm:$0xf]
        %v1081 = vld [vmem:[#allocation2 + $0x1c] sm:$0xf]
        %v1082 = vld [vmem:[#allocation2 + $0x20] sm:$0xf]
        %v1083 = vld [vmem:[#allocation2 + $0x30] sm:$0xf]
        %v1084 = vld [vmem:[#allocation2 + $0x34] sm:$0xf]
        %v1085 = vld [vmem:[#allocation2 + $0x44] sm:$0xf]
        %v1086 = vld [vmem:[#allocation2 + $0x48] sm:$0xf]
        %v1087 = vld [vmem:[#allocation2 + $0x58] sm:$0xf]
        %v1088 = vld [vmem:[#allocation2 + $0x5c] sm:$0xf]
        %v1089 = vld [vmem:[#allocation2 + $0x6c] sm:$0xf]
        %v1090 = vld [vmem:[#allocation2 + $0x70] sm:$0xf]
        %v1091 = vld [vmem:[#allocation2 + $0x80] sm:$0xf]
        %v1092 = vld [vmem:[#allocation2 + $0x84] sm:$0xf]
        %v1093 = vld [vmem:[#allocation2 + $0x94] sm:$0xf]
        %v1094 = vld [vmem:[#allocation2 + $0x98] sm:$0xf]
        %v1095 = vld [vmem:[#allocation2 + $0xa8] sm:$0xf]
        %v1096 = vld [vmem:[#allocation2 + $0xac] sm:$0xf]
        %v1097 = vld [vmem:[#allocation2 + $0xbc] sm:$0xf]
        %v1098 = vld [vmem:[#allocation2 + $0xc0] sm:$0xf]
        %v1099 = vld [vmem:[#allocation2 + $0xd0] sm:$0xf]
        %v1100 = vld [vmem:[#allocation2 + $0xd4] sm:$0xf]
        %v1101 = vld [vmem:[#allocation2 + $0xe4] sm:$0xf]
        %v1102 = vld [vmem:[#allocation2 + $0xe8] sm:$0xf]
        %v1103 = vld [vmem:[#allocation2 + $0xf8] sm:$0xf]
        %v1104 = vld [vmem:[#allocation2 + $0xfc] sm:$0xf]
        %v1105 = vld [vmem:[#allocation2 + $0x10c] sm:$0xf]
        %v1106 = vld [vmem:[#allocation2 + $0x110] sm:$0xf]
        %v1107 = vld [vmem:[#allocation2 + $0x120] sm:$0xf]
        %v1108 = vld [vmem:[#allocation2 + $0x124] sm:$0xf]
        %v1109 = vld [vmem:[#allocation2 + $0x134] sm:$0xf]
        %v1110 = vld [vmem:[#allocation2 + $0x138] sm:$0xf]
        %v1143 = vunpack.c.l.b16 %v1079
        %v1144 = vunpack.c.l.b16 %v1080
        %v1145 = vunpack.c.l.b16 %v1081
        %v1146 = vunpack.c.l.b16 %v1082
        %v1147 = vunpack.c.l.b16 %v1083
        %v1148 = vunpack.c.l.b16 %v1084
        %v1149 = vunpack.c.l.b16 %v1085
        %v1150 = vunpack.c.l.b16 %v1086
        %v1151 = vunpack.c.l.b16 %v1087
        %v1152 = vunpack.c.l.b16 %v1088
        %v1153 = vunpack.c.l.b16 %v1089
        %v1154 = vunpack.c.l.b16 %v1090
        %v1155 = vunpack.c.l.b16 %v1091
        %v1156 = vunpack.c.l.b16 %v1092
        %v1157 = vunpack.c.l.b16 %v1093
        %v1158 = vunpack.c.l.b16 %v1094
        %v1159 = vunpack.c.l.b16 %v1095
        %v1160 = vunpack.c.l.b16 %v1096
        %v1161 = vunpack.c.l.b16 %v1097
        %v1162 = vunpack.c.l.b16 %v1098
        %v1163 = vunpack.c.l.b16 %v1099
        %v1164 = vunpack.c.l.b16 %v1100
        %v1165 = vunpack.c.l.b16 %v1101
        %v1166 = vunpack.c.l.b16 %v1102
        %v1167 = vunpack.c.l.b16 %v1103
        %v1168 = vunpack.c.l.b16 %v1104
        %v1169 = vunpack.c.l.b16 %v1105
        %v1170 = vunpack.c.l.b16 %v1106
        %v1171 = vunpack.c.l.b16 %v1107
        %v1172 = vunpack.c.l.b16 %v1108
        %v1173 = vunpack.c.l.b16 %v1109
        %v1174 = vunpack.c.l.b16 %v1110
        %v1175 = vpack.c.b16 %v1144, %v1143
        %v1176 = vpack.c.b16 %v1146, %v1145
        %v1177 = vpack.c.b16 %v1148, %v1147
        %v1178 = vpack.c.b16 %v1150, %v1149
        %v1179 = vpack.c.b16 %v1152, %v1151
        %v1180 = vpack.c.b16 %v1154, %v1153
        %v1181 = vpack.c.b16 %v1156, %v1155
        %v1182 = vpack.c.b16 %v1158, %v1157
        %v1183 = vpack.c.b16 %v1160, %v1159
        %v1184 = vpack.c.b16 %v1162, %v1161
        %v1185 = vpack.c.b16 %v1164, %v1163
        %v1186 = vpack.c.b16 %v1166, %v1165
        %v1187 = vpack.c.b16 %v1168, %v1167
        %v1188 = vpack.c.b16 %v1170, %v1169
        %v1189 = vpack.c.b16 %v1172, %v1171
        %v1190 = vpack.c.b16 %v1174, %v1173
        %1191 = vrot.lane.b32.xlu0 %v1175, 8
        %v1192 = vpop.permute.xlu0 %1191
        %1193 = vrot.lane.b32.xlu0 %v1176, 8
        %v1194 = vpop.permute.xlu0 %1193
        %1195 = vrot.lane.b32.xlu0 %v1177, 8
        %v1196 = vpop.permute.xlu0 %1195
        %1197 = vrot.lane.b32.xlu0 %v1178, 8
        %v1198 = vpop.permute.xlu0 %1197
        %1199 = vrot.lane.b32.xlu0 %v1179, 8
        %v1200 = vpop.permute.xlu0 %1199
        %1201 = vrot.lane.b32.xlu0 %v1180, 8
        %v1202 = vpop.permute.xlu0 %1201
        %1203 = vrot.lane.b32.xlu0 %v1181, 8
        %v1204 = vpop.permute.xlu0 %1203
        %1205 = vrot.lane.b32.xlu0 %v1182, 8
        %v1206 = vpop.permute.xlu0 %1205
        %1207 = vrot.lane.b32.xlu0 %v1183, 8
        %v1208 = vpop.permute.xlu0 %1207
        %1209 = vrot.lane.b32.xlu0 %v1184, 8
        %v1210 = vpop.permute.xlu0 %1209
        %1211 = vrot.lane.b32.xlu0 %v1185, 8
        %v1212 = vpop.permute.xlu0 %1211
        %1213 = vrot.lane.b32.xlu0 %v1186, 8
        %v1214 = vpop.permute.xlu0 %1213
        %1215 = vrot.lane.b32.xlu0 %v1187, 8
        %v1216 = vpop.permute.xlu0 %1215
        %1217 = vrot.lane.b32.xlu0 %v1188, 8
        %v1218 = vpop.permute.xlu0 %1217
        %1219 = vrot.lane.b32.xlu0 %v1189, 8
        %v1220 = vpop.permute.xlu0 %1219
        %1221 = vrot.lane.b32.xlu0 %v1190, 8
        %v1222 = vpop.permute.xlu0 %1221
        %vm1239 = vcmask 130112
        %1240 = vst.msk [vmem:[#allocation4] sm:$0xff] %vm1239, %v1192
        %1241 = vst.msk [vmem:[#allocation4 + $0x8] sm:$0xff] %vm1239, %v1194
        %1242 = vst.msk [vmem:[#allocation4 + $0x10] sm:$0xff] %vm1239, %v1196
        %1243 = vst.msk [vmem:[#allocation4 + $0x18] sm:$0xff] %vm1239, %v1198
        %1244 = vst.msk [vmem:[#allocation4 + $0x20] sm:$0xff] %vm1239, %v1200
        %1245 = vst.msk [vmem:[#allocation4 + $0x28] sm:$0xff] %vm1239, %v1202
        %1246 = vst.msk [vmem:[#allocation4 + $0x30] sm:$0xff] %vm1239, %v1204
        %1247 = vst.msk [vmem:[#allocation4 + $0x38] sm:$0xff] %vm1239, %v1206
        %1248 = vst.msk [vmem:[#allocation4 + $0x40] sm:$0xff] %vm1239, %v1208
        %1249 = vst.msk [vmem:[#allocation4 + $0x48] sm:$0xff] %vm1239, %v1210
        %1250 = vst.msk [vmem:[#allocation4 + $0x50] sm:$0xff] %vm1239, %v1212
        %1251 = vst.msk [vmem:[#allocation4 + $0x58] sm:$0xff] %vm1239, %v1214
        %1252 = vst.msk [vmem:[#allocation4 + $0x60] sm:$0xff] %vm1239, %v1216
        %1253 = vst.msk [vmem:[#allocation4 + $0x68] sm:$0xff] %vm1239, %v1218
        %1254 = vst.msk [vmem:[#allocation4 + $0x70] sm:$0xff] %vm1239, %v1220
        %1255 = vst.msk [vmem:[#allocation4 + $0x78] sm:$0xff] %vm1239, %v1222
        %v1256 = vld [vmem:[#allocation2 + $0x8] sm:$0xf]
        %v1257 = vld [vmem:[#allocation2 + $0xc] sm:$0xf]
        %v1258 = vld [vmem:[#allocation2 + $0x10] sm:$0x1]
        %v1259 = vld [vmem:[#allocation2 + $0x1c] sm:$0xf]
        %v1260 = vld [vmem:[#allocation2 + $0x20] sm:$0xf]
        %v1261 = vld [vmem:[#allocation2 + $0x24] sm:$0x1]
        %v1262 = vld [vmem:[#allocation2 + $0x30] sm:$0xf]
        %v1263 = vld [vmem:[#allocation2 + $0x34] sm:$0xf]
        %v1264 = vld [vmem:[#allocation2 + $0x38] sm:$0x1]
        %v1265 = vld [vmem:[#allocation2 + $0x44] sm:$0xf]
        %v1266 = vld [vmem:[#allocation2 + $0x48] sm:$0xf]
        %v1267 = vld [vmem:[#allocation2 + $0x4c] sm:$0x1]
        %v1268 = vld [vmem:[#allocation2 + $0x58] sm:$0xf]
        %v1269 = vld [vmem:[#allocation2 + $0x5c] sm:$0xf]
        %v1270 = vld [vmem:[#allocation2 + $0x60] sm:$0x1]
        %v1271 = vld [vmem:[#allocation2 + $0x6c] sm:$0xf]
        %v1272 = vld [vmem:[#allocation2 + $0x70] sm:$0xf]
        %v1273 = vld [vmem:[#allocation2 + $0x74] sm:$0x1]
        %v1274 = vld [vmem:[#allocation2 + $0x80] sm:$0xf]
        %v1275 = vld [vmem:[#allocation2 + $0x84] sm:$0xf]
        %v1276 = vld [vmem:[#allocation2 + $0x88] sm:$0x1]
        %v1277 = vld [vmem:[#allocation2 + $0x94] sm:$0xf]
        %v1278 = vld [vmem:[#allocation2 + $0x98] sm:$0xf]
        %v1279 = vld [vmem:[#allocation2 + $0x9c] sm:$0x1]
        %v1280 = vld [vmem:[#allocation2 + $0xa8] sm:$0xf]
        %v1281 = vld [vmem:[#allocation2 + $0xac] sm:$0xf]
        %v1282 = vld [vmem:[#allocation2 + $0xb0] sm:$0x1]
        %v1283 = vld [vmem:[#allocation2 + $0xbc] sm:$0xf]
        %v1284 = vld [vmem:[#allocation2 + $0xc0] sm:$0xf]
        %v1285 = vld [vmem:[#allocation2 + $0xc4] sm:$0x1]
        %v1286 = vld [vmem:[#allocation2 + $0xd0] sm:$0xf]
        %v1287 = vld [vmem:[#allocation2 + $0xd4] sm:$0xf]
        %v1288 = vld [vmem:[#allocation2 + $0xd8] sm:$0x1]
        %v1289 = vld [vmem:[#allocation2 + $0xe4] sm:$0xf]
        %v1290 = vld [vmem:[#allocation2 + $0xe8] sm:$0xf]
        %v1291 = vld [vmem:[#allocation2 + $0xec] sm:$0x1]
        %v1292 = vld [vmem:[#allocation2 + $0xf8] sm:$0xf]
        %v1293 = vld [vmem:[#allocation2 + $0xfc] sm:$0xf]
        %v1294 = vld [vmem:[#allocation2 + $0x100] sm:$0x1]
        %v1295 = vld [vmem:[#allocation2 + $0x10c] sm:$0xf]
        %v1296 = vld [vmem:[#allocation2 + $0x110] sm:$0xf]
        %v1297 = vld [vmem:[#allocation2 + $0x114] sm:$0x1]
        %v1298 = vld [vmem:[#allocation2 + $0x120] sm:$0xf]
        %v1299 = vld [vmem:[#allocation2 + $0x124] sm:$0xf]
        %v1300 = vld [vmem:[#allocation2 + $0x128] sm:$0x1]
        %v1301 = vld [vmem:[#allocation2 + $0x134] sm:$0xf]
        %v1302 = vld [vmem:[#allocation2 + $0x138] sm:$0xf]
        %v1303 = vld [vmem:[#allocation2 + $0x13c] sm:$0x1]
        %vm1304 = vsmask.f32 3328
        %vm1305 = vsmask.f32 7440
        %vm1306 = vmor %vm1304, %vm1305
        %v1308 = vshrl.u32 %v1256, 16
        %v1310 = vrot.slane %v1308, 4
        %v1311 = vshll.u32 %v1256, 16
        %v1313 = vrot.slane %v1311, 5
        %v1314 = vor.u32 %v1310, %v1313
        %v1315 = vrot.slane %v1314, 4
        %v1317 = vshll.u32 %v1257, 16
        %v1319 = vrot.slane %v1317, 5
        %v1320 = vsel %vm1306, %v1315, %v1319
        %v1321 = vshrl.u32 %v1257, 16
        %v1323 = vrot.slane %v1321, 4
        %v1324 = vor.u32 %v1323, %v1319
        %v1325 = vrot.slane %v1324, 4
        %v1327 = vshll.u32 %v1258, 16
        %v1329 = vrot.slane %v1327, 5
        %v1330 = vsel %vm1306, %v1325, %v1329
        %v1332 = vshrl.u32 %v1259, 16
        %v1334 = vrot.slane %v1332, 4
        %v1335 = vshll.u32 %v1259, 16
        %v1337 = vrot.slane %v1335, 5
        %v1338 = vor.u32 %v1334, %v1337
        %v1339 = vrot.slane %v1338, 4
        %v1341 = vshll.u32 %v1260, 16
        %v1343 = vrot.slane %v1341, 5
        %v1344 = vsel %vm1306, %v1339, %v1343
        %v1345 = vshrl.u32 %v1260, 16
        %v1347 = vrot.slane %v1345, 4
        %v1348 = vor.u32 %v1347, %v1343
        %v1349 = vrot.slane %v1348, 4
        %v1351 = vshll.u32 %v1261, 16
        %v1353 = vrot.slane %v1351, 5
        %v1354 = vsel %vm1306, %v1349, %v1353
        %v1356 = vshrl.u32 %v1262, 16
        %v1358 = vrot.slane %v1356, 4
        %v1359 = vshll.u32 %v1262, 16
        %v1361 = vrot.slane %v1359, 5
        %v1362 = vor.u32 %v1358, %v1361
        %v1363 = vrot.slane %v1362, 4
        %v1365 = vshll.u32 %v1263, 16
        %v1367 = vrot.slane %v1365, 5
        %v1368 = vsel %vm1306, %v1363, %v1367
        %v1369 = vshrl.u32 %v1263, 16
        %v1371 = vrot.slane %v1369, 4
        %v1372 = vor.u32 %v1371, %v1367
        %v1373 = vrot.slane %v1372, 4
        %v1375 = vshll.u32 %v1264, 16
        %v1377 = vrot.slane %v1375, 5
        %v1378 = vsel %vm1306, %v1373, %v1377
        %v1380 = vshrl.u32 %v1265, 16
        %v1382 = vrot.slane %v1380, 4
        %v1383 = vshll.u32 %v1265, 16
        %v1385 = vrot.slane %v1383, 5
        %v1386 = vor.u32 %v1382, %v1385
        %v1387 = vrot.slane %v1386, 4
        %v1389 = vshll.u32 %v1266, 16
        %v1391 = vrot.slane %v1389, 5
        %v1392 = vsel %vm1306, %v1387, %v1391
        %v1393 = vshrl.u32 %v1266, 16
        %v1395 = vrot.slane %v1393, 4
        %v1396 = vor.u32 %v1395, %v1391
        %v1397 = vrot.slane %v1396, 4
        %v1399 = vshll.u32 %v1267, 16
        %v1401 = vrot.slane %v1399, 5
        %v1402 = vsel %vm1306, %v1397, %v1401
        %v1404 = vshrl.u32 %v1268, 16
        %v1406 = vrot.slane %v1404, 4
        %v1407 = vshll.u32 %v1268, 16
        %v1409 = vrot.slane %v1407, 5
        %v1410 = vor.u32 %v1406, %v1409
        %v1411 = vrot.slane %v1410, 4
        %v1413 = vshll.u32 %v1269, 16
        %v1415 = vrot.slane %v1413, 5
        %v1416 = vsel %vm1306, %v1411, %v1415
        %v1417 = vshrl.u32 %v1269, 16
        %v1419 = vrot.slane %v1417, 4
        %v1420 = vor.u32 %v1419, %v1415
        %v1421 = vrot.slane %v1420, 4
        %v1423 = vshll.u32 %v1270, 16
        %v1425 = vrot.slane %v1423, 5
        %v1426 = vsel %vm1306, %v1421, %v1425
        %v1428 = vshrl.u32 %v1271, 16
        %v1430 = vrot.slane %v1428, 4
        %v1431 = vshll.u32 %v1271, 16
        %v1433 = vrot.slane %v1431, 5
        %v1434 = vor.u32 %v1430, %v1433
        %v1435 = vrot.slane %v1434, 4
        %v1437 = vshll.u32 %v1272, 16
        %v1439 = vrot.slane %v1437, 5
        %v1440 = vsel %vm1306, %v1435, %v1439
        %v1441 = vshrl.u32 %v1272, 16
        %v1443 = vrot.slane %v1441, 4
        %v1444 = vor.u32 %v1443, %v1439
        %v1445 = vrot.slane %v1444, 4
        %v1447 = vshll.u32 %v1273, 16
        %v1449 = vrot.slane %v1447, 5
        %v1450 = vsel %vm1306, %v1445, %v1449
        %v1452 = vshrl.u32 %v1274, 16
        %v1454 = vrot.slane %v1452, 4
        %v1455 = vshll.u32 %v1274, 16
        %v1457 = vrot.slane %v1455, 5
        %v1458 = vor.u32 %v1454, %v1457
        %v1459 = vrot.slane %v1458, 4
        %v1461 = vshll.u32 %v1275, 16
        %v1463 = vrot.slane %v1461, 5
        %v1464 = vsel %vm1306, %v1459, %v1463
        %v1465 = vshrl.u32 %v1275, 16
        %v1467 = vrot.slane %v1465, 4
        %v1468 = vor.u32 %v1467, %v1463
        %v1469 = vrot.slane %v1468, 4
        %v1471 = vshll.u32 %v1276, 16
        %v1473 = vrot.slane %v1471, 5
        %v1474 = vsel %vm1306, %v1469, %v1473
        %v1476 = vshrl.u32 %v1277, 16
        %v1478 = vrot.slane %v1476, 4
        %v1479 = vshll.u32 %v1277, 16
        %v1481 = vrot.slane %v1479, 5
        %v1482 = vor.u32 %v1478, %v1481
        %v1483 = vrot.slane %v1482, 4
        %v1485 = vshll.u32 %v1278, 16
        %v1487 = vrot.slane %v1485, 5
        %v1488 = vsel %vm1306, %v1483, %v1487
        %v1489 = vshrl.u32 %v1278, 16
        %v1491 = vrot.slane %v1489, 4
        %v1492 = vor.u32 %v1491, %v1487
        %v1493 = vrot.slane %v1492, 4
        %v1495 = vshll.u32 %v1279, 16
        %v1497 = vrot.slane %v1495, 5
        %v1498 = vsel %vm1306, %v1493, %v1497
        %v1500 = vshrl.u32 %v1280, 16
        %v1502 = vrot.slane %v1500, 4
        %v1503 = vshll.u32 %v1280, 16
        %v1505 = vrot.slane %v1503, 5
        %v1506 = vor.u32 %v1502, %v1505
        %v1507 = vrot.slane %v1506, 4
        %v1509 = vshll.u32 %v1281, 16
        %v1511 = vrot.slane %v1509, 5
        %v1512 = vsel %vm1306, %v1507, %v1511
        %v1513 = vshrl.u32 %v1281, 16
        %v1515 = vrot.slane %v1513, 4
        %v1516 = vor.u32 %v1515, %v1511
        %v1517 = vrot.slane %v1516, 4
        %v1519 = vshll.u32 %v1282, 16
        %v1521 = vrot.slane %v1519, 5
        %v1522 = vsel %vm1306, %v1517, %v1521
        %v1524 = vshrl.u32 %v1283, 16
        %v1526 = vrot.slane %v1524, 4
        %v1527 = vshll.u32 %v1283, 16
        %v1529 = vrot.slane %v1527, 5
        %v1530 = vor.u32 %v1526, %v1529
        %v1531 = vrot.slane %v1530, 4
        %v1533 = vshll.u32 %v1284, 16
        %v1535 = vrot.slane %v1533, 5
        %v1536 = vsel %vm1306, %v1531, %v1535
        %v1537 = vshrl.u32 %v1284, 16
        %v1539 = vrot.slane %v1537, 4
        %v1540 = vor.u32 %v1539, %v1535
        %v1541 = vrot.slane %v1540, 4
        %v1543 = vshll.u32 %v1285, 16
        %v1545 = vrot.slane %v1543, 5
        %v1546 = vsel %vm1306, %v1541, %v1545
        %v1548 = vshrl.u32 %v1286, 16
        %v1550 = vrot.slane %v1548, 4
        %v1551 = vshll.u32 %v1286, 16
        %v1553 = vrot.slane %v1551, 5
        %v1554 = vor.u32 %v1550, %v1553
        %v1555 = vrot.slane %v1554, 4
        %v1557 = vshll.u32 %v1287, 16
        %v1559 = vrot.slane %v1557, 5
        %v1560 = vsel %vm1306, %v1555, %v1559
        %v1561 = vshrl.u32 %v1287, 16
        %v1563 = vrot.slane %v1561, 4
        %v1564 = vor.u32 %v1563, %v1559
        %v1565 = vrot.slane %v1564, 4
        %v1567 = vshll.u32 %v1288, 16
        %v1569 = vrot.slane %v1567, 5
        %v1570 = vsel %vm1306, %v1565, %v1569
        %v1572 = vshrl.u32 %v1289, 16
        %v1574 = vrot.slane %v1572, 4
        %v1575 = vshll.u32 %v1289, 16
        %v1577 = vrot.slane %v1575, 5
        %v1578 = vor.u32 %v1574, %v1577
        %v1579 = vrot.slane %v1578, 4
        %v1581 = vshll.u32 %v1290, 16
        %v1583 = vrot.slane %v1581, 5
        %v1584 = vsel %vm1306, %v1579, %v1583
        %v1585 = vshrl.u32 %v1290, 16
        %v1587 = vrot.slane %v1585, 4
        %v1588 = vor.u32 %v1587, %v1583
        %v1589 = vrot.slane %v1588, 4
        %v1591 = vshll.u32 %v1291, 16
        %v1593 = vrot.slane %v1591, 5
        %v1594 = vsel %vm1306, %v1589, %v1593
        %v1596 = vshrl.u32 %v1292, 16
        %v1598 = vrot.slane %v1596, 4
        %v1599 = vshll.u32 %v1292, 16
        %v1601 = vrot.slane %v1599, 5
        %v1602 = vor.u32 %v1598, %v1601
        %v1603 = vrot.slane %v1602, 4
        %v1605 = vshll.u32 %v1293, 16
        %v1607 = vrot.slane %v1605, 5
        %v1608 = vsel %vm1306, %v1603, %v1607
        %v1609 = vshrl.u32 %v1293, 16
        %v1611 = vrot.slane %v1609, 4
        %v1612 = vor.u32 %v1611, %v1607
        %v1613 = vrot.slane %v1612, 4
        %v1615 = vshll.u32 %v1294, 16
        %v1617 = vrot.slane %v1615, 5
        %v1618 = vsel %vm1306, %v1613, %v1617
        %v1620 = vshrl.u32 %v1295, 16
        %v1622 = vrot.slane %v1620, 4
        %v1623 = vshll.u32 %v1295, 16
        %v1625 = vrot.slane %v1623, 5
        %v1626 = vor.u32 %v1622, %v1625
        %v1627 = vrot.slane %v1626, 4
        %v1629 = vshll.u32 %v1296, 16
        %v1631 = vrot.slane %v1629, 5
        %v1632 = vsel %vm1306, %v1627, %v1631
        %v1633 = vshrl.u32 %v1296, 16
        %v1635 = vrot.slane %v1633, 4
        %v1636 = vor.u32 %v1635, %v1631
        %v1637 = vrot.slane %v1636, 4
        %v1639 = vshll.u32 %v1297, 16
        %v1641 = vrot.slane %v1639, 5
        %v1642 = vsel %vm1306, %v1637, %v1641
        %v1644 = vshrl.u32 %v1298, 16
        %v1646 = vrot.slane %v1644, 4
        %v1647 = vshll.u32 %v1298, 16
        %v1649 = vrot.slane %v1647, 5
        %v1650 = vor.u32 %v1646, %v1649
        %v1651 = vrot.slane %v1650, 4
        %v1653 = vshll.u32 %v1299, 16
        %v1655 = vrot.slane %v1653, 5
        %v1656 = vsel %vm1306, %v1651, %v1655
        %v1657 = vshrl.u32 %v1299, 16
        %v1659 = vrot.slane %v1657, 4
        %v1660 = vor.u32 %v1659, %v1655
        %v1661 = vrot.slane %v1660, 4
        %v1663 = vshll.u32 %v1300, 16
        %v1665 = vrot.slane %v1663, 5
        %v1666 = vsel %vm1306, %v1661, %v1665
        %v1668 = vshrl.u32 %v1301, 16
        %v1670 = vrot.slane %v1668, 4
        %v1671 = vshll.u32 %v1301, 16
        %v1673 = vrot.slane %v1671, 5
        %v1674 = vor.u32 %v1670, %v1673
        %v1675 = vrot.slane %v1674, 4
        %v1677 = vshll.u32 %v1302, 16
        %v1679 = vrot.slane %v1677, 5
        %v1680 = vsel %vm1306, %v1675, %v1679
        %v1681 = vshrl.u32 %v1302, 16
        %v1683 = vrot.slane %v1681, 4
        %v1684 = vor.u32 %v1683, %v1679
        %v1685 = vrot.slane %v1684, 4
        %v1687 = vshll.u32 %v1303, 16
        %v1689 = vrot.slane %v1687, 5
        %v1690 = vsel %vm1306, %v1685, %v1689
        %v1691 = vunpack.c.l.b16 %v1320
        %v1692 = vunpack.c.l.b16 %v1330
        %v1693 = vunpack.c.l.b16 %v1344
        %v1694 = vunpack.c.l.b16 %v1354
        %v1695 = vunpack.c.l.b16 %v1368
        %v1696 = vunpack.c.l.b16 %v1378
        %v1697 = vunpack.c.l.b16 %v1392
        %v1698 = vunpack.c.l.b16 %v1402
        %v1699 = vunpack.c.l.b16 %v1416
        %v1700 = vunpack.c.l.b16 %v1426
        %v1701 = vunpack.c.l.b16 %v1440
        %v1702 = vunpack.c.l.b16 %v1450
        %v1703 = vunpack.c.l.b16 %v1464
        %v1704 = vunpack.c.l.b16 %v1474
        %v1705 = vunpack.c.l.b16 %v1488
        %v1706 = vunpack.c.l.b16 %v1498
        %v1707 = vunpack.c.l.b16 %v1512
        %v1708 = vunpack.c.l.b16 %v1522
        %v1709 = vunpack.c.l.b16 %v1536
        %v1710 = vunpack.c.l.b16 %v1546
        %v1711 = vunpack.c.l.b16 %v1560
        %v1712 = vunpack.c.l.b16 %v1570
        %v1713 = vunpack.c.l.b16 %v1584
        %v1714 = vunpack.c.l.b16 %v1594
        %v1715 = vunpack.c.l.b16 %v1608
        %v1716 = vunpack.c.l.b16 %v1618
        %v1717 = vunpack.c.l.b16 %v1632
        %v1718 = vunpack.c.l.b16 %v1642
        %v1719 = vunpack.c.l.b16 %v1656
        %v1720 = vunpack.c.l.b16 %v1666
        %v1721 = vunpack.c.l.b16 %v1680
        %v1722 = vunpack.c.l.b16 %v1690
        %v1723 = vpack.c.b16 %v1692, %v1691
        %v1724 = vpack.c.b16 %v1694, %v1693
        %v1725 = vpack.c.b16 %v1696, %v1695
        %v1726 = vpack.c.b16 %v1698, %v1697
        %v1727 = vpack.c.b16 %v1700, %v1699
        %v1728 = vpack.c.b16 %v1702, %v1701
        %v1729 = vpack.c.b16 %v1704, %v1703
        %v1730 = vpack.c.b16 %v1706, %v1705
        %v1731 = vpack.c.b16 %v1708, %v1707
        %v1732 = vpack.c.b16 %v1710, %v1709
        %v1733 = vpack.c.b16 %v1712, %v1711
        %v1734 = vpack.c.b16 %v1714, %v1713
        %v1735 = vpack.c.b16 %v1716, %v1715
        %v1736 = vpack.c.b16 %v1718, %v1717
        %v1737 = vpack.c.b16 %v1720, %v1719
        %v1738 = vpack.c.b16 %v1722, %v1721
        %1739 = vrot.lane.b32.xlu0 %v1723, 16
        %v1740 = vpop.permute.xlu0 %1739
        %1741 = vrot.lane.b32.xlu0 %v1724, 16
        %v1742 = vpop.permute.xlu0 %1741
        %1743 = vrot.lane.b32.xlu0 %v1725, 16
        %v1744 = vpop.permute.xlu0 %1743
        %1745 = vrot.lane.b32.xlu0 %v1726, 16
        %v1746 = vpop.permute.xlu0 %1745
        %1747 = vrot.lane.b32.xlu0 %v1727, 16
        %v1748 = vpop.permute.xlu0 %1747
        %1749 = vrot.lane.b32.xlu0 %v1728, 16
        %v1750 = vpop.permute.xlu0 %1749
        %1751 = vrot.lane.b32.xlu0 %v1729, 16
        %v1752 = vpop.permute.xlu0 %1751
        %1753 = vrot.lane.b32.xlu0 %v1730, 16
        %v1754 = vpop.permute.xlu0 %1753
        %1755 = vrot.lane.b32.xlu0 %v1731, 16
        %v1756 = vpop.permute.xlu0 %1755
        %1757 = vrot.lane.b32.xlu0 %v1732, 16
        %v1758 = vpop.permute.xlu0 %1757
        %1759 = vrot.lane.b32.xlu0 %v1733, 16
        %v1760 = vpop.permute.xlu0 %1759
        %1761 = vrot.lane.b32.xlu0 %v1734, 16
        %v1762 = vpop.permute.xlu0 %1761
        %1763 = vrot.lane.b32.xlu0 %v1735, 16
        %v1764 = vpop.permute.xlu0 %1763
        %1765 = vrot.lane.b32.xlu0 %v1736, 16
        %v1766 = vpop.permute.xlu0 %1765
        %1767 = vrot.lane.b32.xlu0 %v1737, 16
        %v1768 = vpop.permute.xlu0 %1767
        %1769 = vrot.lane.b32.xlu0 %v1738, 16
        %v1770 = vpop.permute.xlu0 %1769
        %vm1787 = vcmask 195712
        %1788 = vst.msk [vmem:[#allocation4] sm:$0xff] %vm1787, %v1740
        %1789 = vst.msk [vmem:[#allocation4 + $0x8] sm:$0xff] %vm1787, %v1742
        %1790 = vst.msk [vmem:[#allocation4 + $0x10] sm:$0xff] %vm1787, %v1744
        %1791 = vst.msk [vmem:[#allocation4 + $0x18] sm:$0xff] %vm1787, %v1746
        %1792 = vst.msk [vmem:[#allocation4 + $0x20] sm:$0xff] %vm1787, %v1748
        %1793 = vst.msk [vmem:[#allocation4 + $0x28] sm:$0xff] %vm1787, %v1750
        %1794 = vst.msk [vmem:[#allocation4 + $0x30] sm:$0xff] %vm1787, %v1752
        %1795 = vst.msk [vmem:[#allocation4 + $0x38] sm:$0xff] %vm1787, %v1754
        %1796 = vst.msk [vmem:[#allocation4 + $0x40] sm:$0xff] %vm1787, %v1756
        %1797 = vst.msk [vmem:[#allocation4 + $0x48] sm:$0xff] %vm1787, %v1758
        %1798 = vst.msk [vmem:[#allocation4 + $0x50] sm:$0xff] %vm1787, %v1760
        %1799 = vst.msk [vmem:[#allocation4 + $0x58] sm:$0xff] %vm1787, %v1762
        %1800 = vst.msk [vmem:[#allocation4 + $0x60] sm:$0xff] %vm1787, %v1764
        %1801 = vst.msk [vmem:[#allocation4 + $0x68] sm:$0xff] %vm1787, %v1766
        %1802 = vst.msk [vmem:[#allocation4 + $0x70] sm:$0xff] %vm1787, %v1768
        %1803 = vst.msk [vmem:[#allocation4 + $0x78] sm:$0xff] %vm1787, %v1770
        %v1804 = vld [vmem:[%s563 + $0x4] sm:$0x8]
        %v1805 = vld [vmem:[%s563 + $0x8] sm:$0xf]
        %v1806 = vld [vmem:[%s563 + $0xc] sm:$0xf]
        %v1807 = vld [vmem:[%s563 + $0x18] sm:$0x8]
        %v1808 = vld [vmem:[%s563 + $0x1c] sm:$0xf]
        %v1809 = vld [vmem:[%s563 + $0x20] sm:$0xf]
        %v1810 = vld [vmem:[%s563 + $0x2c] sm:$0x8]
        %v1811 = vld [vmem:[%s563 + $0x30] sm:$0xf]
        %v1812 = vld [vmem:[%s563 + $0x34] sm:$0xf]
        %v1813 = vld [vmem:[%s563 + $0x40] sm:$0x8]
        %v1814 = vld [vmem:[%s563 + $0x44] sm:$0xf]
        %v1815 = vld [vmem:[%s563 + $0x48] sm:$0xf]
        %v1816 = vld [vmem:[%s563 + $0x54] sm:$0x8]
        %v1817 = vld [vmem:[%s563 + $0x58] sm:$0xf]
        %v1818 = vld [vmem:[%s563 + $0x5c] sm:$0xf]
        %v1819 = vld [vmem:[%s563 + $0x68] sm:$0x8]
        %v1820 = vld [vmem:[%s563 + $0x6c] sm:$0xf]
        %v1821 = vld [vmem:[%s563 + $0x70] sm:$0xf]
        %v1822 = vld [vmem:[%s563 + $0x7c] sm:$0x8]
        %v1823 = vld [vmem:[%s563 + $0x80] sm:$0xf]
        %v1824 = vld [vmem:[%s563 + $0x84] sm:$0xf]
        %v1825 = vld [vmem:[%s563 + $0x90] sm:$0x8]
        %v1826 = vld [vmem:[%s563 + $0x94] sm:$0xf]
        %v1827 = vld [vmem:[%s563 + $0x98] sm:$0xf]
        %v1828 = vld [vmem:[%s563 + $0xa4] sm:$0x8]
        %v1829 = vld [vmem:[%s563 + $0xa8] sm:$0xf]
        %v1830 = vld [vmem:[%s563 + $0xac] sm:$0xf]
        %v1831 = vld [vmem:[%s563 + $0xb8] sm:$0x8]
        %v1832 = vld [vmem:[%s563 + $0xbc] sm:$0xf]
        %v1833 = vld [vmem:[%s563 + $0xc0] sm:$0xf]
        %v1834 = vld [vmem:[%s563 + $0xcc] sm:$0x8]
        %v1835 = vld [vmem:[%s563 + $0xd0] sm:$0xf]
        %v1836 = vld [vmem:[%s563 + $0xd4] sm:$0xf]
        %v1837 = vld [vmem:[%s563 + $0xe0] sm:$0x8]
        %v1838 = vld [vmem:[%s563 + $0xe4] sm:$0xf]
        %v1839 = vld [vmem:[%s563 + $0xe8] sm:$0xf]
        %v1840 = vld [vmem:[%s563 + $0xf4] sm:$0x8]
        %v1841 = vld [vmem:[%s563 + $0xf8] sm:$0xf]
        %v1842 = vld [vmem:[%s563 + $0xfc] sm:$0xf]
        %v1843 = vld [vmem:[%s563 + $0x108] sm:$0x8]
        %v1844 = vld [vmem:[%s563 + $0x10c] sm:$0xf]
        %v1845 = vld [vmem:[%s563 + $0x110] sm:$0xf]
        %v1846 = vld [vmem:[%s563 + $0x11c] sm:$0x8]
        %v1847 = vld [vmem:[%s563 + $0x120] sm:$0xf]
        %v1848 = vld [vmem:[%s563 + $0x124] sm:$0xf]
        %v1849 = vld [vmem:[%s563 + $0x130] sm:$0x8]
        %v1850 = vld [vmem:[%s563 + $0x134] sm:$0xf]
        %v1851 = vld [vmem:[%s563 + $0x138] sm:$0xf]
        %v1853 = vshrl.u32 %v1804, 16
        %v1855 = vrot.slane %v1853, 7
        %v1856 = vrot.slane %v1855, 4
        %v1858 = vshrl.u32 %v1805, 16
        %v1860 = vrot.slane %v1858, 7
        %v1861 = vshll.u32 %v1805, 16
        %v1863 = vor.u32 %v1860, %v1861
        %v1864 = vsel %vm645, %v1856, %v1863
        %v1865 = vrot.slane %v1860, 4
        %v1867 = vshrl.u32 %v1806, 16
        %v1869 = vrot.slane %v1867, 7
        %v1870 = vshll.u32 %v1806, 16
        %v1872 = vor.u32 %v1869, %v1870
        %v1873 = vsel %vm645, %v1865, %v1872
        %v1875 = vshrl.u32 %v1807, 16
        %v1877 = vrot.slane %v1875, 7
        %v1878 = vrot.slane %v1877, 4
        %v1880 = vshrl.u32 %v1808, 16
        %v1882 = vrot.slane %v1880, 7
        %v1883 = vshll.u32 %v1808, 16
        %v1885 = vor.u32 %v1882, %v1883
        %v1886 = vsel %vm645, %v1878, %v1885
        %v1887 = vrot.slane %v1882, 4
        %v1889 = vshrl.u32 %v1809, 16
        %v1891 = vrot.slane %v1889, 7
        %v1892 = vshll.u32 %v1809, 16
        %v1894 = vor.u32 %v1891, %v1892
        %v1895 = vsel %vm645, %v1887, %v1894
        %v1897 = vshrl.u32 %v1810, 16
        %v1899 = vrot.slane %v1897, 7
        %v1900 = vrot.slane %v1899, 4
        %v1902 = vshrl.u32 %v1811, 16
        %v1904 = vrot.slane %v1902, 7
        %v1905 = vshll.u32 %v1811, 16
        %v1907 = vor.u32 %v1904, %v1905
        %v1908 = vsel %vm645, %v1900, %v1907
        %v1909 = vrot.slane %v1904, 4
        %v1911 = vshrl.u32 %v1812, 16
        %v1913 = vrot.slane %v1911, 7
        %v1914 = vshll.u32 %v1812, 16
        %v1916 = vor.u32 %v1913, %v1914
        %v1917 = vsel %vm645, %v1909, %v1916
        %v1919 = vshrl.u32 %v1813, 16
        %v1921 = vrot.slane %v1919, 7
        %v1922 = vrot.slane %v1921, 4
        %v1924 = vshrl.u32 %v1814, 16
        %v1926 = vrot.slane %v1924, 7
        %v1927 = vshll.u32 %v1814, 16
        %v1929 = vor.u32 %v1926, %v1927
        %v1930 = vsel %vm645, %v1922, %v1929
        %v1931 = vrot.slane %v1926, 4
        %v1933 = vshrl.u32 %v1815, 16
        %v1935 = vrot.slane %v1933, 7
        %v1936 = vshll.u32 %v1815, 16
        %v1938 = vor.u32 %v1935, %v1936
        %v1939 = vsel %vm645, %v1931, %v1938
        %v1941 = vshrl.u32 %v1816, 16
        %v1943 = vrot.slane %v1941, 7
        %v1944 = vrot.slane %v1943, 4
        %v1946 = vshrl.u32 %v1817, 16
        %v1948 = vrot.slane %v1946, 7
        %v1949 = vshll.u32 %v1817, 16
        %v1951 = vor.u32 %v1948, %v1949
        %v1952 = vsel %vm645, %v1944, %v1951
        %v1953 = vrot.slane %v1948, 4
        %v1955 = vshrl.u32 %v1818, 16
        %v1957 = vrot.slane %v1955, 7
        %v1958 = vshll.u32 %v1818, 16
        %v1960 = vor.u32 %v1957, %v1958
        %v1961 = vsel %vm645, %v1953, %v1960
        %v1963 = vshrl.u32 %v1819, 16
        %v1965 = vrot.slane %v1963, 7
        %v1966 = vrot.slane %v1965, 4
        %v1968 = vshrl.u32 %v1820, 16
        %v1970 = vrot.slane %v1968, 7
        %v1971 = vshll.u32 %v1820, 16
        %v1973 = vor.u32 %v1970, %v1971
        %v1974 = vsel %vm645, %v1966, %v1973
        %v1975 = vrot.slane %v1970, 4
        %v1977 = vshrl.u32 %v1821, 16
        %v1979 = vrot.slane %v1977, 7
        %v1980 = vshll.u32 %v1821, 16
        %v1982 = vor.u32 %v1979, %v1980
        %v1983 = vsel %vm645, %v1975, %v1982
        %v1985 = vshrl.u32 %v1822, 16
        %v1987 = vrot.slane %v1985, 7
        %v1988 = vrot.slane %v1987, 4
        %v1990 = vshrl.u32 %v1823, 16
        %v1992 = vrot.slane %v1990, 7
        %v1993 = vshll.u32 %v1823, 16
        %v1995 = vor.u32 %v1992, %v1993
        %v1996 = vsel %vm645, %v1988, %v1995
        %v1997 = vrot.slane %v1992, 4
        %v1999 = vshrl.u32 %v1824, 16
        %v2001 = vrot.slane %v1999, 7
        %v2002 = vshll.u32 %v1824, 16
        %v2004 = vor.u32 %v2001, %v2002
        %v2005 = vsel %vm645, %v1997, %v2004
        %v2007 = vshrl.u32 %v1825, 16
        %v2009 = vrot.slane %v2007, 7
        %v2010 = vrot.slane %v2009, 4
        %v2012 = vshrl.u32 %v1826, 16
        %v2014 = vrot.slane %v2012, 7
        %v2015 = vshll.u32 %v1826, 16
        %v2017 = vor.u32 %v2014, %v2015
        %v2018 = vsel %vm645, %v2010, %v2017
        %v2019 = vrot.slane %v2014, 4
        %v2021 = vshrl.u32 %v1827, 16
        %v2023 = vrot.slane %v2021, 7
        %v2024 = vshll.u32 %v1827, 16
        %v2026 = vor.u32 %v2023, %v2024
        %v2027 = vsel %vm645, %v2019, %v2026
        %v2029 = vshrl.u32 %v1828, 16
        %v2031 = vrot.slane %v2029, 7
        %v2032 = vrot.slane %v2031, 4
        %v2034 = vshrl.u32 %v1829, 16
        %v2036 = vrot.slane %v2034, 7
        %v2037 = vshll.u32 %v1829, 16
        %v2039 = vor.u32 %v2036, %v2037
        %v2040 = vsel %vm645, %v2032, %v2039
        %v2041 = vrot.slane %v2036, 4
        %v2043 = vshrl.u32 %v1830, 16
        %v2045 = vrot.slane %v2043, 7
        %v2046 = vshll.u32 %v1830, 16
        %v2048 = vor.u32 %v2045, %v2046
        %v2049 = vsel %vm645, %v2041, %v2048
        %v2051 = vshrl.u32 %v1831, 16
        %v2053 = vrot.slane %v2051, 7
        %v2054 = vrot.slane %v2053, 4
        %v2056 = vshrl.u32 %v1832, 16
        %v2058 = vrot.slane %v2056, 7
        %v2059 = vshll.u32 %v1832, 16
        %v2061 = vor.u32 %v2058, %v2059
        %v2062 = vsel %vm645, %v2054, %v2061
        %v2063 = vrot.slane %v2058, 4
        %v2065 = vshrl.u32 %v1833, 16
        %v2067 = vrot.slane %v2065, 7
        %v2068 = vshll.u32 %v1833, 16
        %v2070 = vor.u32 %v2067, %v2068
        %v2071 = vsel %vm645, %v2063, %v2070
        %v2073 = vshrl.u32 %v1834, 16
        %v2075 = vrot.slane %v2073, 7
        %v2076 = vrot.slane %v2075, 4
        %v2078 = vshrl.u32 %v1835, 16
        %v2080 = vrot.slane %v2078, 7
        %v2081 = vshll.u32 %v1835, 16
        %v2083 = vor.u32 %v2080, %v2081
        %v2084 = vsel %vm645, %v2076, %v2083
        %v2085 = vrot.slane %v2080, 4
        %v2087 = vshrl.u32 %v1836, 16
        %v2089 = vrot.slane %v2087, 7
        %v2090 = vshll.u32 %v1836, 16
        %v2092 = vor.u32 %v2089, %v2090
        %v2093 = vsel %vm645, %v2085, %v2092
        %v2095 = vshrl.u32 %v1837, 16
        %v2097 = vrot.slane %v2095, 7
        %v2098 = vrot.slane %v2097, 4
        %v2100 = vshrl.u32 %v1838, 16
        %v2102 = vrot.slane %v2100, 7
        %v2103 = vshll.u32 %v1838, 16
        %v2105 = vor.u32 %v2102, %v2103
        %v2106 = vsel %vm645, %v2098, %v2105
        %v2107 = vrot.slane %v2102, 4
        %v2109 = vshrl.u32 %v1839, 16
        %v2111 = vrot.slane %v2109, 7
        %v2112 = vshll.u32 %v1839, 16
        %v2114 = vor.u32 %v2111, %v2112
        %v2115 = vsel %vm645, %v2107, %v2114
        %v2117 = vshrl.u32 %v1840, 16
        %v2119 = vrot.slane %v2117, 7
        %v2120 = vrot.slane %v2119, 4
        %v2122 = vshrl.u32 %v1841, 16
        %v2124 = vrot.slane %v2122, 7
        %v2125 = vshll.u32 %v1841, 16
        %v2127 = vor.u32 %v2124, %v2125
        %v2128 = vsel %vm645, %v2120, %v2127
        %v2129 = vrot.slane %v2124, 4
        %v2131 = vshrl.u32 %v1842, 16
        %v2133 = vrot.slane %v2131, 7
        %v2134 = vshll.u32 %v1842, 16
        %v2136 = vor.u32 %v2133, %v2134
        %v2137 = vsel %vm645, %v2129, %v2136
        %v2139 = vshrl.u32 %v1843, 16
        %v2141 = vrot.slane %v2139, 7
        %v2142 = vrot.slane %v2141, 4
        %v2144 = vshrl.u32 %v1844, 16
        %v2146 = vrot.slane %v2144, 7
        %v2147 = vshll.u32 %v1844, 16
        %v2149 = vor.u32 %v2146, %v2147
        %v2150 = vsel %vm645, %v2142, %v2149
        %v2151 = vrot.slane %v2146, 4
        %v2153 = vshrl.u32 %v1845, 16
        %v2155 = vrot.slane %v2153, 7
        %v2156 = vshll.u32 %v1845, 16
        %v2158 = vor.u32 %v2155, %v2156
        %v2159 = vsel %vm645, %v2151, %v2158
        %v2161 = vshrl.u32 %v1846, 16
        %v2163 = vrot.slane %v2161, 7
        %v2164 = vrot.slane %v2163, 4
        %v2166 = vshrl.u32 %v1847, 16
        %v2168 = vrot.slane %v2166, 7
        %v2169 = vshll.u32 %v1847, 16
        %v2171 = vor.u32 %v2168, %v2169
        %v2172 = vsel %vm645, %v2164, %v2171
        %v2173 = vrot.slane %v2168, 4
        %v2175 = vshrl.u32 %v1848, 16
        %v2177 = vrot.slane %v2175, 7
        %v2178 = vshll.u32 %v1848, 16
        %v2180 = vor.u32 %v2177, %v2178
        %v2181 = vsel %vm645, %v2173, %v2180
        %v2183 = vshrl.u32 %v1849, 16
        %v2185 = vrot.slane %v2183, 7
        %v2186 = vrot.slane %v2185, 4
        %v2188 = vshrl.u32 %v1850, 16
        %v2190 = vrot.slane %v2188, 7
        %v2191 = vshll.u32 %v1850, 16
        %v2193 = vor.u32 %v2190, %v2191
        %v2194 = vsel %vm645, %v2186, %v2193
        %v2195 = vrot.slane %v2190, 4
        %v2197 = vshrl.u32 %v1851, 16
        %v2199 = vrot.slane %v2197, 7
        %v2200 = vshll.u32 %v1851, 16
        %v2202 = vor.u32 %v2199, %v2200
        %v2203 = vsel %vm645, %v2195, %v2202
        %v2204 = vunpack.c.l.b16 %v1864
        %v2205 = vunpack.c.l.b16 %v1873
        %v2206 = vunpack.c.l.b16 %v1886
        %v2207 = vunpack.c.l.b16 %v1895
        %v2208 = vunpack.c.l.b16 %v1908
        %v2209 = vunpack.c.l.b16 %v1917
        %v2210 = vunpack.c.l.b16 %v1930
        %v2211 = vunpack.c.l.b16 %v1939
        %v2212 = vunpack.c.l.b16 %v1952
        %v2213 = vunpack.c.l.b16 %v1961
        %v2214 = vunpack.c.l.b16 %v1974
        %v2215 = vunpack.c.l.b16 %v1983
        %v2216 = vunpack.c.l.b16 %v1996
        %v2217 = vunpack.c.l.b16 %v2005
        %v2218 = vunpack.c.l.b16 %v2018
        %v2219 = vunpack.c.l.b16 %v2027
        %v2220 = vunpack.c.l.b16 %v2040
        %v2221 = vunpack.c.l.b16 %v2049
        %v2222 = vunpack.c.l.b16 %v2062
        %v2223 = vunpack.c.l.b16 %v2071
        %v2224 = vunpack.c.l.b16 %v2084
        %v2225 = vunpack.c.l.b16 %v2093
        %v2226 = vunpack.c.l.b16 %v2106
        %v2227 = vunpack.c.l.b16 %v2115
        %v2228 = vunpack.c.l.b16 %v2128
        %v2229 = vunpack.c.l.b16 %v2137
        %v2230 = vunpack.c.l.b16 %v2150
        %v2231 = vunpack.c.l.b16 %v2159
        %v2232 = vunpack.c.l.b16 %v2172
        %v2233 = vunpack.c.l.b16 %v2181
        %v2234 = vunpack.c.l.b16 %v2194
        %v2235 = vunpack.c.l.b16 %v2203
        %v2236 = vpack.c.b16 %v2205, %v2204
        %v2237 = vpack.c.b16 %v2207, %v2206
        %v2238 = vpack.c.b16 %v2209, %v2208
        %v2239 = vpack.c.b16 %v2211, %v2210
        %v2240 = vpack.c.b16 %v2213, %v2212
        %v2241 = vpack.c.b16 %v2215, %v2214
        %v2242 = vpack.c.b16 %v2217, %v2216
        %v2243 = vpack.c.b16 %v2219, %v2218
        %v2244 = vpack.c.b16 %v2221, %v2220
        %v2245 = vpack.c.b16 %v2223, %v2222
        %v2246 = vpack.c.b16 %v2225, %v2224
        %v2247 = vpack.c.b16 %v2227, %v2226
        %v2248 = vpack.c.b16 %v2229, %v2228
        %v2249 = vpack.c.b16 %v2231, %v2230
        %v2250 = vpack.c.b16 %v2233, %v2232
        %v2251 = vpack.c.b16 %v2235, %v2234
        %2252 = vrot.lane.b32.xlu0 %v2236, 24
        %v2253 = vpop.permute.xlu0 %2252
        %2254 = vrot.lane.b32.xlu0 %v2237, 24
        %v2255 = vpop.permute.xlu0 %2254
        %2256 = vrot.lane.b32.xlu0 %v2238, 24
        %v2257 = vpop.permute.xlu0 %2256
        %2258 = vrot.lane.b32.xlu0 %v2239, 24
        %v2259 = vpop.permute.xlu0 %2258
        %2260 = vrot.lane.b32.xlu0 %v2240, 24
        %v2261 = vpop.permute.xlu0 %2260
        %2262 = vrot.lane.b32.xlu0 %v2241, 24
        %v2263 = vpop.permute.xlu0 %2262
        %2264 = vrot.lane.b32.xlu0 %v2242, 24
        %v2265 = vpop.permute.xlu0 %2264
        %2266 = vrot.lane.b32.xlu0 %v2243, 24
        %v2267 = vpop.permute.xlu0 %2266
        %2268 = vrot.lane.b32.xlu0 %v2244, 24
        %v2269 = vpop.permute.xlu0 %2268
        %2270 = vrot.lane.b32.xlu0 %v2245, 24
        %v2271 = vpop.permute.xlu0 %2270
        %2272 = vrot.lane.b32.xlu0 %v2246, 24
        %v2273 = vpop.permute.xlu0 %2272
        %2274 = vrot.lane.b32.xlu0 %v2247, 24
        %v2275 = vpop.permute.xlu0 %2274
        %2276 = vrot.lane.b32.xlu0 %v2248, 24
        %v2277 = vpop.permute.xlu0 %2276
        %2278 = vrot.lane.b32.xlu0 %v2249, 24
        %v2279 = vpop.permute.xlu0 %2278
        %2280 = vrot.lane.b32.xlu0 %v2250, 24
        %v2281 = vpop.permute.xlu0 %2280
        %2282 = vrot.lane.b32.xlu0 %v2251, 24
        %v2283 = vpop.permute.xlu0 %2282
        %vm2300 = vcmask 261312
        %2301 = vst.msk [vmem:[#allocation4] sm:$0xff] %vm2300, %v2253
        %2302 = vst.msk [vmem:[#allocation4 + $0x8] sm:$0xff] %vm2300, %v2255
        %2303 = vst.msk [vmem:[#allocation4 + $0x10] sm:$0xff] %vm2300, %v2257
        %2304 = vst.msk [vmem:[#allocation4 + $0x18] sm:$0xff] %vm2300, %v2259
        %2305 = vst.msk [vmem:[#allocation4 + $0x20] sm:$0xff] %vm2300, %v2261
        %2306 = vst.msk [vmem:[#allocation4 + $0x28] sm:$0xff] %vm2300, %v2263
        %2307 = vst.msk [vmem:[#allocation4 + $0x30] sm:$0xff] %vm2300, %v2265
        %2308 = vst.msk [vmem:[#allocation4 + $0x38] sm:$0xff] %vm2300, %v2267
        %2309 = vst.msk [vmem:[#allocation4 + $0x40] sm:$0xff] %vm2300, %v2269
        %2310 = vst.msk [vmem:[#allocation4 + $0x48] sm:$0xff] %vm2300, %v2271
        %2311 = vst.msk [vmem:[#allocation4 + $0x50] sm:$0xff] %vm2300, %v2273
        %2312 = vst.msk [vmem:[#allocation4 + $0x58] sm:$0xff] %vm2300, %v2275
        %2313 = vst.msk [vmem:[#allocation4 + $0x60] sm:$0xff] %vm2300, %v2277
        %2314 = vst.msk [vmem:[#allocation4 + $0x68] sm:$0xff] %vm2300, %v2279
        %2315 = vst.msk [vmem:[#allocation4 + $0x70] sm:$0xff] %vm2300, %v2281
        %2316 = vst.msk [vmem:[#allocation4 + $0x78] sm:$0xff] %vm2300, %v2283
        %v2317 = vld [vmem:[%s563 + $0x8] sm:$0xf]
        %v2318 = vld [vmem:[%s563 + $0xc] sm:$0xf]
        %v2319 = vld [vmem:[%s563 + $0x1c] sm:$0xf]
        %v2320 = vld [vmem:[%s563 + $0x20] sm:$0xf]
        %v2321 = vld [vmem:[%s563 + $0x30] sm:$0xf]
        %v2322 = vld [vmem:[%s563 + $0x34] sm:$0xf]
        %v2323 = vld [vmem:[%s563 + $0x44] sm:$0xf]
        %v2324 = vld [vmem:[%s563 + $0x48] sm:$0xf]
        %v2325 = vld [vmem:[%s563 + $0x58] sm:$0xf]
        %v2326 = vld [vmem:[%s563 + $0x5c] sm:$0xf]
        %v2327 = vld [vmem:[%s563 + $0x6c] sm:$0xf]
        %v2328 = vld [vmem:[%s563 + $0x70] sm:$0xf]
        %v2329 = vld [vmem:[%s563 + $0x80] sm:$0xf]
        %v2330 = vld [vmem:[%s563 + $0x84] sm:$0xf]
        %v2331 = vld [vmem:[%s563 + $0x94] sm:$0xf]
        %v2332 = vld [vmem:[%s563 + $0x98] sm:$0xf]
        %v2333 = vld [vmem:[%s563 + $0xa8] sm:$0xf]
        %v2334 = vld [vmem:[%s563 + $0xac] sm:$0xf]
        %v2335 = vld [vmem:[%s563 + $0xbc] sm:$0xf]
        %v2336 = vld [vmem:[%s563 + $0xc0] sm:$0xf]
        %v2337 = vld [vmem:[%s563 + $0xd0] sm:$0xf]
        %v2338 = vld [vmem:[%s563 + $0xd4] sm:$0xf]
        %v2339 = vld [vmem:[%s563 + $0xe4] sm:$0xf]
        %v2340 = vld [vmem:[%s563 + $0xe8] sm:$0xf]
        %v2341 = vld [vmem:[%s563 + $0xf8] sm:$0xf]
        %v2342 = vld [vmem:[%s563 + $0xfc] sm:$0xf]
        %v2343 = vld [vmem:[%s563 + $0x10c] sm:$0xf]
        %v2344 = vld [vmem:[%s563 + $0x110] sm:$0xf]
        %v2345 = vld [vmem:[%s563 + $0x120] sm:$0xf]
        %v2346 = vld [vmem:[%s563 + $0x124] sm:$0xf]
        %v2347 = vld [vmem:[%s563 + $0x134] sm:$0xf]
        %v2348 = vld [vmem:[%s563 + $0x138] sm:$0xf]
        %v2381 = vunpack.c.l.b16 %v2317
        %v2382 = vunpack.c.l.b16 %v2318
        %v2383 = vunpack.c.l.b16 %v2319
        %v2384 = vunpack.c.l.b16 %v2320
        %v2385 = vunpack.c.l.b16 %v2321
        %v2386 = vunpack.c.l.b16 %v2322
        %v2387 = vunpack.c.l.b16 %v2323
        %v2388 = vunpack.c.l.b16 %v2324
        %v2389 = vunpack.c.l.b16 %v2325
        %v2390 = vunpack.c.l.b16 %v2326
        %v2391 = vunpack.c.l.b16 %v2327
        %v2392 = vunpack.c.l.b16 %v2328
        %v2393 = vunpack.c.l.b16 %v2329
        %v2394 = vunpack.c.l.b16 %v2330
        %v2395 = vunpack.c.l.b16 %v2331
        %v2396 = vunpack.c.l.b16 %v2332
        %v2397 = vunpack.c.l.b16 %v2333
        %v2398 = vunpack.c.l.b16 %v2334
        %v2399 = vunpack.c.l.b16 %v2335
        %v2400 = vunpack.c.l.b16 %v2336
        %v2401 = vunpack.c.l.b16 %v2337
        %v2402 = vunpack.c.l.b16 %v2338
        %v2403 = vunpack.c.l.b16 %v2339
        %v2404 = vunpack.c.l.b16 %v2340
        %v2405 = vunpack.c.l.b16 %v2341
        %v2406 = vunpack.c.l.b16 %v2342
        %v2407 = vunpack.c.l.b16 %v2343
        %v2408 = vunpack.c.l.b16 %v2344
        %v2409 = vunpack.c.l.b16 %v2345
        %v2410 = vunpack.c.l.b16 %v2346
        %v2411 = vunpack.c.l.b16 %v2347
        %v2412 = vunpack.c.l.b16 %v2348
        %v2413 = vpack.c.b16 %v2382, %v2381
        %v2414 = vpack.c.b16 %v2384, %v2383
        %v2415 = vpack.c.b16 %v2386, %v2385
        %v2416 = vpack.c.b16 %v2388, %v2387
        %v2417 = vpack.c.b16 %v2390, %v2389
        %v2418 = vpack.c.b16 %v2392, %v2391
        %v2419 = vpack.c.b16 %v2394, %v2393
        %v2420 = vpack.c.b16 %v2396, %v2395
        %v2421 = vpack.c.b16 %v2398, %v2397
        %v2422 = vpack.c.b16 %v2400, %v2399
        %v2423 = vpack.c.b16 %v2402, %v2401
        %v2424 = vpack.c.b16 %v2404, %v2403
        %v2425 = vpack.c.b16 %v2406, %v2405
        %v2426 = vpack.c.b16 %v2408, %v2407
        %v2427 = vpack.c.b16 %v2410, %v2409
        %v2428 = vpack.c.b16 %v2412, %v2411
        %2429 = vrot.lane.b32.xlu0 %v2413, 32
        %v2430 = vpop.permute.xlu0 %2429
        %2431 = vrot.lane.b32.xlu0 %v2414, 32
        %v2432 = vpop.permute.xlu0 %2431
        %2433 = vrot.lane.b32.xlu0 %v2415, 32
        %v2434 = vpop.permute.xlu0 %2433
        %2435 = vrot.lane.b32.xlu0 %v2416, 32
        %v2436 = vpop.permute.xlu0 %2435
        %2437 = vrot.lane.b32.xlu0 %v2417, 32
        %v2438 = vpop.permute.xlu0 %2437
        %2439 = vrot.lane.b32.xlu0 %v2418, 32
        %v2440 = vpop.permute.xlu0 %2439
        %2441 = vrot.lane.b32.xlu0 %v2419, 32
        %v2442 = vpop.permute.xlu0 %2441
        %2443 = vrot.lane.b32.xlu0 %v2420, 32
        %v2444 = vpop.permute.xlu0 %2443
        %2445 = vrot.lane.b32.xlu0 %v2421, 32
        %v2446 = vpop.permute.xlu0 %2445
        %2447 = vrot.lane.b32.xlu0 %v2422, 32
        %v2448 = vpop.permute.xlu0 %2447
        %2449 = vrot.lane.b32.xlu0 %v2423, 32
        %v2450 = vpop.permute.xlu0 %2449
        %2451 = vrot.lane.b32.xlu0 %v2424, 32
        %v2452 = vpop.permute.xlu0 %2451
        %2453 = vrot.lane.b32.xlu0 %v2425, 32
        %v2454 = vpop.permute.xlu0 %2453
        %2455 = vrot.lane.b32.xlu0 %v2426, 32
        %v2456 = vpop.permute.xlu0 %2455
        %2457 = vrot.lane.b32.xlu0 %v2427, 32
        %v2458 = vpop.permute.xlu0 %2457
        %2459 = vrot.lane.b32.xlu0 %v2428, 32
        %v2460 = vpop.permute.xlu0 %2459
        %vm2477 = vcmask 326912
        %2478 = vst.msk [vmem:[#allocation4] sm:$0xff] %vm2477, %v2430
        %2479 = vst.msk [vmem:[#allocation4 + $0x8] sm:$0xff] %vm2477, %v2432
        %2480 = vst.msk [vmem:[#allocation4 + $0x10] sm:$0xff] %vm2477, %v2434
        %2481 = vst.msk [vmem:[#allocation4 + $0x18] sm:$0xff] %vm2477, %v2436
        %2482 = vst.msk [vmem:[#allocation4 + $0x20] sm:$0xff] %vm2477, %v2438
        %2483 = vst.msk [vmem:[#allocation4 + $0x28] sm:$0xff] %vm2477, %v2440
        %2484 = vst.msk [vmem:[#allocation4 + $0x30] sm:$0xff] %vm2477, %v2442
        %2485 = vst.msk [vmem:[#allocation4 + $0x38] sm:$0xff] %vm2477, %v2444
        %2486 = vst.msk [vmem:[#allocation4 + $0x40] sm:$0xff] %vm2477, %v2446
        %2487 = vst.msk [vmem:[#allocation4 + $0x48] sm:$0xff] %vm2477, %v2448
        %2488 = vst.msk [vmem:[#allocation4 + $0x50] sm:$0xff] %vm2477, %v2450
        %2489 = vst.msk [vmem:[#allocation4 + $0x58] sm:$0xff] %vm2477, %v2452
        %2490 = vst.msk [vmem:[#allocation4 + $0x60] sm:$0xff] %vm2477, %v2454
        %2491 = vst.msk [vmem:[#allocation4 + $0x68] sm:$0xff] %vm2477, %v2456
        %2492 = vst.msk [vmem:[#allocation4 + $0x70] sm:$0xff] %vm2477, %v2458
        %2493 = vst.msk [vmem:[#allocation4 + $0x78] sm:$0xff] %vm2477, %v2460
        %v2494 = vld [vmem:[%s563 + $0x8] sm:$0xf]
        %v2495 = vld [vmem:[%s563 + $0xc] sm:$0xf]
        %v2496 = vld [vmem:[%s563 + $0x10] sm:$0x1]
        %v2497 = vld [vmem:[%s563 + $0x1c] sm:$0xf]
        %v2498 = vld [vmem:[%s563 + $0x20] sm:$0xf]
        %v2499 = vld [vmem:[%s563 + $0x24] sm:$0x1]
        %v2500 = vld [vmem:[%s563 + $0x30] sm:$0xf]
        %v2501 = vld [vmem:[%s563 + $0x34] sm:$0xf]
        %v2502 = vld [vmem:[%s563 + $0x38] sm:$0x1]
        %v2503 = vld [vmem:[%s563 + $0x44] sm:$0xf]
        %v2504 = vld [vmem:[%s563 + $0x48] sm:$0xf]
        %v2505 = vld [vmem:[%s563 + $0x4c] sm:$0x1]
        %v2506 = vld [vmem:[%s563 + $0x58] sm:$0xf]
        %v2507 = vld [vmem:[%s563 + $0x5c] sm:$0xf]
        %v2508 = vld [vmem:[%s563 + $0x60] sm:$0x1]
        %v2509 = vld [vmem:[%s563 + $0x6c] sm:$0xf]
        %v2510 = vld [vmem:[%s563 + $0x70] sm:$0xf]
        %v2511 = vld [vmem:[%s563 + $0x74] sm:$0x1]
        %v2512 = vld [vmem:[%s563 + $0x80] sm:$0xf]
        %v2513 = vld [vmem:[%s563 + $0x84] sm:$0xf]
        %v2514 = vld [vmem:[%s563 + $0x88] sm:$0x1]
        %v2515 = vld [vmem:[%s563 + $0x94] sm:$0xf]
        %v2516 = vld [vmem:[%s563 + $0x98] sm:$0xf]
        %v2517 = vld [vmem:[%s563 + $0x9c] sm:$0x1]
        %v2518 = vld [vmem:[%s563 + $0xa8] sm:$0xf]
        %v2519 = vld [vmem:[%s563 + $0xac] sm:$0xf]
        %v2520 = vld [vmem:[%s563 + $0xb0] sm:$0x1]
        %v2521 = vld [vmem:[%s563 + $0xbc] sm:$0xf]
        %v2522 = vld [vmem:[%s563 + $0xc0] sm:$0xf]
        %v2523 = vld [vmem:[%s563 + $0xc4] sm:$0x1]
        %v2524 = vld [vmem:[%s563 + $0xd0] sm:$0xf]
        %v2525 = vld [vmem:[%s563 + $0xd4] sm:$0xf]
        %v2526 = vld [vmem:[%s563 + $0xd8] sm:$0x1]
        %v2527 = vld [vmem:[%s563 + $0xe4] sm:$0xf]
        %v2528 = vld [vmem:[%s563 + $0xe8] sm:$0xf]
        %v2529 = vld [vmem:[%s563 + $0xec] sm:$0x1]
        %v2530 = vld [vmem:[%s563 + $0xf8] sm:$0xf]
        %v2531 = vld [vmem:[%s563 + $0xfc] sm:$0xf]
        %v2532 = vld [vmem:[%s563 + $0x100] sm:$0x1]
        %v2533 = vld [vmem:[%s563 + $0x10c] sm:$0xf]
        %v2534 = vld [vmem:[%s563 + $0x110] sm:$0xf]
        %v2535 = vld [vmem:[%s563 + $0x114] sm:$0x1]
        %v2536 = vld [vmem:[%s563 + $0x120] sm:$0xf]
        %v2537 = vld [vmem:[%s563 + $0x124] sm:$0xf]
        %v2538 = vld [vmem:[%s563 + $0x128] sm:$0x1]
        %v2539 = vld [vmem:[%s563 + $0x134] sm:$0xf]
        %v2540 = vld [vmem:[%s563 + $0x138] sm:$0xf]
        %v2541 = vld [vmem:[%s563 + $0x13c] sm:$0x1]
        %v2543 = vshrl.u32 %v2494, 16
        %v2545 = vrot.slane %v2543, 4
        %v2546 = vshll.u32 %v2494, 16
        %v2548 = vrot.slane %v2546, 5
        %v2549 = vor.u32 %v2545, %v2548
        %v2550 = vrot.slane %v2549, 4
        %v2552 = vshll.u32 %v2495, 16
        %v2554 = vrot.slane %v2552, 5
        %v2555 = vsel %vm1306, %v2550, %v2554
        %v2556 = vshrl.u32 %v2495, 16
        %v2558 = vrot.slane %v2556, 4
        %v2559 = vor.u32 %v2558, %v2554
        %v2560 = vrot.slane %v2559, 4
        %v2562 = vshll.u32 %v2496, 16
        %v2564 = vrot.slane %v2562, 5
        %v2565 = vsel %vm1306, %v2560, %v2564
        %v2567 = vshrl.u32 %v2497, 16
        %v2569 = vrot.slane %v2567, 4
        %v2570 = vshll.u32 %v2497, 16
        %v2572 = vrot.slane %v2570, 5
        %v2573 = vor.u32 %v2569, %v2572
        %v2574 = vrot.slane %v2573, 4
        %v2576 = vshll.u32 %v2498, 16
        %v2578 = vrot.slane %v2576, 5
        %v2579 = vsel %vm1306, %v2574, %v2578
        %v2580 = vshrl.u32 %v2498, 16
        %v2582 = vrot.slane %v2580, 4
        %v2583 = vor.u32 %v2582, %v2578
        %v2584 = vrot.slane %v2583, 4
        %v2586 = vshll.u32 %v2499, 16
        %v2588 = vrot.slane %v2586, 5
        %v2589 = vsel %vm1306, %v2584, %v2588
        %v2591 = vshrl.u32 %v2500, 16
        %v2593 = vrot.slane %v2591, 4
        %v2594 = vshll.u32 %v2500, 16
        %v2596 = vrot.slane %v2594, 5
        %v2597 = vor.u32 %v2593, %v2596
        %v2598 = vrot.slane %v2597, 4
        %v2600 = vshll.u32 %v2501, 16
        %v2602 = vrot.slane %v2600, 5
        %v2603 = vsel %vm1306, %v2598, %v2602
        %v2604 = vshrl.u32 %v2501, 16
        %v2606 = vrot.slane %v2604, 4
        %v2607 = vor.u32 %v2606, %v2602
        %v2608 = vrot.slane %v2607, 4
        %v2610 = vshll.u32 %v2502, 16
        %v2612 = vrot.slane %v2610, 5
        %v2613 = vsel %vm1306, %v2608, %v2612
        %v2615 = vshrl.u32 %v2503, 16
        %v2617 = vrot.slane %v2615, 4
        %v2618 = vshll.u32 %v2503, 16
        %v2620 = vrot.slane %v2618, 5
        %v2621 = vor.u32 %v2617, %v2620
        %v2622 = vrot.slane %v2621, 4
        %v2624 = vshll.u32 %v2504, 16
        %v2626 = vrot.slane %v2624, 5
        %v2627 = vsel %vm1306, %v2622, %v2626
        %v2628 = vshrl.u32 %v2504, 16
        %v2630 = vrot.slane %v2628, 4
        %v2631 = vor.u32 %v2630, %v2626
        %v2632 = vrot.slane %v2631, 4
        %v2634 = vshll.u32 %v2505, 16
        %v2636 = vrot.slane %v2634, 5
        %v2637 = vsel %vm1306, %v2632, %v2636
        %v2639 = vshrl.u32 %v2506, 16
        %v2641 = vrot.slane %v2639, 4
        %v2642 = vshll.u32 %v2506, 16
        %v2644 = vrot.slane %v2642, 5
        %v2645 = vor.u32 %v2641, %v2644
        %v2646 = vrot.slane %v2645, 4
        %v2648 = vshll.u32 %v2507, 16
        %v2650 = vrot.slane %v2648, 5
        %v2651 = vsel %vm1306, %v2646, %v2650
        %v2652 = vshrl.u32 %v2507, 16
        %v2654 = vrot.slane %v2652, 4
        %v2655 = vor.u32 %v2654, %v2650
        %v2656 = vrot.slane %v2655, 4
        %v2658 = vshll.u32 %v2508, 16
        %v2660 = vrot.slane %v2658, 5
        %v2661 = vsel %vm1306, %v2656, %v2660
        %v2663 = vshrl.u32 %v2509, 16
        %v2665 = vrot.slane %v2663, 4
        %v2666 = vshll.u32 %v2509, 16
        %v2668 = vrot.slane %v2666, 5
        %v2669 = vor.u32 %v2665, %v2668
        %v2670 = vrot.slane %v2669, 4
        %v2672 = vshll.u32 %v2510, 16
        %v2674 = vrot.slane %v2672, 5
        %v2675 = vsel %vm1306, %v2670, %v2674
        %v2676 = vshrl.u32 %v2510, 16
        %v2678 = vrot.slane %v2676, 4
        %v2679 = vor.u32 %v2678, %v2674
        %v2680 = vrot.slane %v2679, 4
        %v2682 = vshll.u32 %v2511, 16
        %v2684 = vrot.slane %v2682, 5
        %v2685 = vsel %vm1306, %v2680, %v2684
        %v2687 = vshrl.u32 %v2512, 16
        %v2689 = vrot.slane %v2687, 4
        %v2690 = vshll.u32 %v2512, 16
        %v2692 = vrot.slane %v2690, 5
        %v2693 = vor.u32 %v2689, %v2692
        %v2694 = vrot.slane %v2693, 4
        %v2696 = vshll.u32 %v2513, 16
        %v2698 = vrot.slane %v2696, 5
        %v2699 = vsel %vm1306, %v2694, %v2698
        %v2700 = vshrl.u32 %v2513, 16
        %v2702 = vrot.slane %v2700, 4
        %v2703 = vor.u32 %v2702, %v2698
        %v2704 = vrot.slane %v2703, 4
        %v2706 = vshll.u32 %v2514, 16
        %v2708 = vrot.slane %v2706, 5
        %v2709 = vsel %vm1306, %v2704, %v2708
        %v2711 = vshrl.u32 %v2515, 16
        %v2713 = vrot.slane %v2711, 4
        %v2714 = vshll.u32 %v2515, 16
        %v2716 = vrot.slane %v2714, 5
        %v2717 = vor.u32 %v2713, %v2716
        %v2718 = vrot.slane %v2717, 4
        %v2720 = vshll.u32 %v2516, 16
        %v2722 = vrot.slane %v2720, 5
        %v2723 = vsel %vm1306, %v2718, %v2722
        %v2724 = vshrl.u32 %v2516, 16
        %v2726 = vrot.slane %v2724, 4
        %v2727 = vor.u32 %v2726, %v2722
        %v2728 = vrot.slane %v2727, 4
        %v2730 = vshll.u32 %v2517, 16
        %v2732 = vrot.slane %v2730, 5
        %v2733 = vsel %vm1306, %v2728, %v2732
        %v2735 = vshrl.u32 %v2518, 16
        %v2737 = vrot.slane %v2735, 4
        %v2738 = vshll.u32 %v2518, 16
        %v2740 = vrot.slane %v2738, 5
        %v2741 = vor.u32 %v2737, %v2740
        %v2742 = vrot.slane %v2741, 4
        %v2744 = vshll.u32 %v2519, 16
        %v2746 = vrot.slane %v2744, 5
        %v2747 = vsel %vm1306, %v2742, %v2746
        %v2748 = vshrl.u32 %v2519, 16
        %v2750 = vrot.slane %v2748, 4
        %v2751 = vor.u32 %v2750, %v2746
        %v2752 = vrot.slane %v2751, 4
        %v2754 = vshll.u32 %v2520, 16
        %v2756 = vrot.slane %v2754, 5
        %v2757 = vsel %vm1306, %v2752, %v2756
        %v2759 = vshrl.u32 %v2521, 16
        %v2761 = vrot.slane %v2759, 4
        %v2762 = vshll.u32 %v2521, 16
        %v2764 = vrot.slane %v2762, 5
        %v2765 = vor.u32 %v2761, %v2764
        %v2766 = vrot.slane %v2765, 4
        %v2768 = vshll.u32 %v2522, 16
        %v2770 = vrot.slane %v2768, 5
        %v2771 = vsel %vm1306, %v2766, %v2770
        %v2772 = vshrl.u32 %v2522, 16
        %v2774 = vrot.slane %v2772, 4
        %v2775 = vor.u32 %v2774, %v2770
        %v2776 = vrot.slane %v2775, 4
        %v2778 = vshll.u32 %v2523, 16
        %v2780 = vrot.slane %v2778, 5
        %v2781 = vsel %vm1306, %v2776, %v2780
        %v2783 = vshrl.u32 %v2524, 16
        %v2785 = vrot.slane %v2783, 4
        %v2786 = vshll.u32 %v2524, 16
        %v2788 = vrot.slane %v2786, 5
        %v2789 = vor.u32 %v2785, %v2788
        %v2790 = vrot.slane %v2789, 4
        %v2792 = vshll.u32 %v2525, 16
        %v2794 = vrot.slane %v2792, 5
        %v2795 = vsel %vm1306, %v2790, %v2794
        %v2796 = vshrl.u32 %v2525, 16
        %v2798 = vrot.slane %v2796, 4
        %v2799 = vor.u32 %v2798, %v2794
        %v2800 = vrot.slane %v2799, 4
        %v2802 = vshll.u32 %v2526, 16
        %v2804 = vrot.slane %v2802, 5
        %v2805 = vsel %vm1306, %v2800, %v2804
        %v2807 = vshrl.u32 %v2527, 16
        %v2809 = vrot.slane %v2807, 4
        %v2810 = vshll.u32 %v2527, 16
        %v2812 = vrot.slane %v2810, 5
        %v2813 = vor.u32 %v2809, %v2812
        %v2814 = vrot.slane %v2813, 4
        %v2816 = vshll.u32 %v2528, 16
        %v2818 = vrot.slane %v2816, 5
        %v2819 = vsel %vm1306, %v2814, %v2818
        %v2820 = vshrl.u32 %v2528, 16
        %v2822 = vrot.slane %v2820, 4
        %v2823 = vor.u32 %v2822, %v2818
        %v2824 = vrot.slane %v2823, 4
        %v2826 = vshll.u32 %v2529, 16
        %v2828 = vrot.slane %v2826, 5
        %v2829 = vsel %vm1306, %v2824, %v2828
        %v2831 = vshrl.u32 %v2530, 16
        %v2833 = vrot.slane %v2831, 4
        %v2834 = vshll.u32 %v2530, 16
        %v2836 = vrot.slane %v2834, 5
        %v2837 = vor.u32 %v2833, %v2836
        %v2838 = vrot.slane %v2837, 4
        %v2840 = vshll.u32 %v2531, 16
        %v2842 = vrot.slane %v2840, 5
        %v2843 = vsel %vm1306, %v2838, %v2842
        %v2844 = vshrl.u32 %v2531, 16
        %v2846 = vrot.slane %v2844, 4
        %v2847 = vor.u32 %v2846, %v2842
        %v2848 = vrot.slane %v2847, 4
        %v2850 = vshll.u32 %v2532, 16
        %v2852 = vrot.slane %v2850, 5
        %v2853 = vsel %vm1306, %v2848, %v2852
        %v2855 = vshrl.u32 %v2533, 16
        %v2857 = vrot.slane %v2855, 4
        %v2858 = vshll.u32 %v2533, 16
        %v2860 = vrot.slane %v2858, 5
        %v2861 = vor.u32 %v2857, %v2860
        %v2862 = vrot.slane %v2861, 4
        %v2864 = vshll.u32 %v2534, 16
        %v2866 = vrot.slane %v2864, 5
        %v2867 = vsel %vm1306, %v2862, %v2866
        %v2868 = vshrl.u32 %v2534, 16
        %v2870 = vrot.slane %v2868, 4
        %v2871 = vor.u32 %v2870, %v2866
        %v2872 = vrot.slane %v2871, 4
        %v2874 = vshll.u32 %v2535, 16
        %v2876 = vrot.slane %v2874, 5
        %v2877 = vsel %vm1306, %v2872, %v2876
        %v2879 = vshrl.u32 %v2536, 16
        %v2881 = vrot.slane %v2879, 4
        %v2882 = vshll.u32 %v2536, 16
        %v2884 = vrot.slane %v2882, 5
        %v2885 = vor.u32 %v2881, %v2884
        %v2886 = vrot.slane %v2885, 4
        %v2888 = vshll.u32 %v2537, 16
        %v2890 = vrot.slane %v2888, 5
        %v2891 = vsel %vm1306, %v2886, %v2890
        %v2892 = vshrl.u32 %v2537, 16
        %v2894 = vrot.slane %v2892, 4
        %v2895 = vor.u32 %v2894, %v2890
        %v2896 = vrot.slane %v2895, 4
        %v2898 = vshll.u32 %v2538, 16
        %v2900 = vrot.slane %v2898, 5
        %v2901 = vsel %vm1306, %v2896, %v2900
        %v2903 = vshrl.u32 %v2539, 16
        %v2905 = vrot.slane %v2903, 4
        %v2906 = vshll.u32 %v2539, 16
        %v2908 = vrot.slane %v2906, 5
        %v2909 = vor.u32 %v2905, %v2908
        %v2910 = vrot.slane %v2909, 4
        %v2912 = vshll.u32 %v2540, 16
        %v2914 = vrot.slane %v2912, 5
        %v2915 = vsel %vm1306, %v2910, %v2914
        %v2916 = vshrl.u32 %v2540, 16
        %v2918 = vrot.slane %v2916, 4
        %v2919 = vor.u32 %v2918, %v2914
        %v2920 = vrot.slane %v2919, 4
        %v2922 = vshll.u32 %v2541, 16
        %v2924 = vrot.slane %v2922, 5
        %v2925 = vsel %vm1306, %v2920, %v2924
        %v2926 = vunpack.c.l.b16 %v2555
        %v2927 = vunpack.c.l.b16 %v2565
        %v2928 = vunpack.c.l.b16 %v2579
        %v2929 = vunpack.c.l.b16 %v2589
        %v2930 = vunpack.c.l.b16 %v2603
        %v2931 = vunpack.c.l.b16 %v2613
        %v2932 = vunpack.c.l.b16 %v2627
        %v2933 = vunpack.c.l.b16 %v2637
        %v2934 = vunpack.c.l.b16 %v2651
        %v2935 = vunpack.c.l.b16 %v2661
        %v2936 = vunpack.c.l.b16 %v2675
        %v2937 = vunpack.c.l.b16 %v2685
        %v2938 = vunpack.c.l.b16 %v2699
        %v2939 = vunpack.c.l.b16 %v2709
        %v2940 = vunpack.c.l.b16 %v2723
        %v2941 = vunpack.c.l.b16 %v2733
        %v2942 = vunpack.c.l.b16 %v2747
        %v2943 = vunpack.c.l.b16 %v2757
        %v2944 = vunpack.c.l.b16 %v2771
        %v2945 = vunpack.c.l.b16 %v2781
        %v2946 = vunpack.c.l.b16 %v2795
        %v2947 = vunpack.c.l.b16 %v2805
        %v2948 = vunpack.c.l.b16 %v2819
        %v2949 = vunpack.c.l.b16 %v2829
        %v2950 = vunpack.c.l.b16 %v2843
        %v2951 = vunpack.c.l.b16 %v2853
        %v2952 = vunpack.c.l.b16 %v2867
        %v2953 = vunpack.c.l.b16 %v2877
        %v2954 = vunpack.c.l.b16 %v2891
        %v2955 = vunpack.c.l.b16 %v2901
        %v2956 = vunpack.c.l.b16 %v2915
        %v2957 = vunpack.c.l.b16 %v2925
        %v2958 = vpack.c.b16 %v2927, %v2926
        %v2959 = vpack.c.b16 %v2929, %v2928
        %v2960 = vpack.c.b16 %v2931, %v2930
        %v2961 = vpack.c.b16 %v2933, %v2932
        %v2962 = vpack.c.b16 %v2935, %v2934
        %v2963 = vpack.c.b16 %v2937, %v2936
        %v2964 = vpack.c.b16 %v2939, %v2938
        %v2965 = vpack.c.b16 %v2941, %v2940
        %v2966 = vpack.c.b16 %v2943, %v2942
        %v2967 = vpack.c.b16 %v2945, %v2944
        %v2968 = vpack.c.b16 %v2947, %v2946
        %v2969 = vpack.c.b16 %v2949, %v2948
        %v2970 = vpack.c.b16 %v2951, %v2950
        %v2971 = vpack.c.b16 %v2953, %v2952
        %v2972 = vpack.c.b16 %v2955, %v2954
        %v2973 = vpack.c.b16 %v2957, %v2956
        %2974 = vrot.lane.b32.xlu0 %v2958, 40
        %v2975 = vpop.permute.xlu0 %2974
        %2976 = vrot.lane.b32.xlu0 %v2959, 40
        %v2977 = vpop.permute.xlu0 %2976
        %2978 = vrot.lane.b32.xlu0 %v2960, 40
        %v2979 = vpop.permute.xlu0 %2978
        %2980 = vrot.lane.b32.xlu0 %v2961, 40
        %v2981 = vpop.permute.xlu0 %2980
        %2982 = vrot.lane.b32.xlu0 %v2962, 40
        %v2983 = vpop.permute.xlu0 %2982
        %2984 = vrot.lane.b32.xlu0 %v2963, 40
        %v2985 = vpop.permute.xlu0 %2984
        %2986 = vrot.lane.b32.xlu0 %v2964, 40
        %v2987 = vpop.permute.xlu0 %2986
        %2988 = vrot.lane.b32.xlu0 %v2965, 40
        %v2989 = vpop.permute.xlu0 %2988
        %2990 = vrot.lane.b32.xlu0 %v2966, 40
        %v2991 = vpop.permute.xlu0 %2990
        %2992 = vrot.lane.b32.xlu0 %v2967, 40
        %v2993 = vpop.permute.xlu0 %2992
        %2994 = vrot.lane.b32.xlu0 %v2968, 40
        %v2995 = vpop.permute.xlu0 %2994
        %2996 = vrot.lane.b32.xlu0 %v2969, 40
        %v2997 = vpop.permute.xlu0 %2996
        %2998 = vrot.lane.b32.xlu0 %v2970, 40
        %v2999 = vpop.permute.xlu0 %2998
        %3000 = vrot.lane.b32.xlu0 %v2971, 40
        %v3001 = vpop.permute.xlu0 %3000
        %3002 = vrot.lane.b32.xlu0 %v2972, 40
        %v3003 = vpop.permute.xlu0 %3002
        %3004 = vrot.lane.b32.xlu0 %v2973, 40
        %v3005 = vpop.permute.xlu0 %3004
        %vm3022 = vcmask 392512
        %3023 = vst.msk [vmem:[#allocation4] sm:$0xff] %vm3022, %v2975
        %3024 = vst.msk [vmem:[#allocation4 + $0x8] sm:$0xff] %vm3022, %v2977
        %3025 = vst.msk [vmem:[#allocation4 + $0x10] sm:$0xff] %vm3022, %v2979
        %3026 = vst.msk [vmem:[#allocation4 + $0x18] sm:$0xff] %vm3022, %v2981
        %3027 = vst.msk [vmem:[#allocation4 + $0x20] sm:$0xff] %vm3022, %v2983
        %3028 = vst.msk [vmem:[#allocation4 + $0x28] sm:$0xff] %vm3022, %v2985
        %3029 = vst.msk [vmem:[#allocation4 + $0x30] sm:$0xff] %vm3022, %v2987
        %3030 = vst.msk [vmem:[#allocation4 + $0x38] sm:$0xff] %vm3022, %v2989
        %3031 = vst.msk [vmem:[#allocation4 + $0x40] sm:$0xff] %vm3022, %v2991
        %3032 = vst.msk [vmem:[#allocation4 + $0x48] sm:$0xff] %vm3022, %v2993
        %3033 = vst.msk [vmem:[#allocation4 + $0x50] sm:$0xff] %vm3022, %v2995
        %3034 = vst.msk [vmem:[#allocation4 + $0x58] sm:$0xff] %vm3022, %v2997
        %3035 = vst.msk [vmem:[#allocation4 + $0x60] sm:$0xff] %vm3022, %v2999
        %3036 = vst.msk [vmem:[#allocation4 + $0x68] sm:$0xff] %vm3022, %v3001
        %3037 = vst.msk [vmem:[#allocation4 + $0x70] sm:$0xff] %vm3022, %v3003
        %3038 = vst.msk [vmem:[#allocation4 + $0x78] sm:$0xff] %vm3022, %v3005
        %s3039 = scalar_lea.vmem [#allocation2], 40
        %v3040 = vld [vmem:[%s3039 + $0x4] sm:$0x8]
        %v3041 = vld [vmem:[%s3039 + $0x8] sm:$0xf]
        %v3042 = vld [vmem:[%s3039 + $0xc] sm:$0xf]
        %v3043 = vld [vmem:[%s3039 + $0x18] sm:$0x8]
        %v3044 = vld [vmem:[%s3039 + $0x1c] sm:$0xf]
        %v3045 = vld [vmem:[%s3039 + $0x20] sm:$0xf]
        %v3046 = vld [vmem:[%s3039 + $0x2c] sm:$0x8]
        %v3047 = vld [vmem:[%s3039 + $0x30] sm:$0xf]
        %v3048 = vld [vmem:[%s3039 + $0x34] sm:$0xf]
        %v3049 = vld [vmem:[%s3039 + $0x40] sm:$0x8]
        %v3050 = vld [vmem:[%s3039 + $0x44] sm:$0xf]
        %v3051 = vld [vmem:[%s3039 + $0x48] sm:$0xf]
        %v3052 = vld [vmem:[%s3039 + $0x54] sm:$0x8]
        %v3053 = vld [vmem:[%s3039 + $0x58] sm:$0xf]
        %v3054 = vld [vmem:[%s3039 + $0x5c] sm:$0xf]
        %v3055 = vld [vmem:[%s3039 + $0x68] sm:$0x8]
        %v3056 = vld [vmem:[%s3039 + $0x6c] sm:$0xf]
        %v3057 = vld [vmem:[%s3039 + $0x70] sm:$0xf]
        %v3058 = vld [vmem:[%s3039 + $0x7c] sm:$0x8]
        %v3059 = vld [vmem:[%s3039 + $0x80] sm:$0xf]
        %v3060 = vld [vmem:[%s3039 + $0x84] sm:$0xf]
        %v3061 = vld [vmem:[%s3039 + $0x90] sm:$0x8]
        %v3062 = vld [vmem:[%s3039 + $0x94] sm:$0xf]
        %v3063 = vld [vmem:[%s3039 + $0x98] sm:$0xf]
        %v3064 = vld [vmem:[%s3039 + $0xa4] sm:$0x8]
        %v3065 = vld [vmem:[%s3039 + $0xa8] sm:$0xf]
        %v3066 = vld [vmem:[%s3039 + $0xac] sm:$0xf]
        %v3067 = vld [vmem:[%s3039 + $0xb8] sm:$0x8]
        %v3068 = vld [vmem:[%s3039 + $0xbc] sm:$0xf]
        %v3069 = vld [vmem:[%s3039 + $0xc0] sm:$0xf]
        %v3070 = vld [vmem:[%s3039 + $0xcc] sm:$0x8]
        %v3071 = vld [vmem:[%s3039 + $0xd0] sm:$0xf]
        %v3072 = vld [vmem:[%s3039 + $0xd4] sm:$0xf]
        %v3073 = vld [vmem:[%s3039 + $0xe0] sm:$0x8]
        %v3074 = vld [vmem:[%s3039 + $0xe4] sm:$0xf]
        %v3075 = vld [vmem:[%s3039 + $0xe8] sm:$0xf]
        %v3076 = vld [vmem:[%s3039 + $0xf4] sm:$0x8]
        %v3077 = vld [vmem:[%s3039 + $0xf8] sm:$0xf]
        %v3078 = vld [vmem:[%s3039 + $0xfc] sm:$0xf]
        %v3079 = vld [vmem:[%s3039 + $0x108] sm:$0x8]
        %v3080 = vld [vmem:[%s3039 + $0x10c] sm:$0xf]
        %v3081 = vld [vmem:[%s3039 + $0x110] sm:$0xf]
        %v3082 = vld [vmem:[%s3039 + $0x11c] sm:$0x8]
        %v3083 = vld [vmem:[%s3039 + $0x120] sm:$0xf]
        %v3084 = vld [vmem:[%s3039 + $0x124] sm:$0xf]
        %v3085 = vld [vmem:[%s3039 + $0x130] sm:$0x8]
        %v3086 = vld [vmem:[%s3039 + $0x134] sm:$0xf]
        %v3087 = vld [vmem:[%s3039 + $0x138] sm:$0xf]
        %v3089 = vshrl.u32 %v3040, 16
        %v3091 = vrot.slane %v3089, 7
        %v3092 = vrot.slane %v3091, 4
        %v3094 = vshrl.u32 %v3041, 16
        %v3096 = vrot.slane %v3094, 7
        %v3097 = vshll.u32 %v3041, 16
        %v3099 = vor.u32 %v3096, %v3097
        %v3100 = vsel %vm645, %v3092, %v3099
        %v3101 = vrot.slane %v3096, 4
        %v3103 = vshrl.u32 %v3042, 16
        %v3105 = vrot.slane %v3103, 7
        %v3106 = vshll.u32 %v3042, 16
        %v3108 = vor.u32 %v3105, %v3106
        %v3109 = vsel %vm645, %v3101, %v3108
        %v3111 = vshrl.u32 %v3043, 16
        %v3113 = vrot.slane %v3111, 7
        %v3114 = vrot.slane %v3113, 4
        %v3116 = vshrl.u32 %v3044, 16
        %v3118 = vrot.slane %v3116, 7
        %v3119 = vshll.u32 %v3044, 16
        %v3121 = vor.u32 %v3118, %v3119
        %v3122 = vsel %vm645, %v3114, %v3121
        %v3123 = vrot.slane %v3118, 4
        %v3125 = vshrl.u32 %v3045, 16
        %v3127 = vrot.slane %v3125, 7
        %v3128 = vshll.u32 %v3045, 16
        %v3130 = vor.u32 %v3127, %v3128
        %v3131 = vsel %vm645, %v3123, %v3130
        %v3133 = vshrl.u32 %v3046, 16
        %v3135 = vrot.slane %v3133, 7
        %v3136 = vrot.slane %v3135, 4
        %v3138 = vshrl.u32 %v3047, 16
        %v3140 = vrot.slane %v3138, 7
        %v3141 = vshll.u32 %v3047, 16
        %v3143 = vor.u32 %v3140, %v3141
        %v3144 = vsel %vm645, %v3136, %v3143
        %v3145 = vrot.slane %v3140, 4
        %v3147 = vshrl.u32 %v3048, 16
        %v3149 = vrot.slane %v3147, 7
        %v3150 = vshll.u32 %v3048, 16
        %v3152 = vor.u32 %v3149, %v3150
        %v3153 = vsel %vm645, %v3145, %v3152
        %v3155 = vshrl.u32 %v3049, 16
        %v3157 = vrot.slane %v3155, 7
        %v3158 = vrot.slane %v3157, 4
        %v3160 = vshrl.u32 %v3050, 16
        %v3162 = vrot.slane %v3160, 7
        %v3163 = vshll.u32 %v3050, 16
        %v3165 = vor.u32 %v3162, %v3163
        %v3166 = vsel %vm645, %v3158, %v3165
        %v3167 = vrot.slane %v3162, 4
        %v3169 = vshrl.u32 %v3051, 16
        %v3171 = vrot.slane %v3169, 7
        %v3172 = vshll.u32 %v3051, 16
        %v3174 = vor.u32 %v3171, %v3172
        %v3175 = vsel %vm645, %v3167, %v3174
        %v3177 = vshrl.u32 %v3052, 16
        %v3179 = vrot.slane %v3177, 7
        %v3180 = vrot.slane %v3179, 4
        %v3182 = vshrl.u32 %v3053, 16
        %v3184 = vrot.slane %v3182, 7
        %v3185 = vshll.u32 %v3053, 16
        %v3187 = vor.u32 %v3184, %v3185
        %v3188 = vsel %vm645, %v3180, %v3187
        %v3189 = vrot.slane %v3184, 4
        %v3191 = vshrl.u32 %v3054, 16
        %v3193 = vrot.slane %v3191, 7
        %v3194 = vshll.u32 %v3054, 16
        %v3196 = vor.u32 %v3193, %v3194
        %v3197 = vsel %vm645, %v3189, %v3196
        %v3199 = vshrl.u32 %v3055, 16
        %v3201 = vrot.slane %v3199, 7
        %v3202 = vrot.slane %v3201, 4
        %v3204 = vshrl.u32 %v3056, 16
        %v3206 = vrot.slane %v3204, 7
        %v3207 = vshll.u32 %v3056, 16
        %v3209 = vor.u32 %v3206, %v3207
        %v3210 = vsel %vm645, %v3202, %v3209
        %v3211 = vrot.slane %v3206, 4
        %v3213 = vshrl.u32 %v3057, 16
        %v3215 = vrot.slane %v3213, 7
        %v3216 = vshll.u32 %v3057, 16
        %v3218 = vor.u32 %v3215, %v3216
        %v3219 = vsel %vm645, %v3211, %v3218
        %v3221 = vshrl.u32 %v3058, 16
        %v3223 = vrot.slane %v3221, 7
        %v3224 = vrot.slane %v3223, 4
        %v3226 = vshrl.u32 %v3059, 16
        %v3228 = vrot.slane %v3226, 7
        %v3229 = vshll.u32 %v3059, 16
        %v3231 = vor.u32 %v3228, %v3229
        %v3232 = vsel %vm645, %v3224, %v3231
        %v3233 = vrot.slane %v3228, 4
        %v3235 = vshrl.u32 %v3060, 16
        %v3237 = vrot.slane %v3235, 7
        %v3238 = vshll.u32 %v3060, 16
        %v3240 = vor.u32 %v3237, %v3238
        %v3241 = vsel %vm645, %v3233, %v3240
        %v3243 = vshrl.u32 %v3061, 16
        %v3245 = vrot.slane %v3243, 7
        %v3246 = vrot.slane %v3245, 4
        %v3248 = vshrl.u32 %v3062, 16
        %v3250 = vrot.slane %v3248, 7
        %v3251 = vshll.u32 %v3062, 16
        %v3253 = vor.u32 %v3250, %v3251
        %v3254 = vsel %vm645, %v3246, %v3253
        %v3255 = vrot.slane %v3250, 4
        %v3257 = vshrl.u32 %v3063, 16
        %v3259 = vrot.slane %v3257, 7
        %v3260 = vshll.u32 %v3063, 16
        %v3262 = vor.u32 %v3259, %v3260
        %v3263 = vsel %vm645, %v3255, %v3262
        %v3265 = vshrl.u32 %v3064, 16
        %v3267 = vrot.slane %v3265, 7
        %v3268 = vrot.slane %v3267, 4
        %v3270 = vshrl.u32 %v3065, 16
        %v3272 = vrot.slane %v3270, 7
        %v3273 = vshll.u32 %v3065, 16
        %v3275 = vor.u32 %v3272, %v3273
        %v3276 = vsel %vm645, %v3268, %v3275
        %v3277 = vrot.slane %v3272, 4
        %v3279 = vshrl.u32 %v3066, 16
        %v3281 = vrot.slane %v3279, 7
        %v3282 = vshll.u32 %v3066, 16
        %v3284 = vor.u32 %v3281, %v3282
        %v3285 = vsel %vm645, %v3277, %v3284
        %v3287 = vshrl.u32 %v3067, 16
        %v3289 = vrot.slane %v3287, 7
        %v3290 = vrot.slane %v3289, 4
        %v3292 = vshrl.u32 %v3068, 16
        %v3294 = vrot.slane %v3292, 7
        %v3295 = vshll.u32 %v3068, 16
        %v3297 = vor.u32 %v3294, %v3295
        %v3298 = vsel %vm645, %v3290, %v3297
        %v3299 = vrot.slane %v3294, 4
        %v3301 = vshrl.u32 %v3069, 16
        %v3303 = vrot.slane %v3301, 7
        %v3304 = vshll.u32 %v3069, 16
        %v3306 = vor.u32 %v3303, %v3304
        %v3307 = vsel %vm645, %v3299, %v3306
        %v3309 = vshrl.u32 %v3070, 16
        %v3311 = vrot.slane %v3309, 7
        %v3312 = vrot.slane %v3311, 4
        %v3314 = vshrl.u32 %v3071, 16
        %v3316 = vrot.slane %v3314, 7
        %v3317 = vshll.u32 %v3071, 16
        %v3319 = vor.u32 %v3316, %v3317
        %v3320 = vsel %vm645, %v3312, %v3319
        %v3321 = vrot.slane %v3316, 4
        %v3323 = vshrl.u32 %v3072, 16
        %v3325 = vrot.slane %v3323, 7
        %v3326 = vshll.u32 %v3072, 16
        %v3328 = vor.u32 %v3325, %v3326
        %v3329 = vsel %vm645, %v3321, %v3328
        %v3331 = vshrl.u32 %v3073, 16
        %v3333 = vrot.slane %v3331, 7
        %v3334 = vrot.slane %v3333, 4
        %v3336 = vshrl.u32 %v3074, 16
        %v3338 = vrot.slane %v3336, 7
        %v3339 = vshll.u32 %v3074, 16
        %v3341 = vor.u32 %v3338, %v3339
        %v3342 = vsel %vm645, %v3334, %v3341
        %v3343 = vrot.slane %v3338, 4
        %v3345 = vshrl.u32 %v3075, 16
        %v3347 = vrot.slane %v3345, 7
        %v3348 = vshll.u32 %v3075, 16
        %v3350 = vor.u32 %v3347, %v3348
        %v3351 = vsel %vm645, %v3343, %v3350
        %v3353 = vshrl.u32 %v3076, 16
        %v3355 = vrot.slane %v3353, 7
        %v3356 = vrot.slane %v3355, 4
        %v3358 = vshrl.u32 %v3077, 16
        %v3360 = vrot.slane %v3358, 7
        %v3361 = vshll.u32 %v3077, 16
        %v3363 = vor.u32 %v3360, %v3361
        %v3364 = vsel %vm645, %v3356, %v3363
        %v3365 = vrot.slane %v3360, 4
        %v3367 = vshrl.u32 %v3078, 16
        %v3369 = vrot.slane %v3367, 7
        %v3370 = vshll.u32 %v3078, 16
        %v3372 = vor.u32 %v3369, %v3370
        %v3373 = vsel %vm645, %v3365, %v3372
        %v3375 = vshrl.u32 %v3079, 16
        %v3377 = vrot.slane %v3375, 7
        %v3378 = vrot.slane %v3377, 4
        %v3380 = vshrl.u32 %v3080, 16
        %v3382 = vrot.slane %v3380, 7
        %v3383 = vshll.u32 %v3080, 16
        %v3385 = vor.u32 %v3382, %v3383
        %v3386 = vsel %vm645, %v3378, %v3385
        %v3387 = vrot.slane %v3382, 4
        %v3389 = vshrl.u32 %v3081, 16
        %v3391 = vrot.slane %v3389, 7
        %v3392 = vshll.u32 %v3081, 16
        %v3394 = vor.u32 %v3391, %v3392
        %v3395 = vsel %vm645, %v3387, %v3394
        %v3397 = vshrl.u32 %v3082, 16
        %v3399 = vrot.slane %v3397, 7
        %v3400 = vrot.slane %v3399, 4
        %v3402 = vshrl.u32 %v3083, 16
        %v3404 = vrot.slane %v3402, 7
        %v3405 = vshll.u32 %v3083, 16
        %v3407 = vor.u32 %v3404, %v3405
        %v3408 = vsel %vm645, %v3400, %v3407
        %v3409 = vrot.slane %v3404, 4
        %v3411 = vshrl.u32 %v3084, 16
        %v3413 = vrot.slane %v3411, 7
        %v3414 = vshll.u32 %v3084, 16
        %v3416 = vor.u32 %v3413, %v3414
        %v3417 = vsel %vm645, %v3409, %v3416
        %v3419 = vshrl.u32 %v3085, 16
        %v3421 = vrot.slane %v3419, 7
        %v3422 = vrot.slane %v3421, 4
        %v3424 = vshrl.u32 %v3086, 16
        %v3426 = vrot.slane %v3424, 7
        %v3427 = vshll.u32 %v3086, 16
        %v3429 = vor.u32 %v3426, %v3427
        %v3430 = vsel %vm645, %v3422, %v3429
        %v3431 = vrot.slane %v3426, 4
        %v3433 = vshrl.u32 %v3087, 16
        %v3435 = vrot.slane %v3433, 7
        %v3436 = vshll.u32 %v3087, 16
        %v3438 = vor.u32 %v3435, %v3436
        %v3439 = vsel %vm645, %v3431, %v3438
        %v3440 = vunpack.c.l.b16 %v3100
        %v3441 = vunpack.c.l.b16 %v3109
        %v3442 = vunpack.c.l.b16 %v3122
        %v3443 = vunpack.c.l.b16 %v3131
        %v3444 = vunpack.c.l.b16 %v3144
        %v3445 = vunpack.c.l.b16 %v3153
        %v3446 = vunpack.c.l.b16 %v3166
        %v3447 = vunpack.c.l.b16 %v3175
        %v3448 = vunpack.c.l.b16 %v3188
        %v3449 = vunpack.c.l.b16 %v3197
        %v3450 = vunpack.c.l.b16 %v3210
        %v3451 = vunpack.c.l.b16 %v3219
        %v3452 = vunpack.c.l.b16 %v3232
        %v3453 = vunpack.c.l.b16 %v3241
        %v3454 = vunpack.c.l.b16 %v3254
        %v3455 = vunpack.c.l.b16 %v3263
        %v3456 = vunpack.c.l.b16 %v3276
        %v3457 = vunpack.c.l.b16 %v3285
        %v3458 = vunpack.c.l.b16 %v3298
        %v3459 = vunpack.c.l.b16 %v3307
        %v3460 = vunpack.c.l.b16 %v3320
        %v3461 = vunpack.c.l.b16 %v3329
        %v3462 = vunpack.c.l.b16 %v3342
        %v3463 = vunpack.c.l.b16 %v3351
        %v3464 = vunpack.c.l.b16 %v3364
        %v3465 = vunpack.c.l.b16 %v3373
        %v3466 = vunpack.c.l.b16 %v3386
        %v3467 = vunpack.c.l.b16 %v3395
        %v3468 = vunpack.c.l.b16 %v3408
        %v3469 = vunpack.c.l.b16 %v3417
        %v3470 = vunpack.c.l.b16 %v3430
        %v3471 = vunpack.c.l.b16 %v3439
        %v3472 = vpack.c.b16 %v3441, %v3440
        %v3473 = vpack.c.b16 %v3443, %v3442
        %v3474 = vpack.c.b16 %v3445, %v3444
        %v3475 = vpack.c.b16 %v3447, %v3446
        %v3476 = vpack.c.b16 %v3449, %v3448
        %v3477 = vpack.c.b16 %v3451, %v3450
        %v3478 = vpack.c.b16 %v3453, %v3452
        %v3479 = vpack.c.b16 %v3455, %v3454
        %v3480 = vpack.c.b16 %v3457, %v3456
        %v3481 = vpack.c.b16 %v3459, %v3458
        %v3482 = vpack.c.b16 %v3461, %v3460
        %v3483 = vpack.c.b16 %v3463, %v3462
        %v3484 = vpack.c.b16 %v3465, %v3464
        %v3485 = vpack.c.b16 %v3467, %v3466
        %v3486 = vpack.c.b16 %v3469, %v3468
        %v3487 = vpack.c.b16 %v3471, %v3470
        %3488 = vrot.lane.b32.xlu0 %v3472, 48
        %v3489 = vpop.permute.xlu0 %3488
        %3490 = vrot.lane.b32.xlu0 %v3473, 48
        %v3491 = vpop.permute.xlu0 %3490
        %3492 = vrot.lane.b32.xlu0 %v3474, 48
        %v3493 = vpop.permute.xlu0 %3492
        %3494 = vrot.lane.b32.xlu0 %v3475, 48
        %v3495 = vpop.permute.xlu0 %3494
        %3496 = vrot.lane.b32.xlu0 %v3476, 48
        %v3497 = vpop.permute.xlu0 %3496
        %3498 = vrot.lane.b32.xlu0 %v3477, 48
        %v3499 = vpop.permute.xlu0 %3498
        %3500 = vrot.lane.b32.xlu0 %v3478, 48
        %v3501 = vpop.permute.xlu0 %3500
        %3502 = vrot.lane.b32.xlu0 %v3479, 48
        %v3503 = vpop.permute.xlu0 %3502
        %3504 = vrot.lane.b32.xlu0 %v3480, 48
        %v3505 = vpop.permute.xlu0 %3504
        %3506 = vrot.lane.b32.xlu0 %v3481, 48
        %v3507 = vpop.permute.xlu0 %3506
        %3508 = vrot.lane.b32.xlu0 %v3482, 48
        %v3509 = vpop.permute.xlu0 %3508
        %3510 = vrot.lane.b32.xlu0 %v3483, 48
        %v3511 = vpop.permute.xlu0 %3510
        %3512 = vrot.lane.b32.xlu0 %v3484, 48
        %v3513 = vpop.permute.xlu0 %3512
        %3514 = vrot.lane.b32.xlu0 %v3485, 48
        %v3515 = vpop.permute.xlu0 %3514
        %3516 = vrot.lane.b32.xlu0 %v3486, 48
        %v3517 = vpop.permute.xlu0 %3516
        %3518 = vrot.lane.b32.xlu0 %v3487, 48
        %v3519 = vpop.permute.xlu0 %3518
        %vm3536 = vcmask 458112
        %3537 = vst.msk [vmem:[#allocation4] sm:$0xff] %vm3536, %v3489
        %3538 = vst.msk [vmem:[#allocation4 + $0x8] sm:$0xff] %vm3536, %v3491
        %3539 = vst.msk [vmem:[#allocation4 + $0x10] sm:$0xff] %vm3536, %v3493
        %3540 = vst.msk [vmem:[#allocation4 + $0x18] sm:$0xff] %vm3536, %v3495
        %3541 = vst.msk [vmem:[#allocation4 + $0x20] sm:$0xff] %vm3536, %v3497
        %3542 = vst.msk [vmem:[#allocation4 + $0x28] sm:$0xff] %vm3536, %v3499
        %3543 = vst.msk [vmem:[#allocation4 + $0x30] sm:$0xff] %vm3536, %v3501
        %3544 = vst.msk [vmem:[#allocation4 + $0x38] sm:$0xff] %vm3536, %v3503
        %3545 = vst.msk [vmem:[#allocation4 + $0x40] sm:$0xff] %vm3536, %v3505
        %3546 = vst.msk [vmem:[#allocation4 + $0x48] sm:$0xff] %vm3536, %v3507
        %3547 = vst.msk [vmem:[#allocation4 + $0x50] sm:$0xff] %vm3536, %v3509
        %3548 = vst.msk [vmem:[#allocation4 + $0x58] sm:$0xff] %vm3536, %v3511
        %3549 = vst.msk [vmem:[#allocation4 + $0x60] sm:$0xff] %vm3536, %v3513
        %3550 = vst.msk [vmem:[#allocation4 + $0x68] sm:$0xff] %vm3536, %v3515
        %3551 = vst.msk [vmem:[#allocation4 + $0x70] sm:$0xff] %vm3536, %v3517
        %3552 = vst.msk [vmem:[#allocation4 + $0x78] sm:$0xff] %vm3536, %v3519
        %v3553 = vld [vmem:[%s3039 + $0x8] sm:$0xf]
        %v3554 = vld [vmem:[%s3039 + $0xc] sm:$0xf]
        %v3555 = vld [vmem:[%s3039 + $0x1c] sm:$0xf]
        %v3556 = vld [vmem:[%s3039 + $0x20] sm:$0xf]
        %v3557 = vld [vmem:[%s3039 + $0x30] sm:$0xf]
        %v3558 = vld [vmem:[%s3039 + $0x34] sm:$0xf]
        %v3559 = vld [vmem:[%s3039 + $0x44] sm:$0xf]
        %v3560 = vld [vmem:[%s3039 + $0x48] sm:$0xf]
        %v3561 = vld [vmem:[%s3039 + $0x58] sm:$0xf]
        %v3562 = vld [vmem:[%s3039 + $0x5c] sm:$0xf]
        %v3563 = vld [vmem:[%s3039 + $0x6c] sm:$0xf]
        %v3564 = vld [vmem:[%s3039 + $0x70] sm:$0xf]
        %v3565 = vld [vmem:[%s3039 + $0x80] sm:$0xf]
        %v3566 = vld [vmem:[%s3039 + $0x84] sm:$0xf]
        %v3567 = vld [vmem:[%s3039 + $0x94] sm:$0xf]
        %v3568 = vld [vmem:[%s3039 + $0x98] sm:$0xf]
        %v3569 = vld [vmem:[%s3039 + $0xa8] sm:$0xf]
        %v3570 = vld [vmem:[%s3039 + $0xac] sm:$0xf]
        %v3571 = vld [vmem:[%s3039 + $0xbc] sm:$0xf]
        %v3572 = vld [vmem:[%s3039 + $0xc0] sm:$0xf]
        %v3573 = vld [vmem:[%s3039 + $0xd0] sm:$0xf]
        %v3574 = vld [vmem:[%s3039 + $0xd4] sm:$0xf]
        %v3575 = vld [vmem:[%s3039 + $0xe4] sm:$0xf]
        %v3576 = vld [vmem:[%s3039 + $0xe8] sm:$0xf]
        %v3577 = vld [vmem:[%s3039 + $0xf8] sm:$0xf]
        %v3578 = vld [vmem:[%s3039 + $0xfc] sm:$0xf]
        %v3579 = vld [vmem:[%s3039 + $0x10c] sm:$0xf]
        %v3580 = vld [vmem:[%s3039 + $0x110] sm:$0xf]
        %v3581 = vld [vmem:[%s3039 + $0x120] sm:$0xf]
        %v3582 = vld [vmem:[%s3039 + $0x124] sm:$0xf]
        %v3583 = vld [vmem:[%s3039 + $0x134] sm:$0xf]
        %v3584 = vld [vmem:[%s3039 + $0x138] sm:$0xf]
        %v3617 = vunpack.c.l.b16 %v3553
        %v3618 = vunpack.c.l.b16 %v3554
        %v3619 = vunpack.c.l.b16 %v3555
        %v3620 = vunpack.c.l.b16 %v3556
        %v3621 = vunpack.c.l.b16 %v3557
        %v3622 = vunpack.c.l.b16 %v3558
        %v3623 = vunpack.c.l.b16 %v3559
        %v3624 = vunpack.c.l.b16 %v3560
        %v3625 = vunpack.c.l.b16 %v3561
        %v3626 = vunpack.c.l.b16 %v3562
        %v3627 = vunpack.c.l.b16 %v3563
        %v3628 = vunpack.c.l.b16 %v3564
        %v3629 = vunpack.c.l.b16 %v3565
        %v3630 = vunpack.c.l.b16 %v3566
        %v3631 = vunpack.c.l.b16 %v3567
        %v3632 = vunpack.c.l.b16 %v3568
        %v3633 = vunpack.c.l.b16 %v3569
        %v3634 = vunpack.c.l.b16 %v3570
        %v3635 = vunpack.c.l.b16 %v3571
        %v3636 = vunpack.c.l.b16 %v3572
        %v3637 = vunpack.c.l.b16 %v3573
        %v3638 = vunpack.c.l.b16 %v3574
        %v3639 = vunpack.c.l.b16 %v3575
        %v3640 = vunpack.c.l.b16 %v3576
        %v3641 = vunpack.c.l.b16 %v3577
        %v3642 = vunpack.c.l.b16 %v3578
        %v3643 = vunpack.c.l.b16 %v3579
        %v3644 = vunpack.c.l.b16 %v3580
        %v3645 = vunpack.c.l.b16 %v3581
        %v3646 = vunpack.c.l.b16 %v3582
        %v3647 = vunpack.c.l.b16 %v3583
        %v3648 = vunpack.c.l.b16 %v3584
        %v3649 = vpack.c.b16 %v3618, %v3617
        %v3650 = vpack.c.b16 %v3620, %v3619
        %v3651 = vpack.c.b16 %v3622, %v3621
        %v3652 = vpack.c.b16 %v3624, %v3623
        %v3653 = vpack.c.b16 %v3626, %v3625
        %v3654 = vpack.c.b16 %v3628, %v3627
        %v3655 = vpack.c.b16 %v3630, %v3629
        %v3656 = vpack.c.b16 %v3632, %v3631
        %v3657 = vpack.c.b16 %v3634, %v3633
        %v3658 = vpack.c.b16 %v3636, %v3635
        %v3659 = vpack.c.b16 %v3638, %v3637
        %v3660 = vpack.c.b16 %v3640, %v3639
        %v3661 = vpack.c.b16 %v3642, %v3641
        %v3662 = vpack.c.b16 %v3644, %v3643
        %v3663 = vpack.c.b16 %v3646, %v3645
        %v3664 = vpack.c.b16 %v3648, %v3647
        %3665 = vrot.lane.b32.xlu0 %v3649, 56
        %v3666 = vpop.permute.xlu0 %3665
        %3667 = vrot.lane.b32.xlu0 %v3650, 56
        %v3668 = vpop.permute.xlu0 %3667
        %3669 = vrot.lane.b32.xlu0 %v3651, 56
        %v3670 = vpop.permute.xlu0 %3669
        %3671 = vrot.lane.b32.xlu0 %v3652, 56
        %v3672 = vpop.permute.xlu0 %3671
        %3673 = vrot.lane.b32.xlu0 %v3653, 56
        %v3674 = vpop.permute.xlu0 %3673
        %3675 = vrot.lane.b32.xlu0 %v3654, 56
        %v3676 = vpop.permute.xlu0 %3675
        %3677 = vrot.lane.b32.xlu0 %v3655, 56
        %v3678 = vpop.permute.xlu0 %3677
        %3679 = vrot.lane.b32.xlu0 %v3656, 56
        %v3680 = vpop.permute.xlu0 %3679
        %3681 = vrot.lane.b32.xlu0 %v3657, 56
        %v3682 = vpop.permute.xlu0 %3681
        %3683 = vrot.lane.b32.xlu0 %v3658, 56
        %v3684 = vpop.permute.xlu0 %3683
        %3685 = vrot.lane.b32.xlu0 %v3659, 56
        %v3686 = vpop.permute.xlu0 %3685
        %3687 = vrot.lane.b32.xlu0 %v3660, 56
        %v3688 = vpop.permute.xlu0 %3687
        %3689 = vrot.lane.b32.xlu0 %v3661, 56
        %v3690 = vpop.permute.xlu0 %3689
        %3691 = vrot.lane.b32.xlu0 %v3662, 56
        %v3692 = vpop.permute.xlu0 %3691
        %3693 = vrot.lane.b32.xlu0 %v3663, 56
        %v3694 = vpop.permute.xlu0 %3693
        %3695 = vrot.lane.b32.xlu0 %v3664, 56
        %v3696 = vpop.permute.xlu0 %3695
        %vm3713 = vcmask 523712
        %3714 = vst.msk [vmem:[#allocation4] sm:$0xff] %vm3713, %v3666
        %3715 = vst.msk [vmem:[#allocation4 + $0x8] sm:$0xff] %vm3713, %v3668
        %3716 = vst.msk [vmem:[#allocation4 + $0x10] sm:$0xff] %vm3713, %v3670
        %3717 = vst.msk [vmem:[#allocation4 + $0x18] sm:$0xff] %vm3713, %v3672
        %3718 = vst.msk [vmem:[#allocation4 + $0x20] sm:$0xff] %vm3713, %v3674
        %3719 = vst.msk [vmem:[#allocation4 + $0x28] sm:$0xff] %vm3713, %v3676
        %3720 = vst.msk [vmem:[#allocation4 + $0x30] sm:$0xff] %vm3713, %v3678
        %3721 = vst.msk [vmem:[#allocation4 + $0x38] sm:$0xff] %vm3713, %v3680
        %3722 = vst.msk [vmem:[#allocation4 + $0x40] sm:$0xff] %vm3713, %v3682
        %3723 = vst.msk [vmem:[#allocation4 + $0x48] sm:$0xff] %vm3713, %v3684
        %3724 = vst.msk [vmem:[#allocation4 + $0x50] sm:$0xff] %vm3713, %v3686
        %3725 = vst.msk [vmem:[#allocation4 + $0x58] sm:$0xff] %vm3713, %v3688
        %3726 = vst.msk [vmem:[#allocation4 + $0x60] sm:$0xff] %vm3713, %v3690
        %3727 = vst.msk [vmem:[#allocation4 + $0x68] sm:$0xff] %vm3713, %v3692
        %3728 = vst.msk [vmem:[#allocation4 + $0x70] sm:$0xff] %vm3713, %v3694
        %3729 = vst.msk [vmem:[#allocation4 + $0x78] sm:$0xff] %vm3713, %v3696
        %v3730 = vld [vmem:[%s3039 + $0x8] sm:$0xf]
        %v3731 = vld [vmem:[%s3039 + $0xc] sm:$0xf]
        %v3732 = vld [vmem:[%s3039 + $0x10] sm:$0x1]
        %v3733 = vld [vmem:[%s3039 + $0x1c] sm:$0xf]
        %v3734 = vld [vmem:[%s3039 + $0x20] sm:$0xf]
        %v3735 = vld [vmem:[%s3039 + $0x24] sm:$0x1]
        %v3736 = vld [vmem:[%s3039 + $0x30] sm:$0xf]
        %v3737 = vld [vmem:[%s3039 + $0x34] sm:$0xf]
        %v3738 = vld [vmem:[%s3039 + $0x38] sm:$0x1]
        %v3739 = vld [vmem:[%s3039 + $0x44] sm:$0xf]
        %v3740 = vld [vmem:[%s3039 + $0x48] sm:$0xf]
        %v3741 = vld [vmem:[%s3039 + $0x4c] sm:$0x1]
        %v3742 = vld [vmem:[%s3039 + $0x58] sm:$0xf]
        %v3743 = vld [vmem:[%s3039 + $0x5c] sm:$0xf]
        %v3744 = vld [vmem:[%s3039 + $0x60] sm:$0x1]
        %v3745 = vld [vmem:[%s3039 + $0x6c] sm:$0xf]
        %v3746 = vld [vmem:[%s3039 + $0x70] sm:$0xf]
        %v3747 = vld [vmem:[%s3039 + $0x74] sm:$0x1]
        %v3748 = vld [vmem:[%s3039 + $0x80] sm:$0xf]
        %v3749 = vld [vmem:[%s3039 + $0x84] sm:$0xf]
        %v3750 = vld [vmem:[%s3039 + $0x88] sm:$0x1]
        %v3751 = vld [vmem:[%s3039 + $0x94] sm:$0xf]
        %v3752 = vld [vmem:[%s3039 + $0x98] sm:$0xf]
        %v3753 = vld [vmem:[%s3039 + $0x9c] sm:$0x1]
        %v3754 = vld [vmem:[%s3039 + $0xa8] sm:$0xf]
        %v3755 = vld [vmem:[%s3039 + $0xac] sm:$0xf]
        %v3756 = vld [vmem:[%s3039 + $0xb0] sm:$0x1]
        %v3757 = vld [vmem:[%s3039 + $0xbc] sm:$0xf]
        %v3758 = vld [vmem:[%s3039 + $0xc0] sm:$0xf]
        %v3759 = vld [vmem:[%s3039 + $0xc4] sm:$0x1]
        %v3760 = vld [vmem:[%s3039 + $0xd0] sm:$0xf]
        %v3761 = vld [vmem:[%s3039 + $0xd4] sm:$0xf]
        %v3762 = vld [vmem:[%s3039 + $0xd8] sm:$0x1]
        %v3763 = vld [vmem:[%s3039 + $0xe4] sm:$0xf]
        %v3764 = vld [vmem:[%s3039 + $0xe8] sm:$0xf]
        %v3765 = vld [vmem:[%s3039 + $0xec] sm:$0x1]
        %v3766 = vld [vmem:[%s3039 + $0xf8] sm:$0xf]
        %v3767 = vld [vmem:[%s3039 + $0xfc] sm:$0xf]
        %v3768 = vld [vmem:[%s3039 + $0x100] sm:$0x1]
        %v3769 = vld [vmem:[%s3039 + $0x10c] sm:$0xf]
        %v3770 = vld [vmem:[%s3039 + $0x110] sm:$0xf]
        %v3771 = vld [vmem:[%s3039 + $0x114] sm:$0x1]
        %v3772 = vld [vmem:[%s3039 + $0x120] sm:$0xf]
        %v3773 = vld [vmem:[%s3039 + $0x124] sm:$0xf]
        %v3774 = vld [vmem:[%s3039 + $0x128] sm:$0x1]
        %v3775 = vld [vmem:[%s3039 + $0x134] sm:$0xf]
        %v3776 = vld [vmem:[%s3039 + $0x138] sm:$0xf]
        %v3777 = vld [vmem:[%s3039 + $0x13c] sm:$0x1]
        %v3779 = vshrl.u32 %v3730, 16
        %v3781 = vrot.slane %v3779, 4
        %v3782 = vshll.u32 %v3730, 16
        %v3784 = vrot.slane %v3782, 5
        %v3785 = vor.u32 %v3781, %v3784
        %v3786 = vrot.slane %v3785, 4
        %v3788 = vshll.u32 %v3731, 16
        %v3790 = vrot.slane %v3788, 5
        %v3791 = vsel %vm1306, %v3786, %v3790
        %v3792 = vshrl.u32 %v3731, 16
        %v3794 = vrot.slane %v3792, 4
        %v3795 = vor.u32 %v3794, %v3790
        %v3796 = vrot.slane %v3795, 4
        %v3798 = vshll.u32 %v3732, 16
        %v3800 = vrot.slane %v3798, 5
        %v3801 = vsel %vm1306, %v3796, %v3800
        %v3803 = vshrl.u32 %v3733, 16
        %v3805 = vrot.slane %v3803, 4
        %v3806 = vshll.u32 %v3733, 16
        %v3808 = vrot.slane %v3806, 5
        %v3809 = vor.u32 %v3805, %v3808
        %v3810 = vrot.slane %v3809, 4
        %v3812 = vshll.u32 %v3734, 16
        %v3814 = vrot.slane %v3812, 5
        %v3815 = vsel %vm1306, %v3810, %v3814
        %v3816 = vshrl.u32 %v3734, 16
        %v3818 = vrot.slane %v3816, 4
        %v3819 = vor.u32 %v3818, %v3814
        %v3820 = vrot.slane %v3819, 4
        %v3822 = vshll.u32 %v3735, 16
        %v3824 = vrot.slane %v3822, 5
        %v3825 = vsel %vm1306, %v3820, %v3824
        %v3827 = vshrl.u32 %v3736, 16
        %v3829 = vrot.slane %v3827, 4
        %v3830 = vshll.u32 %v3736, 16
        %v3832 = vrot.slane %v3830, 5
        %v3833 = vor.u32 %v3829, %v3832
        %v3834 = vrot.slane %v3833, 4
        %v3836 = vshll.u32 %v3737, 16
        %v3838 = vrot.slane %v3836, 5
        %v3839 = vsel %vm1306, %v3834, %v3838
        %v3840 = vshrl.u32 %v3737, 16
        %v3842 = vrot.slane %v3840, 4
        %v3843 = vor.u32 %v3842, %v3838
        %v3844 = vrot.slane %v3843, 4
        %v3846 = vshll.u32 %v3738, 16
        %v3848 = vrot.slane %v3846, 5
        %v3849 = vsel %vm1306, %v3844, %v3848
        %v3851 = vshrl.u32 %v3739, 16
        %v3853 = vrot.slane %v3851, 4
        %v3854 = vshll.u32 %v3739, 16
        %v3856 = vrot.slane %v3854, 5
        %v3857 = vor.u32 %v3853, %v3856
        %v3858 = vrot.slane %v3857, 4
        %v3860 = vshll.u32 %v3740, 16
        %v3862 = vrot.slane %v3860, 5
        %v3863 = vsel %vm1306, %v3858, %v3862
        %v3864 = vshrl.u32 %v3740, 16
        %v3866 = vrot.slane %v3864, 4
        %v3867 = vor.u32 %v3866, %v3862
        %v3868 = vrot.slane %v3867, 4
        %v3870 = vshll.u32 %v3741, 16
        %v3872 = vrot.slane %v3870, 5
        %v3873 = vsel %vm1306, %v3868, %v3872
        %v3875 = vshrl.u32 %v3742, 16
        %v3877 = vrot.slane %v3875, 4
        %v3878 = vshll.u32 %v3742, 16
        %v3880 = vrot.slane %v3878, 5
        %v3881 = vor.u32 %v3877, %v3880
        %v3882 = vrot.slane %v3881, 4
        %v3884 = vshll.u32 %v3743, 16
        %v3886 = vrot.slane %v3884, 5
        %v3887 = vsel %vm1306, %v3882, %v3886
        %v3888 = vshrl.u32 %v3743, 16
        %v3890 = vrot.slane %v3888, 4
        %v3891 = vor.u32 %v3890, %v3886
        %v3892 = vrot.slane %v3891, 4
        %v3894 = vshll.u32 %v3744, 16
        %v3896 = vrot.slane %v3894, 5
        %v3897 = vsel %vm1306, %v3892, %v3896
        %v3899 = vshrl.u32 %v3745, 16
        %v3901 = vrot.slane %v3899, 4
        %v3902 = vshll.u32 %v3745, 16
        %v3904 = vrot.slane %v3902, 5
        %v3905 = vor.u32 %v3901, %v3904
        %v3906 = vrot.slane %v3905, 4
        %v3908 = vshll.u32 %v3746, 16
        %v3910 = vrot.slane %v3908, 5
        %v3911 = vsel %vm1306, %v3906, %v3910
        %v3912 = vshrl.u32 %v3746, 16
        %v3914 = vrot.slane %v3912, 4
        %v3915 = vor.u32 %v3914, %v3910
        %v3916 = vrot.slane %v3915, 4
        %v3918 = vshll.u32 %v3747, 16
        %v3920 = vrot.slane %v3918, 5
        %v3921 = vsel %vm1306, %v3916, %v3920
        %v3923 = vshrl.u32 %v3748, 16
        %v3925 = vrot.slane %v3923, 4
        %v3926 = vshll.u32 %v3748, 16
        %v3928 = vrot.slane %v3926, 5
        %v3929 = vor.u32 %v3925, %v3928
        %v3930 = vrot.slane %v3929, 4
        %v3932 = vshll.u32 %v3749, 16
        %v3934 = vrot.slane %v3932, 5
        %v3935 = vsel %vm1306, %v3930, %v3934
        %v3936 = vshrl.u32 %v3749, 16
        %v3938 = vrot.slane %v3936, 4
        %v3939 = vor.u32 %v3938, %v3934
        %v3940 = vrot.slane %v3939, 4
        %v3942 = vshll.u32 %v3750, 16
        %v3944 = vrot.slane %v3942, 5
        %v3945 = vsel %vm1306, %v3940, %v3944
        %v3947 = vshrl.u32 %v3751, 16
        %v3949 = vrot.slane %v3947, 4
        %v3950 = vshll.u32 %v3751, 16
        %v3952 = vrot.slane %v3950, 5
        %v3953 = vor.u32 %v3949, %v3952
        %v3954 = vrot.slane %v3953, 4
        %v3956 = vshll.u32 %v3752, 16
        %v3958 = vrot.slane %v3956, 5
        %v3959 = vsel %vm1306, %v3954, %v3958
        %v3960 = vshrl.u32 %v3752, 16
        %v3962 = vrot.slane %v3960, 4
        %v3963 = vor.u32 %v3962, %v3958
        %v3964 = vrot.slane %v3963, 4
        %v3966 = vshll.u32 %v3753, 16
        %v3968 = vrot.slane %v3966, 5
        %v3969 = vsel %vm1306, %v3964, %v3968
        %v3971 = vshrl.u32 %v3754, 16
        %v3973 = vrot.slane %v3971, 4
        %v3974 = vshll.u32 %v3754, 16
        %v3976 = vrot.slane %v3974, 5
        %v3977 = vor.u32 %v3973, %v3976
        %v3978 = vrot.slane %v3977, 4
        %v3980 = vshll.u32 %v3755, 16
        %v3982 = vrot.slane %v3980, 5
        %v3983 = vsel %vm1306, %v3978, %v3982
        %v3984 = vshrl.u32 %v3755, 16
        %v3986 = vrot.slane %v3984, 4
        %v3987 = vor.u32 %v3986, %v3982
        %v3988 = vrot.slane %v3987, 4
        %v3990 = vshll.u32 %v3756, 16
        %v3992 = vrot.slane %v3990, 5
        %v3993 = vsel %vm1306, %v3988, %v3992
        %v3995 = vshrl.u32 %v3757, 16
        %v3997 = vrot.slane %v3995, 4
        %v3998 = vshll.u32 %v3757, 16
        %v4000 = vrot.slane %v3998, 5
        %v4001 = vor.u32 %v3997, %v4000
        %v4002 = vrot.slane %v4001, 4
        %v4004 = vshll.u32 %v3758, 16
        %v4006 = vrot.slane %v4004, 5
        %v4007 = vsel %vm1306, %v4002, %v4006
        %v4008 = vshrl.u32 %v3758, 16
        %v4010 = vrot.slane %v4008, 4
        %v4011 = vor.u32 %v4010, %v4006
        %v4012 = vrot.slane %v4011, 4
        %v4014 = vshll.u32 %v3759, 16
        %v4016 = vrot.slane %v4014, 5
        %v4017 = vsel %vm1306, %v4012, %v4016
        %v4019 = vshrl.u32 %v3760, 16
        %v4021 = vrot.slane %v4019, 4
        %v4022 = vshll.u32 %v3760, 16
        %v4024 = vrot.slane %v4022, 5
        %v4025 = vor.u32 %v4021, %v4024
        %v4026 = vrot.slane %v4025, 4
        %v4028 = vshll.u32 %v3761, 16
        %v4030 = vrot.slane %v4028, 5
        %v4031 = vsel %vm1306, %v4026, %v4030
        %v4032 = vshrl.u32 %v3761, 16
        %v4034 = vrot.slane %v4032, 4
        %v4035 = vor.u32 %v4034, %v4030
        %v4036 = vrot.slane %v4035, 4
        %v4038 = vshll.u32 %v3762, 16
        %v4040 = vrot.slane %v4038, 5
        %v4041 = vsel %vm1306, %v4036, %v4040
        %v4043 = vshrl.u32 %v3763, 16
        %v4045 = vrot.slane %v4043, 4
        %v4046 = vshll.u32 %v3763, 16
        %v4048 = vrot.slane %v4046, 5
        %v4049 = vor.u32 %v4045, %v4048
        %v4050 = vrot.slane %v4049, 4
        %v4052 = vshll.u32 %v3764, 16
        %v4054 = vrot.slane %v4052, 5
        %v4055 = vsel %vm1306, %v4050, %v4054
        %v4056 = vshrl.u32 %v3764, 16
        %v4058 = vrot.slane %v4056, 4
        %v4059 = vor.u32 %v4058, %v4054
        %v4060 = vrot.slane %v4059, 4
        %v4062 = vshll.u32 %v3765, 16
        %v4064 = vrot.slane %v4062, 5
        %v4065 = vsel %vm1306, %v4060, %v4064
        %v4067 = vshrl.u32 %v3766, 16
        %v4069 = vrot.slane %v4067, 4
        %v4070 = vshll.u32 %v3766, 16
        %v4072 = vrot.slane %v4070, 5
        %v4073 = vor.u32 %v4069, %v4072
        %v4074 = vrot.slane %v4073, 4
        %v4076 = vshll.u32 %v3767, 16
        %v4078 = vrot.slane %v4076, 5
        %v4079 = vsel %vm1306, %v4074, %v4078
        %v4080 = vshrl.u32 %v3767, 16
        %v4082 = vrot.slane %v4080, 4
        %v4083 = vor.u32 %v4082, %v4078
        %v4084 = vrot.slane %v4083, 4
        %v4086 = vshll.u32 %v3768, 16
        %v4088 = vrot.slane %v4086, 5
        %v4089 = vsel %vm1306, %v4084, %v4088
        %v4091 = vshrl.u32 %v3769, 16
        %v4093 = vrot.slane %v4091, 4
        %v4094 = vshll.u32 %v3769, 16
        %v4096 = vrot.slane %v4094, 5
        %v4097 = vor.u32 %v4093, %v4096
        %v4098 = vrot.slane %v4097, 4
        %v4100 = vshll.u32 %v3770, 16
        %v4102 = vrot.slane %v4100, 5
        %v4103 = vsel %vm1306, %v4098, %v4102
        %v4104 = vshrl.u32 %v3770, 16
        %v4106 = vrot.slane %v4104, 4
        %v4107 = vor.u32 %v4106, %v4102
        %v4108 = vrot.slane %v4107, 4
        %v4110 = vshll.u32 %v3771, 16
        %v4112 = vrot.slane %v4110, 5
        %v4113 = vsel %vm1306, %v4108, %v4112
        %v4115 = vshrl.u32 %v3772, 16
        %v4117 = vrot.slane %v4115, 4
        %v4118 = vshll.u32 %v3772, 16
        %v4120 = vrot.slane %v4118, 5
        %v4121 = vor.u32 %v4117, %v4120
        %v4122 = vrot.slane %v4121, 4
        %v4124 = vshll.u32 %v3773, 16
        %v4126 = vrot.slane %v4124, 5
        %v4127 = vsel %vm1306, %v4122, %v4126
        %v4128 = vshrl.u32 %v3773, 16
        %v4130 = vrot.slane %v4128, 4
        %v4131 = vor.u32 %v4130, %v4126
        %v4132 = vrot.slane %v4131, 4
        %v4134 = vshll.u32 %v3774, 16
        %v4136 = vrot.slane %v4134, 5
        %v4137 = vsel %vm1306, %v4132, %v4136
        %v4139 = vshrl.u32 %v3775, 16
        %v4141 = vrot.slane %v4139, 4
        %v4142 = vshll.u32 %v3775, 16
        %v4144 = vrot.slane %v4142, 5
        %v4145 = vor.u32 %v4141, %v4144
        %v4146 = vrot.slane %v4145, 4
        %v4148 = vshll.u32 %v3776, 16
        %v4150 = vrot.slane %v4148, 5
        %v4151 = vsel %vm1306, %v4146, %v4150
        %v4152 = vshrl.u32 %v3776, 16
        %v4154 = vrot.slane %v4152, 4
        %v4155 = vor.u32 %v4154, %v4150
        %v4156 = vrot.slane %v4155, 4
        %v4158 = vshll.u32 %v3777, 16
        %v4160 = vrot.slane %v4158, 5
        %v4161 = vsel %vm1306, %v4156, %v4160
        %v4162 = vunpack.c.l.b16 %v3791
        %v4163 = vunpack.c.l.b16 %v3801
        %v4164 = vunpack.c.l.b16 %v3815
        %v4165 = vunpack.c.l.b16 %v3825
        %v4166 = vunpack.c.l.b16 %v3839
        %v4167 = vunpack.c.l.b16 %v3849
        %v4168 = vunpack.c.l.b16 %v3863
        %v4169 = vunpack.c.l.b16 %v3873
        %v4170 = vunpack.c.l.b16 %v3887
        %v4171 = vunpack.c.l.b16 %v3897
        %v4172 = vunpack.c.l.b16 %v3911
        %v4173 = vunpack.c.l.b16 %v3921
        %v4174 = vunpack.c.l.b16 %v3935
        %v4175 = vunpack.c.l.b16 %v3945
        %v4176 = vunpack.c.l.b16 %v3959
        %v4177 = vunpack.c.l.b16 %v3969
        %v4178 = vunpack.c.l.b16 %v3983
        %v4179 = vunpack.c.l.b16 %v3993
        %v4180 = vunpack.c.l.b16 %v4007
        %v4181 = vunpack.c.l.b16 %v4017
        %v4182 = vunpack.c.l.b16 %v4031
        %v4183 = vunpack.c.l.b16 %v4041
        %v4184 = vunpack.c.l.b16 %v4055
        %v4185 = vunpack.c.l.b16 %v4065
        %v4186 = vunpack.c.l.b16 %v4079
        %v4187 = vunpack.c.l.b16 %v4089
        %v4188 = vunpack.c.l.b16 %v4103
        %v4189 = vunpack.c.l.b16 %v4113
        %v4190 = vunpack.c.l.b16 %v4127
        %v4191 = vunpack.c.l.b16 %v4137
        %v4192 = vunpack.c.l.b16 %v4151
        %v4193 = vunpack.c.l.b16 %v4161
        %v4194 = vpack.c.b16 %v4163, %v4162
        %v4195 = vpack.c.b16 %v4165, %v4164
        %v4196 = vpack.c.b16 %v4167, %v4166
        %v4197 = vpack.c.b16 %v4169, %v4168
        %v4198 = vpack.c.b16 %v4171, %v4170
        %v4199 = vpack.c.b16 %v4173, %v4172
        %v4200 = vpack.c.b16 %v4175, %v4174
        %v4201 = vpack.c.b16 %v4177, %v4176
        %v4202 = vpack.c.b16 %v4179, %v4178
        %v4203 = vpack.c.b16 %v4181, %v4180
        %v4204 = vpack.c.b16 %v4183, %v4182
        %v4205 = vpack.c.b16 %v4185, %v4184
        %v4206 = vpack.c.b16 %v4187, %v4186
        %v4207 = vpack.c.b16 %v4189, %v4188
        %v4208 = vpack.c.b16 %v4191, %v4190
        %v4209 = vpack.c.b16 %v4193, %v4192
        %4210 = vrot.lane.b32.xlu0 %v4194, 64
        %v4211 = vpop.permute.xlu0 %4210
        %4212 = vrot.lane.b32.xlu0 %v4195, 64
        %v4213 = vpop.permute.xlu0 %4212
        %4214 = vrot.lane.b32.xlu0 %v4196, 64
        %v4215 = vpop.permute.xlu0 %4214
        %4216 = vrot.lane.b32.xlu0 %v4197, 64
        %v4217 = vpop.permute.xlu0 %4216
        %4218 = vrot.lane.b32.xlu0 %v4198, 64
        %v4219 = vpop.permute.xlu0 %4218
        %4220 = vrot.lane.b32.xlu0 %v4199, 64
        %v4221 = vpop.permute.xlu0 %4220
        %4222 = vrot.lane.b32.xlu0 %v4200, 64
        %v4223 = vpop.permute.xlu0 %4222
        %4224 = vrot.lane.b32.xlu0 %v4201, 64
        %v4225 = vpop.permute.xlu0 %4224
        %4226 = vrot.lane.b32.xlu0 %v4202, 64
        %v4227 = vpop.permute.xlu0 %4226
        %4228 = vrot.lane.b32.xlu0 %v4203, 64
        %v4229 = vpop.permute.xlu0 %4228
        %4230 = vrot.lane.b32.xlu0 %v4204, 64
        %v4231 = vpop.permute.xlu0 %4230
        %4232 = vrot.lane.b32.xlu0 %v4205, 64
        %v4233 = vpop.permute.xlu0 %4232
        %4234 = vrot.lane.b32.xlu0 %v4206, 64
        %v4235 = vpop.permute.xlu0 %4234
        %4236 = vrot.lane.b32.xlu0 %v4207, 64
        %v4237 = vpop.permute.xlu0 %4236
        %4238 = vrot.lane.b32.xlu0 %v4208, 64
        %v4239 = vpop.permute.xlu0 %4238
        %4240 = vrot.lane.b32.xlu0 %v4209, 64
        %v4241 = vpop.permute.xlu0 %4240
        %vm4258 = vcmask 589312
        %4259 = vst.msk [vmem:[#allocation4] sm:$0xff] %vm4258, %v4211
        %4260 = vst.msk [vmem:[#allocation4 + $0x8] sm:$0xff] %vm4258, %v4213
        %4261 = vst.msk [vmem:[#allocation4 + $0x10] sm:$0xff] %vm4258, %v4215
        %4262 = vst.msk [vmem:[#allocation4 + $0x18] sm:$0xff] %vm4258, %v4217
        %4263 = vst.msk [vmem:[#allocation4 + $0x20] sm:$0xff] %vm4258, %v4219
        %4264 = vst.msk [vmem:[#allocation4 + $0x28] sm:$0xff] %vm4258, %v4221
        %4265 = vst.msk [vmem:[#allocation4 + $0x30] sm:$0xff] %vm4258, %v4223
        %4266 = vst.msk [vmem:[#allocation4 + $0x38] sm:$0xff] %vm4258, %v4225
        %4267 = vst.msk [vmem:[#allocation4 + $0x40] sm:$0xff] %vm4258, %v4227
        %4268 = vst.msk [vmem:[#allocation4 + $0x48] sm:$0xff] %vm4258, %v4229
        %4269 = vst.msk [vmem:[#allocation4 + $0x50] sm:$0xff] %vm4258, %v4231
        %4270 = vst.msk [vmem:[#allocation4 + $0x58] sm:$0xff] %vm4258, %v4233
        %4271 = vst.msk [vmem:[#allocation4 + $0x60] sm:$0xff] %vm4258, %v4235
        %4272 = vst.msk [vmem:[#allocation4 + $0x68] sm:$0xff] %vm4258, %v4237
        %4273 = vst.msk [vmem:[#allocation4 + $0x70] sm:$0xff] %vm4258, %v4239
        %4274 = vst.msk [vmem:[#allocation4 + $0x78] sm:$0xff] %vm4258, %v4241
        %v4275 = vld [vmem:[#allocation4] sm:$0xff]
        %v4276 = vld [vmem:[#allocation4 + $0x8] sm:$0xff]
        %v4277 = vld [vmem:[#allocation4 + $0x10] sm:$0xff]
        %v4278 = vld [vmem:[#allocation4 + $0x18] sm:$0xff]
        %v4279 = vld [vmem:[#allocation4 + $0x20] sm:$0xff]
        %v4280 = vld [vmem:[#allocation4 + $0x28] sm:$0xff]
        %v4281 = vld [vmem:[#allocation4 + $0x30] sm:$0xff]
        %v4282 = vld [vmem:[#allocation4 + $0x38] sm:$0xff]
        %v4283 = vld [vmem:[#allocation4 + $0x40] sm:$0xff]
        %v4284 = vld [vmem:[#allocation4 + $0x48] sm:$0xff]
        %v4285 = vld [vmem:[#allocation4 + $0x50] sm:$0xff]
        %v4286 = vld [vmem:[#allocation4 + $0x58] sm:$0xff]
        %v4287 = vld [vmem:[#allocation4 + $0x60] sm:$0xff]
        %v4288 = vld [vmem:[#allocation4 + $0x68] sm:$0xff]
        %v4289 = vld [vmem:[#allocation4 + $0x70] sm:$0xff]
        %v4290 = vld [vmem:[#allocation4 + $0x78] sm:$0xff]
        %v4291 = vld [vmem:[%s1] sm:$0xf]
        %v4292 = vld [vmem:[%s1 + $0x4] sm:$0xf]
        %v4293 = vld [vmem:[%s1 + $0x8] sm:$0xf]
        %v4294 = vld [vmem:[%s1 + $0xc] sm:$0xf]
        %v4295 = vld [vmem:[%s1 + $0x10] sm:$0xf]
        %v4296 = vld [vmem:[%s1 + $0x14] sm:$0xf]
        %v4297 = vld [vmem:[%s1 + $0x18] sm:$0xf]
        %v4298 = vld [vmem:[%s1 + $0x1c] sm:$0xf]
        %v4299 = vld [vmem:[%s1 + $0x20] sm:$0xf]
        %v4300 = vld [vmem:[%s2] sm:$0x1]
        %v4302 = vlaneseq
        %v4303 = vshrl.u32 %v4302, 7
        %v4304 = vsub.s32 0, %v4303
        %v4305 = vrot.slane %v4300, %v4304
        %v4316 = vunpack.c.l.b16 %v4291
        %v4317 = vunpack.c.l.b16 %v4292
        %v4318 = vunpack.c.l.b16 %v4293
        %v4319 = vunpack.c.l.b16 %v4294
        %v4320 = vunpack.c.l.b16 %v4295
        %v4321 = vunpack.c.l.b16 %v4296
        %v4322 = vunpack.c.l.b16 %v4297
        %v4323 = vunpack.c.l.b16 %v4298
        %v4324 = vunpack.c.l.b16 %v4299
        %v4325 = vpack.c.b16 %v4317, %v4316
        %v4326 = vpack.c.b16 %v4319, %v4318
        %v4327 = vpack.c.b16 %v4321, %v4320
        %v4328 = vpack.c.b16 %v4323, %v4322
        %v4329 = vpack.c.b16 %v4324, %v4324
        %vm4334 = vcmask 588800
        %v4336 = vsel %vm4334, %v4275, 0
        %v4339 = vsel %vm4334, %v4276, 0
        %v4342 = vsel %vm4334, %v4277, 0
        %v4345 = vsel %vm4334, %v4278, 0
        %v4348 = vsel %vm4334, %v4279, 0
        %v4351 = vsel %vm4334, %v4280, 0
        %v4354 = vsel %vm4334, %v4281, 0
        %v4357 = vsel %vm4334, %v4282, 0
        %v4360 = vsel %vm4334, %v4283, 0
        %v4363 = vsel %vm4334, %v4284, 0
        %v4366 = vsel %vm4334, %v4285, 0
        %v4369 = vsel %vm4334, %v4286, 0
        %v4372 = vsel %vm4334, %v4287, 0
        %v4375 = vsel %vm4334, %v4288, 0
        %v4378 = vsel %vm4334, %v4289, 0
        %v4381 = vsel %vm4334, %v4290, 0
        %vm4383 = vcmask 1043456
        %v4385 = vsel %vm4383, %v4329, 0
        %4387 = vmatprep.subr.bf16.mxu0 0
        %4388 = vmatpush1.bf16.msra.mxu0 %v4325
        %4389 = vmatprep.subr.bf16.mxu0 0
        %4390 = vmatpush1.bf16.msra.mxu0 %v4326
        %4391 = vmatprep.subr.bf16.mxu0 0
        %4392 = vmatpush1.bf16.msra.mxu0 %v4327
        %4393 = vmatprep.subr.bf16.mxu0 0
        %4394 = vmatpush1.bf16.msra.mxu0 %v4328
        %4395 = vmatprep.subr.bf16.mxu0 0
        %4396 = vmatpush1.bf16.msra.mxu0 %v4385
        %4397 = vmatprep.subr.bf16.mxu0 0
        %4398 = vmatpush1.bf16.msra.mxu0 0
        %4399 = vmatprep.subr.bf16.mxu0 0
        %4400 = vmatpush1.bf16.msra.mxu0 0
        %4401 = vmatprep.subr.bf16.mxu0 0
        %4402 = vmatpush1.bf16.msra.mxu0 0
        %4403 = vmatprep.subr.bf16.mxu0 0
        %4404 = vmatpush1.bf16.msra.mxu0 0
        %4405 = vmatprep.subr.bf16.mxu0 0
        %4406 = vmatpush1.bf16.msra.mxu0 0
        %4407 = vmatprep.subr.bf16.mxu0 0
        %4408 = vmatpush1.bf16.msra.mxu0 0
        %4409 = vmatprep.subr.bf16.mxu0 0
        %4410 = vmatpush1.bf16.msra.mxu0 0
        %4411 = vmatprep.subr.bf16.mxu0 0
        %4412 = vmatpush1.bf16.msra.mxu0 0
        %4413 = vmatprep.subr.bf16.mxu0 0
        %4414 = vmatpush1.bf16.msra.mxu0 0
        %4415 = vmatprep.subr.bf16.mxu0 0
        %4416 = vmatpush1.bf16.msra.mxu0 0
        %4417 = vmatprep.subr.bf16.mxu0 0
        %4418 = vmatpush1.bf16.msra.mxu0 0
        %4419 = vmatprep.mubr.bf16.mxu0 0
        %4420 = vmatmul.mubr.bf16.gmra.mrb[0].mxu0 %v4336
        %v4421 = vpop.f32.mrb[0].mxu0
        %v4422 = vadd.f32 %v4305, %v4421
        %v4423 = vpop.f32.mrb[0].mxu0
        %v4424 = vpop.f32.mrb[0].mxu0
        %v4425 = vadd.f32 %v4305, %v4424
        %v4426 = vpop.f32.mrb[0].mxu0
        %4427 = vmatprep.mubr.bf16.mxu0 0
        %4428 = vmatmul.mubr.bf16.gmra.mrb[0].mxu0 %v4339
        %v4429 = vpop.f32.mrb[0].mxu0
        %v4430 = vadd.f32 %v4305, %v4429
        %v4431 = vpop.f32.mrb[0].mxu0
        %v4432 = vpop.f32.mrb[0].mxu0
        %v4433 = vadd.f32 %v4305, %v4432
        %v4434 = vpop.f32.mrb[0].mxu0
        %4435 = vmatprep.mubr.bf16.mxu0 0
        %4436 = vmatmul.mubr.bf16.gmra.mrb[0].mxu0 %v4342
        %v4437 = vpop.f32.mrb[0].mxu0
        %v4438 = vadd.f32 %v4305, %v4437
        %v4439 = vpop.f32.mrb[0].mxu0
        %v4440 = vpop.f32.mrb[0].mxu0
        %v4441 = vadd.f32 %v4305, %v4440
        %v4442 = vpop.f32.mrb[0].mxu0
        %4443 = vmatprep.mubr.bf16.mxu0 0
        %4444 = vmatmul.mubr.bf16.gmra.mrb[0].mxu0 %v4345
        %v4445 = vpop.f32.mrb[0].mxu0
        %v4446 = vadd.f32 %v4305, %v4445
        %v4447 = vpop.f32.mrb[0].mxu0
        %v4448 = vpop.f32.mrb[0].mxu0
        %v4449 = vadd.f32 %v4305, %v4448
        %v4450 = vpop.f32.mrb[0].mxu0
        %4451 = vmatprep.mubr.bf16.mxu0 0
        %4452 = vmatmul.mubr.bf16.gmra.mrb[0].mxu0 %v4348
        %v4453 = vpop.f32.mrb[0].mxu0
        %v4454 = vadd.f32 %v4305, %v4453
        %v4455 = vpop.f32.mrb[0].mxu0
        %v4456 = vpop.f32.mrb[0].mxu0
        %v4457 = vadd.f32 %v4305, %v4456
        %v4458 = vpop.f32.mrb[0].mxu0
        %4459 = vmatprep.mubr.bf16.mxu0 0
        %4460 = vmatmul.mubr.bf16.gmra.mrb[0].mxu0 %v4351
        %v4461 = vpop.f32.mrb[0].mxu0
        %v4462 = vadd.f32 %v4305, %v4461
        %v4463 = vpop.f32.mrb[0].mxu0
        %v4464 = vpop.f32.mrb[0].mxu0
        %v4465 = vadd.f32 %v4305, %v4464
        %v4466 = vpop.f32.mrb[0].mxu0
        %4467 = vmatprep.mubr.bf16.mxu0 0
        %4468 = vmatmul.mubr.bf16.gmra.mrb[0].mxu0 %v4354
        %v4469 = vpop.f32.mrb[0].mxu0
        %v4470 = vadd.f32 %v4305, %v4469
        %v4471 = vpop.f32.mrb[0].mxu0
        %v4472 = vpop.f32.mrb[0].mxu0
        %v4473 = vadd.f32 %v4305, %v4472
        %v4474 = vpop.f32.mrb[0].mxu0
        %4475 = vmatprep.mubr.bf16.mxu0 0
        %4476 = vmatmul.mubr.bf16.gmra.mrb[0].mxu0 %v4357
        %v4477 = vpop.f32.mrb[0].mxu0
        %v4478 = vadd.f32 %v4305, %v4477
        %v4479 = vpop.f32.mrb[0].mxu0
        %v4480 = vpop.f32.mrb[0].mxu0
        %v4481 = vadd.f32 %v4305, %v4480
        %v4482 = vpop.f32.mrb[0].mxu0
        %4483 = vmatprep.mubr.bf16.mxu0 0
        %4484 = vmatmul.mubr.bf16.gmra.mrb[0].mxu0 %v4360
        %v4485 = vpop.f32.mrb[0].mxu0
        %v4486 = vadd.f32 %v4305, %v4485
        %v4487 = vpop.f32.mrb[0].mxu0
        %v4488 = vpop.f32.mrb[0].mxu0
        %v4489 = vadd.f32 %v4305, %v4488
        %v4490 = vpop.f32.mrb[0].mxu0
        %4491 = vmatprep.mubr.bf16.mxu0 0
        %4492 = vmatmul.mubr.bf16.gmra.mrb[0].mxu0 %v4363
        %v4493 = vpop.f32.mrb[0].mxu0
        %v4494 = vadd.f32 %v4305, %v4493
        %v4495 = vpop.f32.mrb[0].mxu0
        %v4496 = vpop.f32.mrb[0].mxu0
        %v4497 = vadd.f32 %v4305, %v4496
        %v4498 = vpop.f32.mrb[0].mxu0
        %4499 = vmatprep.mubr.bf16.mxu0 0
        %4500 = vmatmul.mubr.bf16.gmra.mrb[0].mxu0 %v4366
        %v4501 = vpop.f32.mrb[0].mxu0
        %v4502 = vadd.f32 %v4305, %v4501
        %v4503 = vpop.f32.mrb[0].mxu0
        %v4504 = vpop.f32.mrb[0].mxu0
        %v4505 = vadd.f32 %v4305, %v4504
        %v4506 = vpop.f32.mrb[0].mxu0
        %4507 = vmatprep.mubr.bf16.mxu0 0
        %4508 = vmatmul.mubr.bf16.gmra.mrb[0].mxu0 %v4369
        %v4509 = vpop.f32.mrb[0].mxu0
        %v4510 = vadd.f32 %v4305, %v4509
        %v4511 = vpop.f32.mrb[0].mxu0
        %v4512 = vpop.f32.mrb[0].mxu0
        %v4513 = vadd.f32 %v4305, %v4512
        %v4514 = vpop.f32.mrb[0].mxu0
        %4515 = vmatprep.mubr.bf16.mxu0 0
        %4516 = vmatmul.mubr.bf16.gmra.mrb[0].mxu0 %v4372
        %v4517 = vpop.f32.mrb[0].mxu0
        %v4518 = vadd.f32 %v4305, %v4517
        %v4519 = vpop.f32.mrb[0].mxu0
        %v4520 = vpop.f32.mrb[0].mxu0
        %v4521 = vadd.f32 %v4305, %v4520
        %v4522 = vpop.f32.mrb[0].mxu0
        %4523 = vmatprep.mubr.bf16.mxu0 0
        %4524 = vmatmul.mubr.bf16.gmra.mrb[0].mxu0 %v4375
        %v4525 = vpop.f32.mrb[0].mxu0
        %v4526 = vadd.f32 %v4305, %v4525
        %v4527 = vpop.f32.mrb[0].mxu0
        %v4528 = vpop.f32.mrb[0].mxu0
        %v4529 = vadd.f32 %v4305, %v4528
        %v4530 = vpop.f32.mrb[0].mxu0
        %4531 = vmatprep.mubr.bf16.mxu0 0
        %4532 = vmatmul.mubr.bf16.gmra.mrb[0].mxu0 %v4378
        %v4533 = vpop.f32.mrb[0].mxu0
        %v4534 = vadd.f32 %v4305, %v4533
        %v4535 = vpop.f32.mrb[0].mxu0
        %v4536 = vpop.f32.mrb[0].mxu0
        %v4537 = vadd.f32 %v4305, %v4536
        %v4538 = vpop.f32.mrb[0].mxu0
        %4539 = vmatprep.mubr.bf16.mxu0 0
        %4540 = vmatmul.mubr.bf16.gmra.mrb[0].mxu0 %v4381
        %v4541 = vpop.f32.mrb[0].mxu0
        %v4542 = vadd.f32 %v4305, %v4541
        %v4543 = vpop.f32.mrb[0].mxu0
        %v4544 = vpop.f32.mrb[0].mxu0
        %v4545 = vadd.f32 %v4305, %v4544
        %v4546 = vpop.f32.mrb[0].mxu0
        %4547 = vdwg.mxu0
        %v4548 = vmax.f32 %v4422, 0.0
        %v4549 = vmax.f32 %v4425, 0.0
        %v4550 = vmax.f32 %v4430, 0.0
        %v4551 = vmax.f32 %v4433, 0.0
        %v4552 = vmax.f32 %v4438, 0.0
        %v4553 = vmax.f32 %v4441, 0.0
        %v4554 = vmax.f32 %v4446, 0.0
        %v4555 = vmax.f32 %v4449, 0.0
        %v4556 = vmax.f32 %v4454, 0.0
        %v4557 = vmax.f32 %v4457, 0.0
        %v4558 = vmax.f32 %v4462, 0.0
        %v4559 = vmax.f32 %v4465, 0.0
        %v4560 = vmax.f32 %v4470, 0.0
        %v4561 = vmax.f32 %v4473, 0.0
        %v4562 = vmax.f32 %v4478, 0.0
        %v4563 = vmax.f32 %v4481, 0.0
        %v4564 = vmax.f32 %v4486, 0.0
        %v4565 = vmax.f32 %v4489, 0.0
        %v4566 = vmax.f32 %v4494, 0.0
        %v4567 = vmax.f32 %v4497, 0.0
        %v4568 = vmax.f32 %v4502, 0.0
        %v4569 = vmax.f32 %v4505, 0.0
        %v4570 = vmax.f32 %v4510, 0.0
        %v4571 = vmax.f32 %v4513, 0.0
        %v4572 = vmax.f32 %v4518, 0.0
        %v4573 = vmax.f32 %v4521, 0.0
        %v4574 = vmax.f32 %v4526, 0.0
        %v4575 = vmax.f32 %v4529, 0.0
        %v4576 = vmax.f32 %v4534, 0.0
        %v4577 = vmax.f32 %v4537, 0.0
        %v4578 = vmax.f32 %v4542, 0.0
        %v4579 = vmax.f32 %v4545, 0.0
        %v4580 = vpack.c.bf16 %v4549, %v4548
        %v4581 = vpack.c.bf16 %v4551, %v4550
        %v4582 = vpack.c.bf16 %v4553, %v4552
        %v4583 = vpack.c.bf16 %v4555, %v4554
        %v4584 = vpack.c.bf16 %v4557, %v4556
        %v4585 = vpack.c.bf16 %v4559, %v4558
        %v4586 = vpack.c.bf16 %v4561, %v4560
        %v4587 = vpack.c.bf16 %v4563, %v4562
        %v4588 = vpack.c.bf16 %v4565, %v4564
        %v4589 = vpack.c.bf16 %v4567, %v4566
        %v4590 = vpack.c.bf16 %v4569, %v4568
        %v4591 = vpack.c.bf16 %v4571, %v4570
        %v4592 = vpack.c.bf16 %v4573, %v4572
        %v4593 = vpack.c.bf16 %v4575, %v4574
        %v4594 = vpack.c.bf16 %v4577, %v4576
        %v4595 = vpack.c.bf16 %v4579, %v4578
        %v4612 = vunpack.c.l.b16 %v4580
        %v4613 = vunpack.c.h.b16 %v4580
        %v4614 = vunpack.c.l.b16 %v4581
        %v4615 = vunpack.c.h.b16 %v4581
        %v4616 = vunpack.c.l.b16 %v4582
        %v4617 = vunpack.c.h.b16 %v4582
        %v4618 = vunpack.c.l.b16 %v4583
        %v4619 = vunpack.c.h.b16 %v4583
        %v4620 = vunpack.c.l.b16 %v4584
        %v4621 = vunpack.c.h.b16 %v4584
        %v4622 = vunpack.c.l.b16 %v4585
        %v4623 = vunpack.c.h.b16 %v4585
        %v4624 = vunpack.c.l.b16 %v4586
        %v4625 = vunpack.c.h.b16 %v4586
        %v4626 = vunpack.c.l.b16 %v4587
        %v4627 = vunpack.c.h.b16 %v4587
        %v4628 = vunpack.c.l.b16 %v4588
        %v4629 = vunpack.c.h.b16 %v4588
        %v4630 = vunpack.c.l.b16 %v4589
        %v4631 = vunpack.c.h.b16 %v4589
        %v4632 = vunpack.c.l.b16 %v4590
        %v4633 = vunpack.c.h.b16 %v4590
        %v4634 = vunpack.c.l.b16 %v4591
        %v4635 = vunpack.c.h.b16 %v4591
        %v4636 = vunpack.c.l.b16 %v4592
        %v4637 = vunpack.c.h.b16 %v4592
        %v4638 = vunpack.c.l.b16 %v4593
        %v4639 = vunpack.c.h.b16 %v4593
        %v4640 = vunpack.c.l.b16 %v4594
        %v4641 = vunpack.c.h.b16 %v4594
        %v4642 = vunpack.c.l.b16 %v4595
        %v4643 = vunpack.c.h.b16 %v4595
        %v4644 = vpack.c.b16 %v4612, %v4612
        %v4645 = vpack.c.b16 %v4613, %v4613
        %v4646 = vpack.c.b16 %v4614, %v4614
        %v4647 = vpack.c.b16 %v4615, %v4615
        %v4648 = vpack.c.b16 %v4616, %v4616
        %v4649 = vpack.c.b16 %v4617, %v4617
        %v4650 = vpack.c.b16 %v4618, %v4618
        %v4651 = vpack.c.b16 %v4619, %v4619
        %v4652 = vpack.c.b16 %v4620, %v4620
        %v4653 = vpack.c.b16 %v4621, %v4621
        %v4654 = vpack.c.b16 %v4622, %v4622
        %v4655 = vpack.c.b16 %v4623, %v4623
        %v4656 = vpack.c.b16 %v4624, %v4624
        %v4657 = vpack.c.b16 %v4625, %v4625
        %v4658 = vpack.c.b16 %v4626, %v4626
        %v4659 = vpack.c.b16 %v4627, %v4627
        %v4660 = vpack.c.b16 %v4628, %v4628
        %v4661 = vpack.c.b16 %v4629, %v4629
        %v4662 = vpack.c.b16 %v4630, %v4630
        %v4663 = vpack.c.b16 %v4631, %v4631
        %v4664 = vpack.c.b16 %v4632, %v4632
        %v4665 = vpack.c.b16 %v4633, %v4633
        %v4666 = vpack.c.b16 %v4634, %v4634
        %v4667 = vpack.c.b16 %v4635, %v4635
        %v4668 = vpack.c.b16 %v4636, %v4636
        %v4669 = vpack.c.b16 %v4637, %v4637
        %v4670 = vpack.c.b16 %v4638, %v4638
        %v4671 = vpack.c.b16 %v4639, %v4639
        %v4672 = vpack.c.b16 %v4640, %v4640
        %v4673 = vpack.c.b16 %v4641, %v4641
        %v4674 = vpack.c.b16 %v4642, %v4642
        %v4675 = vpack.c.b16 %v4643, %v4643
        %s4708 = scalar_lea.vmem [#allocation3], 20
        %4709 = vst.msk [vmem:[%s4708 + $0x8] sm:$0xf] %vm278, %v4644
        %4710 = vst.msk [vmem:[%s4708 + $0xc] sm:$0xf] %vm278, %v4645
        %4711 = vst.msk [vmem:[%s4708 + $0x1c] sm:$0xf] %vm278, %v4646
        %4712 = vst.msk [vmem:[%s4708 + $0x20] sm:$0xf] %vm278, %v4647
        %4713 = vst.msk [vmem:[%s4708 + $0x30] sm:$0xf] %vm278, %v4648
        %4714 = vst.msk [vmem:[%s4708 + $0x34] sm:$0xf] %vm278, %v4649
        %4715 = vst.msk [vmem:[%s4708 + $0x44] sm:$0xf] %vm278, %v4650
        %4716 = vst.msk [vmem:[%s4708 + $0x48] sm:$0xf] %vm278, %v4651
        %4717 = vst.msk [vmem:[%s4708 + $0x58] sm:$0xf] %vm278, %v4652
        %4718 = vst.msk [vmem:[%s4708 + $0x5c] sm:$0xf] %vm278, %v4653
        %4719 = vst.msk [vmem:[%s4708 + $0x6c] sm:$0xf] %vm278, %v4654
        %4720 = vst.msk [vmem:[%s4708 + $0x70] sm:$0xf] %vm278, %v4655
        %4721 = vst.msk [vmem:[%s4708 + $0x80] sm:$0xf] %vm278, %v4656
        %4722 = vst.msk [vmem:[%s4708 + $0x84] sm:$0xf] %vm278, %v4657
        %4723 = vst.msk [vmem:[%s4708 + $0x94] sm:$0xf] %vm278, %v4658
        %4724 = vst.msk [vmem:[%s4708 + $0x98] sm:$0xf] %vm278, %v4659
        %4725 = vst.msk [vmem:[%s4708 + $0xa8] sm:$0xf] %vm278, %v4660
        %4726 = vst.msk [vmem:[%s4708 + $0xac] sm:$0xf] %vm278, %v4661
        %4727 = vst.msk [vmem:[%s4708 + $0xbc] sm:$0xf] %vm278, %v4662
        %4728 = vst.msk [vmem:[%s4708 + $0xc0] sm:$0xf] %vm278, %v4663
        %4729 = vst.msk [vmem:[%s4708 + $0xd0] sm:$0xf] %vm278, %v4664
        %4730 = vst.msk [vmem:[%s4708 + $0xd4] sm:$0xf] %vm278, %v4665
        %4731 = vst.msk [vmem:[%s4708 + $0xe4] sm:$0xf] %vm278, %v4666
        %4732 = vst.msk [vmem:[%s4708 + $0xe8] sm:$0xf] %vm278, %v4667
        %4733 = vst.msk [vmem:[%s4708 + $0xf8] sm:$0xf] %vm278, %v4668
        %4734 = vst.msk [vmem:[%s4708 + $0xfc] sm:$0xf] %vm278, %v4669
        %4735 = vst.msk [vmem:[%s4708 + $0x10c] sm:$0xf] %vm278, %v4670
        %4736 = vst.msk [vmem:[%s4708 + $0x110] sm:$0xf] %vm278, %v4671
        %4737 = vst.msk [vmem:[%s4708 + $0x120] sm:$0xf] %vm278, %v4672
        %4738 = vst.msk [vmem:[%s4708 + $0x124] sm:$0xf] %vm278, %v4673
        %4739 = vst.msk [vmem:[%s4708 + $0x134] sm:$0xf] %vm278, %v4674
        %4740 = vst.msk [vmem:[%s4708 + $0x138] sm:$0xf] %vm278, %v4675
        %v4741 = vld [vmem:[#allocation3 + $0x4] sm:$0x8]
        %v4742 = vld [vmem:[#allocation3 + $0x8] sm:$0xf]
        %v4743 = vld [vmem:[#allocation3 + $0xc] sm:$0xf]
        %v4744 = vld [vmem:[#allocation3 + $0x18] sm:$0x8]
        %v4745 = vld [vmem:[#allocation3 + $0x1c] sm:$0xf]
        %v4746 = vld [vmem:[#allocation3 + $0x20] sm:$0xf]
        %v4747 = vld [vmem:[#allocation3 + $0x2c] sm:$0x8]
        %v4748 = vld [vmem:[#allocation3 + $0x30] sm:$0xf]
        %v4749 = vld [vmem:[#allocation3 + $0x34] sm:$0xf]
        %v4750 = vld [vmem:[#allocation3 + $0x40] sm:$0x8]
        %v4751 = vld [vmem:[#allocation3 + $0x44] sm:$0xf]
        %v4752 = vld [vmem:[#allocation3 + $0x48] sm:$0xf]
        %v4753 = vld [vmem:[#allocation3 + $0x54] sm:$0x8]
        %v4754 = vld [vmem:[#allocation3 + $0x58] sm:$0xf]
        %v4755 = vld [vmem:[#allocation3 + $0x5c] sm:$0xf]
        %v4756 = vld [vmem:[#allocation3 + $0x68] sm:$0x8]
        %v4757 = vld [vmem:[#allocation3 + $0x6c] sm:$0xf]
        %v4758 = vld [vmem:[#allocation3 + $0x70] sm:$0xf]
        %v4759 = vld [vmem:[#allocation3 + $0x7c] sm:$0x8]
        %v4760 = vld [vmem:[#allocation3 + $0x80] sm:$0xf]
        %v4761 = vld [vmem:[#allocation3 + $0x84] sm:$0xf]
        %v4762 = vld [vmem:[#allocation3 + $0x90] sm:$0x8]
        %v4763 = vld [vmem:[#allocation3 + $0x94] sm:$0xf]
        %v4764 = vld [vmem:[#allocation3 + $0x98] sm:$0xf]
        %v4765 = vld [vmem:[#allocation3 + $0xa4] sm:$0x8]
        %v4766 = vld [vmem:[#allocation3 + $0xa8] sm:$0xf]
        %v4767 = vld [vmem:[#allocation3 + $0xac] sm:$0xf]
        %v4768 = vld [vmem:[#allocation3 + $0xb8] sm:$0x8]
        %v4769 = vld [vmem:[#allocation3 + $0xbc] sm:$0xf]
        %v4770 = vld [vmem:[#allocation3 + $0xc0] sm:$0xf]
        %v4771 = vld [vmem:[#allocation3 + $0xcc] sm:$0x8]
        %v4772 = vld [vmem:[#allocation3 + $0xd0] sm:$0xf]
        %v4773 = vld [vmem:[#allocation3 + $0xd4] sm:$0xf]
        %v4774 = vld [vmem:[#allocation3 + $0xe0] sm:$0x8]
        %v4775 = vld [vmem:[#allocation3 + $0xe4] sm:$0xf]
        %v4776 = vld [vmem:[#allocation3 + $0xe8] sm:$0xf]
        %v4777 = vld [vmem:[#allocation3 + $0xf4] sm:$0x8]
        %v4778 = vld [vmem:[#allocation3 + $0xf8] sm:$0xf]
        %v4779 = vld [vmem:[#allocation3 + $0xfc] sm:$0xf]
        %v4780 = vld [vmem:[#allocation3 + $0x108] sm:$0x8]
        %v4781 = vld [vmem:[#allocation3 + $0x10c] sm:$0xf]
        %v4782 = vld [vmem:[#allocation3 + $0x110] sm:$0xf]
        %v4783 = vld [vmem:[#allocation3 + $0x11c] sm:$0x8]
        %v4784 = vld [vmem:[#allocation3 + $0x120] sm:$0xf]
        %v4785 = vld [vmem:[#allocation3 + $0x124] sm:$0xf]
        %v4786 = vld [vmem:[#allocation3 + $0x130] sm:$0x8]
        %v4787 = vld [vmem:[#allocation3 + $0x134] sm:$0xf]
        %v4788 = vld [vmem:[#allocation3 + $0x138] sm:$0xf]
        %v4790 = vshrl.u32 %v4741, 16
        %v4792 = vrot.slane %v4790, 7
        %v4793 = vrot.slane %v4792, 4
        %v4795 = vshrl.u32 %v4742, 16
        %v4797 = vrot.slane %v4795, 7
        %v4798 = vshll.u32 %v4742, 16
        %v4800 = vor.u32 %v4797, %v4798
        %v4801 = vsel %vm645, %v4793, %v4800
        %v4802 = vrot.slane %v4797, 4
        %v4804 = vshrl.u32 %v4743, 16
        %v4806 = vrot.slane %v4804, 7
        %v4807 = vshll.u32 %v4743, 16
        %v4809 = vor.u32 %v4806, %v4807
        %v4810 = vsel %vm645, %v4802, %v4809
        %v4812 = vshrl.u32 %v4744, 16
        %v4814 = vrot.slane %v4812, 7
        %v4815 = vrot.slane %v4814, 4
        %v4817 = vshrl.u32 %v4745, 16
        %v4819 = vrot.slane %v4817, 7
        %v4820 = vshll.u32 %v4745, 16
        %v4822 = vor.u32 %v4819, %v4820
        %v4823 = vsel %vm645, %v4815, %v4822
        %v4824 = vrot.slane %v4819, 4
        %v4826 = vshrl.u32 %v4746, 16
        %v4828 = vrot.slane %v4826, 7
        %v4829 = vshll.u32 %v4746, 16
        %v4831 = vor.u32 %v4828, %v4829
        %v4832 = vsel %vm645, %v4824, %v4831
        %v4834 = vshrl.u32 %v4747, 16
        %v4836 = vrot.slane %v4834, 7
        %v4837 = vrot.slane %v4836, 4
        %v4839 = vshrl.u32 %v4748, 16
        %v4841 = vrot.slane %v4839, 7
        %v4842 = vshll.u32 %v4748, 16
        %v4844 = vor.u32 %v4841, %v4842
        %v4845 = vsel %vm645, %v4837, %v4844
        %v4846 = vrot.slane %v4841, 4
        %v4848 = vshrl.u32 %v4749, 16
        %v4850 = vrot.slane %v4848, 7
        %v4851 = vshll.u32 %v4749, 16
        %v4853 = vor.u32 %v4850, %v4851
        %v4854 = vsel %vm645, %v4846, %v4853
        %v4856 = vshrl.u32 %v4750, 16
        %v4858 = vrot.slane %v4856, 7
        %v4859 = vrot.slane %v4858, 4
        %v4861 = vshrl.u32 %v4751, 16
        %v4863 = vrot.slane %v4861, 7
        %v4864 = vshll.u32 %v4751, 16
        %v4866 = vor.u32 %v4863, %v4864
        %v4867 = vsel %vm645, %v4859, %v4866
        %v4868 = vrot.slane %v4863, 4
        %v4870 = vshrl.u32 %v4752, 16
        %v4872 = vrot.slane %v4870, 7
        %v4873 = vshll.u32 %v4752, 16
        %v4875 = vor.u32 %v4872, %v4873
        %v4876 = vsel %vm645, %v4868, %v4875
        %v4878 = vshrl.u32 %v4753, 16
        %v4880 = vrot.slane %v4878, 7
        %v4881 = vrot.slane %v4880, 4
        %v4883 = vshrl.u32 %v4754, 16
        %v4885 = vrot.slane %v4883, 7
        %v4886 = vshll.u32 %v4754, 16
        %v4888 = vor.u32 %v4885, %v4886
        %v4889 = vsel %vm645, %v4881, %v4888
        %v4890 = vrot.slane %v4885, 4
        %v4892 = vshrl.u32 %v4755, 16
        %v4894 = vrot.slane %v4892, 7
        %v4895 = vshll.u32 %v4755, 16
        %v4897 = vor.u32 %v4894, %v4895
        %v4898 = vsel %vm645, %v4890, %v4897
        %v4900 = vshrl.u32 %v4756, 16
        %v4902 = vrot.slane %v4900, 7
        %v4903 = vrot.slane %v4902, 4
        %v4905 = vshrl.u32 %v4757, 16
        %v4907 = vrot.slane %v4905, 7
        %v4908 = vshll.u32 %v4757, 16
        %v4910 = vor.u32 %v4907, %v4908
        %v4911 = vsel %vm645, %v4903, %v4910
        %v4912 = vrot.slane %v4907, 4
        %v4914 = vshrl.u32 %v4758, 16
        %v4916 = vrot.slane %v4914, 7
        %v4917 = vshll.u32 %v4758, 16
        %v4919 = vor.u32 %v4916, %v4917
        %v4920 = vsel %vm645, %v4912, %v4919
        %v4922 = vshrl.u32 %v4759, 16
        %v4924 = vrot.slane %v4922, 7
        %v4925 = vrot.slane %v4924, 4
        %v4927 = vshrl.u32 %v4760, 16
        %v4929 = vrot.slane %v4927, 7
        %v4930 = vshll.u32 %v4760, 16
        %v4932 = vor.u32 %v4929, %v4930
        %v4933 = vsel %vm645, %v4925, %v4932
        %v4934 = vrot.slane %v4929, 4
        %v4936 = vshrl.u32 %v4761, 16
        %v4938 = vrot.slane %v4936, 7
        %v4939 = vshll.u32 %v4761, 16
        %v4941 = vor.u32 %v4938, %v4939
        %v4942 = vsel %vm645, %v4934, %v4941
        %v4944 = vshrl.u32 %v4762, 16
        %v4946 = vrot.slane %v4944, 7
        %v4947 = vrot.slane %v4946, 4
        %v4949 = vshrl.u32 %v4763, 16
        %v4951 = vrot.slane %v4949, 7
        %v4952 = vshll.u32 %v4763, 16
        %v4954 = vor.u32 %v4951, %v4952
        %v4955 = vsel %vm645, %v4947, %v4954
        %v4956 = vrot.slane %v4951, 4
        %v4958 = vshrl.u32 %v4764, 16
        %v4960 = vrot.slane %v4958, 7
        %v4961 = vshll.u32 %v4764, 16
        %v4963 = vor.u32 %v4960, %v4961
        %v4964 = vsel %vm645, %v4956, %v4963
        %v4966 = vshrl.u32 %v4765, 16
        %v4968 = vrot.slane %v4966, 7
        %v4969 = vrot.slane %v4968, 4
        %v4971 = vshrl.u32 %v4766, 16
        %v4973 = vrot.slane %v4971, 7
        %v4974 = vshll.u32 %v4766, 16
        %v4976 = vor.u32 %v4973, %v4974
        %v4977 = vsel %vm645, %v4969, %v4976
        %v4978 = vrot.slane %v4973, 4
        %v4980 = vshrl.u32 %v4767, 16
        %v4982 = vrot.slane %v4980, 7
        %v4983 = vshll.u32 %v4767, 16
        %v4985 = vor.u32 %v4982, %v4983
        %v4986 = vsel %vm645, %v4978, %v4985
        %v4988 = vshrl.u32 %v4768, 16
        %v4990 = vrot.slane %v4988, 7
        %v4991 = vrot.slane %v4990, 4
        %v4993 = vshrl.u32 %v4769, 16
        %v4995 = vrot.slane %v4993, 7
        %v4996 = vshll.u32 %v4769, 16
        %v4998 = vor.u32 %v4995, %v4996
        %v4999 = vsel %vm645, %v4991, %v4998
        %v5000 = vrot.slane %v4995, 4
        %v5002 = vshrl.u32 %v4770, 16
        %v5004 = vrot.slane %v5002, 7
        %v5005 = vshll.u32 %v4770, 16
        %v5007 = vor.u32 %v5004, %v5005
        %v5008 = vsel %vm645, %v5000, %v5007
        %v5010 = vshrl.u32 %v4771, 16
        %v5012 = vrot.slane %v5010, 7
        %v5013 = vrot.slane %v5012, 4
        %v5015 = vshrl.u32 %v4772, 16
        %v5017 = vrot.slane %v5015, 7
        %v5018 = vshll.u32 %v4772, 16
        %v5020 = vor.u32 %v5017, %v5018
        %v5021 = vsel %vm645, %v5013, %v5020
        %v5022 = vrot.slane %v5017, 4
        %v5024 = vshrl.u32 %v4773, 16
        %v5026 = vrot.slane %v5024, 7
        %v5027 = vshll.u32 %v4773, 16
        %v5029 = vor.u32 %v5026, %v5027
        %v5030 = vsel %vm645, %v5022, %v5029
        %v5032 = vshrl.u32 %v4774, 16
        %v5034 = vrot.slane %v5032, 7
        %v5035 = vrot.slane %v5034, 4
        %v5037 = vshrl.u32 %v4775, 16
        %v5039 = vrot.slane %v5037, 7
        %v5040 = vshll.u32 %v4775, 16
        %v5042 = vor.u32 %v5039, %v5040
        %v5043 = vsel %vm645, %v5035, %v5042
        %v5044 = vrot.slane %v5039, 4
        %v5046 = vshrl.u32 %v4776, 16
        %v5048 = vrot.slane %v5046, 7
        %v5049 = vshll.u32 %v4776, 16
        %v5051 = vor.u32 %v5048, %v5049
        %v5052 = vsel %vm645, %v5044, %v5051
        %v5054 = vshrl.u32 %v4777, 16
        %v5056 = vrot.slane %v5054, 7
        %v5057 = vrot.slane %v5056, 4
        %v5059 = vshrl.u32 %v4778, 16
        %v5061 = vrot.slane %v5059, 7
        %v5062 = vshll.u32 %v4778, 16
        %v5064 = vor.u32 %v5061, %v5062
        %v5065 = vsel %vm645, %v5057, %v5064
        %v5066 = vrot.slane %v5061, 4
        %v5068 = vshrl.u32 %v4779, 16
        %v5070 = vrot.slane %v5068, 7
        %v5071 = vshll.u32 %v4779, 16
        %v5073 = vor.u32 %v5070, %v5071
        %v5074 = vsel %vm645, %v5066, %v5073
        %v5076 = vshrl.u32 %v4780, 16
        %v5078 = vrot.slane %v5076, 7
        %v5079 = vrot.slane %v5078, 4
        %v5081 = vshrl.u32 %v4781, 16
        %v5083 = vrot.slane %v5081, 7
        %v5084 = vshll.u32 %v4781, 16
        %v5086 = vor.u32 %v5083, %v5084
        %v5087 = vsel %vm645, %v5079, %v5086
        %v5088 = vrot.slane %v5083, 4
        %v5090 = vshrl.u32 %v4782, 16
        %v5092 = vrot.slane %v5090, 7
        %v5093 = vshll.u32 %v4782, 16
        %v5095 = vor.u32 %v5092, %v5093
        %v5096 = vsel %vm645, %v5088, %v5095
        %v5098 = vshrl.u32 %v4783, 16
        %v5100 = vrot.slane %v5098, 7
        %v5101 = vrot.slane %v5100, 4
        %v5103 = vshrl.u32 %v4784, 16
        %v5105 = vrot.slane %v5103, 7
        %v5106 = vshll.u32 %v4784, 16
        %v5108 = vor.u32 %v5105, %v5106
        %v5109 = vsel %vm645, %v5101, %v5108
        %v5110 = vrot.slane %v5105, 4
        %v5112 = vshrl.u32 %v4785, 16
        %v5114 = vrot.slane %v5112, 7
        %v5115 = vshll.u32 %v4785, 16
        %v5117 = vor.u32 %v5114, %v5115
        %v5118 = vsel %vm645, %v5110, %v5117
        %v5120 = vshrl.u32 %v4786, 16
        %v5122 = vrot.slane %v5120, 7
        %v5123 = vrot.slane %v5122, 4
        %v5125 = vshrl.u32 %v4787, 16
        %v5127 = vrot.slane %v5125, 7
        %v5128 = vshll.u32 %v4787, 16
        %v5130 = vor.u32 %v5127, %v5128
        %v5131 = vsel %vm645, %v5123, %v5130
        %v5132 = vrot.slane %v5127, 4
        %v5134 = vshrl.u32 %v4788, 16
        %v5136 = vrot.slane %v5134, 7
        %v5137 = vshll.u32 %v4788, 16
        %v5139 = vor.u32 %v5136, %v5137
        %v5140 = vsel %vm645, %v5132, %v5139
        %v5141 = vunpack.c.l.b16 %v4801
        %v5142 = vunpack.c.l.b16 %v4810
        %v5143 = vunpack.c.l.b16 %v4823
        %v5144 = vunpack.c.l.b16 %v4832
        %v5145 = vunpack.c.l.b16 %v4845
        %v5146 = vunpack.c.l.b16 %v4854
        %v5147 = vunpack.c.l.b16 %v4867
        %v5148 = vunpack.c.l.b16 %v4876
        %v5149 = vunpack.c.l.b16 %v4889
        %v5150 = vunpack.c.l.b16 %v4898
        %v5151 = vunpack.c.l.b16 %v4911
        %v5152 = vunpack.c.l.b16 %v4920
        %v5153 = vunpack.c.l.b16 %v4933
        %v5154 = vunpack.c.l.b16 %v4942
        %v5155 = vunpack.c.l.b16 %v4955
        %v5156 = vunpack.c.l.b16 %v4964
        %v5157 = vunpack.c.l.b16 %v4977
        %v5158 = vunpack.c.l.b16 %v4986
        %v5159 = vunpack.c.l.b16 %v4999
        %v5160 = vunpack.c.l.b16 %v5008
        %v5161 = vunpack.c.l.b16 %v5021
        %v5162 = vunpack.c.l.b16 %v5030
        %v5163 = vunpack.c.l.b16 %v5043
        %v5164 = vunpack.c.l.b16 %v5052
        %v5165 = vunpack.c.l.b16 %v5065
        %v5166 = vunpack.c.l.b16 %v5074
        %v5167 = vunpack.c.l.b16 %v5087
        %v5168 = vunpack.c.l.b16 %v5096
        %v5169 = vunpack.c.l.b16 %v5109
        %v5170 = vunpack.c.l.b16 %v5118
        %v5171 = vunpack.c.l.b16 %v5131
        %v5172 = vunpack.c.l.b16 %v5140
        %v5173 = vpack.c.b16 %v5142, %v5141
        %v5174 = vpack.c.b16 %v5144, %v5143
        %v5175 = vpack.c.b16 %v5146, %v5145
        %v5176 = vpack.c.b16 %v5148, %v5147
        %v5177 = vpack.c.b16 %v5150, %v5149
        %v5178 = vpack.c.b16 %v5152, %v5151
        %v5179 = vpack.c.b16 %v5154, %v5153
        %v5180 = vpack.c.b16 %v5156, %v5155
        %v5181 = vpack.c.b16 %v5158, %v5157
        %v5182 = vpack.c.b16 %v5160, %v5159
        %v5183 = vpack.c.b16 %v5162, %v5161
        %v5184 = vpack.c.b16 %v5164, %v5163
        %v5185 = vpack.c.b16 %v5166, %v5165
        %v5186 = vpack.c.b16 %v5168, %v5167
        %v5187 = vpack.c.b16 %v5170, %v5169
        %v5188 = vpack.c.b16 %v5172, %v5171
        %5205 = vst.msk [vmem:[#allocation4] sm:$0xff] %vm1062, %v5173
        %5206 = vst.msk [vmem:[#allocation4 + $0x8] sm:$0xff] %vm1062, %v5174
        %5207 = vst.msk [vmem:[#allocation4 + $0x10] sm:$0xff] %vm1062, %v5175
        %5208 = vst.msk [vmem:[#allocation4 + $0x18] sm:$0xff] %vm1062, %v5176
        %5209 = vst.msk [vmem:[#allocation4 + $0x20] sm:$0xff] %vm1062, %v5177
        %5210 = vst.msk [vmem:[#allocation4 + $0x28] sm:$0xff] %vm1062, %v5178
        %5211 = vst.msk [vmem:[#allocation4 + $0x30] sm:$0xff] %vm1062, %v5179
        %5212 = vst.msk [vmem:[#allocation4 + $0x38] sm:$0xff] %vm1062, %v5180
        %5213 = vst.msk [vmem:[#allocation4 + $0x40] sm:$0xff] %vm1062, %v5181
        %5214 = vst.msk [vmem:[#allocation4 + $0x48] sm:$0xff] %vm1062, %v5182
        %5215 = vst.msk [vmem:[#allocation4 + $0x50] sm:$0xff] %vm1062, %v5183
        %5216 = vst.msk [vmem:[#allocation4 + $0x58] sm:$0xff] %vm1062, %v5184
        %5217 = vst.msk [vmem:[#allocation4 + $0x60] sm:$0xff] %vm1062, %v5185
        %5218 = vst.msk [vmem:[#allocation4 + $0x68] sm:$0xff] %vm1062, %v5186
        %5219 = vst.msk [vmem:[#allocation4 + $0x70] sm:$0xff] %vm1062, %v5187
        %5220 = vst.msk [vmem:[#allocation4 + $0x78] sm:$0xff] %vm1062, %v5188
        %v5221 = vld [vmem:[#allocation3 + $0x8] sm:$0xf]
        %v5222 = vld [vmem:[#allocation3 + $0xc] sm:$0xf]
        %v5223 = vld [vmem:[#allocation3 + $0x1c] sm:$0xf]
        %v5224 = vld [vmem:[#allocation3 + $0x20] sm:$0xf]
        %v5225 = vld [vmem:[#allocation3 + $0x30] sm:$0xf]
        %v5226 = vld [vmem:[#allocation3 + $0x34] sm:$0xf]
        %v5227 = vld [vmem:[#allocation3 + $0x44] sm:$0xf]
        %v5228 = vld [vmem:[#allocation3 + $0x48] sm:$0xf]
        %v5229 = vld [vmem:[#allocation3 + $0x58] sm:$0xf]
        %v5230 = vld [vmem:[#allocation3 + $0x5c] sm:$0xf]
        %v5231 = vld [vmem:[#allocation3 + $0x6c] sm:$0xf]
        %v5232 = vld [vmem:[#allocation3 + $0x70] sm:$0xf]
        %v5233 = vld [vmem:[#allocation3 + $0x80] sm:$0xf]
        %v5234 = vld [vmem:[#allocation3 + $0x84] sm:$0xf]
        %v5235 = vld [vmem:[#allocation3 + $0x94] sm:$0xf]
        %v5236 = vld [vmem:[#allocation3 + $0x98] sm:$0xf]
        %v5237 = vld [vmem:[#allocation3 + $0xa8] sm:$0xf]
        %v5238 = vld [vmem:[#allocation3 + $0xac] sm:$0xf]
        %v5239 = vld [vmem:[#allocation3 + $0xbc] sm:$0xf]
        %v5240 = vld [vmem:[#allocation3 + $0xc0] sm:$0xf]
        %v5241 = vld [vmem:[#allocation3 + $0xd0] sm:$0xf]
        %v5242 = vld [vmem:[#allocation3 + $0xd4] sm:$0xf]
        %v5243 = vld [vmem:[#allocation3 + $0xe4] sm:$0xf]
        %v5244 = vld [vmem:[#allocation3 + $0xe8] sm:$0xf]
        %v5245 = vld [vmem:[#allocation3 + $0xf8] sm:$0xf]
        %v5246 = vld [vmem:[#allocation3 + $0xfc] sm:$0xf]
        %v5247 = vld [vmem:[#allocation3 + $0x10c] sm:$0xf]
        %v5248 = vld [vmem:[#allocation3 + $0x110] sm:$0xf]
        %v5249 = vld [vmem:[#allocation3 + $0x120] sm:$0xf]
        %v5250 = vld [vmem:[#allocation3 + $0x124] sm:$0xf]
        %v5251 = vld [vmem:[#allocation3 + $0x134] sm:$0xf]
        %v5252 = vld [vmem:[#allocation3 + $0x138] sm:$0xf]
        %v5285 = vunpack.c.l.b16 %v5221
        %v5286 = vunpack.c.l.b16 %v5222
        %v5287 = vunpack.c.l.b16 %v5223
        %v5288 = vunpack.c.l.b16 %v5224
        %v5289 = vunpack.c.l.b16 %v5225
        %v5290 = vunpack.c.l.b16 %v5226
        %v5291 = vunpack.c.l.b16 %v5227
        %v5292 = vunpack.c.l.b16 %v5228
        %v5293 = vunpack.c.l.b16 %v5229
        %v5294 = vunpack.c.l.b16 %v5230
        %v5295 = vunpack.c.l.b16 %v5231
        %v5296 = vunpack.c.l.b16 %v5232
        %v5297 = vunpack.c.l.b16 %v5233
        %v5298 = vunpack.c.l.b16 %v5234
        %v5299 = vunpack.c.l.b16 %v5235
        %v5300 = vunpack.c.l.b16 %v5236
        %v5301 = vunpack.c.l.b16 %v5237
        %v5302 = vunpack.c.l.b16 %v5238
        %v5303 = vunpack.c.l.b16 %v5239
        %v5304 = vunpack.c.l.b16 %v5240
        %v5305 = vunpack.c.l.b16 %v5241
        %v5306 = vunpack.c.l.b16 %v5242
        %v5307 = vunpack.c.l.b16 %v5243
        %v5308 = vunpack.c.l.b16 %v5244
        %v5309 = vunpack.c.l.b16 %v5245
        %v5310 = vunpack.c.l.b16 %v5246
        %v5311 = vunpack.c.l.b16 %v5247
        %v5312 = vunpack.c.l.b16 %v5248
        %v5313 = vunpack.c.l.b16 %v5249
        %v5314 = vunpack.c.l.b16 %v5250
        %v5315 = vunpack.c.l.b16 %v5251
        %v5316 = vunpack.c.l.b16 %v5252
        %v5317 = vpack.c.b16 %v5286, %v5285
        %v5318 = vpack.c.b16 %v5288, %v5287
        %v5319 = vpack.c.b16 %v5290, %v5289
        %v5320 = vpack.c.b16 %v5292, %v5291
        %v5321 = vpack.c.b16 %v5294, %v5293
        %v5322 = vpack.c.b16 %v5296, %v5295
        %v5323 = vpack.c.b16 %v5298, %v5297
        %v5324 = vpack.c.b16 %v5300, %v5299
        %v5325 = vpack.c.b16 %v5302, %v5301
        %v5326 = vpack.c.b16 %v5304, %v5303
        %v5327 = vpack.c.b16 %v5306, %v5305
        %v5328 = vpack.c.b16 %v5308, %v5307
        %v5329 = vpack.c.b16 %v5310, %v5309
        %v5330 = vpack.c.b16 %v5312, %v5311
        %v5331 = vpack.c.b16 %v5314, %v5313
        %v5332 = vpack.c.b16 %v5316, %v5315
        %5333 = vrot.lane.b32.xlu0 %v5317, 8
        %v5334 = vpop.permute.xlu0 %5333
        %5335 = vrot.lane.b32.xlu0 %v5318, 8
        %v5336 = vpop.permute.xlu0 %5335
        %5337 = vrot.lane.b32.xlu0 %v5319, 8
        %v5338 = vpop.permute.xlu0 %5337
        %5339 = vrot.lane.b32.xlu0 %v5320, 8
        %v5340 = vpop.permute.xlu0 %5339
        %5341 = vrot.lane.b32.xlu0 %v5321, 8
        %v5342 = vpop.permute.xlu0 %5341
        %5343 = vrot.lane.b32.xlu0 %v5322, 8
        %v5344 = vpop.permute.xlu0 %5343
        %5345 = vrot.lane.b32.xlu0 %v5323, 8
        %v5346 = vpop.permute.xlu0 %5345
        %5347 = vrot.lane.b32.xlu0 %v5324, 8
        %v5348 = vpop.permute.xlu0 %5347
        %5349 = vrot.lane.b32.xlu0 %v5325, 8
        %v5350 = vpop.permute.xlu0 %5349
        %5351 = vrot.lane.b32.xlu0 %v5326, 8
        %v5352 = vpop.permute.xlu0 %5351
        %5353 = vrot.lane.b32.xlu0 %v5327, 8
        %v5354 = vpop.permute.xlu0 %5353
        %5355 = vrot.lane.b32.xlu0 %v5328, 8
        %v5356 = vpop.permute.xlu0 %5355
        %5357 = vrot.lane.b32.xlu0 %v5329, 8
        %v5358 = vpop.permute.xlu0 %5357
        %5359 = vrot.lane.b32.xlu0 %v5330, 8
        %v5360 = vpop.permute.xlu0 %5359
        %5361 = vrot.lane.b32.xlu0 %v5331, 8
        %v5362 = vpop.permute.xlu0 %5361
        %5363 = vrot.lane.b32.xlu0 %v5332, 8
        %v5364 = vpop.permute.xlu0 %5363
        %5381 = vst.msk [vmem:[#allocation4] sm:$0xff] %vm1239, %v5334
        %5382 = vst.msk [vmem:[#allocation4 + $0x8] sm:$0xff] %vm1239, %v5336
        %5383 = vst.msk [vmem:[#allocation4 + $0x10] sm:$0xff] %vm1239, %v5338
        %5384 = vst.msk [vmem:[#allocation4 + $0x18] sm:$0xff] %vm1239, %v5340
        %5385 = vst.msk [vmem:[#allocation4 + $0x20] sm:$0xff] %vm1239, %v5342
        %5386 = vst.msk [vmem:[#allocation4 + $0x28] sm:$0xff] %vm1239, %v5344
        %5387 = vst.msk [vmem:[#allocation4 + $0x30] sm:$0xff] %vm1239, %v5346
        %5388 = vst.msk [vmem:[#allocation4 + $0x38] sm:$0xff] %vm1239, %v5348
        %5389 = vst.msk [vmem:[#allocation4 + $0x40] sm:$0xff] %vm1239, %v5350
        %5390 = vst.msk [vmem:[#allocation4 + $0x48] sm:$0xff] %vm1239, %v5352
        %5391 = vst.msk [vmem:[#allocation4 + $0x50] sm:$0xff] %vm1239, %v5354
        %5392 = vst.msk [vmem:[#allocation4 + $0x58] sm:$0xff] %vm1239, %v5356
        %5393 = vst.msk [vmem:[#allocation4 + $0x60] sm:$0xff] %vm1239, %v5358
        %5394 = vst.msk [vmem:[#allocation4 + $0x68] sm:$0xff] %vm1239, %v5360
        %5395 = vst.msk [vmem:[#allocation4 + $0x70] sm:$0xff] %vm1239, %v5362
        %5396 = vst.msk [vmem:[#allocation4 + $0x78] sm:$0xff] %vm1239, %v5364
        %v5397 = vld [vmem:[#allocation3 + $0x8] sm:$0xf]
        %v5398 = vld [vmem:[#allocation3 + $0xc] sm:$0xf]
        %v5399 = vld [vmem:[#allocation3 + $0x10] sm:$0x1]
        %v5400 = vld [vmem:[#allocation3 + $0x1c] sm:$0xf]
        %v5401 = vld [vmem:[#allocation3 + $0x20] sm:$0xf]
        %v5402 = vld [vmem:[#allocation3 + $0x24] sm:$0x1]
        %v5403 = vld [vmem:[#allocation3 + $0x30] sm:$0xf]
        %v5404 = vld [vmem:[#allocation3 + $0x34] sm:$0xf]
        %v5405 = vld [vmem:[#allocation3 + $0x38] sm:$0x1]
        %v5406 = vld [vmem:[#allocation3 + $0x44] sm:$0xf]
        %v5407 = vld [vmem:[#allocation3 + $0x48] sm:$0xf]
        %v5408 = vld [vmem:[#allocation3 + $0x4c] sm:$0x1]
        %v5409 = vld [vmem:[#allocation3 + $0x58] sm:$0xf]
        %v5410 = vld [vmem:[#allocation3 + $0x5c] sm:$0xf]
        %v5411 = vld [vmem:[#allocation3 + $0x60] sm:$0x1]
        %v5412 = vld [vmem:[#allocation3 + $0x6c] sm:$0xf]
        %v5413 = vld [vmem:[#allocation3 + $0x70] sm:$0xf]
        %v5414 = vld [vmem:[#allocation3 + $0x74] sm:$0x1]
        %v5415 = vld [vmem:[#allocation3 + $0x80] sm:$0xf]
        %v5416 = vld [vmem:[#allocation3 + $0x84] sm:$0xf]
        %v5417 = vld [vmem:[#allocation3 + $0x88] sm:$0x1]
        %v5418 = vld [vmem:[#allocation3 + $0x94] sm:$0xf]
        %v5419 = vld [vmem:[#allocation3 + $0x98] sm:$0xf]
        %v5420 = vld [vmem:[#allocation3 + $0x9c] sm:$0x1]
        %v5421 = vld [vmem:[#allocation3 + $0xa8] sm:$0xf]
        %v5422 = vld [vmem:[#allocation3 + $0xac] sm:$0xf]
        %v5423 = vld [vmem:[#allocation3 + $0xb0] sm:$0x1]
        %v5424 = vld [vmem:[#allocation3 + $0xbc] sm:$0xf]
        %v5425 = vld [vmem:[#allocation3 + $0xc0] sm:$0xf]
        %v5426 = vld [vmem:[#allocation3 + $0xc4] sm:$0x1]
        %v5427 = vld [vmem:[#allocation3 + $0xd0] sm:$0xf]
        %v5428 = vld [vmem:[#allocation3 + $0xd4] sm:$0xf]
        %v5429 = vld [vmem:[#allocation3 + $0xd8] sm:$0x1]
        %v5430 = vld [vmem:[#allocation3 + $0xe4] sm:$0xf]
        %v5431 = vld [vmem:[#allocation3 + $0xe8] sm:$0xf]
        %v5432 = vld [vmem:[#allocation3 + $0xec] sm:$0x1]
        %v5433 = vld [vmem:[#allocation3 + $0xf8] sm:$0xf]
        %v5434 = vld [vmem:[#allocation3 + $0xfc] sm:$0xf]
        %v5435 = vld [vmem:[#allocation3 + $0x100] sm:$0x1]
        %v5436 = vld [vmem:[#allocation3 + $0x10c] sm:$0xf]
        %v5437 = vld [vmem:[#allocation3 + $0x110] sm:$0xf]
        %v5438 = vld [vmem:[#allocation3 + $0x114] sm:$0x1]
        %v5439 = vld [vmem:[#allocation3 + $0x120] sm:$0xf]
        %v5440 = vld [vmem:[#allocation3 + $0x124] sm:$0xf]
        %v5441 = vld [vmem:[#allocation3 + $0x128] sm:$0x1]
        %v5442 = vld [vmem:[#allocation3 + $0x134] sm:$0xf]
        %v5443 = vld [vmem:[#allocation3 + $0x138] sm:$0xf]
        %v5444 = vld [vmem:[#allocation3 + $0x13c] sm:$0x1]
        %v5446 = vshrl.u32 %v5397, 16
        %v5448 = vrot.slane %v5446, 4
        %v5449 = vshll.u32 %v5397, 16
        %v5451 = vrot.slane %v5449, 5
        %v5452 = vor.u32 %v5448, %v5451
        %v5453 = vrot.slane %v5452, 4
        %v5455 = vshll.u32 %v5398, 16
        %v5457 = vrot.slane %v5455, 5
        %v5458 = vsel %vm1306, %v5453, %v5457
        %v5459 = vshrl.u32 %v5398, 16
        %v5461 = vrot.slane %v5459, 4
        %v5462 = vor.u32 %v5461, %v5457
        %v5463 = vrot.slane %v5462, 4
        %v5465 = vshll.u32 %v5399, 16
        %v5467 = vrot.slane %v5465, 5
        %v5468 = vsel %vm1306, %v5463, %v5467
        %v5470 = vshrl.u32 %v5400, 16
        %v5472 = vrot.slane %v5470, 4
        %v5473 = vshll.u32 %v5400, 16
        %v5475 = vrot.slane %v5473, 5
        %v5476 = vor.u32 %v5472, %v5475
        %v5477 = vrot.slane %v5476, 4
        %v5479 = vshll.u32 %v5401, 16
        %v5481 = vrot.slane %v5479, 5
        %v5482 = vsel %vm1306, %v5477, %v5481
        %v5483 = vshrl.u32 %v5401, 16
        %v5485 = vrot.slane %v5483, 4
        %v5486 = vor.u32 %v5485, %v5481
        %v5487 = vrot.slane %v5486, 4
        %v5489 = vshll.u32 %v5402, 16
        %v5491 = vrot.slane %v5489, 5
        %v5492 = vsel %vm1306, %v5487, %v5491
        %v5494 = vshrl.u32 %v5403, 16
        %v5496 = vrot.slane %v5494, 4
        %v5497 = vshll.u32 %v5403, 16
        %v5499 = vrot.slane %v5497, 5
        %v5500 = vor.u32 %v5496, %v5499
        %v5501 = vrot.slane %v5500, 4
        %v5503 = vshll.u32 %v5404, 16
        %v5505 = vrot.slane %v5503, 5
        %v5506 = vsel %vm1306, %v5501, %v5505
        %v5507 = vshrl.u32 %v5404, 16
        %v5509 = vrot.slane %v5507, 4
        %v5510 = vor.u32 %v5509, %v5505
        %v5511 = vrot.slane %v5510, 4
        %v5513 = vshll.u32 %v5405, 16
        %v5515 = vrot.slane %v5513, 5
        %v5516 = vsel %vm1306, %v5511, %v5515
        %v5518 = vshrl.u32 %v5406, 16
        %v5520 = vrot.slane %v5518, 4
        %v5521 = vshll.u32 %v5406, 16
        %v5523 = vrot.slane %v5521, 5
        %v5524 = vor.u32 %v5520, %v5523
        %v5525 = vrot.slane %v5524, 4
        %v5527 = vshll.u32 %v5407, 16
        %v5529 = vrot.slane %v5527, 5
        %v5530 = vsel %vm1306, %v5525, %v5529
        %v5531 = vshrl.u32 %v5407, 16
        %v5533 = vrot.slane %v5531, 4
        %v5534 = vor.u32 %v5533, %v5529
        %v5535 = vrot.slane %v5534, 4
        %v5537 = vshll.u32 %v5408, 16
        %v5539 = vrot.slane %v5537, 5
        %v5540 = vsel %vm1306, %v5535, %v5539
        %v5542 = vshrl.u32 %v5409, 16
        %v5544 = vrot.slane %v5542, 4
        %v5545 = vshll.u32 %v5409, 16
        %v5547 = vrot.slane %v5545, 5
        %v5548 = vor.u32 %v5544, %v5547
        %v5549 = vrot.slane %v5548, 4
        %v5551 = vshll.u32 %v5410, 16
        %v5553 = vrot.slane %v5551, 5
        %v5554 = vsel %vm1306, %v5549, %v5553
        %v5555 = vshrl.u32 %v5410, 16
        %v5557 = vrot.slane %v5555, 4
        %v5558 = vor.u32 %v5557, %v5553
        %v5559 = vrot.slane %v5558, 4
        %v5561 = vshll.u32 %v5411, 16
        %v5563 = vrot.slane %v5561, 5
        %v5564 = vsel %vm1306, %v5559, %v5563
        %v5566 = vshrl.u32 %v5412, 16
        %v5568 = vrot.slane %v5566, 4
        %v5569 = vshll.u32 %v5412, 16
        %v5571 = vrot.slane %v5569, 5
        %v5572 = vor.u32 %v5568, %v5571
        %v5573 = vrot.slane %v5572, 4
        %v5575 = vshll.u32 %v5413, 16
        %v5577 = vrot.slane %v5575, 5
        %v5578 = vsel %vm1306, %v5573, %v5577
        %v5579 = vshrl.u32 %v5413, 16
        %v5581 = vrot.slane %v5579, 4
        %v5582 = vor.u32 %v5581, %v5577
        %v5583 = vrot.slane %v5582, 4
        %v5585 = vshll.u32 %v5414, 16
        %v5587 = vrot.slane %v5585, 5
        %v5588 = vsel %vm1306, %v5583, %v5587
        %v5590 = vshrl.u32 %v5415, 16
        %v5592 = vrot.slane %v5590, 4
        %v5593 = vshll.u32 %v5415, 16
        %v5595 = vrot.slane %v5593, 5
        %v5596 = vor.u32 %v5592, %v5595
        %v5597 = vrot.slane %v5596, 4
        %v5599 = vshll.u32 %v5416, 16
        %v5601 = vrot.slane %v5599, 5
        %v5602 = vsel %vm1306, %v5597, %v5601
        %v5603 = vshrl.u32 %v5416, 16
        %v5605 = vrot.slane %v5603, 4
        %v5606 = vor.u32 %v5605, %v5601
        %v5607 = vrot.slane %v5606, 4
        %v5609 = vshll.u32 %v5417, 16
        %v5611 = vrot.slane %v5609, 5
        %v5612 = vsel %vm1306, %v5607, %v5611
        %v5614 = vshrl.u32 %v5418, 16
        %v5616 = vrot.slane %v5614, 4
        %v5617 = vshll.u32 %v5418, 16
        %v5619 = vrot.slane %v5617, 5
        %v5620 = vor.u32 %v5616, %v5619
        %v5621 = vrot.slane %v5620, 4
        %v5623 = vshll.u32 %v5419, 16
        %v5625 = vrot.slane %v5623, 5
        %v5626 = vsel %vm1306, %v5621, %v5625
        %v5627 = vshrl.u32 %v5419, 16
        %v5629 = vrot.slane %v5627, 4
        %v5630 = vor.u32 %v5629, %v5625
        %v5631 = vrot.slane %v5630, 4
        %v5633 = vshll.u32 %v5420, 16
        %v5635 = vrot.slane %v5633, 5
        %v5636 = vsel %vm1306, %v5631, %v5635
        %v5638 = vshrl.u32 %v5421, 16
        %v5640 = vrot.slane %v5638, 4
        %v5641 = vshll.u32 %v5421, 16
        %v5643 = vrot.slane %v5641, 5
        %v5644 = vor.u32 %v5640, %v5643
        %v5645 = vrot.slane %v5644, 4
        %v5647 = vshll.u32 %v5422, 16
        %v5649 = vrot.slane %v5647, 5
        %v5650 = vsel %vm1306, %v5645, %v5649
        %v5651 = vshrl.u32 %v5422, 16
        %v5653 = vrot.slane %v5651, 4
        %v5654 = vor.u32 %v5653, %v5649
        %v5655 = vrot.slane %v5654, 4
        %v5657 = vshll.u32 %v5423, 16
        %v5659 = vrot.slane %v5657, 5
        %v5660 = vsel %vm1306, %v5655, %v5659
        %v5662 = vshrl.u32 %v5424, 16
        %v5664 = vrot.slane %v5662, 4
        %v5665 = vshll.u32 %v5424, 16
        %v5667 = vrot.slane %v5665, 5
        %v5668 = vor.u32 %v5664, %v5667
        %v5669 = vrot.slane %v5668, 4
        %v5671 = vshll.u32 %v5425, 16
        %v5673 = vrot.slane %v5671, 5
        %v5674 = vsel %vm1306, %v5669, %v5673
        %v5675 = vshrl.u32 %v5425, 16
        %v5677 = vrot.slane %v5675, 4
        %v5678 = vor.u32 %v5677, %v5673
        %v5679 = vrot.slane %v5678, 4
        %v5681 = vshll.u32 %v5426, 16
        %v5683 = vrot.slane %v5681, 5
        %v5684 = vsel %vm1306, %v5679, %v5683
        %v5686 = vshrl.u32 %v5427, 16
        %v5688 = vrot.slane %v5686, 4
        %v5689 = vshll.u32 %v5427, 16
        %v5691 = vrot.slane %v5689, 5
        %v5692 = vor.u32 %v5688, %v5691
        %v5693 = vrot.slane %v5692, 4
        %v5695 = vshll.u32 %v5428, 16
        %v5697 = vrot.slane %v5695, 5
        %v5698 = vsel %vm1306, %v5693, %v5697
        %v5699 = vshrl.u32 %v5428, 16
        %v5701 = vrot.slane %v5699, 4
        %v5702 = vor.u32 %v5701, %v5697
        %v5703 = vrot.slane %v5702, 4
        %v5705 = vshll.u32 %v5429, 16
        %v5707 = vrot.slane %v5705, 5
        %v5708 = vsel %vm1306, %v5703, %v5707
        %v5710 = vshrl.u32 %v5430, 16
        %v5712 = vrot.slane %v5710, 4
        %v5713 = vshll.u32 %v5430, 16
        %v5715 = vrot.slane %v5713, 5
        %v5716 = vor.u32 %v5712, %v5715
        %v5717 = vrot.slane %v5716, 4
        %v5719 = vshll.u32 %v5431, 16
        %v5721 = vrot.slane %v5719, 5
        %v5722 = vsel %vm1306, %v5717, %v5721
        %v5723 = vshrl.u32 %v5431, 16
        %v5725 = vrot.slane %v5723, 4
        %v5726 = vor.u32 %v5725, %v5721
        %v5727 = vrot.slane %v5726, 4
        %v5729 = vshll.u32 %v5432, 16
        %v5731 = vrot.slane %v5729, 5
        %v5732 = vsel %vm1306, %v5727, %v5731
        %v5734 = vshrl.u32 %v5433, 16
        %v5736 = vrot.slane %v5734, 4
        %v5737 = vshll.u32 %v5433, 16
        %v5739 = vrot.slane %v5737, 5
        %v5740 = vor.u32 %v5736, %v5739
        %v5741 = vrot.slane %v5740, 4
        %v5743 = vshll.u32 %v5434, 16
        %v5745 = vrot.slane %v5743, 5
        %v5746 = vsel %vm1306, %v5741, %v5745
        %v5747 = vshrl.u32 %v5434, 16
        %v5749 = vrot.slane %v5747, 4
        %v5750 = vor.u32 %v5749, %v5745
        %v5751 = vrot.slane %v5750, 4
        %v5753 = vshll.u32 %v5435, 16
        %v5755 = vrot.slane %v5753, 5
        %v5756 = vsel %vm1306, %v5751, %v5755
        %v5758 = vshrl.u32 %v5436, 16
        %v5760 = vrot.slane %v5758, 4
        %v5761 = vshll.u32 %v5436, 16
        %v5763 = vrot.slane %v5761, 5
        %v5764 = vor.u32 %v5760, %v5763
        %v5765 = vrot.slane %v5764, 4
        %v5767 = vshll.u32 %v5437, 16
        %v5769 = vrot.slane %v5767, 5
        %v5770 = vsel %vm1306, %v5765, %v5769
        %v5771 = vshrl.u32 %v5437, 16
        %v5773 = vrot.slane %v5771, 4
        %v5774 = vor.u32 %v5773, %v5769
        %v5775 = vrot.slane %v5774, 4
        %v5777 = vshll.u32 %v5438, 16
        %v5779 = vrot.slane %v5777, 5
        %v5780 = vsel %vm1306, %v5775, %v5779
        %v5782 = vshrl.u32 %v5439, 16
        %v5784 = vrot.slane %v5782, 4
        %v5785 = vshll.u32 %v5439, 16
        %v5787 = vrot.slane %v5785, 5
        %v5788 = vor.u32 %v5784, %v5787
        %v5789 = vrot.slane %v5788, 4
        %v5791 = vshll.u32 %v5440, 16
        %v5793 = vrot.slane %v5791, 5
        %v5794 = vsel %vm1306, %v5789, %v5793
        %v5795 = vshrl.u32 %v5440, 16
        %v5797 = vrot.slane %v5795, 4
        %v5798 = vor.u32 %v5797, %v5793
        %v5799 = vrot.slane %v5798, 4
        %v5801 = vshll.u32 %v5441, 16
        %v5803 = vrot.slane %v5801, 5
        %v5804 = vsel %vm1306, %v5799, %v5803
        %v5806 = vshrl.u32 %v5442, 16
        %v5808 = vrot.slane %v5806, 4
        %v5809 = vshll.u32 %v5442, 16
        %v5811 = vrot.slane %v5809, 5
        %v5812 = vor.u32 %v5808, %v5811
        %v5813 = vrot.slane %v5812, 4
        %v5815 = vshll.u32 %v5443, 16
        %v5817 = vrot.slane %v5815, 5
        %v5818 = vsel %vm1306, %v5813, %v5817
        %v5819 = vshrl.u32 %v5443, 16
        %v5821 = vrot.slane %v5819, 4
        %v5822 = vor.u32 %v5821, %v5817
        %v5823 = vrot.slane %v5822, 4
        %v5825 = vshll.u32 %v5444, 16
        %v5827 = vrot.slane %v5825, 5
        %v5828 = vsel %vm1306, %v5823, %v5827
        %v5829 = vunpack.c.l.b16 %v5458
        %v5830 = vunpack.c.l.b16 %v5468
        %v5831 = vunpack.c.l.b16 %v5482
        %v5832 = vunpack.c.l.b16 %v5492
        %v5833 = vunpack.c.l.b16 %v5506
        %v5834 = vunpack.c.l.b16 %v5516
        %v5835 = vunpack.c.l.b16 %v5530
        %v5836 = vunpack.c.l.b16 %v5540
        %v5837 = vunpack.c.l.b16 %v5554
        %v5838 = vunpack.c.l.b16 %v5564
        %v5839 = vunpack.c.l.b16 %v5578
        %v5840 = vunpack.c.l.b16 %v5588
        %v5841 = vunpack.c.l.b16 %v5602
        %v5842 = vunpack.c.l.b16 %v5612
        %v5843 = vunpack.c.l.b16 %v5626
        %v5844 = vunpack.c.l.b16 %v5636
        %v5845 = vunpack.c.l.b16 %v5650
        %v5846 = vunpack.c.l.b16 %v5660
        %v5847 = vunpack.c.l.b16 %v5674
        %v5848 = vunpack.c.l.b16 %v5684
        %v5849 = vunpack.c.l.b16 %v5698
        %v5850 = vunpack.c.l.b16 %v5708
        %v5851 = vunpack.c.l.b16 %v5722
        %v5852 = vunpack.c.l.b16 %v5732
        %v5853 = vunpack.c.l.b16 %v5746
        %v5854 = vunpack.c.l.b16 %v5756
        %v5855 = vunpack.c.l.b16 %v5770
        %v5856 = vunpack.c.l.b16 %v5780
        %v5857 = vunpack.c.l.b16 %v5794
        %v5858 = vunpack.c.l.b16 %v5804
        %v5859 = vunpack.c.l.b16 %v5818
        %v5860 = vunpack.c.l.b16 %v5828
        %v5861 = vpack.c.b16 %v5830, %v5829
        %v5862 = vpack.c.b16 %v5832, %v5831
        %v5863 = vpack.c.b16 %v5834, %v5833
        %v5864 = vpack.c.b16 %v5836, %v5835
        %v5865 = vpack.c.b16 %v5838, %v5837
        %v5866 = vpack.c.b16 %v5840, %v5839
        %v5867 = vpack.c.b16 %v5842, %v5841
        %v5868 = vpack.c.b16 %v5844, %v5843
        %v5869 = vpack.c.b16 %v5846, %v5845
        %v5870 = vpack.c.b16 %v5848, %v5847
        %v5871 = vpack.c.b16 %v5850, %v5849
        %v5872 = vpack.c.b16 %v5852, %v5851
        %v5873 = vpack.c.b16 %v5854, %v5853
        %v5874 = vpack.c.b16 %v5856, %v5855
        %v5875 = vpack.c.b16 %v5858, %v5857
        %v5876 = vpack.c.b16 %v5860, %v5859
        %5877 = vrot.lane.b32.xlu0 %v5861, 16
        %v5878 = vpop.permute.xlu0 %5877
        %5879 = vrot.lane.b32.xlu0 %v5862, 16
        %v5880 = vpop.permute.xlu0 %5879
        %5881 = vrot.lane.b32.xlu0 %v5863, 16
        %v5882 = vpop.permute.xlu0 %5881
        %5883 = vrot.lane.b32.xlu0 %v5864, 16
        %v5884 = vpop.permute.xlu0 %5883
        %5885 = vrot.lane.b32.xlu0 %v5865, 16
        %v5886 = vpop.permute.xlu0 %5885
        %5887 = vrot.lane.b32.xlu0 %v5866, 16
        %v5888 = vpop.permute.xlu0 %5887
        %5889 = vrot.lane.b32.xlu0 %v5867, 16
        %v5890 = vpop.permute.xlu0 %5889
        %5891 = vrot.lane.b32.xlu0 %v5868, 16
        %v5892 = vpop.permute.xlu0 %5891
        %5893 = vrot.lane.b32.xlu0 %v5869, 16
        %v5894 = vpop.permute.xlu0 %5893
        %5895 = vrot.lane.b32.xlu0 %v5870, 16
        %v5896 = vpop.permute.xlu0 %5895
        %5897 = vrot.lane.b32.xlu0 %v5871, 16
        %v5898 = vpop.permute.xlu0 %5897
        %5899 = vrot.lane.b32.xlu0 %v5872, 16
        %v5900 = vpop.permute.xlu0 %5899
        %5901 = vrot.lane.b32.xlu0 %v5873, 16
        %v5902 = vpop.permute.xlu0 %5901
        %5903 = vrot.lane.b32.xlu0 %v5874, 16
        %v5904 = vpop.permute.xlu0 %5903
        %5905 = vrot.lane.b32.xlu0 %v5875, 16
        %v5906 = vpop.permute.xlu0 %5905
        %5907 = vrot.lane.b32.xlu0 %v5876, 16
        %v5908 = vpop.permute.xlu0 %5907
        %5925 = vst.msk [vmem:[#allocation4] sm:$0xff] %vm1787, %v5878
        %5926 = vst.msk [vmem:[#allocation4 + $0x8] sm:$0xff] %vm1787, %v5880
        %5927 = vst.msk [vmem:[#allocation4 + $0x10] sm:$0xff] %vm1787, %v5882
        %5928 = vst.msk [vmem:[#allocation4 + $0x18] sm:$0xff] %vm1787, %v5884
        %5929 = vst.msk [vmem:[#allocation4 + $0x20] sm:$0xff] %vm1787, %v5886
        %5930 = vst.msk [vmem:[#allocation4 + $0x28] sm:$0xff] %vm1787, %v5888
        %5931 = vst.msk [vmem:[#allocation4 + $0x30] sm:$0xff] %vm1787, %v5890
        %5932 = vst.msk [vmem:[#allocation4 + $0x38] sm:$0xff] %vm1787, %v5892
        %5933 = vst.msk [vmem:[#allocation4 + $0x40] sm:$0xff] %vm1787, %v5894
        %5934 = vst.msk [vmem:[#allocation4 + $0x48] sm:$0xff] %vm1787, %v5896
        %5935 = vst.msk [vmem:[#allocation4 + $0x50] sm:$0xff] %vm1787, %v5898
        %5936 = vst.msk [vmem:[#allocation4 + $0x58] sm:$0xff] %vm1787, %v5900
        %5937 = vst.msk [vmem:[#allocation4 + $0x60] sm:$0xff] %vm1787, %v5902
        %5938 = vst.msk [vmem:[#allocation4 + $0x68] sm:$0xff] %vm1787, %v5904
        %5939 = vst.msk [vmem:[#allocation4 + $0x70] sm:$0xff] %vm1787, %v5906
        %5940 = vst.msk [vmem:[#allocation4 + $0x78] sm:$0xff] %vm1787, %v5908
        %v5941 = vld [vmem:[%s4708 + $0x4] sm:$0x8]
        %v5942 = vld [vmem:[%s4708 + $0x8] sm:$0xf]
        %v5943 = vld [vmem:[%s4708 + $0xc] sm:$0xf]
        %v5944 = vld [vmem:[%s4708 + $0x18] sm:$0x8]
        %v5945 = vld [vmem:[%s4708 + $0x1c] sm:$0xf]
        %v5946 = vld [vmem:[%s4708 + $0x20] sm:$0xf]
        %v5947 = vld [vmem:[%s4708 + $0x2c] sm:$0x8]
        %v5948 = vld [vmem:[%s4708 + $0x30] sm:$0xf]
        %v5949 = vld [vmem:[%s4708 + $0x34] sm:$0xf]
        %v5950 = vld [vmem:[%s4708 + $0x40] sm:$0x8]
        %v5951 = vld [vmem:[%s4708 + $0x44] sm:$0xf]
        %v5952 = vld [vmem:[%s4708 + $0x48] sm:$0xf]
        %v5953 = vld [vmem:[%s4708 + $0x54] sm:$0x8]
        %v5954 = vld [vmem:[%s4708 + $0x58] sm:$0xf]
        %v5955 = vld [vmem:[%s4708 + $0x5c] sm:$0xf]
        %v5956 = vld [vmem:[%s4708 + $0x68] sm:$0x8]
        %v5957 = vld [vmem:[%s4708 + $0x6c] sm:$0xf]
        %v5958 = vld [vmem:[%s4708 + $0x70] sm:$0xf]
        %v5959 = vld [vmem:[%s4708 + $0x7c] sm:$0x8]
        %v5960 = vld [vmem:[%s4708 + $0x80] sm:$0xf]
        %v5961 = vld [vmem:[%s4708 + $0x84] sm:$0xf]
        %v5962 = vld [vmem:[%s4708 + $0x90] sm:$0x8]
        %v5963 = vld [vmem:[%s4708 + $0x94] sm:$0xf]
        %v5964 = vld [vmem:[%s4708 + $0x98] sm:$0xf]
        %v5965 = vld [vmem:[%s4708 + $0xa4] sm:$0x8]
        %v5966 = vld [vmem:[%s4708 + $0xa8] sm:$0xf]
        %v5967 = vld [vmem:[%s4708 + $0xac] sm:$0xf]
        %v5968 = vld [vmem:[%s4708 + $0xb8] sm:$0x8]
        %v5969 = vld [vmem:[%s4708 + $0xbc] sm:$0xf]
        %v5970 = vld [vmem:[%s4708 + $0xc0] sm:$0xf]
        %v5971 = vld [vmem:[%s4708 + $0xcc] sm:$0x8]
        %v5972 = vld [vmem:[%s4708 + $0xd0] sm:$0xf]
        %v5973 = vld [vmem:[%s4708 + $0xd4] sm:$0xf]
        %v5974 = vld [vmem:[%s4708 + $0xe0] sm:$0x8]
        %v5975 = vld [vmem:[%s4708 + $0xe4] sm:$0xf]
        %v5976 = vld [vmem:[%s4708 + $0xe8] sm:$0xf]
        %v5977 = vld [vmem:[%s4708 + $0xf4] sm:$0x8]
        %v5978 = vld [vmem:[%s4708 + $0xf8] sm:$0xf]
        %v5979 = vld [vmem:[%s4708 + $0xfc] sm:$0xf]
        %v5980 = vld [vmem:[%s4708 + $0x108] sm:$0x8]
        %v5981 = vld [vmem:[%s4708 + $0x10c] sm:$0xf]
        %v5982 = vld [vmem:[%s4708 + $0x110] sm:$0xf]
        %v5983 = vld [vmem:[%s4708 + $0x11c] sm:$0x8]
        %v5984 = vld [vmem:[%s4708 + $0x120] sm:$0xf]
        %v5985 = vld [vmem:[%s4708 + $0x124] sm:$0xf]
        %v5986 = vld [vmem:[%s4708 + $0x130] sm:$0x8]
        %v5987 = vld [vmem:[%s4708 + $0x134] sm:$0xf]
        %v5988 = vld [vmem:[%s4708 + $0x138] sm:$0xf]
        %v5990 = vshrl.u32 %v5941, 16
        %v5992 = vrot.slane %v5990, 7
        %v5993 = vrot.slane %v5992, 4
        %v5995 = vshrl.u32 %v5942, 16
        %v5997 = vrot.slane %v5995, 7
        %v5998 = vshll.u32 %v5942, 16
        %v6000 = vor.u32 %v5997, %v5998
        %v6001 = vsel %vm645, %v5993, %v6000
        %v6002 = vrot.slane %v5997, 4
        %v6004 = vshrl.u32 %v5943, 16
        %v6006 = vrot.slane %v6004, 7
        %v6007 = vshll.u32 %v5943, 16
        %v6009 = vor.u32 %v6006, %v6007
        %v6010 = vsel %vm645, %v6002, %v6009
        %v6012 = vshrl.u32 %v5944, 16
        %v6014 = vrot.slane %v6012, 7
        %v6015 = vrot.slane %v6014, 4
        %v6017 = vshrl.u32 %v5945, 16
        %v6019 = vrot.slane %v6017, 7
        %v6020 = vshll.u32 %v5945, 16
        %v6022 = vor.u32 %v6019, %v6020
        %v6023 = vsel %vm645, %v6015, %v6022
        %v6024 = vrot.slane %v6019, 4
        %v6026 = vshrl.u32 %v5946, 16
        %v6028 = vrot.slane %v6026, 7
        %v6029 = vshll.u32 %v5946, 16
        %v6031 = vor.u32 %v6028, %v6029
        %v6032 = vsel %vm645, %v6024, %v6031
        %v6034 = vshrl.u32 %v5947, 16
        %v6036 = vrot.slane %v6034, 7
        %v6037 = vrot.slane %v6036, 4
        %v6039 = vshrl.u32 %v5948, 16
        %v6041 = vrot.slane %v6039, 7
        %v6042 = vshll.u32 %v5948, 16
        %v6044 = vor.u32 %v6041, %v6042
        %v6045 = vsel %vm645, %v6037, %v6044
        %v6046 = vrot.slane %v6041, 4
        %v6048 = vshrl.u32 %v5949, 16
        %v6050 = vrot.slane %v6048, 7
        %v6051 = vshll.u32 %v5949, 16
        %v6053 = vor.u32 %v6050, %v6051
        %v6054 = vsel %vm645, %v6046, %v6053
        %v6056 = vshrl.u32 %v5950, 16
        %v6058 = vrot.slane %v6056, 7
        %v6059 = vrot.slane %v6058, 4
        %v6061 = vshrl.u32 %v5951, 16
        %v6063 = vrot.slane %v6061, 7
        %v6064 = vshll.u32 %v5951, 16
        %v6066 = vor.u32 %v6063, %v6064
        %v6067 = vsel %vm645, %v6059, %v6066
        %v6068 = vrot.slane %v6063, 4
        %v6070 = vshrl.u32 %v5952, 16
        %v6072 = vrot.slane %v6070, 7
        %v6073 = vshll.u32 %v5952, 16
        %v6075 = vor.u32 %v6072, %v6073
        %v6076 = vsel %vm645, %v6068, %v6075
        %v6078 = vshrl.u32 %v5953, 16
        %v6080 = vrot.slane %v6078, 7
        %v6081 = vrot.slane %v6080, 4
        %v6083 = vshrl.u32 %v5954, 16
        %v6085 = vrot.slane %v6083, 7
        %v6086 = vshll.u32 %v5954, 16
        %v6088 = vor.u32 %v6085, %v6086
        %v6089 = vsel %vm645, %v6081, %v6088
        %v6090 = vrot.slane %v6085, 4
        %v6092 = vshrl.u32 %v5955, 16
        %v6094 = vrot.slane %v6092, 7
        %v6095 = vshll.u32 %v5955, 16
        %v6097 = vor.u32 %v6094, %v6095
        %v6098 = vsel %vm645, %v6090, %v6097
        %v6100 = vshrl.u32 %v5956, 16
        %v6102 = vrot.slane %v6100, 7
        %v6103 = vrot.slane %v6102, 4
        %v6105 = vshrl.u32 %v5957, 16
        %v6107 = vrot.slane %v6105, 7
        %v6108 = vshll.u32 %v5957, 16
        %v6110 = vor.u32 %v6107, %v6108
        %v6111 = vsel %vm645, %v6103, %v6110
        %v6112 = vrot.slane %v6107, 4
        %v6114 = vshrl.u32 %v5958, 16
        %v6116 = vrot.slane %v6114, 7
        %v6117 = vshll.u32 %v5958, 16
        %v6119 = vor.u32 %v6116, %v6117
        %v6120 = vsel %vm645, %v6112, %v6119
        %v6122 = vshrl.u32 %v5959, 16
        %v6124 = vrot.slane %v6122, 7
        %v6125 = vrot.slane %v6124, 4
        %v6127 = vshrl.u32 %v5960, 16
        %v6129 = vrot.slane %v6127, 7
        %v6130 = vshll.u32 %v5960, 16
        %v6132 = vor.u32 %v6129, %v6130
        %v6133 = vsel %vm645, %v6125, %v6132
        %v6134 = vrot.slane %v6129, 4
        %v6136 = vshrl.u32 %v5961, 16
        %v6138 = vrot.slane %v6136, 7
        %v6139 = vshll.u32 %v5961, 16
        %v6141 = vor.u32 %v6138, %v6139
        %v6142 = vsel %vm645, %v6134, %v6141
        %v6144 = vshrl.u32 %v5962, 16
        %v6146 = vrot.slane %v6144, 7
        %v6147 = vrot.slane %v6146, 4
        %v6149 = vshrl.u32 %v5963, 16
        %v6151 = vrot.slane %v6149, 7
        %v6152 = vshll.u32 %v5963, 16
        %v6154 = vor.u32 %v6151, %v6152
        %v6155 = vsel %vm645, %v6147, %v6154
        %v6156 = vrot.slane %v6151, 4
        %v6158 = vshrl.u32 %v5964, 16
        %v6160 = vrot.slane %v6158, 7
        %v6161 = vshll.u32 %v5964, 16
        %v6163 = vor.u32 %v6160, %v6161
        %v6164 = vsel %vm645, %v6156, %v6163
        %v6166 = vshrl.u32 %v5965, 16
        %v6168 = vrot.slane %v6166, 7
        %v6169 = vrot.slane %v6168, 4
        %v6171 = vshrl.u32 %v5966, 16
        %v6173 = vrot.slane %v6171, 7
        %v6174 = vshll.u32 %v5966, 16
        %v6176 = vor.u32 %v6173, %v6174
        %v6177 = vsel %vm645, %v6169, %v6176
        %v6178 = vrot.slane %v6173, 4
        %v6180 = vshrl.u32 %v5967, 16
        %v6182 = vrot.slane %v6180, 7
        %v6183 = vshll.u32 %v5967, 16
        %v6185 = vor.u32 %v6182, %v6183
        %v6186 = vsel %vm645, %v6178, %v6185
        %v6188 = vshrl.u32 %v5968, 16
        %v6190 = vrot.slane %v6188, 7
        %v6191 = vrot.slane %v6190, 4
        %v6193 = vshrl.u32 %v5969, 16
        %v6195 = vrot.slane %v6193, 7
        %v6196 = vshll.u32 %v5969, 16
        %v6198 = vor.u32 %v6195, %v6196
        %v6199 = vsel %vm645, %v6191, %v6198
        %v6200 = vrot.slane %v6195, 4
        %v6202 = vshrl.u32 %v5970, 16
        %v6204 = vrot.slane %v6202, 7
        %v6205 = vshll.u32 %v5970, 16
        %v6207 = vor.u32 %v6204, %v6205
        %v6208 = vsel %vm645, %v6200, %v6207
        %v6210 = vshrl.u32 %v5971, 16
        %v6212 = vrot.slane %v6210, 7
        %v6213 = vrot.slane %v6212, 4
        %v6215 = vshrl.u32 %v5972, 16
        %v6217 = vrot.slane %v6215, 7
        %v6218 = vshll.u32 %v5972, 16
        %v6220 = vor.u32 %v6217, %v6218
        %v6221 = vsel %vm645, %v6213, %v6220
        %v6222 = vrot.slane %v6217, 4
        %v6224 = vshrl.u32 %v5973, 16
        %v6226 = vrot.slane %v6224, 7
        %v6227 = vshll.u32 %v5973, 16
        %v6229 = vor.u32 %v6226, %v6227
        %v6230 = vsel %vm645, %v6222, %v6229
        %v6232 = vshrl.u32 %v5974, 16
        %v6234 = vrot.slane %v6232, 7
        %v6235 = vrot.slane %v6234, 4
        %v6237 = vshrl.u32 %v5975, 16
        %v6239 = vrot.slane %v6237, 7
        %v6240 = vshll.u32 %v5975, 16
        %v6242 = vor.u32 %v6239, %v6240
        %v6243 = vsel %vm645, %v6235, %v6242
        %v6244 = vrot.slane %v6239, 4
        %v6246 = vshrl.u32 %v5976, 16
        %v6248 = vrot.slane %v6246, 7
        %v6249 = vshll.u32 %v5976, 16
        %v6251 = vor.u32 %v6248, %v6249
        %v6252 = vsel %vm645, %v6244, %v6251
        %v6254 = vshrl.u32 %v5977, 16
        %v6256 = vrot.slane %v6254, 7
        %v6257 = vrot.slane %v6256, 4
        %v6259 = vshrl.u32 %v5978, 16
        %v6261 = vrot.slane %v6259, 7
        %v6262 = vshll.u32 %v5978, 16
        %v6264 = vor.u32 %v6261, %v6262
        %v6265 = vsel %vm645, %v6257, %v6264
        %v6266 = vrot.slane %v6261, 4
        %v6268 = vshrl.u32 %v5979, 16
        %v6270 = vrot.slane %v6268, 7
        %v6271 = vshll.u32 %v5979, 16
        %v6273 = vor.u32 %v6270, %v6271
        %v6274 = vsel %vm645, %v6266, %v6273
        %v6276 = vshrl.u32 %v5980, 16
        %v6278 = vrot.slane %v6276, 7
        %v6279 = vrot.slane %v6278, 4
        %v6281 = vshrl.u32 %v5981, 16
        %v6283 = vrot.slane %v6281, 7
        %v6284 = vshll.u32 %v5981, 16
        %v6286 = vor.u32 %v6283, %v6284
        %v6287 = vsel %vm645, %v6279, %v6286
        %v6288 = vrot.slane %v6283, 4
        %v6290 = vshrl.u32 %v5982, 16
        %v6292 = vrot.slane %v6290, 7
        %v6293 = vshll.u32 %v5982, 16
        %v6295 = vor.u32 %v6292, %v6293
        %v6296 = vsel %vm645, %v6288, %v6295
        %v6298 = vshrl.u32 %v5983, 16
        %v6300 = vrot.slane %v6298, 7
        %v6301 = vrot.slane %v6300, 4
        %v6303 = vshrl.u32 %v5984, 16
        %v6305 = vrot.slane %v6303, 7
        %v6306 = vshll.u32 %v5984, 16
        %v6308 = vor.u32 %v6305, %v6306
        %v6309 = vsel %vm645, %v6301, %v6308
        %v6310 = vrot.slane %v6305, 4
        %v6312 = vshrl.u32 %v5985, 16
        %v6314 = vrot.slane %v6312, 7
        %v6315 = vshll.u32 %v5985, 16
        %v6317 = vor.u32 %v6314, %v6315
        %v6318 = vsel %vm645, %v6310, %v6317
        %v6320 = vshrl.u32 %v5986, 16
        %v6322 = vrot.slane %v6320, 7
        %v6323 = vrot.slane %v6322, 4
        %v6325 = vshrl.u32 %v5987, 16
        %v6327 = vrot.slane %v6325, 7
        %v6328 = vshll.u32 %v5987, 16
        %v6330 = vor.u32 %v6327, %v6328
        %v6331 = vsel %vm645, %v6323, %v6330
        %v6332 = vrot.slane %v6327, 4
        %v6334 = vshrl.u32 %v5988, 16
        %v6336 = vrot.slane %v6334, 7
        %v6337 = vshll.u32 %v5988, 16
        %v6339 = vor.u32 %v6336, %v6337
        %v6340 = vsel %vm645, %v6332, %v6339
        %v6341 = vunpack.c.l.b16 %v6001
        %v6342 = vunpack.c.l.b16 %v6010
        %v6343 = vunpack.c.l.b16 %v6023
        %v6344 = vunpack.c.l.b16 %v6032
        %v6345 = vunpack.c.l.b16 %v6045
        %v6346 = vunpack.c.l.b16 %v6054
        %v6347 = vunpack.c.l.b16 %v6067
        %v6348 = vunpack.c.l.b16 %v6076
        %v6349 = vunpack.c.l.b16 %v6089
        %v6350 = vunpack.c.l.b16 %v6098
        %v6351 = vunpack.c.l.b16 %v6111
        %v6352 = vunpack.c.l.b16 %v6120
        %v6353 = vunpack.c.l.b16 %v6133
        %v6354 = vunpack.c.l.b16 %v6142
        %v6355 = vunpack.c.l.b16 %v6155
        %v6356 = vunpack.c.l.b16 %v6164
        %v6357 = vunpack.c.l.b16 %v6177
        %v6358 = vunpack.c.l.b16 %v6186
        %v6359 = vunpack.c.l.b16 %v6199
        %v6360 = vunpack.c.l.b16 %v6208
        %v6361 = vunpack.c.l.b16 %v6221
        %v6362 = vunpack.c.l.b16 %v6230
        %v6363 = vunpack.c.l.b16 %v6243
        %v6364 = vunpack.c.l.b16 %v6252
        %v6365 = vunpack.c.l.b16 %v6265
        %v6366 = vunpack.c.l.b16 %v6274
        %v6367 = vunpack.c.l.b16 %v6287
        %v6368 = vunpack.c.l.b16 %v6296
        %v6369 = vunpack.c.l.b16 %v6309
        %v6370 = vunpack.c.l.b16 %v6318
        %v6371 = vunpack.c.l.b16 %v6331
        %v6372 = vunpack.c.l.b16 %v6340
        %v6373 = vpack.c.b16 %v6342, %v6341
        %v6374 = vpack.c.b16 %v6344, %v6343
        %v6375 = vpack.c.b16 %v6346, %v6345
        %v6376 = vpack.c.b16 %v6348, %v6347
        %v6377 = vpack.c.b16 %v6350, %v6349
        %v6378 = vpack.c.b16 %v6352, %v6351
        %v6379 = vpack.c.b16 %v6354, %v6353
        %v6380 = vpack.c.b16 %v6356, %v6355
        %v6381 = vpack.c.b16 %v6358, %v6357
        %v6382 = vpack.c.b16 %v6360, %v6359
        %v6383 = vpack.c.b16 %v6362, %v6361
        %v6384 = vpack.c.b16 %v6364, %v6363
        %v6385 = vpack.c.b16 %v6366, %v6365
        %v6386 = vpack.c.b16 %v6368, %v6367
        %v6387 = vpack.c.b16 %v6370, %v6369
        %v6388 = vpack.c.b16 %v6372, %v6371
        %6389 = vrot.lane.b32.xlu0 %v6373, 24
        %v6390 = vpop.permute.xlu0 %6389
        %6391 = vrot.lane.b32.xlu0 %v6374, 24
        %v6392 = vpop.permute.xlu0 %6391
        %6393 = vrot.lane.b32.xlu0 %v6375, 24
        %v6394 = vpop.permute.xlu0 %6393
        %6395 = vrot.lane.b32.xlu0 %v6376, 24
        %v6396 = vpop.permute.xlu0 %6395
        %6397 = vrot.lane.b32.xlu0 %v6377, 24
        %v6398 = vpop.permute.xlu0 %6397
        %6399 = vrot.lane.b32.xlu0 %v6378, 24
        %v6400 = vpop.permute.xlu0 %6399
        %6401 = vrot.lane.b32.xlu0 %v6379, 24
        %v6402 = vpop.permute.xlu0 %6401
        %6403 = vrot.lane.b32.xlu0 %v6380, 24
        %v6404 = vpop.permute.xlu0 %6403
        %6405 = vrot.lane.b32.xlu0 %v6381, 24
        %v6406 = vpop.permute.xlu0 %6405
        %6407 = vrot.lane.b32.xlu0 %v6382, 24
        %v6408 = vpop.permute.xlu0 %6407
        %6409 = vrot.lane.b32.xlu0 %v6383, 24
        %v6410 = vpop.permute.xlu0 %6409
        %6411 = vrot.lane.b32.xlu0 %v6384, 24
        %v6412 = vpop.permute.xlu0 %6411
        %6413 = vrot.lane.b32.xlu0 %v6385, 24
        %v6414 = vpop.permute.xlu0 %6413
        %6415 = vrot.lane.b32.xlu0 %v6386, 24
        %v6416 = vpop.permute.xlu0 %6415
        %6417 = vrot.lane.b32.xlu0 %v6387, 24
        %v6418 = vpop.permute.xlu0 %6417
        %6419 = vrot.lane.b32.xlu0 %v6388, 24
        %v6420 = vpop.permute.xlu0 %6419
        %6437 = vst.msk [vmem:[#allocation4] sm:$0xff] %vm2300, %v6390
        %6438 = vst.msk [vmem:[#allocation4 + $0x8] sm:$0xff] %vm2300, %v6392
        %6439 = vst.msk [vmem:[#allocation4 + $0x10] sm:$0xff] %vm2300, %v6394
        %6440 = vst.msk [vmem:[#allocation4 + $0x18] sm:$0xff] %vm2300, %v6396
        %6441 = vst.msk [vmem:[#allocation4 + $0x20] sm:$0xff] %vm2300, %v6398
        %6442 = vst.msk [vmem:[#allocation4 + $0x28] sm:$0xff] %vm2300, %v6400
        %6443 = vst.msk [vmem:[#allocation4 + $0x30] sm:$0xff] %vm2300, %v6402
        %6444 = vst.msk [vmem:[#allocation4 + $0x38] sm:$0xff] %vm2300, %v6404
        %6445 = vst.msk [vmem:[#allocation4 + $0x40] sm:$0xff] %vm2300, %v6406
        %6446 = vst.msk [vmem:[#allocation4 + $0x48] sm:$0xff] %vm2300, %v6408
        %6447 = vst.msk [vmem:[#allocation4 + $0x50] sm:$0xff] %vm2300, %v6410
        %6448 = vst.msk [vmem:[#allocation4 + $0x58] sm:$0xff] %vm2300, %v6412
        %6449 = vst.msk [vmem:[#allocation4 + $0x60] sm:$0xff] %vm2300, %v6414
        %6450 = vst.msk [vmem:[#allocation4 + $0x68] sm:$0xff] %vm2300, %v6416
        %6451 = vst.msk [vmem:[#allocation4 + $0x70] sm:$0xff] %vm2300, %v6418
        %6452 = vst.msk [vmem:[#allocation4 + $0x78] sm:$0xff] %vm2300, %v6420
        %v6453 = vld [vmem:[%s4708 + $0x8] sm:$0xf]
        %v6454 = vld [vmem:[%s4708 + $0xc] sm:$0xf]
        %v6455 = vld [vmem:[%s4708 + $0x1c] sm:$0xf]
        %v6456 = vld [vmem:[%s4708 + $0x20] sm:$0xf]
        %v6457 = vld [vmem:[%s4708 + $0x30] sm:$0xf]
        %v6458 = vld [vmem:[%s4708 + $0x34] sm:$0xf]
        %v6459 = vld [vmem:[%s4708 + $0x44] sm:$0xf]
        %v6460 = vld [vmem:[%s4708 + $0x48] sm:$0xf]
        %v6461 = vld [vmem:[%s4708 + $0x58] sm:$0xf]
        %v6462 = vld [vmem:[%s4708 + $0x5c] sm:$0xf]
        %v6463 = vld [vmem:[%s4708 + $0x6c] sm:$0xf]
        %v6464 = vld [vmem:[%s4708 + $0x70] sm:$0xf]
        %v6465 = vld [vmem:[%s4708 + $0x80] sm:$0xf]
        %v6466 = vld [vmem:[%s4708 + $0x84] sm:$0xf]
        %v6467 = vld [vmem:[%s4708 + $0x94] sm:$0xf]
        %v6468 = vld [vmem:[%s4708 + $0x98] sm:$0xf]
        %v6469 = vld [vmem:[%s4708 + $0xa8] sm:$0xf]
        %v6470 = vld [vmem:[%s4708 + $0xac] sm:$0xf]
        %v6471 = vld [vmem:[%s4708 + $0xbc] sm:$0xf]
        %v6472 = vld [vmem:[%s4708 + $0xc0] sm:$0xf]
        %v6473 = vld [vmem:[%s4708 + $0xd0] sm:$0xf]
        %v6474 = vld [vmem:[%s4708 + $0xd4] sm:$0xf]
        %v6475 = vld [vmem:[%s4708 + $0xe4] sm:$0xf]
        %v6476 = vld [vmem:[%s4708 + $0xe8] sm:$0xf]
        %v6477 = vld [vmem:[%s4708 + $0xf8] sm:$0xf]
        %v6478 = vld [vmem:[%s4708 + $0xfc] sm:$0xf]
        %v6479 = vld [vmem:[%s4708 + $0x10c] sm:$0xf]
        %v6480 = vld [vmem:[%s4708 + $0x110] sm:$0xf]
        %v6481 = vld [vmem:[%s4708 + $0x120] sm:$0xf]
        %v6482 = vld [vmem:[%s4708 + $0x124] sm:$0xf]
        %v6483 = vld [vmem:[%s4708 + $0x134] sm:$0xf]
        %v6484 = vld [vmem:[%s4708 + $0x138] sm:$0xf]
        %v6517 = vunpack.c.l.b16 %v6453
        %v6518 = vunpack.c.l.b16 %v6454
        %v6519 = vunpack.c.l.b16 %v6455
        %v6520 = vunpack.c.l.b16 %v6456
        %v6521 = vunpack.c.l.b16 %v6457
        %v6522 = vunpack.c.l.b16 %v6458
        %v6523 = vunpack.c.l.b16 %v6459
        %v6524 = vunpack.c.l.b16 %v6460
        %v6525 = vunpack.c.l.b16 %v6461
        %v6526 = vunpack.c.l.b16 %v6462
        %v6527 = vunpack.c.l.b16 %v6463
        %v6528 = vunpack.c.l.b16 %v6464
        %v6529 = vunpack.c.l.b16 %v6465
        %v6530 = vunpack.c.l.b16 %v6466
        %v6531 = vunpack.c.l.b16 %v6467
        %v6532 = vunpack.c.l.b16 %v6468
        %v6533 = vunpack.c.l.b16 %v6469
        %v6534 = vunpack.c.l.b16 %v6470
        %v6535 = vunpack.c.l.b16 %v6471
        %v6536 = vunpack.c.l.b16 %v6472
        %v6537 = vunpack.c.l.b16 %v6473
        %v6538 = vunpack.c.l.b16 %v6474
        %v6539 = vunpack.c.l.b16 %v6475
        %v6540 = vunpack.c.l.b16 %v6476
        %v6541 = vunpack.c.l.b16 %v6477
        %v6542 = vunpack.c.l.b16 %v6478
        %v6543 = vunpack.c.l.b16 %v6479
        %v6544 = vunpack.c.l.b16 %v6480
        %v6545 = vunpack.c.l.b16 %v6481
        %v6546 = vunpack.c.l.b16 %v6482
        %v6547 = vunpack.c.l.b16 %v6483
        %v6548 = vunpack.c.l.b16 %v6484
        %v6549 = vpack.c.b16 %v6518, %v6517
        %v6550 = vpack.c.b16 %v6520, %v6519
        %v6551 = vpack.c.b16 %v6522, %v6521
        %v6552 = vpack.c.b16 %v6524, %v6523
        %v6553 = vpack.c.b16 %v6526, %v6525
        %v6554 = vpack.c.b16 %v6528, %v6527
        %v6555 = vpack.c.b16 %v6530, %v6529
        %v6556 = vpack.c.b16 %v6532, %v6531
        %v6557 = vpack.c.b16 %v6534, %v6533
        %v6558 = vpack.c.b16 %v6536, %v6535
        %v6559 = vpack.c.b16 %v6538, %v6537
        %v6560 = vpack.c.b16 %v6540, %v6539
        %v6561 = vpack.c.b16 %v6542, %v6541
        %v6562 = vpack.c.b16 %v6544, %v6543
        %v6563 = vpack.c.b16 %v6546, %v6545
        %v6564 = vpack.c.b16 %v6548, %v6547
        %6565 = vrot.lane.b32.xlu0 %v6549, 32
        %v6566 = vpop.permute.xlu0 %6565
        %6567 = vrot.lane.b32.xlu0 %v6550, 32
        %v6568 = vpop.permute.xlu0 %6567
        %6569 = vrot.lane.b32.xlu0 %v6551, 32
        %v6570 = vpop.permute.xlu0 %6569
        %6571 = vrot.lane.b32.xlu0 %v6552, 32
        %v6572 = vpop.permute.xlu0 %6571
        %6573 = vrot.lane.b32.xlu0 %v6553, 32
        %v6574 = vpop.permute.xlu0 %6573
        %6575 = vrot.lane.b32.xlu0 %v6554, 32
        %v6576 = vpop.permute.xlu0 %6575
        %6577 = vrot.lane.b32.xlu0 %v6555, 32
        %v6578 = vpop.permute.xlu0 %6577
        %6579 = vrot.lane.b32.xlu0 %v6556, 32
        %v6580 = vpop.permute.xlu0 %6579
        %6581 = vrot.lane.b32.xlu0 %v6557, 32
        %v6582 = vpop.permute.xlu0 %6581
        %6583 = vrot.lane.b32.xlu0 %v6558, 32
        %v6584 = vpop.permute.xlu0 %6583
        %6585 = vrot.lane.b32.xlu0 %v6559, 32
        %v6586 = vpop.permute.xlu0 %6585
        %6587 = vrot.lane.b32.xlu0 %v6560, 32
        %v6588 = vpop.permute.xlu0 %6587
        %6589 = vrot.lane.b32.xlu0 %v6561, 32
        %v6590 = vpop.permute.xlu0 %6589
        %6591 = vrot.lane.b32.xlu0 %v6562, 32
        %v6592 = vpop.permute.xlu0 %6591
        %6593 = vrot.lane.b32.xlu0 %v6563, 32
        %v6594 = vpop.permute.xlu0 %6593
        %6595 = vrot.lane.b32.xlu0 %v6564, 32
        %v6596 = vpop.permute.xlu0 %6595
        %6613 = vst.msk [vmem:[#allocation4] sm:$0xff] %vm2477, %v6566
        %6614 = vst.msk [vmem:[#allocation4 + $0x8] sm:$0xff] %vm2477, %v6568
        %6615 = vst.msk [vmem:[#allocation4 + $0x10] sm:$0xff] %vm2477, %v6570
        %6616 = vst.msk [vmem:[#allocation4 + $0x18] sm:$0xff] %vm2477, %v6572
        %6617 = vst.msk [vmem:[#allocation4 + $0x20] sm:$0xff] %vm2477, %v6574
        %6618 = vst.msk [vmem:[#allocation4 + $0x28] sm:$0xff] %vm2477, %v6576
        %6619 = vst.msk [vmem:[#allocation4 + $0x30] sm:$0xff] %vm2477, %v6578
        %6620 = vst.msk [vmem:[#allocation4 + $0x38] sm:$0xff] %vm2477, %v6580
        %6621 = vst.msk [vmem:[#allocation4 + $0x40] sm:$0xff] %vm2477, %v6582
        %6622 = vst.msk [vmem:[#allocation4 + $0x48] sm:$0xff] %vm2477, %v6584
        %6623 = vst.msk [vmem:[#allocation4 + $0x50] sm:$0xff] %vm2477, %v6586
        %6624 = vst.msk [vmem:[#allocation4 + $0x58] sm:$0xff] %vm2477, %v6588
        %6625 = vst.msk [vmem:[#allocation4 + $0x60] sm:$0xff] %vm2477, %v6590
        %6626 = vst.msk [vmem:[#allocation4 + $0x68] sm:$0xff] %vm2477, %v6592
        %6627 = vst.msk [vmem:[#allocation4 + $0x70] sm:$0xff] %vm2477, %v6594
        %6628 = vst.msk [vmem:[#allocation4 + $0x78] sm:$0xff] %vm2477, %v6596
        %v6629 = vld [vmem:[%s4708 + $0x8] sm:$0xf]
        %v6630 = vld [vmem:[%s4708 + $0xc] sm:$0xf]
        %v6631 = vld [vmem:[%s4708 + $0x10] sm:$0x1]
        %v6632 = vld [vmem:[%s4708 + $0x1c] sm:$0xf]
        %v6633 = vld [vmem:[%s4708 + $0x20] sm:$0xf]
        %v6634 = vld [vmem:[%s4708 + $0x24] sm:$0x1]
        %v6635 = vld [vmem:[%s4708 + $0x30] sm:$0xf]
        %v6636 = vld [vmem:[%s4708 + $0x34] sm:$0xf]
        %v6637 = vld [vmem:[%s4708 + $0x38] sm:$0x1]
        %v6638 = vld [vmem:[%s4708 + $0x44] sm:$0xf]
        %v6639 = vld [vmem:[%s4708 + $0x48] sm:$0xf]
        %v6640 = vld [vmem:[%s4708 + $0x4c] sm:$0x1]
        %v6641 = vld [vmem:[%s4708 + $0x58] sm:$0xf]
        %v6642 = vld [vmem:[%s4708 + $0x5c] sm:$0xf]
        %v6643 = vld [vmem:[%s4708 + $0x60] sm:$0x1]
        %v6644 = vld [vmem:[%s4708 + $0x6c] sm:$0xf]
        %v6645 = vld [vmem:[%s4708 + $0x70] sm:$0xf]
        %v6646 = vld [vmem:[%s4708 + $0x74] sm:$0x1]
        %v6647 = vld [vmem:[%s4708 + $0x80] sm:$0xf]
        %v6648 = vld [vmem:[%s4708 + $0x84] sm:$0xf]
        %v6649 = vld [vmem:[%s4708 + $0x88] sm:$0x1]
        %v6650 = vld [vmem:[%s4708 + $0x94] sm:$0xf]
        %v6651 = vld [vmem:[%s4708 + $0x98] sm:$0xf]
        %v6652 = vld [vmem:[%s4708 + $0x9c] sm:$0x1]
        %v6653 = vld [vmem:[%s4708 + $0xa8] sm:$0xf]
        %v6654 = vld [vmem:[%s4708 + $0xac] sm:$0xf]
        %v6655 = vld [vmem:[%s4708 + $0xb0] sm:$0x1]
        %v6656 = vld [vmem:[%s4708 + $0xbc] sm:$0xf]
        %v6657 = vld [vmem:[%s4708 + $0xc0] sm:$0xf]
        %v6658 = vld [vmem:[%s4708 + $0xc4] sm:$0x1]
        %v6659 = vld [vmem:[%s4708 + $0xd0] sm:$0xf]
        %v6660 = vld [vmem:[%s4708 + $0xd4] sm:$0xf]
        %v6661 = vld [vmem:[%s4708 + $0xd8] sm:$0x1]
        %v6662 = vld [vmem:[%s4708 + $0xe4] sm:$0xf]
        %v6663 = vld [vmem:[%s4708 + $0xe8] sm:$0xf]
        %v6664 = vld [vmem:[%s4708 + $0xec] sm:$0x1]
        %v6665 = vld [vmem:[%s4708 + $0xf8] sm:$0xf]
        %v6666 = vld [vmem:[%s4708 + $0xfc] sm:$0xf]
        %v6667 = vld [vmem:[%s4708 + $0x100] sm:$0x1]
        %v6668 = vld [vmem:[%s4708 + $0x10c] sm:$0xf]
        %v6669 = vld [vmem:[%s4708 + $0x110] sm:$0xf]
        %v6670 = vld [vmem:[%s4708 + $0x114] sm:$0x1]
        %v6671 = vld [vmem:[%s4708 + $0x120] sm:$0xf]
        %v6672 = vld [vmem:[%s4708 + $0x124] sm:$0xf]
        %v6673 = vld [vmem:[%s4708 + $0x128] sm:$0x1]
        %v6674 = vld [vmem:[%s4708 + $0x134] sm:$0xf]
        %v6675 = vld [vmem:[%s4708 + $0x138] sm:$0xf]
        %v6676 = vld [vmem:[%s4708 + $0x13c] sm:$0x1]
        %v6678 = vshrl.u32 %v6629, 16
        %v6680 = vrot.slane %v6678, 4
        %v6681 = vshll.u32 %v6629, 16
        %v6683 = vrot.slane %v6681, 5
        %v6684 = vor.u32 %v6680, %v6683
        %v6685 = vrot.slane %v6684, 4
        %v6687 = vshll.u32 %v6630, 16
        %v6689 = vrot.slane %v6687, 5
        %v6690 = vsel %vm1306, %v6685, %v6689
        %v6691 = vshrl.u32 %v6630, 16
        %v6693 = vrot.slane %v6691, 4
        %v6694 = vor.u32 %v6693, %v6689
        %v6695 = vrot.slane %v6694, 4
        %v6697 = vshll.u32 %v6631, 16
        %v6699 = vrot.slane %v6697, 5
        %v6700 = vsel %vm1306, %v6695, %v6699
        %v6702 = vshrl.u32 %v6632, 16
        %v6704 = vrot.slane %v6702, 4
        %v6705 = vshll.u32 %v6632, 16
        %v6707 = vrot.slane %v6705, 5
        %v6708 = vor.u32 %v6704, %v6707
        %v6709 = vrot.slane %v6708, 4
        %v6711 = vshll.u32 %v6633, 16
        %v6713 = vrot.slane %v6711, 5
        %v6714 = vsel %vm1306, %v6709, %v6713
        %v6715 = vshrl.u32 %v6633, 16
        %v6717 = vrot.slane %v6715, 4
        %v6718 = vor.u32 %v6717, %v6713
        %v6719 = vrot.slane %v6718, 4
        %v6721 = vshll.u32 %v6634, 16
        %v6723 = vrot.slane %v6721, 5
        %v6724 = vsel %vm1306, %v6719, %v6723
        %v6726 = vshrl.u32 %v6635, 16
        %v6728 = vrot.slane %v6726, 4
        %v6729 = vshll.u32 %v6635, 16
        %v6731 = vrot.slane %v6729, 5
        %v6732 = vor.u32 %v6728, %v6731
        %v6733 = vrot.slane %v6732, 4
        %v6735 = vshll.u32 %v6636, 16
        %v6737 = vrot.slane %v6735, 5
        %v6738 = vsel %vm1306, %v6733, %v6737
        %v6739 = vshrl.u32 %v6636, 16
        %v6741 = vrot.slane %v6739, 4
        %v6742 = vor.u32 %v6741, %v6737
        %v6743 = vrot.slane %v6742, 4
        %v6745 = vshll.u32 %v6637, 16
        %v6747 = vrot.slane %v6745, 5
        %v6748 = vsel %vm1306, %v6743, %v6747
        %v6750 = vshrl.u32 %v6638, 16
        %v6752 = vrot.slane %v6750, 4
        %v6753 = vshll.u32 %v6638, 16
        %v6755 = vrot.slane %v6753, 5
        %v6756 = vor.u32 %v6752, %v6755
        %v6757 = vrot.slane %v6756, 4
        %v6759 = vshll.u32 %v6639, 16
        %v6761 = vrot.slane %v6759, 5
        %v6762 = vsel %vm1306, %v6757, %v6761
        %v6763 = vshrl.u32 %v6639, 16
        %v6765 = vrot.slane %v6763, 4
        %v6766 = vor.u32 %v6765, %v6761
        %v6767 = vrot.slane %v6766, 4
        %v6769 = vshll.u32 %v6640, 16
        %v6771 = vrot.slane %v6769, 5
        %v6772 = vsel %vm1306, %v6767, %v6771
        %v6774 = vshrl.u32 %v6641, 16
        %v6776 = vrot.slane %v6774, 4
        %v6777 = vshll.u32 %v6641, 16
        %v6779 = vrot.slane %v6777, 5
        %v6780 = vor.u32 %v6776, %v6779
        %v6781 = vrot.slane %v6780, 4
        %v6783 = vshll.u32 %v6642, 16
        %v6785 = vrot.slane %v6783, 5
        %v6786 = vsel %vm1306, %v6781, %v6785
        %v6787 = vshrl.u32 %v6642, 16
        %v6789 = vrot.slane %v6787, 4
        %v6790 = vor.u32 %v6789, %v6785
        %v6791 = vrot.slane %v6790, 4
        %v6793 = vshll.u32 %v6643, 16
        %v6795 = vrot.slane %v6793, 5
        %v6796 = vsel %vm1306, %v6791, %v6795
        %v6798 = vshrl.u32 %v6644, 16
        %v6800 = vrot.slane %v6798, 4
        %v6801 = vshll.u32 %v6644, 16
        %v6803 = vrot.slane %v6801, 5
        %v6804 = vor.u32 %v6800, %v6803
        %v6805 = vrot.slane %v6804, 4
        %v6807 = vshll.u32 %v6645, 16
        %v6809 = vrot.slane %v6807, 5
        %v6810 = vsel %vm1306, %v6805, %v6809
        %v6811 = vshrl.u32 %v6645, 16
        %v6813 = vrot.slane %v6811, 4
        %v6814 = vor.u32 %v6813, %v6809
        %v6815 = vrot.slane %v6814, 4
        %v6817 = vshll.u32 %v6646, 16
        %v6819 = vrot.slane %v6817, 5
        %v6820 = vsel %vm1306, %v6815, %v6819
        %v6822 = vshrl.u32 %v6647, 16
        %v6824 = vrot.slane %v6822, 4
        %v6825 = vshll.u32 %v6647, 16
        %v6827 = vrot.slane %v6825, 5
        %v6828 = vor.u32 %v6824, %v6827
        %v6829 = vrot.slane %v6828, 4
        %v6831 = vshll.u32 %v6648, 16
        %v6833 = vrot.slane %v6831, 5
        %v6834 = vsel %vm1306, %v6829, %v6833
        %v6835 = vshrl.u32 %v6648, 16
        %v6837 = vrot.slane %v6835, 4
        %v6838 = vor.u32 %v6837, %v6833
        %v6839 = vrot.slane %v6838, 4
        %v6841 = vshll.u32 %v6649, 16
        %v6843 = vrot.slane %v6841, 5
        %v6844 = vsel %vm1306, %v6839, %v6843
        %v6846 = vshrl.u32 %v6650, 16
        %v6848 = vrot.slane %v6846, 4
        %v6849 = vshll.u32 %v6650, 16
        %v6851 = vrot.slane %v6849, 5
        %v6852 = vor.u32 %v6848, %v6851
        %v6853 = vrot.slane %v6852, 4
        %v6855 = vshll.u32 %v6651, 16
        %v6857 = vrot.slane %v6855, 5
        %v6858 = vsel %vm1306, %v6853, %v6857
        %v6859 = vshrl.u32 %v6651, 16
        %v6861 = vrot.slane %v6859, 4
        %v6862 = vor.u32 %v6861, %v6857
        %v6863 = vrot.slane %v6862, 4
        %v6865 = vshll.u32 %v6652, 16
        %v6867 = vrot.slane %v6865, 5
        %v6868 = vsel %vm1306, %v6863, %v6867
        %v6870 = vshrl.u32 %v6653, 16
        %v6872 = vrot.slane %v6870, 4
        %v6873 = vshll.u32 %v6653, 16
        %v6875 = vrot.slane %v6873, 5
        %v6876 = vor.u32 %v6872, %v6875
        %v6877 = vrot.slane %v6876, 4
        %v6879 = vshll.u32 %v6654, 16
        %v6881 = vrot.slane %v6879, 5
        %v6882 = vsel %vm1306, %v6877, %v6881
        %v6883 = vshrl.u32 %v6654, 16
        %v6885 = vrot.slane %v6883, 4
        %v6886 = vor.u32 %v6885, %v6881
        %v6887 = vrot.slane %v6886, 4
        %v6889 = vshll.u32 %v6655, 16
        %v6891 = vrot.slane %v6889, 5
        %v6892 = vsel %vm1306, %v6887, %v6891
        %v6894 = vshrl.u32 %v6656, 16
        %v6896 = vrot.slane %v6894, 4
        %v6897 = vshll.u32 %v6656, 16
        %v6899 = vrot.slane %v6897, 5
        %v6900 = vor.u32 %v6896, %v6899
        %v6901 = vrot.slane %v6900, 4
        %v6903 = vshll.u32 %v6657, 16
        %v6905 = vrot.slane %v6903, 5
        %v6906 = vsel %vm1306, %v6901, %v6905
        %v6907 = vshrl.u32 %v6657, 16
        %v6909 = vrot.slane %v6907, 4
        %v6910 = vor.u32 %v6909, %v6905
        %v6911 = vrot.slane %v6910, 4
        %v6913 = vshll.u32 %v6658, 16
        %v6915 = vrot.slane %v6913, 5
        %v6916 = vsel %vm1306, %v6911, %v6915
        %v6918 = vshrl.u32 %v6659, 16
        %v6920 = vrot.slane %v6918, 4
        %v6921 = vshll.u32 %v6659, 16
        %v6923 = vrot.slane %v6921, 5
        %v6924 = vor.u32 %v6920, %v6923
        %v6925 = vrot.slane %v6924, 4
        %v6927 = vshll.u32 %v6660, 16
        %v6929 = vrot.slane %v6927, 5
        %v6930 = vsel %vm1306, %v6925, %v6929
        %v6931 = vshrl.u32 %v6660, 16
        %v6933 = vrot.slane %v6931, 4
        %v6934 = vor.u32 %v6933, %v6929
        %v6935 = vrot.slane %v6934, 4
        %v6937 = vshll.u32 %v6661, 16
        %v6939 = vrot.slane %v6937, 5
        %v6940 = vsel %vm1306, %v6935, %v6939
        %v6942 = vshrl.u32 %v6662, 16
        %v6944 = vrot.slane %v6942, 4
        %v6945 = vshll.u32 %v6662, 16
        %v6947 = vrot.slane %v6945, 5
        %v6948 = vor.u32 %v6944, %v6947
        %v6949 = vrot.slane %v6948, 4
        %v6951 = vshll.u32 %v6663, 16
        %v6953 = vrot.slane %v6951, 5
        %v6954 = vsel %vm1306, %v6949, %v6953
        %v6955 = vshrl.u32 %v6663, 16
        %v6957 = vrot.slane %v6955, 4
        %v6958 = vor.u32 %v6957, %v6953
        %v6959 = vrot.slane %v6958, 4
        %v6961 = vshll.u32 %v6664, 16
        %v6963 = vrot.slane %v6961, 5
        %v6964 = vsel %vm1306, %v6959, %v6963
        %v6966 = vshrl.u32 %v6665, 16
        %v6968 = vrot.slane %v6966, 4
        %v6969 = vshll.u32 %v6665, 16
        %v6971 = vrot.slane %v6969, 5
        %v6972 = vor.u32 %v6968, %v6971
        %v6973 = vrot.slane %v6972, 4
        %v6975 = vshll.u32 %v6666, 16
        %v6977 = vrot.slane %v6975, 5
        %v6978 = vsel %vm1306, %v6973, %v6977
        %v6979 = vshrl.u32 %v6666, 16
        %v6981 = vrot.slane %v6979, 4
        %v6982 = vor.u32 %v6981, %v6977
        %v6983 = vrot.slane %v6982, 4
        %v6985 = vshll.u32 %v6667, 16
        %v6987 = vrot.slane %v6985, 5
        %v6988 = vsel %vm1306, %v6983, %v6987
        %v6990 = vshrl.u32 %v6668, 16
        %v6992 = vrot.slane %v6990, 4
        %v6993 = vshll.u32 %v6668, 16
        %v6995 = vrot.slane %v6993, 5
        %v6996 = vor.u32 %v6992, %v6995
        %v6997 = vrot.slane %v6996, 4
        %v6999 = vshll.u32 %v6669, 16
        %v7001 = vrot.slane %v6999, 5
        %v7002 = vsel %vm1306, %v6997, %v7001
        %v7003 = vshrl.u32 %v6669, 16
        %v7005 = vrot.slane %v7003, 4
        %v7006 = vor.u32 %v7005, %v7001
        %v7007 = vrot.slane %v7006, 4
        %v7009 = vshll.u32 %v6670, 16
        %v7011 = vrot.slane %v7009, 5
        %v7012 = vsel %vm1306, %v7007, %v7011
        %v7014 = vshrl.u32 %v6671, 16
        %v7016 = vrot.slane %v7014, 4
        %v7017 = vshll.u32 %v6671, 16
        %v7019 = vrot.slane %v7017, 5
        %v7020 = vor.u32 %v7016, %v7019
        %v7021 = vrot.slane %v7020, 4
        %v7023 = vshll.u32 %v6672, 16
        %v7025 = vrot.slane %v7023, 5
        %v7026 = vsel %vm1306, %v7021, %v7025
        %v7027 = vshrl.u32 %v6672, 16
        %v7029 = vrot.slane %v7027, 4
        %v7030 = vor.u32 %v7029, %v7025
        %v7031 = vrot.slane %v7030, 4
        %v7033 = vshll.u32 %v6673, 16
        %v7035 = vrot.slane %v7033, 5
        %v7036 = vsel %vm1306, %v7031, %v7035
        %v7038 = vshrl.u32 %v6674, 16
        %v7040 = vrot.slane %v7038, 4
        %v7041 = vshll.u32 %v6674, 16
        %v7043 = vrot.slane %v7041, 5
        %v7044 = vor.u32 %v7040, %v7043
        %v7045 = vrot.slane %v7044, 4
        %v7047 = vshll.u32 %v6675, 16
        %v7049 = vrot.slane %v7047, 5
        %v7050 = vsel %vm1306, %v7045, %v7049
        %v7051 = vshrl.u32 %v6675, 16
        %v7053 = vrot.slane %v7051, 4
        %v7054 = vor.u32 %v7053, %v7049
        %v7055 = vrot.slane %v7054, 4
        %v7057 = vshll.u32 %v6676, 16
        %v7059 = vrot.slane %v7057, 5
        %v7060 = vsel %vm1306, %v7055, %v7059
        %v7061 = vunpack.c.l.b16 %v6690
        %v7062 = vunpack.c.l.b16 %v6700
        %v7063 = vunpack.c.l.b16 %v6714
        %v7064 = vunpack.c.l.b16 %v6724
        %v7065 = vunpack.c.l.b16 %v6738
        %v7066 = vunpack.c.l.b16 %v6748
        %v7067 = vunpack.c.l.b16 %v6762
        %v7068 = vunpack.c.l.b16 %v6772
        %v7069 = vunpack.c.l.b16 %v6786
        %v7070 = vunpack.c.l.b16 %v6796
        %v7071 = vunpack.c.l.b16 %v6810
        %v7072 = vunpack.c.l.b16 %v6820
        %v7073 = vunpack.c.l.b16 %v6834
        %v7074 = vunpack.c.l.b16 %v6844
        %v7075 = vunpack.c.l.b16 %v6858
        %v7076 = vunpack.c.l.b16 %v6868
        %v7077 = vunpack.c.l.b16 %v6882
        %v7078 = vunpack.c.l.b16 %v6892
        %v7079 = vunpack.c.l.b16 %v6906
        %v7080 = vunpack.c.l.b16 %v6916
        %v7081 = vunpack.c.l.b16 %v6930
        %v7082 = vunpack.c.l.b16 %v6940
        %v7083 = vunpack.c.l.b16 %v6954
        %v7084 = vunpack.c.l.b16 %v6964
        %v7085 = vunpack.c.l.b16 %v6978
        %v7086 = vunpack.c.l.b16 %v6988
        %v7087 = vunpack.c.l.b16 %v7002
        %v7088 = vunpack.c.l.b16 %v7012
        %v7089 = vunpack.c.l.b16 %v7026
        %v7090 = vunpack.c.l.b16 %v7036
        %v7091 = vunpack.c.l.b16 %v7050
        %v7092 = vunpack.c.l.b16 %v7060
        %v7093 = vpack.c.b16 %v7062, %v7061
        %v7094 = vpack.c.b16 %v7064, %v7063
        %v7095 = vpack.c.b16 %v7066, %v7065
        %v7096 = vpack.c.b16 %v7068, %v7067
        %v7097 = vpack.c.b16 %v7070, %v7069
        %v7098 = vpack.c.b16 %v7072, %v7071
        %v7099 = vpack.c.b16 %v7074, %v7073
        %v7100 = vpack.c.b16 %v7076, %v7075
        %v7101 = vpack.c.b16 %v7078, %v7077
        %v7102 = vpack.c.b16 %v7080, %v7079
        %v7103 = vpack.c.b16 %v7082, %v7081
        %v7104 = vpack.c.b16 %v7084, %v7083
        %v7105 = vpack.c.b16 %v7086, %v7085
        %v7106 = vpack.c.b16 %v7088, %v7087
        %v7107 = vpack.c.b16 %v7090, %v7089
        %v7108 = vpack.c.b16 %v7092, %v7091
        %7109 = vrot.lane.b32.xlu0 %v7093, 40
        %v7110 = vpop.permute.xlu0 %7109
        %7111 = vrot.lane.b32.xlu0 %v7094, 40
        %v7112 = vpop.permute.xlu0 %7111
        %7113 = vrot.lane.b32.xlu0 %v7095, 40
        %v7114 = vpop.permute.xlu0 %7113
        %7115 = vrot.lane.b32.xlu0 %v7096, 40
        %v7116 = vpop.permute.xlu0 %7115
        %7117 = vrot.lane.b32.xlu0 %v7097, 40
        %v7118 = vpop.permute.xlu0 %7117
        %7119 = vrot.lane.b32.xlu0 %v7098, 40
        %v7120 = vpop.permute.xlu0 %7119
        %7121 = vrot.lane.b32.xlu0 %v7099, 40
        %v7122 = vpop.permute.xlu0 %7121
        %7123 = vrot.lane.b32.xlu0 %v7100, 40
        %v7124 = vpop.permute.xlu0 %7123
        %7125 = vrot.lane.b32.xlu0 %v7101, 40
        %v7126 = vpop.permute.xlu0 %7125
        %7127 = vrot.lane.b32.xlu0 %v7102, 40
        %v7128 = vpop.permute.xlu0 %7127
        %7129 = vrot.lane.b32.xlu0 %v7103, 40
        %v7130 = vpop.permute.xlu0 %7129
        %7131 = vrot.lane.b32.xlu0 %v7104, 40
        %v7132 = vpop.permute.xlu0 %7131
        %7133 = vrot.lane.b32.xlu0 %v7105, 40
        %v7134 = vpop.permute.xlu0 %7133
        %7135 = vrot.lane.b32.xlu0 %v7106, 40
        %v7136 = vpop.permute.xlu0 %7135
        %7137 = vrot.lane.b32.xlu0 %v7107, 40
        %v7138 = vpop.permute.xlu0 %7137
        %7139 = vrot.lane.b32.xlu0 %v7108, 40
        %v7140 = vpop.permute.xlu0 %7139
        %7157 = vst.msk [vmem:[#allocation4] sm:$0xff] %vm3022, %v7110
        %7158 = vst.msk [vmem:[#allocation4 + $0x8] sm:$0xff] %vm3022, %v7112
        %7159 = vst.msk [vmem:[#allocation4 + $0x10] sm:$0xff] %vm3022, %v7114
        %7160 = vst.msk [vmem:[#allocation4 + $0x18] sm:$0xff] %vm3022, %v7116
        %7161 = vst.msk [vmem:[#allocation4 + $0x20] sm:$0xff] %vm3022, %v7118
        %7162 = vst.msk [vmem:[#allocation4 + $0x28] sm:$0xff] %vm3022, %v7120
        %7163 = vst.msk [vmem:[#allocation4 + $0x30] sm:$0xff] %vm3022, %v7122
        %7164 = vst.msk [vmem:[#allocation4 + $0x38] sm:$0xff] %vm3022, %v7124
        %7165 = vst.msk [vmem:[#allocation4 + $0x40] sm:$0xff] %vm3022, %v7126
        %7166 = vst.msk [vmem:[#allocation4 + $0x48] sm:$0xff] %vm3022, %v7128
        %7167 = vst.msk [vmem:[#allocation4 + $0x50] sm:$0xff] %vm3022, %v7130
        %7168 = vst.msk [vmem:[#allocation4 + $0x58] sm:$0xff] %vm3022, %v7132
        %7169 = vst.msk [vmem:[#allocation4 + $0x60] sm:$0xff] %vm3022, %v7134
        %7170 = vst.msk [vmem:[#allocation4 + $0x68] sm:$0xff] %vm3022, %v7136
        %7171 = vst.msk [vmem:[#allocation4 + $0x70] sm:$0xff] %vm3022, %v7138
        %7172 = vst.msk [vmem:[#allocation4 + $0x78] sm:$0xff] %vm3022, %v7140
        %s7173 = scalar_lea.vmem [#allocation3], 40
        %v7174 = vld [vmem:[%s7173 + $0x4] sm:$0x8]
        %v7175 = vld [vmem:[%s7173 + $0x8] sm:$0xf]
        %v7176 = vld [vmem:[%s7173 + $0xc] sm:$0xf]
        %v7177 = vld [vmem:[%s7173 + $0x18] sm:$0x8]
        %v7178 = vld [vmem:[%s7173 + $0x1c] sm:$0xf]
        %v7179 = vld [vmem:[%s7173 + $0x20] sm:$0xf]
        %v7180 = vld [vmem:[%s7173 + $0x2c] sm:$0x8]
        %v7181 = vld [vmem:[%s7173 + $0x30] sm:$0xf]
        %v7182 = vld [vmem:[%s7173 + $0x34] sm:$0xf]
        %v7183 = vld [vmem:[%s7173 + $0x40] sm:$0x8]
        %v7184 = vld [vmem:[%s7173 + $0x44] sm:$0xf]
        %v7185 = vld [vmem:[%s7173 + $0x48] sm:$0xf]
        %v7186 = vld [vmem:[%s7173 + $0x54] sm:$0x8]
        %v7187 = vld [vmem:[%s7173 + $0x58] sm:$0xf]
        %v7188 = vld [vmem:[%s7173 + $0x5c] sm:$0xf]
        %v7189 = vld [vmem:[%s7173 + $0x68] sm:$0x8]
        %v7190 = vld [vmem:[%s7173 + $0x6c] sm:$0xf]
        %v7191 = vld [vmem:[%s7173 + $0x70] sm:$0xf]
        %v7192 = vld [vmem:[%s7173 + $0x7c] sm:$0x8]
        %v7193 = vld [vmem:[%s7173 + $0x80] sm:$0xf]
        %v7194 = vld [vmem:[%s7173 + $0x84] sm:$0xf]
        %v7195 = vld [vmem:[%s7173 + $0x90] sm:$0x8]
        %v7196 = vld [vmem:[%s7173 + $0x94] sm:$0xf]
        %v7197 = vld [vmem:[%s7173 + $0x98] sm:$0xf]
        %v7198 = vld [vmem:[%s7173 + $0xa4] sm:$0x8]
        %v7199 = vld [vmem:[%s7173 + $0xa8] sm:$0xf]
        %v7200 = vld [vmem:[%s7173 + $0xac] sm:$0xf]
        %v7201 = vld [vmem:[%s7173 + $0xb8] sm:$0x8]
        %v7202 = vld [vmem:[%s7173 + $0xbc] sm:$0xf]
        %v7203 = vld [vmem:[%s7173 + $0xc0] sm:$0xf]
        %v7204 = vld [vmem:[%s7173 + $0xcc] sm:$0x8]
        %v7205 = vld [vmem:[%s7173 + $0xd0] sm:$0xf]
        %v7206 = vld [vmem:[%s7173 + $0xd4] sm:$0xf]
        %v7207 = vld [vmem:[%s7173 + $0xe0] sm:$0x8]
        %v7208 = vld [vmem:[%s7173 + $0xe4] sm:$0xf]
        %v7209 = vld [vmem:[%s7173 + $0xe8] sm:$0xf]
        %v7210 = vld [vmem:[%s7173 + $0xf4] sm:$0x8]
        %v7211 = vld [vmem:[%s7173 + $0xf8] sm:$0xf]
        %v7212 = vld [vmem:[%s7173 + $0xfc] sm:$0xf]
        %v7213 = vld [vmem:[%s7173 + $0x108] sm:$0x8]
        %v7214 = vld [vmem:[%s7173 + $0x10c] sm:$0xf]
        %v7215 = vld [vmem:[%s7173 + $0x110] sm:$0xf]
        %v7216 = vld [vmem:[%s7173 + $0x11c] sm:$0x8]
        %v7217 = vld [vmem:[%s7173 + $0x120] sm:$0xf]
        %v7218 = vld [vmem:[%s7173 + $0x124] sm:$0xf]
        %v7219 = vld [vmem:[%s7173 + $0x130] sm:$0x8]
        %v7220 = vld [vmem:[%s7173 + $0x134] sm:$0xf]
        %v7221 = vld [vmem:[%s7173 + $0x138] sm:$0xf]
        %v7223 = vshrl.u32 %v7174, 16
        %v7225 = vrot.slane %v7223, 7
        %v7226 = vrot.slane %v7225, 4
        %v7228 = vshrl.u32 %v7175, 16
        %v7230 = vrot.slane %v7228, 7
        %v7231 = vshll.u32 %v7175, 16
        %v7233 = vor.u32 %v7230, %v7231
        %v7234 = vsel %vm645, %v7226, %v7233
        %v7235 = vrot.slane %v7230, 4
        %v7237 = vshrl.u32 %v7176, 16
        %v7239 = vrot.slane %v7237, 7
        %v7240 = vshll.u32 %v7176, 16
        %v7242 = vor.u32 %v7239, %v7240
        %v7243 = vsel %vm645, %v7235, %v7242
        %v7245 = vshrl.u32 %v7177, 16
        %v7247 = vrot.slane %v7245, 7
        %v7248 = vrot.slane %v7247, 4
        %v7250 = vshrl.u32 %v7178, 16
        %v7252 = vrot.slane %v7250, 7
        %v7253 = vshll.u32 %v7178, 16
        %v7255 = vor.u32 %v7252, %v7253
        %v7256 = vsel %vm645, %v7248, %v7255
        %v7257 = vrot.slane %v7252, 4
        %v7259 = vshrl.u32 %v7179, 16
        %v7261 = vrot.slane %v7259, 7
        %v7262 = vshll.u32 %v7179, 16
        %v7264 = vor.u32 %v7261, %v7262
        %v7265 = vsel %vm645, %v7257, %v7264
        %v7267 = vshrl.u32 %v7180, 16
        %v7269 = vrot.slane %v7267, 7
        %v7270 = vrot.slane %v7269, 4
        %v7272 = vshrl.u32 %v7181, 16
        %v7274 = vrot.slane %v7272, 7
        %v7275 = vshll.u32 %v7181, 16
        %v7277 = vor.u32 %v7274, %v7275
        %v7278 = vsel %vm645, %v7270, %v7277
        %v7279 = vrot.slane %v7274, 4
        %v7281 = vshrl.u32 %v7182, 16
        %v7283 = vrot.slane %v7281, 7
        %v7284 = vshll.u32 %v7182, 16
        %v7286 = vor.u32 %v7283, %v7284
        %v7287 = vsel %vm645, %v7279, %v7286
        %v7289 = vshrl.u32 %v7183, 16
        %v7291 = vrot.slane %v7289, 7
        %v7292 = vrot.slane %v7291, 4
        %v7294 = vshrl.u32 %v7184, 16
        %v7296 = vrot.slane %v7294, 7
        %v7297 = vshll.u32 %v7184, 16
        %v7299 = vor.u32 %v7296, %v7297
        %v7300 = vsel %vm645, %v7292, %v7299
        %v7301 = vrot.slane %v7296, 4
        %v7303 = vshrl.u32 %v7185, 16
        %v7305 = vrot.slane %v7303, 7
        %v7306 = vshll.u32 %v7185, 16
        %v7308 = vor.u32 %v7305, %v7306
        %v7309 = vsel %vm645, %v7301, %v7308
        %v7311 = vshrl.u32 %v7186, 16
        %v7313 = vrot.slane %v7311, 7
        %v7314 = vrot.slane %v7313, 4
        %v7316 = vshrl.u32 %v7187, 16
        %v7318 = vrot.slane %v7316, 7
        %v7319 = vshll.u32 %v7187, 16
        %v7321 = vor.u32 %v7318, %v7319
        %v7322 = vsel %vm645, %v7314, %v7321
        %v7323 = vrot.slane %v7318, 4
        %v7325 = vshrl.u32 %v7188, 16
        %v7327 = vrot.slane %v7325, 7
        %v7328 = vshll.u32 %v7188, 16
        %v7330 = vor.u32 %v7327, %v7328
        %v7331 = vsel %vm645, %v7323, %v7330
        %v7333 = vshrl.u32 %v7189, 16
        %v7335 = vrot.slane %v7333, 7
        %v7336 = vrot.slane %v7335, 4
        %v7338 = vshrl.u32 %v7190, 16
        %v7340 = vrot.slane %v7338, 7
        %v7341 = vshll.u32 %v7190, 16
        %v7343 = vor.u32 %v7340, %v7341
        %v7344 = vsel %vm645, %v7336, %v7343
        %v7345 = vrot.slane %v7340, 4
        %v7347 = vshrl.u32 %v7191, 16
        %v7349 = vrot.slane %v7347, 7
        %v7350 = vshll.u32 %v7191, 16
        %v7352 = vor.u32 %v7349, %v7350
        %v7353 = vsel %vm645, %v7345, %v7352
        %v7355 = vshrl.u32 %v7192, 16
        %v7357 = vrot.slane %v7355, 7
        %v7358 = vrot.slane %v7357, 4
        %v7360 = vshrl.u32 %v7193, 16
        %v7362 = vrot.slane %v7360, 7
        %v7363 = vshll.u32 %v7193, 16
        %v7365 = vor.u32 %v7362, %v7363
        %v7366 = vsel %vm645, %v7358, %v7365
        %v7367 = vrot.slane %v7362, 4
        %v7369 = vshrl.u32 %v7194, 16
        %v7371 = vrot.slane %v7369, 7
        %v7372 = vshll.u32 %v7194, 16
        %v7374 = vor.u32 %v7371, %v7372
        %v7375 = vsel %vm645, %v7367, %v7374
        %v7377 = vshrl.u32 %v7195, 16
        %v7379 = vrot.slane %v7377, 7
        %v7380 = vrot.slane %v7379, 4
        %v7382 = vshrl.u32 %v7196, 16
        %v7384 = vrot.slane %v7382, 7
        %v7385 = vshll.u32 %v7196, 16
        %v7387 = vor.u32 %v7384, %v7385
        %v7388 = vsel %vm645, %v7380, %v7387
        %v7389 = vrot.slane %v7384, 4
        %v7391 = vshrl.u32 %v7197, 16
        %v7393 = vrot.slane %v7391, 7
        %v7394 = vshll.u32 %v7197, 16
        %v7396 = vor.u32 %v7393, %v7394
        %v7397 = vsel %vm645, %v7389, %v7396
        %v7399 = vshrl.u32 %v7198, 16
        %v7401 = vrot.slane %v7399, 7
        %v7402 = vrot.slane %v7401, 4
        %v7404 = vshrl.u32 %v7199, 16
        %v7406 = vrot.slane %v7404, 7
        %v7407 = vshll.u32 %v7199, 16
        %v7409 = vor.u32 %v7406, %v7407
        %v7410 = vsel %vm645, %v7402, %v7409
        %v7411 = vrot.slane %v7406, 4
        %v7413 = vshrl.u32 %v7200, 16
        %v7415 = vrot.slane %v7413, 7
        %v7416 = vshll.u32 %v7200, 16
        %v7418 = vor.u32 %v7415, %v7416
        %v7419 = vsel %vm645, %v7411, %v7418
        %v7421 = vshrl.u32 %v7201, 16
        %v7423 = vrot.slane %v7421, 7
        %v7424 = vrot.slane %v7423, 4
        %v7426 = vshrl.u32 %v7202, 16
        %v7428 = vrot.slane %v7426, 7
        %v7429 = vshll.u32 %v7202, 16
        %v7431 = vor.u32 %v7428, %v7429
        %v7432 = vsel %vm645, %v7424, %v7431
        %v7433 = vrot.slane %v7428, 4
        %v7435 = vshrl.u32 %v7203, 16
        %v7437 = vrot.slane %v7435, 7
        %v7438 = vshll.u32 %v7203, 16
        %v7440 = vor.u32 %v7437, %v7438
        %v7441 = vsel %vm645, %v7433, %v7440
        %v7443 = vshrl.u32 %v7204, 16
        %v7445 = vrot.slane %v7443, 7
        %v7446 = vrot.slane %v7445, 4
        %v7448 = vshrl.u32 %v7205, 16
        %v7450 = vrot.slane %v7448, 7
        %v7451 = vshll.u32 %v7205, 16
        %v7453 = vor.u32 %v7450, %v7451
        %v7454 = vsel %vm645, %v7446, %v7453
        %v7455 = vrot.slane %v7450, 4
        %v7457 = vshrl.u32 %v7206, 16
        %v7459 = vrot.slane %v7457, 7
        %v7460 = vshll.u32 %v7206, 16
        %v7462 = vor.u32 %v7459, %v7460
        %v7463 = vsel %vm645, %v7455, %v7462
        %v7465 = vshrl.u32 %v7207, 16
        %v7467 = vrot.slane %v7465, 7
        %v7468 = vrot.slane %v7467, 4
        %v7470 = vshrl.u32 %v7208, 16
        %v7472 = vrot.slane %v7470, 7
        %v7473 = vshll.u32 %v7208, 16
        %v7475 = vor.u32 %v7472, %v7473
        %v7476 = vsel %vm645, %v7468, %v7475
        %v7477 = vrot.slane %v7472, 4
        %v7479 = vshrl.u32 %v7209, 16
        %v7481 = vrot.slane %v7479, 7
        %v7482 = vshll.u32 %v7209, 16
        %v7484 = vor.u32 %v7481, %v7482
        %v7485 = vsel %vm645, %v7477, %v7484
        %v7487 = vshrl.u32 %v7210, 16
        %v7489 = vrot.slane %v7487, 7
        %v7490 = vrot.slane %v7489, 4
        %v7492 = vshrl.u32 %v7211, 16
        %v7494 = vrot.slane %v7492, 7
        %v7495 = vshll.u32 %v7211, 16
        %v7497 = vor.u32 %v7494, %v7495
        %v7498 = vsel %vm645, %v7490, %v7497
        %v7499 = vrot.slane %v7494, 4
        %v7501 = vshrl.u32 %v7212, 16
        %v7503 = vrot.slane %v7501, 7
        %v7504 = vshll.u32 %v7212, 16
        %v7506 = vor.u32 %v7503, %v7504
        %v7507 = vsel %vm645, %v7499, %v7506
        %v7509 = vshrl.u32 %v7213, 16
        %v7511 = vrot.slane %v7509, 7
        %v7512 = vrot.slane %v7511, 4
        %v7514 = vshrl.u32 %v7214, 16
        %v7516 = vrot.slane %v7514, 7
        %v7517 = vshll.u32 %v7214, 16
        %v7519 = vor.u32 %v7516, %v7517
        %v7520 = vsel %vm645, %v7512, %v7519
        %v7521 = vrot.slane %v7516, 4
        %v7523 = vshrl.u32 %v7215, 16
        %v7525 = vrot.slane %v7523, 7
        %v7526 = vshll.u32 %v7215, 16
        %v7528 = vor.u32 %v7525, %v7526
        %v7529 = vsel %vm645, %v7521, %v7528
        %v7531 = vshrl.u32 %v7216, 16
        %v7533 = vrot.slane %v7531, 7
        %v7534 = vrot.slane %v7533, 4
        %v7536 = vshrl.u32 %v7217, 16
        %v7538 = vrot.slane %v7536, 7
        %v7539 = vshll.u32 %v7217, 16
        %v7541 = vor.u32 %v7538, %v7539
        %v7542 = vsel %vm645, %v7534, %v7541
        %v7543 = vrot.slane %v7538, 4
        %v7545 = vshrl.u32 %v7218, 16
        %v7547 = vrot.slane %v7545, 7
        %v7548 = vshll.u32 %v7218, 16
        %v7550 = vor.u32 %v7547, %v7548
        %v7551 = vsel %vm645, %v7543, %v7550
        %v7553 = vshrl.u32 %v7219, 16
        %v7555 = vrot.slane %v7553, 7
        %v7556 = vrot.slane %v7555, 4
        %v7558 = vshrl.u32 %v7220, 16
        %v7560 = vrot.slane %v7558, 7
        %v7561 = vshll.u32 %v7220, 16
        %v7563 = vor.u32 %v7560, %v7561
        %v7564 = vsel %vm645, %v7556, %v7563
        %v7565 = vrot.slane %v7560, 4
        %v7567 = vshrl.u32 %v7221, 16
        %v7569 = vrot.slane %v7567, 7
        %v7570 = vshll.u32 %v7221, 16
        %v7572 = vor.u32 %v7569, %v7570
        %v7573 = vsel %vm645, %v7565, %v7572
        %v7574 = vunpack.c.l.b16 %v7234
        %v7575 = vunpack.c.l.b16 %v7243
        %v7576 = vunpack.c.l.b16 %v7256
        %v7577 = vunpack.c.l.b16 %v7265
        %v7578 = vunpack.c.l.b16 %v7278
        %v7579 = vunpack.c.l.b16 %v7287
        %v7580 = vunpack.c.l.b16 %v7300
        %v7581 = vunpack.c.l.b16 %v7309
        %v7582 = vunpack.c.l.b16 %v7322
        %v7583 = vunpack.c.l.b16 %v7331
        %v7584 = vunpack.c.l.b16 %v7344
        %v7585 = vunpack.c.l.b16 %v7353
        %v7586 = vunpack.c.l.b16 %v7366
        %v7587 = vunpack.c.l.b16 %v7375
        %v7588 = vunpack.c.l.b16 %v7388
        %v7589 = vunpack.c.l.b16 %v7397
        %v7590 = vunpack.c.l.b16 %v7410
        %v7591 = vunpack.c.l.b16 %v7419
        %v7592 = vunpack.c.l.b16 %v7432
        %v7593 = vunpack.c.l.b16 %v7441
        %v7594 = vunpack.c.l.b16 %v7454
        %v7595 = vunpack.c.l.b16 %v7463
        %v7596 = vunpack.c.l.b16 %v7476
        %v7597 = vunpack.c.l.b16 %v7485
        %v7598 = vunpack.c.l.b16 %v7498
        %v7599 = vunpack.c.l.b16 %v7507
        %v7600 = vunpack.c.l.b16 %v7520
        %v7601 = vunpack.c.l.b16 %v7529
        %v7602 = vunpack.c.l.b16 %v7542
        %v7603 = vunpack.c.l.b16 %v7551
        %v7604 = vunpack.c.l.b16 %v7564
        %v7605 = vunpack.c.l.b16 %v7573
        %v7606 = vpack.c.b16 %v7575, %v7574
        %v7607 = vpack.c.b16 %v7577, %v7576
        %v7608 = vpack.c.b16 %v7579, %v7578
        %v7609 = vpack.c.b16 %v7581, %v7580
        %v7610 = vpack.c.b16 %v7583, %v7582
        %v7611 = vpack.c.b16 %v7585, %v7584
        %v7612 = vpack.c.b16 %v7587, %v7586
        %v7613 = vpack.c.b16 %v7589, %v7588
        %v7614 = vpack.c.b16 %v7591, %v7590
        %v7615 = vpack.c.b16 %v7593, %v7592
        %v7616 = vpack.c.b16 %v7595, %v7594
        %v7617 = vpack.c.b16 %v7597, %v7596
        %v7618 = vpack.c.b16 %v7599, %v7598
        %v7619 = vpack.c.b16 %v7601, %v7600
        %v7620 = vpack.c.b16 %v7603, %v7602
        %v7621 = vpack.c.b16 %v7605, %v7604
        %7622 = vrot.lane.b32.xlu0 %v7606, 48
        %v7623 = vpop.permute.xlu0 %7622
        %7624 = vrot.lane.b32.xlu0 %v7607, 48
        %v7625 = vpop.permute.xlu0 %7624
        %7626 = vrot.lane.b32.xlu0 %v7608, 48
        %v7627 = vpop.permute.xlu0 %7626
        %7628 = vrot.lane.b32.xlu0 %v7609, 48
        %v7629 = vpop.permute.xlu0 %7628
        %7630 = vrot.lane.b32.xlu0 %v7610, 48
        %v7631 = vpop.permute.xlu0 %7630
        %7632 = vrot.lane.b32.xlu0 %v7611, 48
        %v7633 = vpop.permute.xlu0 %7632
        %7634 = vrot.lane.b32.xlu0 %v7612, 48
        %v7635 = vpop.permute.xlu0 %7634
        %7636 = vrot.lane.b32.xlu0 %v7613, 48
        %v7637 = vpop.permute.xlu0 %7636
        %7638 = vrot.lane.b32.xlu0 %v7614, 48
        %v7639 = vpop.permute.xlu0 %7638
        %7640 = vrot.lane.b32.xlu0 %v7615, 48
        %v7641 = vpop.permute.xlu0 %7640
        %7642 = vrot.lane.b32.xlu0 %v7616, 48
        %v7643 = vpop.permute.xlu0 %7642
        %7644 = vrot.lane.b32.xlu0 %v7617, 48
        %v7645 = vpop.permute.xlu0 %7644
        %7646 = vrot.lane.b32.xlu0 %v7618, 48
        %v7647 = vpop.permute.xlu0 %7646
        %7648 = vrot.lane.b32.xlu0 %v7619, 48
        %v7649 = vpop.permute.xlu0 %7648
        %7650 = vrot.lane.b32.xlu0 %v7620, 48
        %v7651 = vpop.permute.xlu0 %7650
        %7652 = vrot.lane.b32.xlu0 %v7621, 48
        %v7653 = vpop.permute.xlu0 %7652
        %7670 = vst.msk [vmem:[#allocation4] sm:$0xff] %vm3536, %v7623
        %7671 = vst.msk [vmem:[#allocation4 + $0x8] sm:$0xff] %vm3536, %v7625
        %7672 = vst.msk [vmem:[#allocation4 + $0x10] sm:$0xff] %vm3536, %v7627
        %7673 = vst.msk [vmem:[#allocation4 + $0x18] sm:$0xff] %vm3536, %v7629
        %7674 = vst.msk [vmem:[#allocation4 + $0x20] sm:$0xff] %vm3536, %v7631
        %7675 = vst.msk [vmem:[#allocation4 + $0x28] sm:$0xff] %vm3536, %v7633
        %7676 = vst.msk [vmem:[#allocation4 + $0x30] sm:$0xff] %vm3536, %v7635
        %7677 = vst.msk [vmem:[#allocation4 + $0x38] sm:$0xff] %vm3536, %v7637
        %7678 = vst.msk [vmem:[#allocation4 + $0x40] sm:$0xff] %vm3536, %v7639
        %7679 = vst.msk [vmem:[#allocation4 + $0x48] sm:$0xff] %vm3536, %v7641
        %7680 = vst.msk [vmem:[#allocation4 + $0x50] sm:$0xff] %vm3536, %v7643
        %7681 = vst.msk [vmem:[#allocation4 + $0x58] sm:$0xff] %vm3536, %v7645
        %7682 = vst.msk [vmem:[#allocation4 + $0x60] sm:$0xff] %vm3536, %v7647
        %7683 = vst.msk [vmem:[#allocation4 + $0x68] sm:$0xff] %vm3536, %v7649
        %7684 = vst.msk [vmem:[#allocation4 + $0x70] sm:$0xff] %vm3536, %v7651
        %7685 = vst.msk [vmem:[#allocation4 + $0x78] sm:$0xff] %vm3536, %v7653
        %v7686 = vld [vmem:[%s7173 + $0x8] sm:$0xf]
        %v7687 = vld [vmem:[%s7173 + $0xc] sm:$0xf]
        %v7688 = vld [vmem:[%s7173 + $0x1c] sm:$0xf]
        %v7689 = vld [vmem:[%s7173 + $0x20] sm:$0xf]
        %v7690 = vld [vmem:[%s7173 + $0x30] sm:$0xf]
        %v7691 = vld [vmem:[%s7173 + $0x34] sm:$0xf]
        %v7692 = vld [vmem:[%s7173 + $0x44] sm:$0xf]
        %v7693 = vld [vmem:[%s7173 + $0x48] sm:$0xf]
        %v7694 = vld [vmem:[%s7173 + $0x58] sm:$0xf]
        %v7695 = vld [vmem:[%s7173 + $0x5c] sm:$0xf]
        %v7696 = vld [vmem:[%s7173 + $0x6c] sm:$0xf]
        %v7697 = vld [vmem:[%s7173 + $0x70] sm:$0xf]
        %v7698 = vld [vmem:[%s7173 + $0x80] sm:$0xf]
        %v7699 = vld [vmem:[%s7173 + $0x84] sm:$0xf]
        %v7700 = vld [vmem:[%s7173 + $0x94] sm:$0xf]
        %v7701 = vld [vmem:[%s7173 + $0x98] sm:$0xf]
        %v7702 = vld [vmem:[%s7173 + $0xa8] sm:$0xf]
        %v7703 = vld [vmem:[%s7173 + $0xac] sm:$0xf]
        %v7704 = vld [vmem:[%s7173 + $0xbc] sm:$0xf]
        %v7705 = vld [vmem:[%s7173 + $0xc0] sm:$0xf]
        %v7706 = vld [vmem:[%s7173 + $0xd0] sm:$0xf]
        %v7707 = vld [vmem:[%s7173 + $0xd4] sm:$0xf]
        %v7708 = vld [vmem:[%s7173 + $0xe4] sm:$0xf]
        %v7709 = vld [vmem:[%s7173 + $0xe8] sm:$0xf]
        %v7710 = vld [vmem:[%s7173 + $0xf8] sm:$0xf]
        %v7711 = vld [vmem:[%s7173 + $0xfc] sm:$0xf]
        %v7712 = vld [vmem:[%s7173 + $0x10c] sm:$0xf]
        %v7713 = vld [vmem:[%s7173 + $0x110] sm:$0xf]
        %v7714 = vld [vmem:[%s7173 + $0x120] sm:$0xf]
        %v7715 = vld [vmem:[%s7173 + $0x124] sm:$0xf]
        %v7716 = vld [vmem:[%s7173 + $0x134] sm:$0xf]
        %v7717 = vld [vmem:[%s7173 + $0x138] sm:$0xf]
        %v7750 = vunpack.c.l.b16 %v7686
        %v7751 = vunpack.c.l.b16 %v7687
        %v7752 = vunpack.c.l.b16 %v7688
        %v7753 = vunpack.c.l.b16 %v7689
        %v7754 = vunpack.c.l.b16 %v7690
        %v7755 = vunpack.c.l.b16 %v7691
        %v7756 = vunpack.c.l.b16 %v7692
        %v7757 = vunpack.c.l.b16 %v7693
        %v7758 = vunpack.c.l.b16 %v7694
        %v7759 = vunpack.c.l.b16 %v7695
        %v7760 = vunpack.c.l.b16 %v7696
        %v7761 = vunpack.c.l.b16 %v7697
        %v7762 = vunpack.c.l.b16 %v7698
        %v7763 = vunpack.c.l.b16 %v7699
        %v7764 = vunpack.c.l.b16 %v7700
        %v7765 = vunpack.c.l.b16 %v7701
        %v7766 = vunpack.c.l.b16 %v7702
        %v7767 = vunpack.c.l.b16 %v7703
        %v7768 = vunpack.c.l.b16 %v7704
        %v7769 = vunpack.c.l.b16 %v7705
        %v7770 = vunpack.c.l.b16 %v7706
        %v7771 = vunpack.c.l.b16 %v7707
        %v7772 = vunpack.c.l.b16 %v7708
        %v7773 = vunpack.c.l.b16 %v7709
        %v7774 = vunpack.c.l.b16 %v7710
        %v7775 = vunpack.c.l.b16 %v7711
        %v7776 = vunpack.c.l.b16 %v7712
        %v7777 = vunpack.c.l.b16 %v7713
        %v7778 = vunpack.c.l.b16 %v7714
        %v7779 = vunpack.c.l.b16 %v7715
        %v7780 = vunpack.c.l.b16 %v7716
        %v7781 = vunpack.c.l.b16 %v7717
        %v7782 = vpack.c.b16 %v7751, %v7750
        %v7783 = vpack.c.b16 %v7753, %v7752
        %v7784 = vpack.c.b16 %v7755, %v7754
        %v7785 = vpack.c.b16 %v7757, %v7756
        %v7786 = vpack.c.b16 %v7759, %v7758
        %v7787 = vpack.c.b16 %v7761, %v7760
        %v7788 = vpack.c.b16 %v7763, %v7762
        %v7789 = vpack.c.b16 %v7765, %v7764
        %v7790 = vpack.c.b16 %v7767, %v7766
        %v7791 = vpack.c.b16 %v7769, %v7768
        %v7792 = vpack.c.b16 %v7771, %v7770
        %v7793 = vpack.c.b16 %v7773, %v7772
        %v7794 = vpack.c.b16 %v7775, %v7774
        %v7795 = vpack.c.b16 %v7777, %v7776
        %v7796 = vpack.c.b16 %v7779, %v7778
        %v7797 = vpack.c.b16 %v7781, %v7780
        %7798 = vrot.lane.b32.xlu0 %v7782, 56
        %v7799 = vpop.permute.xlu0 %7798
        %7800 = vrot.lane.b32.xlu0 %v7783, 56
        %v7801 = vpop.permute.xlu0 %7800
        %7802 = vrot.lane.b32.xlu0 %v7784, 56
        %v7803 = vpop.permute.xlu0 %7802
        %7804 = vrot.lane.b32.xlu0 %v7785, 56
        %v7805 = vpop.permute.xlu0 %7804
        %7806 = vrot.lane.b32.xlu0 %v7786, 56
        %v7807 = vpop.permute.xlu0 %7806
        %7808 = vrot.lane.b32.xlu0 %v7787, 56
        %v7809 = vpop.permute.xlu0 %7808
        %7810 = vrot.lane.b32.xlu0 %v7788, 56
        %v7811 = vpop.permute.xlu0 %7810
        %7812 = vrot.lane.b32.xlu0 %v7789, 56
        %v7813 = vpop.permute.xlu0 %7812
        %7814 = vrot.lane.b32.xlu0 %v7790, 56
        %v7815 = vpop.permute.xlu0 %7814
        %7816 = vrot.lane.b32.xlu0 %v7791, 56
        %v7817 = vpop.permute.xlu0 %7816
        %7818 = vrot.lane.b32.xlu0 %v7792, 56
        %v7819 = vpop.permute.xlu0 %7818
        %7820 = vrot.lane.b32.xlu0 %v7793, 56
        %v7821 = vpop.permute.xlu0 %7820
        %7822 = vrot.lane.b32.xlu0 %v7794, 56
        %v7823 = vpop.permute.xlu0 %7822
        %7824 = vrot.lane.b32.xlu0 %v7795, 56
        %v7825 = vpop.permute.xlu0 %7824
        %7826 = vrot.lane.b32.xlu0 %v7796, 56
        %v7827 = vpop.permute.xlu0 %7826
        %7828 = vrot.lane.b32.xlu0 %v7797, 56
        %v7829 = vpop.permute.xlu0 %7828
        %7846 = vst.msk [vmem:[#allocation4] sm:$0xff] %vm3713, %v7799
        %7847 = vst.msk [vmem:[#allocation4 + $0x8] sm:$0xff] %vm3713, %v7801
        %7848 = vst.msk [vmem:[#allocation4 + $0x10] sm:$0xff] %vm3713, %v7803
        %7849 = vst.msk [vmem:[#allocation4 + $0x18] sm:$0xff] %vm3713, %v7805
        %7850 = vst.msk [vmem:[#allocation4 + $0x20] sm:$0xff] %vm3713, %v7807
        %7851 = vst.msk [vmem:[#allocation4 + $0x28] sm:$0xff] %vm3713, %v7809
        %7852 = vst.msk [vmem:[#allocation4 + $0x30] sm:$0xff] %vm3713, %v7811
        %7853 = vst.msk [vmem:[#allocation4 + $0x38] sm:$0xff] %vm3713, %v7813
        %7854 = vst.msk [vmem:[#allocation4 + $0x40] sm:$0xff] %vm3713, %v7815
        %7855 = vst.msk [vmem:[#allocation4 + $0x48] sm:$0xff] %vm3713, %v7817
        %7856 = vst.msk [vmem:[#allocation4 + $0x50] sm:$0xff] %vm3713, %v7819
        %7857 = vst.msk [vmem:[#allocation4 + $0x58] sm:$0xff] %vm3713, %v7821
        %7858 = vst.msk [vmem:[#allocation4 + $0x60] sm:$0xff] %vm3713, %v7823
        %7859 = vst.msk [vmem:[#allocation4 + $0x68] sm:$0xff] %vm3713, %v7825
        %7860 = vst.msk [vmem:[#allocation4 + $0x70] sm:$0xff] %vm3713, %v7827
        %7861 = vst.msk [vmem:[#allocation4 + $0x78] sm:$0xff] %vm3713, %v7829
        %v7862 = vld [vmem:[%s7173 + $0x8] sm:$0xf]
        %v7863 = vld [vmem:[%s7173 + $0xc] sm:$0xf]
        %v7864 = vld [vmem:[%s7173 + $0x10] sm:$0x1]
        %v7865 = vld [vmem:[%s7173 + $0x1c] sm:$0xf]
        %v7866 = vld [vmem:[%s7173 + $0x20] sm:$0xf]
        %v7867 = vld [vmem:[%s7173 + $0x24] sm:$0x1]
        %v7868 = vld [vmem:[%s7173 + $0x30] sm:$0xf]
        %v7869 = vld [vmem:[%s7173 + $0x34] sm:$0xf]
        %v7870 = vld [vmem:[%s7173 + $0x38] sm:$0x1]
        %v7871 = vld [vmem:[%s7173 + $0x44] sm:$0xf]
        %v7872 = vld [vmem:[%s7173 + $0x48] sm:$0xf]
        %v7873 = vld [vmem:[%s7173 + $0x4c] sm:$0x1]
        %v7874 = vld [vmem:[%s7173 + $0x58] sm:$0xf]
        %v7875 = vld [vmem:[%s7173 + $0x5c] sm:$0xf]
        %v7876 = vld [vmem:[%s7173 + $0x60] sm:$0x1]
        %v7877 = vld [vmem:[%s7173 + $0x6c] sm:$0xf]
        %v7878 = vld [vmem:[%s7173 + $0x70] sm:$0xf]
        %v7879 = vld [vmem:[%s7173 + $0x74] sm:$0x1]
        %v7880 = vld [vmem:[%s7173 + $0x80] sm:$0xf]
        %v7881 = vld [vmem:[%s7173 + $0x84] sm:$0xf]
        %v7882 = vld [vmem:[%s7173 + $0x88] sm:$0x1]
        %v7883 = vld [vmem:[%s7173 + $0x94] sm:$0xf]
        %v7884 = vld [vmem:[%s7173 + $0x98] sm:$0xf]
        %v7885 = vld [vmem:[%s7173 + $0x9c] sm:$0x1]
        %v7886 = vld [vmem:[%s7173 + $0xa8] sm:$0xf]
        %v7887 = vld [vmem:[%s7173 + $0xac] sm:$0xf]
        %v7888 = vld [vmem:[%s7173 + $0xb0] sm:$0x1]
        %v7889 = vld [vmem:[%s7173 + $0xbc] sm:$0xf]
        %v7890 = vld [vmem:[%s7173 + $0xc0] sm:$0xf]
        %v7891 = vld [vmem:[%s7173 + $0xc4] sm:$0x1]
        %v7892 = vld [vmem:[%s7173 + $0xd0] sm:$0xf]
        %v7893 = vld [vmem:[%s7173 + $0xd4] sm:$0xf]
        %v7894 = vld [vmem:[%s7173 + $0xd8] sm:$0x1]
        %v7895 = vld [vmem:[%s7173 + $0xe4] sm:$0xf]
        %v7896 = vld [vmem:[%s7173 + $0xe8] sm:$0xf]
        %v7897 = vld [vmem:[%s7173 + $0xec] sm:$0x1]
        %v7898 = vld [vmem:[%s7173 + $0xf8] sm:$0xf]
        %v7899 = vld [vmem:[%s7173 + $0xfc] sm:$0xf]
        %v7900 = vld [vmem:[%s7173 + $0x100] sm:$0x1]
        %v7901 = vld [vmem:[%s7173 + $0x10c] sm:$0xf]
        %v7902 = vld [vmem:[%s7173 + $0x110] sm:$0xf]
        %v7903 = vld [vmem:[%s7173 + $0x114] sm:$0x1]
        %v7904 = vld [vmem:[%s7173 + $0x120] sm:$0xf]
        %v7905 = vld [vmem:[%s7173 + $0x124] sm:$0xf]
        %v7906 = vld [vmem:[%s7173 + $0x128] sm:$0x1]
        %v7907 = vld [vmem:[%s7173 + $0x134] sm:$0xf]
        %v7908 = vld [vmem:[%s7173 + $0x138] sm:$0xf]
        %v7909 = vld [vmem:[%s7173 + $0x13c] sm:$0x1]
        %v7911 = vshrl.u32 %v7862, 16
        %v7913 = vrot.slane %v7911, 4
        %v7914 = vshll.u32 %v7862, 16
        %v7916 = vrot.slane %v7914, 5
        %v7917 = vor.u32 %v7913, %v7916
        %v7918 = vrot.slane %v7917, 4
        %v7920 = vshll.u32 %v7863, 16
        %v7922 = vrot.slane %v7920, 5
        %v7923 = vsel %vm1306, %v7918, %v7922
        %v7924 = vshrl.u32 %v7863, 16
        %v7926 = vrot.slane %v7924, 4
        %v7927 = vor.u32 %v7926, %v7922
        %v7928 = vrot.slane %v7927, 4
        %v7930 = vshll.u32 %v7864, 16
        %v7932 = vrot.slane %v7930, 5
        %v7933 = vsel %vm1306, %v7928, %v7932
        %v7935 = vshrl.u32 %v7865, 16
        %v7937 = vrot.slane %v7935, 4
        %v7938 = vshll.u32 %v7865, 16
        %v7940 = vrot.slane %v7938, 5
        %v7941 = vor.u32 %v7937, %v7940
        %v7942 = vrot.slane %v7941, 4
        %v7944 = vshll.u32 %v7866, 16
        %v7946 = vrot.slane %v7944, 5
        %v7947 = vsel %vm1306, %v7942, %v7946
        %v7948 = vshrl.u32 %v7866, 16
        %v7950 = vrot.slane %v7948, 4
        %v7951 = vor.u32 %v7950, %v7946
        %v7952 = vrot.slane %v7951, 4
        %v7954 = vshll.u32 %v7867, 16
        %v7956 = vrot.slane %v7954, 5
        %v7957 = vsel %vm1306, %v7952, %v7956
        %v7959 = vshrl.u32 %v7868, 16
        %v7961 = vrot.slane %v7959, 4
        %v7962 = vshll.u32 %v7868, 16
        %v7964 = vrot.slane %v7962, 5
        %v7965 = vor.u32 %v7961, %v7964
        %v7966 = vrot.slane %v7965, 4
        %v7968 = vshll.u32 %v7869, 16
        %v7970 = vrot.slane %v7968, 5
        %v7971 = vsel %vm1306, %v7966, %v7970
        %v7972 = vshrl.u32 %v7869, 16
        %v7974 = vrot.slane %v7972, 4
        %v7975 = vor.u32 %v7974, %v7970
        %v7976 = vrot.slane %v7975, 4
        %v7978 = vshll.u32 %v7870, 16
        %v7980 = vrot.slane %v7978, 5
        %v7981 = vsel %vm1306, %v7976, %v7980
        %v7983 = vshrl.u32 %v7871, 16
        %v7985 = vrot.slane %v7983, 4
        %v7986 = vshll.u32 %v7871, 16
        %v7988 = vrot.slane %v7986, 5
        %v7989 = vor.u32 %v7985, %v7988
        %v7990 = vrot.slane %v7989, 4
        %v7992 = vshll.u32 %v7872, 16
        %v7994 = vrot.slane %v7992, 5
        %v7995 = vsel %vm1306, %v7990, %v7994
        %v7996 = vshrl.u32 %v7872, 16
        %v7998 = vrot.slane %v7996, 4
        %v7999 = vor.u32 %v7998, %v7994
        %v8000 = vrot.slane %v7999, 4
        %v8002 = vshll.u32 %v7873, 16
        %v8004 = vrot.slane %v8002, 5
        %v8005 = vsel %vm1306, %v8000, %v8004
        %v8007 = vshrl.u32 %v7874, 16
        %v8009 = vrot.slane %v8007, 4
        %v8010 = vshll.u32 %v7874, 16
        %v8012 = vrot.slane %v8010, 5
        %v8013 = vor.u32 %v8009, %v8012
        %v8014 = vrot.slane %v8013, 4
        %v8016 = vshll.u32 %v7875, 16
        %v8018 = vrot.slane %v8016, 5
        %v8019 = vsel %vm1306, %v8014, %v8018
        %v8020 = vshrl.u32 %v7875, 16
        %v8022 = vrot.slane %v8020, 4
        %v8023 = vor.u32 %v8022, %v8018
        %v8024 = vrot.slane %v8023, 4
        %v8026 = vshll.u32 %v7876, 16
        %v8028 = vrot.slane %v8026, 5
        %v8029 = vsel %vm1306, %v8024, %v8028
        %v8031 = vshrl.u32 %v7877, 16
        %v8033 = vrot.slane %v8031, 4
        %v8034 = vshll.u32 %v7877, 16
        %v8036 = vrot.slane %v8034, 5
        %v8037 = vor.u32 %v8033, %v8036
        %v8038 = vrot.slane %v8037, 4
        %v8040 = vshll.u32 %v7878, 16
        %v8042 = vrot.slane %v8040, 5
        %v8043 = vsel %vm1306, %v8038, %v8042
        %v8044 = vshrl.u32 %v7878, 16
        %v8046 = vrot.slane %v8044, 4
        %v8047 = vor.u32 %v8046, %v8042
        %v8048 = vrot.slane %v8047, 4
        %v8050 = vshll.u32 %v7879, 16
        %v8052 = vrot.slane %v8050, 5
        %v8053 = vsel %vm1306, %v8048, %v8052
        %v8055 = vshrl.u32 %v7880, 16
        %v8057 = vrot.slane %v8055, 4
        %v8058 = vshll.u32 %v7880, 16
        %v8060 = vrot.slane %v8058, 5
        %v8061 = vor.u32 %v8057, %v8060
        %v8062 = vrot.slane %v8061, 4
        %v8064 = vshll.u32 %v7881, 16
        %v8066 = vrot.slane %v8064, 5
        %v8067 = vsel %vm1306, %v8062, %v8066
        %v8068 = vshrl.u32 %v7881, 16
        %v8070 = vrot.slane %v8068, 4
        %v8071 = vor.u32 %v8070, %v8066
        %v8072 = vrot.slane %v8071, 4
        %v8074 = vshll.u32 %v7882, 16
        %v8076 = vrot.slane %v8074, 5
        %v8077 = vsel %vm1306, %v8072, %v8076
        %v8079 = vshrl.u32 %v7883, 16
        %v8081 = vrot.slane %v8079, 4
        %v8082 = vshll.u32 %v7883, 16
        %v8084 = vrot.slane %v8082, 5
        %v8085 = vor.u32 %v8081, %v8084
        %v8086 = vrot.slane %v8085, 4
        %v8088 = vshll.u32 %v7884, 16
        %v8090 = vrot.slane %v8088, 5
        %v8091 = vsel %vm1306, %v8086, %v8090
        %v8092 = vshrl.u32 %v7884, 16
        %v8094 = vrot.slane %v8092, 4
        %v8095 = vor.u32 %v8094, %v8090
        %v8096 = vrot.slane %v8095, 4
        %v8098 = vshll.u32 %v7885, 16
        %v8100 = vrot.slane %v8098, 5
        %v8101 = vsel %vm1306, %v8096, %v8100
        %v8103 = vshrl.u32 %v7886, 16
        %v8105 = vrot.slane %v8103, 4
        %v8106 = vshll.u32 %v7886, 16
        %v8108 = vrot.slane %v8106, 5
        %v8109 = vor.u32 %v8105, %v8108
        %v8110 = vrot.slane %v8109, 4
        %v8112 = vshll.u32 %v7887, 16
        %v8114 = vrot.slane %v8112, 5
        %v8115 = vsel %vm1306, %v8110, %v8114
        %v8116 = vshrl.u32 %v7887, 16
        %v8118 = vrot.slane %v8116, 4
        %v8119 = vor.u32 %v8118, %v8114
        %v8120 = vrot.slane %v8119, 4
        %v8122 = vshll.u32 %v7888, 16
        %v8124 = vrot.slane %v8122, 5
        %v8125 = vsel %vm1306, %v8120, %v8124
        %v8127 = vshrl.u32 %v7889, 16
        %v8129 = vrot.slane %v8127, 4
        %v8130 = vshll.u32 %v7889, 16
        %v8132 = vrot.slane %v8130, 5
        %v8133 = vor.u32 %v8129, %v8132
        %v8134 = vrot.slane %v8133, 4
        %v8136 = vshll.u32 %v7890, 16
        %v8138 = vrot.slane %v8136, 5
        %v8139 = vsel %vm1306, %v8134, %v8138
        %v8140 = vshrl.u32 %v7890, 16
        %v8142 = vrot.slane %v8140, 4
        %v8143 = vor.u32 %v8142, %v8138
        %v8144 = vrot.slane %v8143, 4
        %v8146 = vshll.u32 %v7891, 16
        %v8148 = vrot.slane %v8146, 5
        %v8149 = vsel %vm1306, %v8144, %v8148
        %v8151 = vshrl.u32 %v7892, 16
        %v8153 = vrot.slane %v8151, 4
        %v8154 = vshll.u32 %v7892, 16
        %v8156 = vrot.slane %v8154, 5
        %v8157 = vor.u32 %v8153, %v8156
        %v8158 = vrot.slane %v8157, 4
        %v8160 = vshll.u32 %v7893, 16
        %v8162 = vrot.slane %v8160, 5
        %v8163 = vsel %vm1306, %v8158, %v8162
        %v8164 = vshrl.u32 %v7893, 16
        %v8166 = vrot.slane %v8164, 4
        %v8167 = vor.u32 %v8166, %v8162
        %v8168 = vrot.slane %v8167, 4
        %v8170 = vshll.u32 %v7894, 16
        %v8172 = vrot.slane %v8170, 5
        %v8173 = vsel %vm1306, %v8168, %v8172
        %v8175 = vshrl.u32 %v7895, 16
        %v8177 = vrot.slane %v8175, 4
        %v8178 = vshll.u32 %v7895, 16
        %v8180 = vrot.slane %v8178, 5
        %v8181 = vor.u32 %v8177, %v8180
        %v8182 = vrot.slane %v8181, 4
        %v8184 = vshll.u32 %v7896, 16
        %v8186 = vrot.slane %v8184, 5
        %v8187 = vsel %vm1306, %v8182, %v8186
        %v8188 = vshrl.u32 %v7896, 16
        %v8190 = vrot.slane %v8188, 4
        %v8191 = vor.u32 %v8190, %v8186
        %v8192 = vrot.slane %v8191, 4
        %v8194 = vshll.u32 %v7897, 16
        %v8196 = vrot.slane %v8194, 5
        %v8197 = vsel %vm1306, %v8192, %v8196
        %v8199 = vshrl.u32 %v7898, 16
        %v8201 = vrot.slane %v8199, 4
        %v8202 = vshll.u32 %v7898, 16
        %v8204 = vrot.slane %v8202, 5
        %v8205 = vor.u32 %v8201, %v8204
        %v8206 = vrot.slane %v8205, 4
        %v8208 = vshll.u32 %v7899, 16
        %v8210 = vrot.slane %v8208, 5
        %v8211 = vsel %vm1306, %v8206, %v8210
        %v8212 = vshrl.u32 %v7899, 16
        %v8214 = vrot.slane %v8212, 4
        %v8215 = vor.u32 %v8214, %v8210
        %v8216 = vrot.slane %v8215, 4
        %v8218 = vshll.u32 %v7900, 16
        %v8220 = vrot.slane %v8218, 5
        %v8221 = vsel %vm1306, %v8216, %v8220
        %v8223 = vshrl.u32 %v7901, 16
        %v8225 = vrot.slane %v8223, 4
        %v8226 = vshll.u32 %v7901, 16
        %v8228 = vrot.slane %v8226, 5
        %v8229 = vor.u32 %v8225, %v8228
        %v8230 = vrot.slane %v8229, 4
        %v8232 = vshll.u32 %v7902, 16
        %v8234 = vrot.slane %v8232, 5
        %v8235 = vsel %vm1306, %v8230, %v8234
        %v8236 = vshrl.u32 %v7902, 16
        %v8238 = vrot.slane %v8236, 4
        %v8239 = vor.u32 %v8238, %v8234
        %v8240 = vrot.slane %v8239, 4
        %v8242 = vshll.u32 %v7903, 16
        %v8244 = vrot.slane %v8242, 5
        %v8245 = vsel %vm1306, %v8240, %v8244
        %v8247 = vshrl.u32 %v7904, 16
        %v8249 = vrot.slane %v8247, 4
        %v8250 = vshll.u32 %v7904, 16
        %v8252 = vrot.slane %v8250, 5
        %v8253 = vor.u32 %v8249, %v8252
        %v8254 = vrot.slane %v8253, 4
        %v8256 = vshll.u32 %v7905, 16
        %v8258 = vrot.slane %v8256, 5
        %v8259 = vsel %vm1306, %v8254, %v8258
        %v8260 = vshrl.u32 %v7905, 16
        %v8262 = vrot.slane %v8260, 4
        %v8263 = vor.u32 %v8262, %v8258
        %v8264 = vrot.slane %v8263, 4
        %v8266 = vshll.u32 %v7906, 16
        %v8268 = vrot.slane %v8266, 5
        %v8269 = vsel %vm1306, %v8264, %v8268
        %v8271 = vshrl.u32 %v7907, 16
        %v8273 = vrot.slane %v8271, 4
        %v8274 = vshll.u32 %v7907, 16
        %v8276 = vrot.slane %v8274, 5
        %v8277 = vor.u32 %v8273, %v8276
        %v8278 = vrot.slane %v8277, 4
        %v8280 = vshll.u32 %v7908, 16
        %v8282 = vrot.slane %v8280, 5
        %v8283 = vsel %vm1306, %v8278, %v8282
        %v8284 = vshrl.u32 %v7908, 16
        %v8286 = vrot.slane %v8284, 4
        %v8287 = vor.u32 %v8286, %v8282
        %v8288 = vrot.slane %v8287, 4
        %v8290 = vshll.u32 %v7909, 16
        %v8292 = vrot.slane %v8290, 5
        %v8293 = vsel %vm1306, %v8288, %v8292
        %v8294 = vunpack.c.l.b16 %v7923
        %v8295 = vunpack.c.l.b16 %v7933
        %v8296 = vunpack.c.l.b16 %v7947
        %v8297 = vunpack.c.l.b16 %v7957
        %v8298 = vunpack.c.l.b16 %v7971
        %v8299 = vunpack.c.l.b16 %v7981
        %v8300 = vunpack.c.l.b16 %v7995
        %v8301 = vunpack.c.l.b16 %v8005
        %v8302 = vunpack.c.l.b16 %v8019
        %v8303 = vunpack.c.l.b16 %v8029
        %v8304 = vunpack.c.l.b16 %v8043
        %v8305 = vunpack.c.l.b16 %v8053
        %v8306 = vunpack.c.l.b16 %v8067
        %v8307 = vunpack.c.l.b16 %v8077
        %v8308 = vunpack.c.l.b16 %v8091
        %v8309 = vunpack.c.l.b16 %v8101
        %v8310 = vunpack.c.l.b16 %v8115
        %v8311 = vunpack.c.l.b16 %v8125
        %v8312 = vunpack.c.l.b16 %v8139
        %v8313 = vunpack.c.l.b16 %v8149
        %v8314 = vunpack.c.l.b16 %v8163
        %v8315 = vunpack.c.l.b16 %v8173
        %v8316 = vunpack.c.l.b16 %v8187
        %v8317 = vunpack.c.l.b16 %v8197
        %v8318 = vunpack.c.l.b16 %v8211
        %v8319 = vunpack.c.l.b16 %v8221
        %v8320 = vunpack.c.l.b16 %v8235
        %v8321 = vunpack.c.l.b16 %v8245
        %v8322 = vunpack.c.l.b16 %v8259
        %v8323 = vunpack.c.l.b16 %v8269
        %v8324 = vunpack.c.l.b16 %v8283
        %v8325 = vunpack.c.l.b16 %v8293
        %v8326 = vpack.c.b16 %v8295, %v8294
        %v8327 = vpack.c.b16 %v8297, %v8296
        %v8328 = vpack.c.b16 %v8299, %v8298
        %v8329 = vpack.c.b16 %v8301, %v8300
        %v8330 = vpack.c.b16 %v8303, %v8302
        %v8331 = vpack.c.b16 %v8305, %v8304
        %v8332 = vpack.c.b16 %v8307, %v8306
        %v8333 = vpack.c.b16 %v8309, %v8308
        %v8334 = vpack.c.b16 %v8311, %v8310
        %v8335 = vpack.c.b16 %v8313, %v8312
        %v8336 = vpack.c.b16 %v8315, %v8314
        %v8337 = vpack.c.b16 %v8317, %v8316
        %v8338 = vpack.c.b16 %v8319, %v8318
        %v8339 = vpack.c.b16 %v8321, %v8320
        %v8340 = vpack.c.b16 %v8323, %v8322
        %v8341 = vpack.c.b16 %v8325, %v8324
        %8342 = vrot.lane.b32.xlu0 %v8326, 64
        %v8343 = vpop.permute.xlu0 %8342
        %8344 = vrot.lane.b32.xlu0 %v8327, 64
        %v8345 = vpop.permute.xlu0 %8344
        %8346 = vrot.lane.b32.xlu0 %v8328, 64
        %v8347 = vpop.permute.xlu0 %8346
        %8348 = vrot.lane.b32.xlu0 %v8329, 64
        %v8349 = vpop.permute.xlu0 %8348
        %8350 = vrot.lane.b32.xlu0 %v8330, 64
        %v8351 = vpop.permute.xlu0 %8350
        %8352 = vrot.lane.b32.xlu0 %v8331, 64
        %v8353 = vpop.permute.xlu0 %8352
        %8354 = vrot.lane.b32.xlu0 %v8332, 64
        %v8355 = vpop.permute.xlu0 %8354
        %8356 = vrot.lane.b32.xlu0 %v8333, 64
        %v8357 = vpop.permute.xlu0 %8356
        %8358 = vrot.lane.b32.xlu0 %v8334, 64
        %v8359 = vpop.permute.xlu0 %8358
        %8360 = vrot.lane.b32.xlu0 %v8335, 64
        %v8361 = vpop.permute.xlu0 %8360
        %8362 = vrot.lane.b32.xlu0 %v8336, 64
        %v8363 = vpop.permute.xlu0 %8362
        %8364 = vrot.lane.b32.xlu0 %v8337, 64
        %v8365 = vpop.permute.xlu0 %8364
        %8366 = vrot.lane.b32.xlu0 %v8338, 64
        %v8367 = vpop.permute.xlu0 %8366
        %8368 = vrot.lane.b32.xlu0 %v8339, 64
        %v8369 = vpop.permute.xlu0 %8368
        %8370 = vrot.lane.b32.xlu0 %v8340, 64
        %v8371 = vpop.permute.xlu0 %8370
        %8372 = vrot.lane.b32.xlu0 %v8341, 64
        %v8373 = vpop.permute.xlu0 %8372
        %8390 = vst.msk [vmem:[#allocation4] sm:$0xff] %vm4258, %v8343
        %8391 = vst.msk [vmem:[#allocation4 + $0x8] sm:$0xff] %vm4258, %v8345
        %8392 = vst.msk [vmem:[#allocation4 + $0x10] sm:$0xff] %vm4258, %v8347
        %8393 = vst.msk [vmem:[#allocation4 + $0x18] sm:$0xff] %vm4258, %v8349
        %8394 = vst.msk [vmem:[#allocation4 + $0x20] sm:$0xff] %vm4258, %v8351
        %8395 = vst.msk [vmem:[#allocation4 + $0x28] sm:$0xff] %vm4258, %v8353
        %8396 = vst.msk [vmem:[#allocation4 + $0x30] sm:$0xff] %vm4258, %v8355
        %8397 = vst.msk [vmem:[#allocation4 + $0x38] sm:$0xff] %vm4258, %v8357
        %8398 = vst.msk [vmem:[#allocation4 + $0x40] sm:$0xff] %vm4258, %v8359
        %8399 = vst.msk [vmem:[#allocation4 + $0x48] sm:$0xff] %vm4258, %v8361
        %8400 = vst.msk [vmem:[#allocation4 + $0x50] sm:$0xff] %vm4258, %v8363
        %8401 = vst.msk [vmem:[#allocation4 + $0x58] sm:$0xff] %vm4258, %v8365
        %8402 = vst.msk [vmem:[#allocation4 + $0x60] sm:$0xff] %vm4258, %v8367
        %8403 = vst.msk [vmem:[#allocation4 + $0x68] sm:$0xff] %vm4258, %v8369
        %8404 = vst.msk [vmem:[#allocation4 + $0x70] sm:$0xff] %vm4258, %v8371
        %8405 = vst.msk [vmem:[#allocation4 + $0x78] sm:$0xff] %vm4258, %v8373
        %v8406 = vld [vmem:[#allocation4] sm:$0xff]
        %v8407 = vld [vmem:[#allocation4 + $0x8] sm:$0xff]
        %v8408 = vld [vmem:[#allocation4 + $0x10] sm:$0xff]
        %v8409 = vld [vmem:[#allocation4 + $0x18] sm:$0xff]
        %v8410 = vld [vmem:[#allocation4 + $0x20] sm:$0xff]
        %v8411 = vld [vmem:[#allocation4 + $0x28] sm:$0xff]
        %v8412 = vld [vmem:[#allocation4 + $0x30] sm:$0xff]
        %v8413 = vld [vmem:[#allocation4 + $0x38] sm:$0xff]
        %v8414 = vld [vmem:[#allocation4 + $0x40] sm:$0xff]
        %v8415 = vld [vmem:[#allocation4 + $0x48] sm:$0xff]
        %v8416 = vld [vmem:[#allocation4 + $0x50] sm:$0xff]
        %v8417 = vld [vmem:[#allocation4 + $0x58] sm:$0xff]
        %v8418 = vld [vmem:[#allocation4 + $0x60] sm:$0xff]
        %v8419 = vld [vmem:[#allocation4 + $0x68] sm:$0xff]
        %v8420 = vld [vmem:[#allocation4 + $0x70] sm:$0xff]
        %v8421 = vld [vmem:[#allocation4 + $0x78] sm:$0xff]
        %v8422 = vld [vmem:[%s3] sm:$0xf]
        %v8423 = vld [vmem:[%s3 + $0x4] sm:$0xf]
        %v8424 = vld [vmem:[%s3 + $0x8] sm:$0xf]
        %v8425 = vld [vmem:[%s3 + $0xc] sm:$0xf]
        %v8426 = vld [vmem:[%s3 + $0x10] sm:$0xf]
        %v8427 = vld [vmem:[%s3 + $0x14] sm:$0xf]
        %v8428 = vld [vmem:[%s3 + $0x18] sm:$0xf]
        %v8429 = vld [vmem:[%s3 + $0x1c] sm:$0xf]
        %v8430 = vld [vmem:[%s3 + $0x20] sm:$0xf]
        %v8431 = vld [vmem:[%s4] sm:$0x1]
        %v8433 = vlaneseq
        %v8434 = vshrl.u32 %v8433, 7
        %v8435 = vsub.s32 0, %v8434
        %v8436 = vrot.slane %v8431, %v8435
        %v8447 = vunpack.c.l.b16 %v8422
        %v8448 = vunpack.c.l.b16 %v8423
        %v8449 = vunpack.c.l.b16 %v8424
        %v8450 = vunpack.c.l.b16 %v8425
        %v8451 = vunpack.c.l.b16 %v8426
        %v8452 = vunpack.c.l.b16 %v8427
        %v8453 = vunpack.c.l.b16 %v8428
        %v8454 = vunpack.c.l.b16 %v8429
        %v8455 = vunpack.c.l.b16 %v8430
        %v8456 = vpack.c.b16 %v8448, %v8447
        %v8457 = vpack.c.b16 %v8450, %v8449
        %v8458 = vpack.c.b16 %v8452, %v8451
        %v8459 = vpack.c.b16 %v8454, %v8453
        %v8460 = vpack.c.b16 %v8455, %v8455
        %v8466 = vsel %vm4334, %v8406, 0
        %v8469 = vsel %vm4334, %v8407, 0
        %v8472 = vsel %vm4334, %v8408, 0
        %v8475 = vsel %vm4334, %v8409, 0
        %v8478 = vsel %vm4334, %v8410, 0
        %v8481 = vsel %vm4334, %v8411, 0
        %v8484 = vsel %vm4334, %v8412, 0
        %v8487 = vsel %vm4334, %v8413, 0
        %v8490 = vsel %vm4334, %v8414, 0
        %v8493 = vsel %vm4334, %v8415, 0
        %v8496 = vsel %vm4334, %v8416, 0
        %v8499 = vsel %vm4334, %v8417, 0
        %v8502 = vsel %vm4334, %v8418, 0
        %v8505 = vsel %vm4334, %v8419, 0
        %v8508 = vsel %vm4334, %v8420, 0
        %v8511 = vsel %vm4334, %v8421, 0
        %v8514 = vsel %vm4383, %v8460, 0
        %8516 = vmatprep.subr.bf16.mxu0 0
        %8517 = vmatpush1.bf16.msra.mxu0 %v8456
        %8518 = vmatprep.subr.bf16.mxu0 0
        %8519 = vmatpush1.bf16.msra.mxu0 %v8457
        %8520 = vmatprep.subr.bf16.mxu0 0
        %8521 = vmatpush1.bf16.msra.mxu0 %v8458
        %8522 = vmatprep.subr.bf16.mxu0 0
        %8523 = vmatpush1.bf16.msra.mxu0 %v8459
        %8524 = vmatprep.subr.bf16.mxu0 0
        %8525 = vmatpush1.bf16.msra.mxu0 %v8514
        %8526 = vmatprep.subr.bf16.mxu0 0
        %8527 = vmatpush1.bf16.msra.mxu0 0
        %8528 = vmatprep.subr.bf16.mxu0 0
        %8529 = vmatpush1.bf16.msra.mxu0 0
        %8530 = vmatprep.subr.bf16.mxu0 0
        %8531 = vmatpush1.bf16.msra.mxu0 0
        %8532 = vmatprep.subr.bf16.mxu0 0
        %8533 = vmatpush1.bf16.msra.mxu0 0
        %8534 = vmatprep.subr.bf16.mxu0 0
        %8535 = vmatpush1.bf16.msra.mxu0 0
        %8536 = vmatprep.subr.bf16.mxu0 0
        %8537 = vmatpush1.bf16.msra.mxu0 0
        %8538 = vmatprep.subr.bf16.mxu0 0
        %8539 = vmatpush1.bf16.msra.mxu0 0
        %8540 = vmatprep.subr.bf16.mxu0 0
        %8541 = vmatpush1.bf16.msra.mxu0 0
        %8542 = vmatprep.subr.bf16.mxu0 0
        %8543 = vmatpush1.bf16.msra.mxu0 0
        %8544 = vmatprep.subr.bf16.mxu0 0
        %8545 = vmatpush1.bf16.msra.mxu0 0
        %8546 = vmatprep.subr.bf16.mxu0 0
        %8547 = vmatpush1.bf16.msra.mxu0 0
        %8548 = vmatprep.mubr.bf16.mxu0 0
        %8549 = vmatmul.mubr.bf16.gmra.mrb[0].mxu0 %v8466
        %v8550 = vpop.f32.mrb[0].mxu0
        %v8551 = vadd.f32 %v8436, %v8550
        %v8552 = vpop.f32.mrb[0].mxu0
        %v8553 = vpop.f32.mrb[0].mxu0
        %v8554 = vadd.f32 %v8436, %v8553
        %v8555 = vpop.f32.mrb[0].mxu0
        %8556 = vmatprep.mubr.bf16.mxu0 0
        %8557 = vmatmul.mubr.bf16.gmra.mrb[0].mxu0 %v8469
        %v8558 = vpop.f32.mrb[0].mxu0
        %v8559 = vadd.f32 %v8436, %v8558
        %v8560 = vpop.f32.mrb[0].mxu0
        %v8561 = vpop.f32.mrb[0].mxu0
        %v8562 = vadd.f32 %v8436, %v8561
        %v8563 = vpop.f32.mrb[0].mxu0
        %8564 = vmatprep.mubr.bf16.mxu0 0
        %8565 = vmatmul.mubr.bf16.gmra.mrb[0].mxu0 %v8472
        %v8566 = vpop.f32.mrb[0].mxu0
        %v8567 = vadd.f32 %v8436, %v8566
        %v8568 = vpop.f32.mrb[0].mxu0
        %v8569 = vpop.f32.mrb[0].mxu0
        %v8570 = vadd.f32 %v8436, %v8569
        %v8571 = vpop.f32.mrb[0].mxu0
        %8572 = vmatprep.mubr.bf16.mxu0 0
        %8573 = vmatmul.mubr.bf16.gmra.mrb[0].mxu0 %v8475
        %v8574 = vpop.f32.mrb[0].mxu0
        %v8575 = vadd.f32 %v8436, %v8574
        %v8576 = vpop.f32.mrb[0].mxu0
        %v8577 = vpop.f32.mrb[0].mxu0
        %v8578 = vadd.f32 %v8436, %v8577
        %v8579 = vpop.f32.mrb[0].mxu0
        %8580 = vmatprep.mubr.bf16.mxu0 0
        %8581 = vmatmul.mubr.bf16.gmra.mrb[0].mxu0 %v8478
        %v8582 = vpop.f32.mrb[0].mxu0
        %v8583 = vadd.f32 %v8436, %v8582
        %v8584 = vpop.f32.mrb[0].mxu0
        %v8585 = vpop.f32.mrb[0].mxu0
        %v8586 = vadd.f32 %v8436, %v8585
        %v8587 = vpop.f32.mrb[0].mxu0
        %8588 = vmatprep.mubr.bf16.mxu0 0
        %8589 = vmatmul.mubr.bf16.gmra.mrb[0].mxu0 %v8481
        %v8590 = vpop.f32.mrb[0].mxu0
        %v8591 = vadd.f32 %v8436, %v8590
        %v8592 = vpop.f32.mrb[0].mxu0
        %v8593 = vpop.f32.mrb[0].mxu0
        %v8594 = vadd.f32 %v8436, %v8593
        %v8595 = vpop.f32.mrb[0].mxu0
        %8596 = vmatprep.mubr.bf16.mxu0 0
        %8597 = vmatmul.mubr.bf16.gmra.mrb[0].mxu0 %v8484
        %v8598 = vpop.f32.mrb[0].mxu0
        %v8599 = vadd.f32 %v8436, %v8598
        %v8600 = vpop.f32.mrb[0].mxu0
        %v8601 = vpop.f32.mrb[0].mxu0
        %v8602 = vadd.f32 %v8436, %v8601
        %v8603 = vpop.f32.mrb[0].mxu0
        %8604 = vmatprep.mubr.bf16.mxu0 0
        %8605 = vmatmul.mubr.bf16.gmra.mrb[0].mxu0 %v8487
        %v8606 = vpop.f32.mrb[0].mxu0
        %v8607 = vadd.f32 %v8436, %v8606
        %v8608 = vpop.f32.mrb[0].mxu0
        %v8609 = vpop.f32.mrb[0].mxu0
        %v8610 = vadd.f32 %v8436, %v8609
        %v8611 = vpop.f32.mrb[0].mxu0
        %8612 = vmatprep.mubr.bf16.mxu0 0
        %8613 = vmatmul.mubr.bf16.gmra.mrb[0].mxu0 %v8490
        %v8614 = vpop.f32.mrb[0].mxu0
        %v8615 = vadd.f32 %v8436, %v8614
        %v8616 = vpop.f32.mrb[0].mxu0
        %v8617 = vpop.f32.mrb[0].mxu0
        %v8618 = vadd.f32 %v8436, %v8617
        %v8619 = vpop.f32.mrb[0].mxu0
        %8620 = vmatprep.mubr.bf16.mxu0 0
        %8621 = vmatmul.mubr.bf16.gmra.mrb[0].mxu0 %v8493
        %v8622 = vpop.f32.mrb[0].mxu0
        %v8623 = vadd.f32 %v8436, %v8622
        %v8624 = vpop.f32.mrb[0].mxu0
        %v8625 = vpop.f32.mrb[0].mxu0
        %v8626 = vadd.f32 %v8436, %v8625
        %v8627 = vpop.f32.mrb[0].mxu0
        %8628 = vmatprep.mubr.bf16.mxu0 0
        %8629 = vmatmul.mubr.bf16.gmra.mrb[0].mxu0 %v8496
        %v8630 = vpop.f32.mrb[0].mxu0
        %v8631 = vadd.f32 %v8436, %v8630
        %v8632 = vpop.f32.mrb[0].mxu0
        %v8633 = vpop.f32.mrb[0].mxu0
        %v8634 = vadd.f32 %v8436, %v8633
        %v8635 = vpop.f32.mrb[0].mxu0
        %8636 = vmatprep.mubr.bf16.mxu0 0
        %8637 = vmatmul.mubr.bf16.gmra.mrb[0].mxu0 %v8499
        %v8638 = vpop.f32.mrb[0].mxu0
        %v8639 = vadd.f32 %v8436, %v8638
        %v8640 = vpop.f32.mrb[0].mxu0
        %v8641 = vpop.f32.mrb[0].mxu0
        %v8642 = vadd.f32 %v8436, %v8641
        %v8643 = vpop.f32.mrb[0].mxu0
        %8644 = vmatprep.mubr.bf16.mxu0 0
        %8645 = vmatmul.mubr.bf16.gmra.mrb[0].mxu0 %v8502
        %v8646 = vpop.f32.mrb[0].mxu0
        %v8647 = vadd.f32 %v8436, %v8646
        %v8648 = vpop.f32.mrb[0].mxu0
        %v8649 = vpop.f32.mrb[0].mxu0
        %v8650 = vadd.f32 %v8436, %v8649
        %v8651 = vpop.f32.mrb[0].mxu0
        %8652 = vmatprep.mubr.bf16.mxu0 0
        %8653 = vmatmul.mubr.bf16.gmra.mrb[0].mxu0 %v8505
        %v8654 = vpop.f32.mrb[0].mxu0
        %v8655 = vadd.f32 %v8436, %v8654
        %v8656 = vpop.f32.mrb[0].mxu0
        %v8657 = vpop.f32.mrb[0].mxu0
        %v8658 = vadd.f32 %v8436, %v8657
        %v8659 = vpop.f32.mrb[0].mxu0
        %8660 = vmatprep.mubr.bf16.mxu0 0
        %8661 = vmatmul.mubr.bf16.gmra.mrb[0].mxu0 %v8508
        %v8662 = vpop.f32.mrb[0].mxu0
        %v8663 = vadd.f32 %v8436, %v8662
        %v8664 = vpop.f32.mrb[0].mxu0
        %v8665 = vpop.f32.mrb[0].mxu0
        %v8666 = vadd.f32 %v8436, %v8665
        %v8667 = vpop.f32.mrb[0].mxu0
        %8668 = vmatprep.mubr.bf16.mxu0 0
        %8669 = vmatmul.mubr.bf16.gmra.mrb[0].mxu0 %v8511
        %v8670 = vpop.f32.mrb[0].mxu0
        %v8671 = vadd.f32 %v8436, %v8670
        %v8672 = vpop.f32.mrb[0].mxu0
        %v8673 = vpop.f32.mrb[0].mxu0
        %v8674 = vadd.f32 %v8436, %v8673
        %v8675 = vpop.f32.mrb[0].mxu0
        %8676 = vdwg.mxu0
        %v8677 = vmax.f32 %v8551, 0.0
        %v8678 = vmax.f32 %v8554, 0.0
        %v8679 = vmax.f32 %v8559, 0.0
        %v8680 = vmax.f32 %v8562, 0.0
        %v8681 = vmax.f32 %v8567, 0.0
        %v8682 = vmax.f32 %v8570, 0.0
        %v8683 = vmax.f32 %v8575, 0.0
        %v8684 = vmax.f32 %v8578, 0.0
        %v8685 = vmax.f32 %v8583, 0.0
        %v8686 = vmax.f32 %v8586, 0.0
        %v8687 = vmax.f32 %v8591, 0.0
        %v8688 = vmax.f32 %v8594, 0.0
        %v8689 = vmax.f32 %v8599, 0.0
        %v8690 = vmax.f32 %v8602, 0.0
        %v8691 = vmax.f32 %v8607, 0.0
        %v8692 = vmax.f32 %v8610, 0.0
        %v8693 = vmax.f32 %v8615, 0.0
        %v8694 = vmax.f32 %v8618, 0.0
        %v8695 = vmax.f32 %v8623, 0.0
        %v8696 = vmax.f32 %v8626, 0.0
        %v8697 = vmax.f32 %v8631, 0.0
        %v8698 = vmax.f32 %v8634, 0.0
        %v8699 = vmax.f32 %v8639, 0.0
        %v8700 = vmax.f32 %v8642, 0.0
        %v8701 = vmax.f32 %v8647, 0.0
        %v8702 = vmax.f32 %v8650, 0.0
        %v8703 = vmax.f32 %v8655, 0.0
        %v8704 = vmax.f32 %v8658, 0.0
        %v8705 = vmax.f32 %v8663, 0.0
        %v8706 = vmax.f32 %v8666, 0.0
        %v8707 = vmax.f32 %v8671, 0.0
        %v8708 = vmax.f32 %v8674, 0.0
        %v8709 = vpack.c.bf16 %v8678, %v8677
        %v8710 = vpack.c.bf16 %v8680, %v8679
        %v8711 = vpack.c.bf16 %v8682, %v8681
        %v8712 = vpack.c.bf16 %v8684, %v8683
        %v8713 = vpack.c.bf16 %v8686, %v8685
        %v8714 = vpack.c.bf16 %v8688, %v8687
        %v8715 = vpack.c.bf16 %v8690, %v8689
        %v8716 = vpack.c.bf16 %v8692, %v8691
        %v8717 = vpack.c.bf16 %v8694, %v8693
        %v8718 = vpack.c.bf16 %v8696, %v8695
        %v8719 = vpack.c.bf16 %v8698, %v8697
        %v8720 = vpack.c.bf16 %v8700, %v8699
        %v8721 = vpack.c.bf16 %v8702, %v8701
        %v8722 = vpack.c.bf16 %v8704, %v8703
        %v8723 = vpack.c.bf16 %v8706, %v8705
        %v8724 = vpack.c.bf16 %v8708, %v8707
        %v8741 = vunpack.c.l.b16 %v8709
        %v8742 = vunpack.c.h.b16 %v8709
        %v8743 = vunpack.c.l.b16 %v8710
        %v8744 = vunpack.c.h.b16 %v8710
        %v8745 = vunpack.c.l.b16 %v8711
        %v8746 = vunpack.c.h.b16 %v8711
        %v8747 = vunpack.c.l.b16 %v8712
        %v8748 = vunpack.c.h.b16 %v8712
        %v8749 = vunpack.c.l.b16 %v8713
        %v8750 = vunpack.c.h.b16 %v8713
        %v8751 = vunpack.c.l.b16 %v8714
        %v8752 = vunpack.c.h.b16 %v8714
        %v8753 = vunpack.c.l.b16 %v8715
        %v8754 = vunpack.c.h.b16 %v8715
        %v8755 = vunpack.c.l.b16 %v8716
        %v8756 = vunpack.c.h.b16 %v8716
        %v8757 = vunpack.c.l.b16 %v8717
        %v8758 = vunpack.c.h.b16 %v8717
        %v8759 = vunpack.c.l.b16 %v8718
        %v8760 = vunpack.c.h.b16 %v8718
        %v8761 = vunpack.c.l.b16 %v8719
        %v8762 = vunpack.c.h.b16 %v8719
        %v8763 = vunpack.c.l.b16 %v8720
        %v8764 = vunpack.c.h.b16 %v8720
        %v8765 = vunpack.c.l.b16 %v8721
        %v8766 = vunpack.c.h.b16 %v8721
        %v8767 = vunpack.c.l.b16 %v8722
        %v8768 = vunpack.c.h.b16 %v8722
        %v8769 = vunpack.c.l.b16 %v8723
        %v8770 = vunpack.c.h.b16 %v8723
        %v8771 = vunpack.c.l.b16 %v8724
        %v8772 = vunpack.c.h.b16 %v8724
        %v8773 = vpack.c.b16 %v8741, %v8741
        %v8774 = vpack.c.b16 %v8742, %v8742
        %v8775 = vpack.c.b16 %v8743, %v8743
        %v8776 = vpack.c.b16 %v8744, %v8744
        %v8777 = vpack.c.b16 %v8745, %v8745
        %v8778 = vpack.c.b16 %v8746, %v8746
        %v8779 = vpack.c.b16 %v8747, %v8747
        %v8780 = vpack.c.b16 %v8748, %v8748
        %v8781 = vpack.c.b16 %v8749, %v8749
        %v8782 = vpack.c.b16 %v8750, %v8750
        %v8783 = vpack.c.b16 %v8751, %v8751
        %v8784 = vpack.c.b16 %v8752, %v8752
        %v8785 = vpack.c.b16 %v8753, %v8753
        %v8786 = vpack.c.b16 %v8754, %v8754
        %v8787 = vpack.c.b16 %v8755, %v8755
        %v8788 = vpack.c.b16 %v8756, %v8756
        %v8789 = vpack.c.b16 %v8757, %v8757
        %v8790 = vpack.c.b16 %v8758, %v8758
        %v8791 = vpack.c.b16 %v8759, %v8759
        %v8792 = vpack.c.b16 %v8760, %v8760
        %v8793 = vpack.c.b16 %v8761, %v8761
        %v8794 = vpack.c.b16 %v8762, %v8762
        %v8795 = vpack.c.b16 %v8763, %v8763
        %v8796 = vpack.c.b16 %v8764, %v8764
        %v8797 = vpack.c.b16 %v8765, %v8765
        %v8798 = vpack.c.b16 %v8766, %v8766
        %v8799 = vpack.c.b16 %v8767, %v8767
        %v8800 = vpack.c.b16 %v8768, %v8768
        %v8801 = vpack.c.b16 %v8769, %v8769
        %v8802 = vpack.c.b16 %v8770, %v8770
        %v8803 = vpack.c.b16 %v8771, %v8771
        %v8804 = vpack.c.b16 %v8772, %v8772
        %8837 = vst.msk [vmem:[%s563 + $0x8] sm:$0xf] %vm278, %v8773
        %8838 = vst.msk [vmem:[%s563 + $0xc] sm:$0xf] %vm278, %v8774
        %8839 = vst.msk [vmem:[%s563 + $0x1c] sm:$0xf] %vm278, %v8775
        %8840 = vst.msk [vmem:[%s563 + $0x20] sm:$0xf] %vm278, %v8776
        %8841 = vst.msk [vmem:[%s563 + $0x30] sm:$0xf] %vm278, %v8777
        %8842 = vst.msk [vmem:[%s563 + $0x34] sm:$0xf] %vm278, %v8778
        %8843 = vst.msk [vmem:[%s563 + $0x44] sm:$0xf] %vm278, %v8779
        %8844 = vst.msk [vmem:[%s563 + $0x48] sm:$0xf] %vm278, %v8780
        %8845 = vst.msk [vmem:[%s563 + $0x58] sm:$0xf] %vm278, %v8781
        %8846 = vst.msk [vmem:[%s563 + $0x5c] sm:$0xf] %vm278, %v8782
        %8847 = vst.msk [vmem:[%s563 + $0x6c] sm:$0xf] %vm278, %v8783
        %8848 = vst.msk [vmem:[%s563 + $0x70] sm:$0xf] %vm278, %v8784
        %8849 = vst.msk [vmem:[%s563 + $0x80] sm:$0xf] %vm278, %v8785
        %8850 = vst.msk [vmem:[%s563 + $0x84] sm:$0xf] %vm278, %v8786
        %8851 = vst.msk [vmem:[%s563 + $0x94] sm:$0xf] %vm278, %v8787
        %8852 = vst.msk [vmem:[%s563 + $0x98] sm:$0xf] %vm278, %v8788
        %8853 = vst.msk [vmem:[%s563 + $0xa8] sm:$0xf] %vm278, %v8789
        %8854 = vst.msk [vmem:[%s563 + $0xac] sm:$0xf] %vm278, %v8790
        %8855 = vst.msk [vmem:[%s563 + $0xbc] sm:$0xf] %vm278, %v8791
        %8856 = vst.msk [vmem:[%s563 + $0xc0] sm:$0xf] %vm278, %v8792
        %8857 = vst.msk [vmem:[%s563 + $0xd0] sm:$0xf] %vm278, %v8793
        %8858 = vst.msk [vmem:[%s563 + $0xd4] sm:$0xf] %vm278, %v8794
        %8859 = vst.msk [vmem:[%s563 + $0xe4] sm:$0xf] %vm278, %v8795
        %8860 = vst.msk [vmem:[%s563 + $0xe8] sm:$0xf] %vm278, %v8796
        %8861 = vst.msk [vmem:[%s563 + $0xf8] sm:$0xf] %vm278, %v8797
        %8862 = vst.msk [vmem:[%s563 + $0xfc] sm:$0xf] %vm278, %v8798
        %8863 = vst.msk [vmem:[%s563 + $0x10c] sm:$0xf] %vm278, %v8799
        %8864 = vst.msk [vmem:[%s563 + $0x110] sm:$0xf] %vm278, %v8800
        %8865 = vst.msk [vmem:[%s563 + $0x120] sm:$0xf] %vm278, %v8801
        %8866 = vst.msk [vmem:[%s563 + $0x124] sm:$0xf] %vm278, %v8802
        %8867 = vst.msk [vmem:[%s563 + $0x134] sm:$0xf] %vm278, %v8803
        %8868 = vst.msk [vmem:[%s563 + $0x138] sm:$0xf] %vm278, %v8804
        %v8869 = vld [vmem:[%s5] sm:$0xf]
        %v8870 = vld [vmem:[#allocation2 + $0x4] sm:$0x8]
        %v8871 = vld [vmem:[#allocation2 + $0x8] sm:$0xf]
        %v8872 = vld [vmem:[#allocation2 + $0xc] sm:$0xf]
        %v8873 = vld [vmem:[#allocation2 + $0x18] sm:$0x8]
        %v8874 = vld [vmem:[#allocation2 + $0x1c] sm:$0xf]
        %v8875 = vld [vmem:[#allocation2 + $0x20] sm:$0xf]
        %v8876 = vld [vmem:[#allocation2 + $0x2c] sm:$0x8]
        %v8877 = vld [vmem:[#allocation2 + $0x30] sm:$0xf]
        %v8878 = vld [vmem:[#allocation2 + $0x34] sm:$0xf]
        %v8879 = vld [vmem:[#allocation2 + $0x40] sm:$0x8]
        %v8880 = vld [vmem:[#allocation2 + $0x44] sm:$0xf]
        %v8881 = vld [vmem:[#allocation2 + $0x48] sm:$0xf]
        %v8882 = vld [vmem:[#allocation2 + $0x54] sm:$0x8]
        %v8883 = vld [vmem:[#allocation2 + $0x58] sm:$0xf]
        %v8884 = vld [vmem:[#allocation2 + $0x5c] sm:$0xf]
        %v8885 = vld [vmem:[#allocation2 + $0x68] sm:$0x8]
        %v8886 = vld [vmem:[#allocation2 + $0x6c] sm:$0xf]
        %v8887 = vld [vmem:[#allocation2 + $0x70] sm:$0xf]
        %v8888 = vld [vmem:[#allocation2 + $0x7c] sm:$0x8]
        %v8889 = vld [vmem:[#allocation2 + $0x80] sm:$0xf]
        %v8890 = vld [vmem:[#allocation2 + $0x84] sm:$0xf]
        %v8891 = vld [vmem:[#allocation2 + $0x90] sm:$0x8]
        %v8892 = vld [vmem:[#allocation2 + $0x94] sm:$0xf]
        %v8893 = vld [vmem:[#allocation2 + $0x98] sm:$0xf]
        %v8894 = vld [vmem:[#allocation2 + $0xa4] sm:$0x8]
        %v8895 = vld [vmem:[#allocation2 + $0xa8] sm:$0xf]
        %v8896 = vld [vmem:[#allocation2 + $0xac] sm:$0xf]
        %v8897 = vld [vmem:[#allocation2 + $0xb8] sm:$0x8]
        %v8898 = vld [vmem:[#allocation2 + $0xbc] sm:$0xf]
        %v8899 = vld [vmem:[#allocation2 + $0xc0] sm:$0xf]
        %v8900 = vld [vmem:[#allocation2 + $0xcc] sm:$0x8]
        %v8901 = vld [vmem:[#allocation2 + $0xd0] sm:$0xf]
        %v8902 = vld [vmem:[#allocation2 + $0xd4] sm:$0xf]
        %v8903 = vld [vmem:[#allocation2 + $0xe0] sm:$0x8]
        %v8904 = vld [vmem:[#allocation2 + $0xe4] sm:$0xf]
        %v8905 = vld [vmem:[#allocation2 + $0xe8] sm:$0xf]
        %v8906 = vld [vmem:[#allocation2 + $0xf4] sm:$0x8]
        %v8907 = vld [vmem:[#allocation2 + $0xf8] sm:$0xf]
        %v8908 = vld [vmem:[#allocation2 + $0xfc] sm:$0xf]
        %v8909 = vld [vmem:[#allocation2 + $0x108] sm:$0x8]
        %v8910 = vld [vmem:[#allocation2 + $0x10c] sm:$0xf]
        %v8911 = vld [vmem:[#allocation2 + $0x110] sm:$0xf]
        %v8912 = vld [vmem:[#allocation2 + $0x11c] sm:$0x8]
        %v8913 = vld [vmem:[#allocation2 + $0x120] sm:$0xf]
        %v8914 = vld [vmem:[#allocation2 + $0x124] sm:$0xf]
        %v8915 = vld [vmem:[#allocation2 + $0x130] sm:$0x8]
        %v8916 = vld [vmem:[#allocation2 + $0x134] sm:$0xf]
        %v8917 = vld [vmem:[#allocation2 + $0x138] sm:$0xf]
        %v8919 = vshrl.u32 %v8870, 16
        %v8921 = vrot.slane %v8919, 7
        %v8922 = vrot.slane %v8921, 4
        %v8924 = vshrl.u32 %v8871, 16
        %v8926 = vrot.slane %v8924, 7
        %v8927 = vshll.u32 %v8871, 16
        %v8929 = vor.u32 %v8926, %v8927
        %v8930 = vsel %vm645, %v8922, %v8929
        %v8931 = vrot.slane %v8926, 4
        %v8933 = vshrl.u32 %v8872, 16
        %v8935 = vrot.slane %v8933, 7
        %v8936 = vshll.u32 %v8872, 16
        %v8938 = vor.u32 %v8935, %v8936
        %v8939 = vsel %vm645, %v8931, %v8938
        %v8941 = vshrl.u32 %v8873, 16
        %v8943 = vrot.slane %v8941, 7
        %v8944 = vrot.slane %v8943, 4
        %v8946 = vshrl.u32 %v8874, 16
        %v8948 = vrot.slane %v8946, 7
        %v8949 = vshll.u32 %v8874, 16
        %v8951 = vor.u32 %v8948, %v8949
        %v8952 = vsel %vm645, %v8944, %v8951
        %v8953 = vrot.slane %v8948, 4
        %v8955 = vshrl.u32 %v8875, 16
        %v8957 = vrot.slane %v8955, 7
        %v8958 = vshll.u32 %v8875, 16
        %v8960 = vor.u32 %v8957, %v8958
        %v8961 = vsel %vm645, %v8953, %v8960
        %v8963 = vshrl.u32 %v8876, 16
        %v8965 = vrot.slane %v8963, 7
        %v8966 = vrot.slane %v8965, 4
        %v8968 = vshrl.u32 %v8877, 16
        %v8970 = vrot.slane %v8968, 7
        %v8971 = vshll.u32 %v8877, 16
        %v8973 = vor.u32 %v8970, %v8971
        %v8974 = vsel %vm645, %v8966, %v8973
        %v8975 = vrot.slane %v8970, 4
        %v8977 = vshrl.u32 %v8878, 16
        %v8979 = vrot.slane %v8977, 7
        %v8980 = vshll.u32 %v8878, 16
        %v8982 = vor.u32 %v8979, %v8980
        %v8983 = vsel %vm645, %v8975, %v8982
        %v8985 = vshrl.u32 %v8879, 16
        %v8987 = vrot.slane %v8985, 7
        %v8988 = vrot.slane %v8987, 4
        %v8990 = vshrl.u32 %v8880, 16
        %v8992 = vrot.slane %v8990, 7
        %v8993 = vshll.u32 %v8880, 16
        %v8995 = vor.u32 %v8992, %v8993
        %v8996 = vsel %vm645, %v8988, %v8995
        %v8997 = vrot.slane %v8992, 4
        %v8999 = vshrl.u32 %v8881, 16
        %v9001 = vrot.slane %v8999, 7
        %v9002 = vshll.u32 %v8881, 16
        %v9004 = vor.u32 %v9001, %v9002
        %v9005 = vsel %vm645, %v8997, %v9004
        %v9007 = vshrl.u32 %v8882, 16
        %v9009 = vrot.slane %v9007, 7
        %v9010 = vrot.slane %v9009, 4
        %v9012 = vshrl.u32 %v8883, 16
        %v9014 = vrot.slane %v9012, 7
        %v9015 = vshll.u32 %v8883, 16
        %v9017 = vor.u32 %v9014, %v9015
        %v9018 = vsel %vm645, %v9010, %v9017
        %v9019 = vrot.slane %v9014, 4
        %v9021 = vshrl.u32 %v8884, 16
        %v9023 = vrot.slane %v9021, 7
        %v9024 = vshll.u32 %v8884, 16
        %v9026 = vor.u32 %v9023, %v9024
        %v9027 = vsel %vm645, %v9019, %v9026
        %v9029 = vshrl.u32 %v8885, 16
        %v9031 = vrot.slane %v9029, 7
        %v9032 = vrot.slane %v9031, 4
        %v9034 = vshrl.u32 %v8886, 16
        %v9036 = vrot.slane %v9034, 7
        %v9037 = vshll.u32 %v8886, 16
        %v9039 = vor.u32 %v9036, %v9037
        %v9040 = vsel %vm645, %v9032, %v9039
        %v9041 = vrot.slane %v9036, 4
        %v9043 = vshrl.u32 %v8887, 16
        %v9045 = vrot.slane %v9043, 7
        %v9046 = vshll.u32 %v8887, 16
        %v9048 = vor.u32 %v9045, %v9046
        %v9049 = vsel %vm645, %v9041, %v9048
        %v9051 = vshrl.u32 %v8888, 16
        %v9053 = vrot.slane %v9051, 7
        %v9054 = vrot.slane %v9053, 4
        %v9056 = vshrl.u32 %v8889, 16
        %v9058 = vrot.slane %v9056, 7
        %v9059 = vshll.u32 %v8889, 16
        %v9061 = vor.u32 %v9058, %v9059
        %v9062 = vsel %vm645, %v9054, %v9061
        %v9063 = vrot.slane %v9058, 4
        %v9065 = vshrl.u32 %v8890, 16
        %v9067 = vrot.slane %v9065, 7
        %v9068 = vshll.u32 %v8890, 16
        %v9070 = vor.u32 %v9067, %v9068
        %v9071 = vsel %vm645, %v9063, %v9070
        %v9073 = vshrl.u32 %v8891, 16
        %v9075 = vrot.slane %v9073, 7
        %v9076 = vrot.slane %v9075, 4
        %v9078 = vshrl.u32 %v8892, 16
        %v9080 = vrot.slane %v9078, 7
        %v9081 = vshll.u32 %v8892, 16
        %v9083 = vor.u32 %v9080, %v9081
        %v9084 = vsel %vm645, %v9076, %v9083
        %v9085 = vrot.slane %v9080, 4
        %v9087 = vshrl.u32 %v8893, 16
        %v9089 = vrot.slane %v9087, 7
        %v9090 = vshll.u32 %v8893, 16
        %v9092 = vor.u32 %v9089, %v9090
        %v9093 = vsel %vm645, %v9085, %v9092
        %v9095 = vshrl.u32 %v8894, 16
        %v9097 = vrot.slane %v9095, 7
        %v9098 = vrot.slane %v9097, 4
        %v9100 = vshrl.u32 %v8895, 16
        %v9102 = vrot.slane %v9100, 7
        %v9103 = vshll.u32 %v8895, 16
        %v9105 = vor.u32 %v9102, %v9103
        %v9106 = vsel %vm645, %v9098, %v9105
        %v9107 = vrot.slane %v9102, 4
        %v9109 = vshrl.u32 %v8896, 16
        %v9111 = vrot.slane %v9109, 7
        %v9112 = vshll.u32 %v8896, 16
        %v9114 = vor.u32 %v9111, %v9112
        %v9115 = vsel %vm645, %v9107, %v9114
        %v9117 = vshrl.u32 %v8897, 16
        %v9119 = vrot.slane %v9117, 7
        %v9120 = vrot.slane %v9119, 4
        %v9122 = vshrl.u32 %v8898, 16
        %v9124 = vrot.slane %v9122, 7
        %v9125 = vshll.u32 %v8898, 16
        %v9127 = vor.u32 %v9124, %v9125
        %v9128 = vsel %vm645, %v9120, %v9127
        %v9129 = vrot.slane %v9124, 4
        %v9131 = vshrl.u32 %v8899, 16
        %v9133 = vrot.slane %v9131, 7
        %v9134 = vshll.u32 %v8899, 16
        %v9136 = vor.u32 %v9133, %v9134
        %v9137 = vsel %vm645, %v9129, %v9136
        %v9139 = vshrl.u32 %v8900, 16
        %v9141 = vrot.slane %v9139, 7
        %v9142 = vrot.slane %v9141, 4
        %v9144 = vshrl.u32 %v8901, 16
        %v9146 = vrot.slane %v9144, 7
        %v9147 = vshll.u32 %v8901, 16
        %v9149 = vor.u32 %v9146, %v9147
        %v9150 = vsel %vm645, %v9142, %v9149
        %v9151 = vrot.slane %v9146, 4
        %v9153 = vshrl.u32 %v8902, 16
        %v9155 = vrot.slane %v9153, 7
        %v9156 = vshll.u32 %v8902, 16
        %v9158 = vor.u32 %v9155, %v9156
        %v9159 = vsel %vm645, %v9151, %v9158
        %v9161 = vshrl.u32 %v8903, 16
        %v9163 = vrot.slane %v9161, 7
        %v9164 = vrot.slane %v9163, 4
        %v9166 = vshrl.u32 %v8904, 16
        %v9168 = vrot.slane %v9166, 7
        %v9169 = vshll.u32 %v8904, 16
        %v9171 = vor.u32 %v9168, %v9169
        %v9172 = vsel %vm645, %v9164, %v9171
        %v9173 = vrot.slane %v9168, 4
        %v9175 = vshrl.u32 %v8905, 16
        %v9177 = vrot.slane %v9175, 7
        %v9178 = vshll.u32 %v8905, 16
        %v9180 = vor.u32 %v9177, %v9178
        %v9181 = vsel %vm645, %v9173, %v9180
        %v9183 = vshrl.u32 %v8906, 16
        %v9185 = vrot.slane %v9183, 7
        %v9186 = vrot.slane %v9185, 4
        %v9188 = vshrl.u32 %v8907, 16
        %v9190 = vrot.slane %v9188, 7
        %v9191 = vshll.u32 %v8907, 16
        %v9193 = vor.u32 %v9190, %v9191
        %v9194 = vsel %vm645, %v9186, %v9193
        %v9195 = vrot.slane %v9190, 4
        %v9197 = vshrl.u32 %v8908, 16
        %v9199 = vrot.slane %v9197, 7
        %v9200 = vshll.u32 %v8908, 16
        %v9202 = vor.u32 %v9199, %v9200
        %v9203 = vsel %vm645, %v9195, %v9202
        %v9205 = vshrl.u32 %v8909, 16
        %v9207 = vrot.slane %v9205, 7
        %v9208 = vrot.slane %v9207, 4
        %v9210 = vshrl.u32 %v8910, 16
        %v9212 = vrot.slane %v9210, 7
        %v9213 = vshll.u32 %v8910, 16
        %v9215 = vor.u32 %v9212, %v9213
        %v9216 = vsel %vm645, %v9208, %v9215
        %v9217 = vrot.slane %v9212, 4
        %v9219 = vshrl.u32 %v8911, 16
        %v9221 = vrot.slane %v9219, 7
        %v9222 = vshll.u32 %v8911, 16
        %v9224 = vor.u32 %v9221, %v9222
        %v9225 = vsel %vm645, %v9217, %v9224
        %v9227 = vshrl.u32 %v8912, 16
        %v9229 = vrot.slane %v9227, 7
        %v9230 = vrot.slane %v9229, 4
        %v9232 = vshrl.u32 %v8913, 16
        %v9234 = vrot.slane %v9232, 7
        %v9235 = vshll.u32 %v8913, 16
        %v9237 = vor.u32 %v9234, %v9235
        %v9238 = vsel %vm645, %v9230, %v9237
        %v9239 = vrot.slane %v9234, 4
        %v9241 = vshrl.u32 %v8914, 16
        %v9243 = vrot.slane %v9241, 7
        %v9244 = vshll.u32 %v8914, 16
        %v9246 = vor.u32 %v9243, %v9244
        %v9247 = vsel %vm645, %v9239, %v9246
        %v9249 = vshrl.u32 %v8915, 16
        %v9251 = vrot.slane %v9249, 7
        %v9252 = vrot.slane %v9251, 4
        %v9254 = vshrl.u32 %v8916, 16
        %v9256 = vrot.slane %v9254, 7
        %v9257 = vshll.u32 %v8916, 16
        %v9259 = vor.u32 %v9256, %v9257
        %v9260 = vsel %vm645, %v9252, %v9259
        %v9261 = vrot.slane %v9256, 4
        %v9263 = vshrl.u32 %v8917, 16
        %v9265 = vrot.slane %v9263, 7
        %v9266 = vshll.u32 %v8917, 16
        %v9268 = vor.u32 %v9265, %v9266
        %v9269 = vsel %vm645, %v9261, %v9268
        %v9270 = vunpack.c.l.b16 %v8930
        %v9271 = vunpack.c.l.b16 %v8939
        %v9272 = vunpack.c.l.b16 %v8952
        %v9273 = vunpack.c.l.b16 %v8961
        %v9274 = vunpack.c.l.b16 %v8974
        %v9275 = vunpack.c.l.b16 %v8983
        %v9276 = vunpack.c.l.b16 %v8996
        %v9277 = vunpack.c.l.b16 %v9005
        %v9278 = vunpack.c.l.b16 %v9018
        %v9279 = vunpack.c.l.b16 %v9027
        %v9280 = vunpack.c.l.b16 %v9040
        %v9281 = vunpack.c.l.b16 %v9049
        %v9282 = vunpack.c.l.b16 %v9062
        %v9283 = vunpack.c.l.b16 %v9071
        %v9284 = vunpack.c.l.b16 %v9084
        %v9285 = vunpack.c.l.b16 %v9093
        %v9286 = vunpack.c.l.b16 %v9106
        %v9287 = vunpack.c.l.b16 %v9115
        %v9288 = vunpack.c.l.b16 %v9128
        %v9289 = vunpack.c.l.b16 %v9137
        %v9290 = vunpack.c.l.b16 %v9150
        %v9291 = vunpack.c.l.b16 %v9159
        %v9292 = vunpack.c.l.b16 %v9172
        %v9293 = vunpack.c.l.b16 %v9181
        %v9294 = vunpack.c.l.b16 %v9194
        %v9295 = vunpack.c.l.b16 %v9203
        %v9296 = vunpack.c.l.b16 %v9216
        %v9297 = vunpack.c.l.b16 %v9225
        %v9298 = vunpack.c.l.b16 %v9238
        %v9299 = vunpack.c.l.b16 %v9247
        %v9300 = vunpack.c.l.b16 %v9260
        %v9301 = vunpack.c.l.b16 %v9269
        %v9302 = vpack.c.b16 %v9271, %v9270
        %v9303 = vpack.c.b16 %v9273, %v9272
        %v9304 = vpack.c.b16 %v9275, %v9274
        %v9305 = vpack.c.b16 %v9277, %v9276
        %v9306 = vpack.c.b16 %v9279, %v9278
        %v9307 = vpack.c.b16 %v9281, %v9280
        %v9308 = vpack.c.b16 %v9283, %v9282
        %v9309 = vpack.c.b16 %v9285, %v9284
        %v9310 = vpack.c.b16 %v9287, %v9286
        %v9311 = vpack.c.b16 %v9289, %v9288
        %v9312 = vpack.c.b16 %v9291, %v9290
        %v9313 = vpack.c.b16 %v9293, %v9292
        %v9314 = vpack.c.b16 %v9295, %v9294
        %v9315 = vpack.c.b16 %v9297, %v9296
        %v9316 = vpack.c.b16 %v9299, %v9298
        %v9317 = vpack.c.b16 %v9301, %v9300
        %9334 = vst.msk [vmem:[#allocation4] sm:$0xff] %vm1062, %v9302
        %9335 = vst.msk [vmem:[#allocation4 + $0x8] sm:$0xff] %vm1062, %v9303
        %9336 = vst.msk [vmem:[#allocation4 + $0x10] sm:$0xff] %vm1062, %v9304
        %9337 = vst.msk [vmem:[#allocation4 + $0x18] sm:$0xff] %vm1062, %v9305
        %9338 = vst.msk [vmem:[#allocation4 + $0x20] sm:$0xff] %vm1062, %v9306
        %9339 = vst.msk [vmem:[#allocation4 + $0x28] sm:$0xff] %vm1062, %v9307
        %9340 = vst.msk [vmem:[#allocation4 + $0x30] sm:$0xff] %vm1062, %v9308
        %9341 = vst.msk [vmem:[#allocation4 + $0x38] sm:$0xff] %vm1062, %v9309
        %9342 = vst.msk [vmem:[#allocation4 + $0x40] sm:$0xff] %vm1062, %v9310
        %9343 = vst.msk [vmem:[#allocation4 + $0x48] sm:$0xff] %vm1062, %v9311
        %9344 = vst.msk [vmem:[#allocation4 + $0x50] sm:$0xff] %vm1062, %v9312
        %9345 = vst.msk [vmem:[#allocation4 + $0x58] sm:$0xff] %vm1062, %v9313
        %9346 = vst.msk [vmem:[#allocation4 + $0x60] sm:$0xff] %vm1062, %v9314
        %9347 = vst.msk [vmem:[#allocation4 + $0x68] sm:$0xff] %vm1062, %v9315
        %9348 = vst.msk [vmem:[#allocation4 + $0x70] sm:$0xff] %vm1062, %v9316
        %9349 = vst.msk [vmem:[#allocation4 + $0x78] sm:$0xff] %vm1062, %v9317
        %v9350 = vld [vmem:[#allocation2 + $0x8] sm:$0xf]
        %v9351 = vld [vmem:[#allocation2 + $0xc] sm:$0xf]
        %v9352 = vld [vmem:[#allocation2 + $0x1c] sm:$0xf]
        %v9353 = vld [vmem:[#allocation2 + $0x20] sm:$0xf]
        %v9354 = vld [vmem:[#allocation2 + $0x30] sm:$0xf]
        %v9355 = vld [vmem:[#allocation2 + $0x34] sm:$0xf]
        %v9356 = vld [vmem:[#allocation2 + $0x44] sm:$0xf]
        %v9357 = vld [vmem:[#allocation2 + $0x48] sm:$0xf]
        %v9358 = vld [vmem:[#allocation2 + $0x58] sm:$0xf]
        %v9359 = vld [vmem:[#allocation2 + $0x5c] sm:$0xf]
        %v9360 = vld [vmem:[#allocation2 + $0x6c] sm:$0xf]
        %v9361 = vld [vmem:[#allocation2 + $0x70] sm:$0xf]
        %v9362 = vld [vmem:[#allocation2 + $0x80] sm:$0xf]
        %v9363 = vld [vmem:[#allocation2 + $0x84] sm:$0xf]
        %v9364 = vld [vmem:[#allocation2 + $0x94] sm:$0xf]
        %v9365 = vld [vmem:[#allocation2 + $0x98] sm:$0xf]
        %v9366 = vld [vmem:[#allocation2 + $0xa8] sm:$0xf]
        %v9367 = vld [vmem:[#allocation2 + $0xac] sm:$0xf]
        %v9368 = vld [vmem:[#allocation2 + $0xbc] sm:$0xf]
        %v9369 = vld [vmem:[#allocation2 + $0xc0] sm:$0xf]
        %v9370 = vld [vmem:[#allocation2 + $0xd0] sm:$0xf]
        %v9371 = vld [vmem:[#allocation2 + $0xd4] sm:$0xf]
        %v9372 = vld [vmem:[#allocation2 + $0xe4] sm:$0xf]
        %v9373 = vld [vmem:[#allocation2 + $0xe8] sm:$0xf]
        %v9374 = vld [vmem:[#allocation2 + $0xf8] sm:$0xf]
        %v9375 = vld [vmem:[#allocation2 + $0xfc] sm:$0xf]
        %v9376 = vld [vmem:[#allocation2 + $0x10c] sm:$0xf]
        %v9377 = vld [vmem:[#allocation2 + $0x110] sm:$0xf]
        %v9378 = vld [vmem:[#allocation2 + $0x120] sm:$0xf]
        %v9379 = vld [vmem:[#allocation2 + $0x124] sm:$0xf]
        %v9380 = vld [vmem:[#allocation2 + $0x134] sm:$0xf]
        %v9381 = vld [vmem:[#allocation2 + $0x138] sm:$0xf]
        %v9414 = vunpack.c.l.b16 %v9350
        %v9415 = vunpack.c.l.b16 %v9351
        %v9416 = vunpack.c.l.b16 %v9352
        %v9417 = vunpack.c.l.b16 %v9353
        %v9418 = vunpack.c.l.b16 %v9354
        %v9419 = vunpack.c.l.b16 %v9355
        %v9420 = vunpack.c.l.b16 %v9356
        %v9421 = vunpack.c.l.b16 %v9357
        %v9422 = vunpack.c.l.b16 %v9358
        %v9423 = vunpack.c.l.b16 %v9359
        %v9424 = vunpack.c.l.b16 %v9360
        %v9425 = vunpack.c.l.b16 %v9361
        %v9426 = vunpack.c.l.b16 %v9362
        %v9427 = vunpack.c.l.b16 %v9363
        %v9428 = vunpack.c.l.b16 %v9364
        %v9429 = vunpack.c.l.b16 %v9365
        %v9430 = vunpack.c.l.b16 %v9366
        %v9431 = vunpack.c.l.b16 %v9367
        %v9432 = vunpack.c.l.b16 %v9368
        %v9433 = vunpack.c.l.b16 %v9369
        %v9434 = vunpack.c.l.b16 %v9370
        %v9435 = vunpack.c.l.b16 %v9371
        %v9436 = vunpack.c.l.b16 %v9372
        %v9437 = vunpack.c.l.b16 %v9373
        %v9438 = vunpack.c.l.b16 %v9374
        %v9439 = vunpack.c.l.b16 %v9375
        %v9440 = vunpack.c.l.b16 %v9376
        %v9441 = vunpack.c.l.b16 %v9377
        %v9442 = vunpack.c.l.b16 %v9378
        %v9443 = vunpack.c.l.b16 %v9379
        %v9444 = vunpack.c.l.b16 %v9380
        %v9445 = vunpack.c.l.b16 %v9381
        %v9446 = vpack.c.b16 %v9415, %v9414
        %v9447 = vpack.c.b16 %v9417, %v9416
        %v9448 = vpack.c.b16 %v9419, %v9418
        %v9449 = vpack.c.b16 %v9421, %v9420
        %v9450 = vpack.c.b16 %v9423, %v9422
        %v9451 = vpack.c.b16 %v9425, %v9424
        %v9452 = vpack.c.b16 %v9427, %v9426
        %v9453 = vpack.c.b16 %v9429, %v9428
        %v9454 = vpack.c.b16 %v9431, %v9430
        %v9455 = vpack.c.b16 %v9433, %v9432
        %v9456 = vpack.c.b16 %v9435, %v9434
        %v9457 = vpack.c.b16 %v9437, %v9436
        %v9458 = vpack.c.b16 %v9439, %v9438
        %v9459 = vpack.c.b16 %v9441, %v9440
        %v9460 = vpack.c.b16 %v9443, %v9442
        %v9461 = vpack.c.b16 %v9445, %v9444
        %9462 = vrot.lane.b32.xlu0 %v9446, 8
        %v9463 = vpop.permute.xlu0 %9462
        %9464 = vrot.lane.b32.xlu0 %v9447, 8
        %v9465 = vpop.permute.xlu0 %9464
        %9466 = vrot.lane.b32.xlu0 %v9448, 8
        %v9467 = vpop.permute.xlu0 %9466
        %9468 = vrot.lane.b32.xlu0 %v9449, 8
        %v9469 = vpop.permute.xlu0 %9468
        %9470 = vrot.lane.b32.xlu0 %v9450, 8
        %v9471 = vpop.permute.xlu0 %9470
        %9472 = vrot.lane.b32.xlu0 %v9451, 8
        %v9473 = vpop.permute.xlu0 %9472
        %9474 = vrot.lane.b32.xlu0 %v9452, 8
        %v9475 = vpop.permute.xlu0 %9474
        %9476 = vrot.lane.b32.xlu0 %v9453, 8
        %v9477 = vpop.permute.xlu0 %9476
        %9478 = vrot.lane.b32.xlu0 %v9454, 8
        %v9479 = vpop.permute.xlu0 %9478
        %9480 = vrot.lane.b32.xlu0 %v9455, 8
        %v9481 = vpop.permute.xlu0 %9480
        %9482 = vrot.lane.b32.xlu0 %v9456, 8
        %v9483 = vpop.permute.xlu0 %9482
        %9484 = vrot.lane.b32.xlu0 %v9457, 8
        %v9485 = vpop.permute.xlu0 %9484
        %9486 = vrot.lane.b32.xlu0 %v9458, 8
        %v9487 = vpop.permute.xlu0 %9486
        %9488 = vrot.lane.b32.xlu0 %v9459, 8
        %v9489 = vpop.permute.xlu0 %9488
        %9490 = vrot.lane.b32.xlu0 %v9460, 8
        %v9491 = vpop.permute.xlu0 %9490
        %9492 = vrot.lane.b32.xlu0 %v9461, 8
        %v9493 = vpop.permute.xlu0 %9492
        %9510 = vst.msk [vmem:[#allocation4] sm:$0xff] %vm1239, %v9463
        %9511 = vst.msk [vmem:[#allocation4 + $0x8] sm:$0xff] %vm1239, %v9465
        %9512 = vst.msk [vmem:[#allocation4 + $0x10] sm:$0xff] %vm1239, %v9467
        %9513 = vst.msk [vmem:[#allocation4 + $0x18] sm:$0xff] %vm1239, %v9469
        %9514 = vst.msk [vmem:[#allocation4 + $0x20] sm:$0xff] %vm1239, %v9471
        %9515 = vst.msk [vmem:[#allocation4 + $0x28] sm:$0xff] %vm1239, %v9473
        %9516 = vst.msk [vmem:[#allocation4 + $0x30] sm:$0xff] %vm1239, %v9475
        %9517 = vst.msk [vmem:[#allocation4 + $0x38] sm:$0xff] %vm1239, %v9477
        %9518 = vst.msk [vmem:[#allocation4 + $0x40] sm:$0xff] %vm1239, %v9479
        %9519 = vst.msk [vmem:[#allocation4 + $0x48] sm:$0xff] %vm1239, %v9481
        %9520 = vst.msk [vmem:[#allocation4 + $0x50] sm:$0xff] %vm1239, %v9483
        %9521 = vst.msk [vmem:[#allocation4 + $0x58] sm:$0xff] %vm1239, %v9485
        %9522 = vst.msk [vmem:[#allocation4 + $0x60] sm:$0xff] %vm1239, %v9487
        %9523 = vst.msk [vmem:[#allocation4 + $0x68] sm:$0xff] %vm1239, %v9489
        %9524 = vst.msk [vmem:[#allocation4 + $0x70] sm:$0xff] %vm1239, %v9491
        %9525 = vst.msk [vmem:[#allocation4 + $0x78] sm:$0xff] %vm1239, %v9493
        %v9526 = vld [vmem:[#allocation2 + $0x8] sm:$0xf]
        %v9527 = vld [vmem:[#allocation2 + $0xc] sm:$0xf]
        %v9528 = vld [vmem:[#allocation2 + $0x10] sm:$0x1]
        %v9529 = vld [vmem:[#allocation2 + $0x1c] sm:$0xf]
        %v9530 = vld [vmem:[#allocation2 + $0x20] sm:$0xf]
        %v9531 = vld [vmem:[#allocation2 + $0x24] sm:$0x1]
        %v9532 = vld [vmem:[#allocation2 + $0x30] sm:$0xf]
        %v9533 = vld [vmem:[#allocation2 + $0x34] sm:$0xf]
        %v9534 = vld [vmem:[#allocation2 + $0x38] sm:$0x1]
        %v9535 = vld [vmem:[#allocation2 + $0x44] sm:$0xf]
        %v9536 = vld [vmem:[#allocation2 + $0x48] sm:$0xf]
        %v9537 = vld [vmem:[#allocation2 + $0x4c] sm:$0x1]
        %v9538 = vld [vmem:[#allocation2 + $0x58] sm:$0xf]
        %v9539 = vld [vmem:[#allocation2 + $0x5c] sm:$0xf]
        %v9540 = vld [vmem:[#allocation2 + $0x60] sm:$0x1]
        %v9541 = vld [vmem:[#allocation2 + $0x6c] sm:$0xf]
        %v9542 = vld [vmem:[#allocation2 + $0x70] sm:$0xf]
        %v9543 = vld [vmem:[#allocation2 + $0x74] sm:$0x1]
        %v9544 = vld [vmem:[#allocation2 + $0x80] sm:$0xf]
        %v9545 = vld [vmem:[#allocation2 + $0x84] sm:$0xf]
        %v9546 = vld [vmem:[#allocation2 + $0x88] sm:$0x1]
        %v9547 = vld [vmem:[#allocation2 + $0x94] sm:$0xf]
        %v9548 = vld [vmem:[#allocation2 + $0x98] sm:$0xf]
        %v9549 = vld [vmem:[#allocation2 + $0x9c] sm:$0x1]
        %v9550 = vld [vmem:[#allocation2 + $0xa8] sm:$0xf]
        %v9551 = vld [vmem:[#allocation2 + $0xac] sm:$0xf]
        %v9552 = vld [vmem:[#allocation2 + $0xb0] sm:$0x1]
        %v9553 = vld [vmem:[#allocation2 + $0xbc] sm:$0xf]
        %v9554 = vld [vmem:[#allocation2 + $0xc0] sm:$0xf]
        %v9555 = vld [vmem:[#allocation2 + $0xc4] sm:$0x1]
        %v9556 = vld [vmem:[#allocation2 + $0xd0] sm:$0xf]
        %v9557 = vld [vmem:[#allocation2 + $0xd4] sm:$0xf]
        %v9558 = vld [vmem:[#allocation2 + $0xd8] sm:$0x1]
        %v9559 = vld [vmem:[#allocation2 + $0xe4] sm:$0xf]
        %v9560 = vld [vmem:[#allocation2 + $0xe8] sm:$0xf]
        %v9561 = vld [vmem:[#allocation2 + $0xec] sm:$0x1]
        %v9562 = vld [vmem:[#allocation2 + $0xf8] sm:$0xf]
        %v9563 = vld [vmem:[#allocation2 + $0xfc] sm:$0xf]
        %v9564 = vld [vmem:[#allocation2 + $0x100] sm:$0x1]
        %v9565 = vld [vmem:[#allocation2 + $0x10c] sm:$0xf]
        %v9566 = vld [vmem:[#allocation2 + $0x110] sm:$0xf]
        %v9567 = vld [vmem:[#allocation2 + $0x114] sm:$0x1]
        %v9568 = vld [vmem:[#allocation2 + $0x120] sm:$0xf]
        %v9569 = vld [vmem:[#allocation2 + $0x124] sm:$0xf]
        %v9570 = vld [vmem:[#allocation2 + $0x128] sm:$0x1]
        %v9571 = vld [vmem:[#allocation2 + $0x134] sm:$0xf]
        %v9572 = vld [vmem:[#allocation2 + $0x138] sm:$0xf]
        %v9573 = vld [vmem:[#allocation2 + $0x13c] sm:$0x1]
        %v9575 = vshrl.u32 %v9526, 16
        %v9577 = vrot.slane %v9575, 4
        %v9578 = vshll.u32 %v9526, 16
        %v9580 = vrot.slane %v9578, 5
        %v9581 = vor.u32 %v9577, %v9580
        %v9582 = vrot.slane %v9581, 4
        %v9584 = vshll.u32 %v9527, 16
        %v9586 = vrot.slane %v9584, 5
        %v9587 = vsel %vm1306, %v9582, %v9586
        %v9588 = vshrl.u32 %v9527, 16
        %v9590 = vrot.slane %v9588, 4
        %v9591 = vor.u32 %v9590, %v9586
        %v9592 = vrot.slane %v9591, 4
        %v9594 = vshll.u32 %v9528, 16
        %v9596 = vrot.slane %v9594, 5
        %v9597 = vsel %vm1306, %v9592, %v9596
        %v9599 = vshrl.u32 %v9529, 16
        %v9601 = vrot.slane %v9599, 4
        %v9602 = vshll.u32 %v9529, 16
        %v9604 = vrot.slane %v9602, 5
        %v9605 = vor.u32 %v9601, %v9604
        %v9606 = vrot.slane %v9605, 4
        %v9608 = vshll.u32 %v9530, 16
        %v9610 = vrot.slane %v9608, 5
        %v9611 = vsel %vm1306, %v9606, %v9610
        %v9612 = vshrl.u32 %v9530, 16
        %v9614 = vrot.slane %v9612, 4
        %v9615 = vor.u32 %v9614, %v9610
        %v9616 = vrot.slane %v9615, 4
        %v9618 = vshll.u32 %v9531, 16
        %v9620 = vrot.slane %v9618, 5
        %v9621 = vsel %vm1306, %v9616, %v9620
        %v9623 = vshrl.u32 %v9532, 16
        %v9625 = vrot.slane %v9623, 4
        %v9626 = vshll.u32 %v9532, 16
        %v9628 = vrot.slane %v9626, 5
        %v9629 = vor.u32 %v9625, %v9628
        %v9630 = vrot.slane %v9629, 4
        %v9632 = vshll.u32 %v9533, 16
        %v9634 = vrot.slane %v9632, 5
        %v9635 = vsel %vm1306, %v9630, %v9634
        %v9636 = vshrl.u32 %v9533, 16
        %v9638 = vrot.slane %v9636, 4
        %v9639 = vor.u32 %v9638, %v9634
        %v9640 = vrot.slane %v9639, 4
        %v9642 = vshll.u32 %v9534, 16
        %v9644 = vrot.slane %v9642, 5
        %v9645 = vsel %vm1306, %v9640, %v9644
        %v9647 = vshrl.u32 %v9535, 16
        %v9649 = vrot.slane %v9647, 4
        %v9650 = vshll.u32 %v9535, 16
        %v9652 = vrot.slane %v9650, 5
        %v9653 = vor.u32 %v9649, %v9652
        %v9654 = vrot.slane %v9653, 4
        %v9656 = vshll.u32 %v9536, 16
        %v9658 = vrot.slane %v9656, 5
        %v9659 = vsel %vm1306, %v9654, %v9658
        %v9660 = vshrl.u32 %v9536, 16
        %v9662 = vrot.slane %v9660, 4
        %v9663 = vor.u32 %v9662, %v9658
        %v9664 = vrot.slane %v9663, 4
        %v9666 = vshll.u32 %v9537, 16
        %v9668 = vrot.slane %v9666, 5
        %v9669 = vsel %vm1306, %v9664, %v9668
        %v9671 = vshrl.u32 %v9538, 16
        %v9673 = vrot.slane %v9671, 4
        %v9674 = vshll.u32 %v9538, 16
        %v9676 = vrot.slane %v9674, 5
        %v9677 = vor.u32 %v9673, %v9676
        %v9678 = vrot.slane %v9677, 4
        %v9680 = vshll.u32 %v9539, 16
        %v9682 = vrot.slane %v9680, 5
        %v9683 = vsel %vm1306, %v9678, %v9682
        %v9684 = vshrl.u32 %v9539, 16
        %v9686 = vrot.slane %v9684, 4
        %v9687 = vor.u32 %v9686, %v9682
        %v9688 = vrot.slane %v9687, 4
        %v9690 = vshll.u32 %v9540, 16
        %v9692 = vrot.slane %v9690, 5
        %v9693 = vsel %vm1306, %v9688, %v9692
        %v9695 = vshrl.u32 %v9541, 16
        %v9697 = vrot.slane %v9695, 4
        %v9698 = vshll.u32 %v9541, 16
        %v9700 = vrot.slane %v9698, 5
        %v9701 = vor.u32 %v9697, %v9700
        %v9702 = vrot.slane %v9701, 4
        %v9704 = vshll.u32 %v9542, 16
        %v9706 = vrot.slane %v9704, 5
        %v9707 = vsel %vm1306, %v9702, %v9706
        %v9708 = vshrl.u32 %v9542, 16
        %v9710 = vrot.slane %v9708, 4
        %v9711 = vor.u32 %v9710, %v9706
        %v9712 = vrot.slane %v9711, 4
        %v9714 = vshll.u32 %v9543, 16
        %v9716 = vrot.slane %v9714, 5
        %v9717 = vsel %vm1306, %v9712, %v9716
        %v9719 = vshrl.u32 %v9544, 16
        %v9721 = vrot.slane %v9719, 4
        %v9722 = vshll.u32 %v9544, 16
        %v9724 = vrot.slane %v9722, 5
        %v9725 = vor.u32 %v9721, %v9724
        %v9726 = vrot.slane %v9725, 4
        %v9728 = vshll.u32 %v9545, 16
        %v9730 = vrot.slane %v9728, 5
        %v9731 = vsel %vm1306, %v9726, %v9730
        %v9732 = vshrl.u32 %v9545, 16
        %v9734 = vrot.slane %v9732, 4
        %v9735 = vor.u32 %v9734, %v9730
        %v9736 = vrot.slane %v9735, 4
        %v9738 = vshll.u32 %v9546, 16
        %v9740 = vrot.slane %v9738, 5
        %v9741 = vsel %vm1306, %v9736, %v9740
        %v9743 = vshrl.u32 %v9547, 16
        %v9745 = vrot.slane %v9743, 4
        %v9746 = vshll.u32 %v9547, 16
        %v9748 = vrot.slane %v9746, 5
        %v9749 = vor.u32 %v9745, %v9748
        %v9750 = vrot.slane %v9749, 4
        %v9752 = vshll.u32 %v9548, 16
        %v9754 = vrot.slane %v9752, 5
        %v9755 = vsel %vm1306, %v9750, %v9754
        %v9756 = vshrl.u32 %v9548, 16
        %v9758 = vrot.slane %v9756, 4
        %v9759 = vor.u32 %v9758, %v9754
        %v9760 = vrot.slane %v9759, 4
        %v9762 = vshll.u32 %v9549, 16
        %v9764 = vrot.slane %v9762, 5
        %v9765 = vsel %vm1306, %v9760, %v9764
        %v9767 = vshrl.u32 %v9550, 16
        %v9769 = vrot.slane %v9767, 4
        %v9770 = vshll.u32 %v9550, 16
        %v9772 = vrot.slane %v9770, 5
        %v9773 = vor.u32 %v9769, %v9772
        %v9774 = vrot.slane %v9773, 4
        %v9776 = vshll.u32 %v9551, 16
        %v9778 = vrot.slane %v9776, 5
        %v9779 = vsel %vm1306, %v9774, %v9778
        %v9780 = vshrl.u32 %v9551, 16
        %v9782 = vrot.slane %v9780, 4
        %v9783 = vor.u32 %v9782, %v9778
        %v9784 = vrot.slane %v9783, 4
        %v9786 = vshll.u32 %v9552, 16
        %v9788 = vrot.slane %v9786, 5
        %v9789 = vsel %vm1306, %v9784, %v9788
        %v9791 = vshrl.u32 %v9553, 16
        %v9793 = vrot.slane %v9791, 4
        %v9794 = vshll.u32 %v9553, 16
        %v9796 = vrot.slane %v9794, 5
        %v9797 = vor.u32 %v9793, %v9796
        %v9798 = vrot.slane %v9797, 4
        %v9800 = vshll.u32 %v9554, 16
        %v9802 = vrot.slane %v9800, 5
        %v9803 = vsel %vm1306, %v9798, %v9802
        %v9804 = vshrl.u32 %v9554, 16
        %v9806 = vrot.slane %v9804, 4
        %v9807 = vor.u32 %v9806, %v9802
        %v9808 = vrot.slane %v9807, 4
        %v9810 = vshll.u32 %v9555, 16
        %v9812 = vrot.slane %v9810, 5
        %v9813 = vsel %vm1306, %v9808, %v9812
        %v9815 = vshrl.u32 %v9556, 16
        %v9817 = vrot.slane %v9815, 4
        %v9818 = vshll.u32 %v9556, 16
        %v9820 = vrot.slane %v9818, 5
        %v9821 = vor.u32 %v9817, %v9820
        %v9822 = vrot.slane %v9821, 4
        %v9824 = vshll.u32 %v9557, 16
        %v9826 = vrot.slane %v9824, 5
        %v9827 = vsel %vm1306, %v9822, %v9826
        %v9828 = vshrl.u32 %v9557, 16
        %v9830 = vrot.slane %v9828, 4
        %v9831 = vor.u32 %v9830, %v9826
        %v9832 = vrot.slane %v9831, 4
        %v9834 = vshll.u32 %v9558, 16
        %v9836 = vrot.slane %v9834, 5
        %v9837 = vsel %vm1306, %v9832, %v9836
        %v9839 = vshrl.u32 %v9559, 16
        %v9841 = vrot.slane %v9839, 4
        %v9842 = vshll.u32 %v9559, 16
        %v9844 = vrot.slane %v9842, 5
        %v9845 = vor.u32 %v9841, %v9844
        %v9846 = vrot.slane %v9845, 4
        %v9848 = vshll.u32 %v9560, 16
        %v9850 = vrot.slane %v9848, 5
        %v9851 = vsel %vm1306, %v9846, %v9850
        %v9852 = vshrl.u32 %v9560, 16
        %v9854 = vrot.slane %v9852, 4
        %v9855 = vor.u32 %v9854, %v9850
        %v9856 = vrot.slane %v9855, 4
        %v9858 = vshll.u32 %v9561, 16
        %v9860 = vrot.slane %v9858, 5
        %v9861 = vsel %vm1306, %v9856, %v9860
        %v9863 = vshrl.u32 %v9562, 16
        %v9865 = vrot.slane %v9863, 4
        %v9866 = vshll.u32 %v9562, 16
        %v9868 = vrot.slane %v9866, 5
        %v9869 = vor.u32 %v9865, %v9868
        %v9870 = vrot.slane %v9869, 4
        %v9872 = vshll.u32 %v9563, 16
        %v9874 = vrot.slane %v9872, 5
        %v9875 = vsel %vm1306, %v9870, %v9874
        %v9876 = vshrl.u32 %v9563, 16
        %v9878 = vrot.slane %v9876, 4
        %v9879 = vor.u32 %v9878, %v9874
        %v9880 = vrot.slane %v9879, 4
        %v9882 = vshll.u32 %v9564, 16
        %v9884 = vrot.slane %v9882, 5
        %v9885 = vsel %vm1306, %v9880, %v9884
        %v9887 = vshrl.u32 %v9565, 16
        %v9889 = vrot.slane %v9887, 4
        %v9890 = vshll.u32 %v9565, 16
        %v9892 = vrot.slane %v9890, 5
        %v9893 = vor.u32 %v9889, %v9892
        %v9894 = vrot.slane %v9893, 4
        %v9896 = vshll.u32 %v9566, 16
        %v9898 = vrot.slane %v9896, 5
        %v9899 = vsel %vm1306, %v9894, %v9898
        %v9900 = vshrl.u32 %v9566, 16
        %v9902 = vrot.slane %v9900, 4
        %v9903 = vor.u32 %v9902, %v9898
        %v9904 = vrot.slane %v9903, 4
        %v9906 = vshll.u32 %v9567, 16
        %v9908 = vrot.slane %v9906, 5
        %v9909 = vsel %vm1306, %v9904, %v9908
        %v9911 = vshrl.u32 %v9568, 16
        %v9913 = vrot.slane %v9911, 4
        %v9914 = vshll.u32 %v9568, 16
        %v9916 = vrot.slane %v9914, 5
        %v9917 = vor.u32 %v9913, %v9916
        %v9918 = vrot.slane %v9917, 4
        %v9920 = vshll.u32 %v9569, 16
        %v9922 = vrot.slane %v9920, 5
        %v9923 = vsel %vm1306, %v9918, %v9922
        %v9924 = vshrl.u32 %v9569, 16
        %v9926 = vrot.slane %v9924, 4
        %v9927 = vor.u32 %v9926, %v9922
        %v9928 = vrot.slane %v9927, 4
        %v9930 = vshll.u32 %v9570, 16
        %v9932 = vrot.slane %v9930, 5
        %v9933 = vsel %vm1306, %v9928, %v9932
        %v9935 = vshrl.u32 %v9571, 16
        %v9937 = vrot.slane %v9935, 4
        %v9938 = vshll.u32 %v9571, 16
        %v9940 = vrot.slane %v9938, 5
        %v9941 = vor.u32 %v9937, %v9940
        %v9942 = vrot.slane %v9941, 4
        %v9944 = vshll.u32 %v9572, 16
        %v9946 = vrot.slane %v9944, 5
        %v9947 = vsel %vm1306, %v9942, %v9946
        %v9948 = vshrl.u32 %v9572, 16
        %v9950 = vrot.slane %v9948, 4
        %v9951 = vor.u32 %v9950, %v9946
        %v9952 = vrot.slane %v9951, 4
        %v9954 = vshll.u32 %v9573, 16
        %v9956 = vrot.slane %v9954, 5
        %v9957 = vsel %vm1306, %v9952, %v9956
        %v9958 = vunpack.c.l.b16 %v9587
        %v9959 = vunpack.c.l.b16 %v9597
        %v9960 = vunpack.c.l.b16 %v9611
        %v9961 = vunpack.c.l.b16 %v9621
        %v9962 = vunpack.c.l.b16 %v9635
        %v9963 = vunpack.c.l.b16 %v9645
        %v9964 = vunpack.c.l.b16 %v9659
        %v9965 = vunpack.c.l.b16 %v9669
        %v9966 = vunpack.c.l.b16 %v9683
        %v9967 = vunpack.c.l.b16 %v9693
        %v9968 = vunpack.c.l.b16 %v9707
        %v9969 = vunpack.c.l.b16 %v9717
        %v9970 = vunpack.c.l.b16 %v9731
        %v9971 = vunpack.c.l.b16 %v9741
        %v9972 = vunpack.c.l.b16 %v9755
        %v9973 = vunpack.c.l.b16 %v9765
        %v9974 = vunpack.c.l.b16 %v9779
        %v9975 = vunpack.c.l.b16 %v9789
        %v9976 = vunpack.c.l.b16 %v9803
        %v9977 = vunpack.c.l.b16 %v9813
        %v9978 = vunpack.c.l.b16 %v9827
        %v9979 = vunpack.c.l.b16 %v9837
        %v9980 = vunpack.c.l.b16 %v9851
        %v9981 = vunpack.c.l.b16 %v9861
        %v9982 = vunpack.c.l.b16 %v9875
        %v9983 = vunpack.c.l.b16 %v9885
        %v9984 = vunpack.c.l.b16 %v9899
        %v9985 = vunpack.c.l.b16 %v9909
        %v9986 = vunpack.c.l.b16 %v9923
        %v9987 = vunpack.c.l.b16 %v9933
        %v9988 = vunpack.c.l.b16 %v9947
        %v9989 = vunpack.c.l.b16 %v9957
        %v9990 = vpack.c.b16 %v9959, %v9958
        %v9991 = vpack.c.b16 %v9961, %v9960
        %v9992 = vpack.c.b16 %v9963, %v9962
        %v9993 = vpack.c.b16 %v9965, %v9964
        %v9994 = vpack.c.b16 %v9967, %v9966
        %v9995 = vpack.c.b16 %v9969, %v9968
        %v9996 = vpack.c.b16 %v9971, %v9970
        %v9997 = vpack.c.b16 %v9973, %v9972
        %v9998 = vpack.c.b16 %v9975, %v9974
        %v9999 = vpack.c.b16 %v9977, %v9976
        %v10000 = vpack.c.b16 %v9979, %v9978
        %v10001 = vpack.c.b16 %v9981, %v9980
        %v10002 = vpack.c.b16 %v9983, %v9982
        %v10003 = vpack.c.b16 %v9985, %v9984
        %v10004 = vpack.c.b16 %v9987, %v9986
        %v10005 = vpack.c.b16 %v9989, %v9988
        %10006 = vrot.lane.b32.xlu0 %v9990, 16
        %v10007 = vpop.permute.xlu0 %10006
        %10008 = vrot.lane.b32.xlu0 %v9991, 16
        %v10009 = vpop.permute.xlu0 %10008
        %10010 = vrot.lane.b32.xlu0 %v9992, 16
        %v10011 = vpop.permute.xlu0 %10010
        %10012 = vrot.lane.b32.xlu0 %v9993, 16
        %v10013 = vpop.permute.xlu0 %10012
        %10014 = vrot.lane.b32.xlu0 %v9994, 16
        %v10015 = vpop.permute.xlu0 %10014
        %10016 = vrot.lane.b32.xlu0 %v9995, 16
        %v10017 = vpop.permute.xlu0 %10016
        %10018 = vrot.lane.b32.xlu0 %v9996, 16
        %v10019 = vpop.permute.xlu0 %10018
        %10020 = vrot.lane.b32.xlu0 %v9997, 16
        %v10021 = vpop.permute.xlu0 %10020
        %10022 = vrot.lane.b32.xlu0 %v9998, 16
        %v10023 = vpop.permute.xlu0 %10022
        %10024 = vrot.lane.b32.xlu0 %v9999, 16
        %v10025 = vpop.permute.xlu0 %10024
        %10026 = vrot.lane.b32.xlu0 %v10000, 16
        %v10027 = vpop.permute.xlu0 %10026
        %10028 = vrot.lane.b32.xlu0 %v10001, 16
        %v10029 = vpop.permute.xlu0 %10028
        %10030 = vrot.lane.b32.xlu0 %v10002, 16
        %v10031 = vpop.permute.xlu0 %10030
        %10032 = vrot.lane.b32.xlu0 %v10003, 16
        %v10033 = vpop.permute.xlu0 %10032
        %10034 = vrot.lane.b32.xlu0 %v10004, 16
        %v10035 = vpop.permute.xlu0 %10034
        %10036 = vrot.lane.b32.xlu0 %v10005, 16
        %v10037 = vpop.permute.xlu0 %10036
        %10054 = vst.msk [vmem:[#allocation4] sm:$0xff] %vm1787, %v10007
        %10055 = vst.msk [vmem:[#allocation4 + $0x8] sm:$0xff] %vm1787, %v10009
        %10056 = vst.msk [vmem:[#allocation4 + $0x10] sm:$0xff] %vm1787, %v10011
        %10057 = vst.msk [vmem:[#allocation4 + $0x18] sm:$0xff] %vm1787, %v10013
        %10058 = vst.msk [vmem:[#allocation4 + $0x20] sm:$0xff] %vm1787, %v10015
        %10059 = vst.msk [vmem:[#allocation4 + $0x28] sm:$0xff] %vm1787, %v10017
        %10060 = vst.msk [vmem:[#allocation4 + $0x30] sm:$0xff] %vm1787, %v10019
        %10061 = vst.msk [vmem:[#allocation4 + $0x38] sm:$0xff] %vm1787, %v10021
        %10062 = vst.msk [vmem:[#allocation4 + $0x40] sm:$0xff] %vm1787, %v10023
        %10063 = vst.msk [vmem:[#allocation4 + $0x48] sm:$0xff] %vm1787, %v10025
        %10064 = vst.msk [vmem:[#allocation4 + $0x50] sm:$0xff] %vm1787, %v10027
        %10065 = vst.msk [vmem:[#allocation4 + $0x58] sm:$0xff] %vm1787, %v10029
        %10066 = vst.msk [vmem:[#allocation4 + $0x60] sm:$0xff] %vm1787, %v10031
        %10067 = vst.msk [vmem:[#allocation4 + $0x68] sm:$0xff] %vm1787, %v10033
        %10068 = vst.msk [vmem:[#allocation4 + $0x70] sm:$0xff] %vm1787, %v10035
        %10069 = vst.msk [vmem:[#allocation4 + $0x78] sm:$0xff] %vm1787, %v10037
        %v10070 = vld [vmem:[%s563 + $0x4] sm:$0x8]
        %v10071 = vld [vmem:[%s563 + $0x8] sm:$0xf]
        %v10072 = vld [vmem:[%s563 + $0xc] sm:$0xf]
        %v10073 = vld [vmem:[%s563 + $0x18] sm:$0x8]
        %v10074 = vld [vmem:[%s563 + $0x1c] sm:$0xf]
        %v10075 = vld [vmem:[%s563 + $0x20] sm:$0xf]
        %v10076 = vld [vmem:[%s563 + $0x2c] sm:$0x8]
        %v10077 = vld [vmem:[%s563 + $0x30] sm:$0xf]
        %v10078 = vld [vmem:[%s563 + $0x34] sm:$0xf]
        %v10079 = vld [vmem:[%s563 + $0x40] sm:$0x8]
        %v10080 = vld [vmem:[%s563 + $0x44] sm:$0xf]
        %v10081 = vld [vmem:[%s563 + $0x48] sm:$0xf]
        %v10082 = vld [vmem:[%s563 + $0x54] sm:$0x8]
        %v10083 = vld [vmem:[%s563 + $0x58] sm:$0xf]
        %v10084 = vld [vmem:[%s563 + $0x5c] sm:$0xf]
        %v10085 = vld [vmem:[%s563 + $0x68] sm:$0x8]
        %v10086 = vld [vmem:[%s563 + $0x6c] sm:$0xf]
        %v10087 = vld [vmem:[%s563 + $0x70] sm:$0xf]
        %v10088 = vld [vmem:[%s563 + $0x7c] sm:$0x8]
        %v10089 = vld [vmem:[%s563 + $0x80] sm:$0xf]
        %v10090 = vld [vmem:[%s563 + $0x84] sm:$0xf]
        %v10091 = vld [vmem:[%s563 + $0x90] sm:$0x8]
        %v10092 = vld [vmem:[%s563 + $0x94] sm:$0xf]
        %v10093 = vld [vmem:[%s563 + $0x98] sm:$0xf]
        %v10094 = vld [vmem:[%s563 + $0xa4] sm:$0x8]
        %v10095 = vld [vmem:[%s563 + $0xa8] sm:$0xf]
        %v10096 = vld [vmem:[%s563 + $0xac] sm:$0xf]
        %v10097 = vld [vmem:[%s563 + $0xb8] sm:$0x8]
        %v10098 = vld [vmem:[%s563 + $0xbc] sm:$0xf]
        %v10099 = vld [vmem:[%s563 + $0xc0] sm:$0xf]
        %v10100 = vld [vmem:[%s563 + $0xcc] sm:$0x8]
        %v10101 = vld [vmem:[%s563 + $0xd0] sm:$0xf]
        %v10102 = vld [vmem:[%s563 + $0xd4] sm:$0xf]
        %v10103 = vld [vmem:[%s563 + $0xe0] sm:$0x8]
        %v10104 = vld [vmem:[%s563 + $0xe4] sm:$0xf]
        %v10105 = vld [vmem:[%s563 + $0xe8] sm:$0xf]
        %v10106 = vld [vmem:[%s563 + $0xf4] sm:$0x8]
        %v10107 = vld [vmem:[%s563 + $0xf8] sm:$0xf]
        %v10108 = vld [vmem:[%s563 + $0xfc] sm:$0xf]
        %v10109 = vld [vmem:[%s563 + $0x108] sm:$0x8]
        %v10110 = vld [vmem:[%s563 + $0x10c] sm:$0xf]
        %v10111 = vld [vmem:[%s563 + $0x110] sm:$0xf]
        %v10112 = vld [vmem:[%s563 + $0x11c] sm:$0x8]
        %v10113 = vld [vmem:[%s563 + $0x120] sm:$0xf]
        %v10114 = vld [vmem:[%s563 + $0x124] sm:$0xf]
        %v10115 = vld [vmem:[%s563 + $0x130] sm:$0x8]
        %v10116 = vld [vmem:[%s563 + $0x134] sm:$0xf]
        %v10117 = vld [vmem:[%s563 + $0x138] sm:$0xf]
        %v10119 = vshrl.u32 %v10070, 16
        %v10121 = vrot.slane %v10119, 7
        %v10122 = vrot.slane %v10121, 4
        %v10124 = vshrl.u32 %v10071, 16
        %v10126 = vrot.slane %v10124, 7
        %v10127 = vshll.u32 %v10071, 16
        %v10129 = vor.u32 %v10126, %v10127
        %v10130 = vsel %vm645, %v10122, %v10129
        %v10131 = vrot.slane %v10126, 4
        %v10133 = vshrl.u32 %v10072, 16
        %v10135 = vrot.slane %v10133, 7
        %v10136 = vshll.u32 %v10072, 16
        %v10138 = vor.u32 %v10135, %v10136
        %v10139 = vsel %vm645, %v10131, %v10138
        %v10141 = vshrl.u32 %v10073, 16
        %v10143 = vrot.slane %v10141, 7
        %v10144 = vrot.slane %v10143, 4
        %v10146 = vshrl.u32 %v10074, 16
        %v10148 = vrot.slane %v10146, 7
        %v10149 = vshll.u32 %v10074, 16
        %v10151 = vor.u32 %v10148, %v10149
        %v10152 = vsel %vm645, %v10144, %v10151
        %v10153 = vrot.slane %v10148, 4
        %v10155 = vshrl.u32 %v10075, 16
        %v10157 = vrot.slane %v10155, 7
        %v10158 = vshll.u32 %v10075, 16
        %v10160 = vor.u32 %v10157, %v10158
        %v10161 = vsel %vm645, %v10153, %v10160
        %v10163 = vshrl.u32 %v10076, 16
        %v10165 = vrot.slane %v10163, 7
        %v10166 = vrot.slane %v10165, 4
        %v10168 = vshrl.u32 %v10077, 16
        %v10170 = vrot.slane %v10168, 7
        %v10171 = vshll.u32 %v10077, 16
        %v10173 = vor.u32 %v10170, %v10171
        %v10174 = vsel %vm645, %v10166, %v10173
        %v10175 = vrot.slane %v10170, 4
        %v10177 = vshrl.u32 %v10078, 16
        %v10179 = vrot.slane %v10177, 7
        %v10180 = vshll.u32 %v10078, 16
        %v10182 = vor.u32 %v10179, %v10180
        %v10183 = vsel %vm645, %v10175, %v10182
        %v10185 = vshrl.u32 %v10079, 16
        %v10187 = vrot.slane %v10185, 7
        %v10188 = vrot.slane %v10187, 4
        %v10190 = vshrl.u32 %v10080, 16
        %v10192 = vrot.slane %v10190, 7
        %v10193 = vshll.u32 %v10080, 16
        %v10195 = vor.u32 %v10192, %v10193
        %v10196 = vsel %vm645, %v10188, %v10195
        %v10197 = vrot.slane %v10192, 4
        %v10199 = vshrl.u32 %v10081, 16
        %v10201 = vrot.slane %v10199, 7
        %v10202 = vshll.u32 %v10081, 16
        %v10204 = vor.u32 %v10201, %v10202
        %v10205 = vsel %vm645, %v10197, %v10204
        %v10207 = vshrl.u32 %v10082, 16
        %v10209 = vrot.slane %v10207, 7
        %v10210 = vrot.slane %v10209, 4
        %v10212 = vshrl.u32 %v10083, 16
        %v10214 = vrot.slane %v10212, 7
        %v10215 = vshll.u32 %v10083, 16
        %v10217 = vor.u32 %v10214, %v10215
        %v10218 = vsel %vm645, %v10210, %v10217
        %v10219 = vrot.slane %v10214, 4
        %v10221 = vshrl.u32 %v10084, 16
        %v10223 = vrot.slane %v10221, 7
        %v10224 = vshll.u32 %v10084, 16
        %v10226 = vor.u32 %v10223, %v10224
        %v10227 = vsel %vm645, %v10219, %v10226
        %v10229 = vshrl.u32 %v10085, 16
        %v10231 = vrot.slane %v10229, 7
        %v10232 = vrot.slane %v10231, 4
        %v10234 = vshrl.u32 %v10086, 16
        %v10236 = vrot.slane %v10234, 7
        %v10237 = vshll.u32 %v10086, 16
        %v10239 = vor.u32 %v10236, %v10237
        %v10240 = vsel %vm645, %v10232, %v10239
        %v10241 = vrot.slane %v10236, 4
        %v10243 = vshrl.u32 %v10087, 16
        %v10245 = vrot.slane %v10243, 7
        %v10246 = vshll.u32 %v10087, 16
        %v10248 = vor.u32 %v10245, %v10246
        %v10249 = vsel %vm645, %v10241, %v10248
        %v10251 = vshrl.u32 %v10088, 16
        %v10253 = vrot.slane %v10251, 7
        %v10254 = vrot.slane %v10253, 4
        %v10256 = vshrl.u32 %v10089, 16
        %v10258 = vrot.slane %v10256, 7
        %v10259 = vshll.u32 %v10089, 16
        %v10261 = vor.u32 %v10258, %v10259
        %v10262 = vsel %vm645, %v10254, %v10261
        %v10263 = vrot.slane %v10258, 4
        %v10265 = vshrl.u32 %v10090, 16
        %v10267 = vrot.slane %v10265, 7
        %v10268 = vshll.u32 %v10090, 16
        %v10270 = vor.u32 %v10267, %v10268
        %v10271 = vsel %vm645, %v10263, %v10270
        %v10273 = vshrl.u32 %v10091, 16
        %v10275 = vrot.slane %v10273, 7
        %v10276 = vrot.slane %v10275, 4
        %v10278 = vshrl.u32 %v10092, 16
        %v10280 = vrot.slane %v10278, 7
        %v10281 = vshll.u32 %v10092, 16
        %v10283 = vor.u32 %v10280, %v10281
        %v10284 = vsel %vm645, %v10276, %v10283
        %v10285 = vrot.slane %v10280, 4
        %v10287 = vshrl.u32 %v10093, 16
        %v10289 = vrot.slane %v10287, 7
        %v10290 = vshll.u32 %v10093, 16
        %v10292 = vor.u32 %v10289, %v10290
        %v10293 = vsel %vm645, %v10285, %v10292
        %v10295 = vshrl.u32 %v10094, 16
        %v10297 = vrot.slane %v10295, 7
        %v10298 = vrot.slane %v10297, 4
        %v10300 = vshrl.u32 %v10095, 16
        %v10302 = vrot.slane %v10300, 7
        %v10303 = vshll.u32 %v10095, 16
        %v10305 = vor.u32 %v10302, %v10303
        %v10306 = vsel %vm645, %v10298, %v10305
        %v10307 = vrot.slane %v10302, 4
        %v10309 = vshrl.u32 %v10096, 16
        %v10311 = vrot.slane %v10309, 7
        %v10312 = vshll.u32 %v10096, 16
        %v10314 = vor.u32 %v10311, %v10312
        %v10315 = vsel %vm645, %v10307, %v10314
        %v10317 = vshrl.u32 %v10097, 16
        %v10319 = vrot.slane %v10317, 7
        %v10320 = vrot.slane %v10319, 4
        %v10322 = vshrl.u32 %v10098, 16
        %v10324 = vrot.slane %v10322, 7
        %v10325 = vshll.u32 %v10098, 16
        %v10327 = vor.u32 %v10324, %v10325
        %v10328 = vsel %vm645, %v10320, %v10327
        %v10329 = vrot.slane %v10324, 4
        %v10331 = vshrl.u32 %v10099, 16
        %v10333 = vrot.slane %v10331, 7
        %v10334 = vshll.u32 %v10099, 16
        %v10336 = vor.u32 %v10333, %v10334
        %v10337 = vsel %vm645, %v10329, %v10336
        %v10339 = vshrl.u32 %v10100, 16
        %v10341 = vrot.slane %v10339, 7
        %v10342 = vrot.slane %v10341, 4
        %v10344 = vshrl.u32 %v10101, 16
        %v10346 = vrot.slane %v10344, 7
        %v10347 = vshll.u32 %v10101, 16
        %v10349 = vor.u32 %v10346, %v10347
        %v10350 = vsel %vm645, %v10342, %v10349
        %v10351 = vrot.slane %v10346, 4
        %v10353 = vshrl.u32 %v10102, 16
        %v10355 = vrot.slane %v10353, 7
        %v10356 = vshll.u32 %v10102, 16
        %v10358 = vor.u32 %v10355, %v10356
        %v10359 = vsel %vm645, %v10351, %v10358
        %v10361 = vshrl.u32 %v10103, 16
        %v10363 = vrot.slane %v10361, 7
        %v10364 = vrot.slane %v10363, 4
        %v10366 = vshrl.u32 %v10104, 16
        %v10368 = vrot.slane %v10366, 7
        %v10369 = vshll.u32 %v10104, 16
        %v10371 = vor.u32 %v10368, %v10369
        %v10372 = vsel %vm645, %v10364, %v10371
        %v10373 = vrot.slane %v10368, 4
        %v10375 = vshrl.u32 %v10105, 16
        %v10377 = vrot.slane %v10375, 7
        %v10378 = vshll.u32 %v10105, 16
        %v10380 = vor.u32 %v10377, %v10378
        %v10381 = vsel %vm645, %v10373, %v10380
        %v10383 = vshrl.u32 %v10106, 16
        %v10385 = vrot.slane %v10383, 7
        %v10386 = vrot.slane %v10385, 4
        %v10388 = vshrl.u32 %v10107, 16
        %v10390 = vrot.slane %v10388, 7
        %v10391 = vshll.u32 %v10107, 16
        %v10393 = vor.u32 %v10390, %v10391
        %v10394 = vsel %vm645, %v10386, %v10393
        %v10395 = vrot.slane %v10390, 4
        %v10397 = vshrl.u32 %v10108, 16
        %v10399 = vrot.slane %v10397, 7
        %v10400 = vshll.u32 %v10108, 16
        %v10402 = vor.u32 %v10399, %v10400
        %v10403 = vsel %vm645, %v10395, %v10402
        %v10405 = vshrl.u32 %v10109, 16
        %v10407 = vrot.slane %v10405, 7
        %v10408 = vrot.slane %v10407, 4
        %v10410 = vshrl.u32 %v10110, 16
        %v10412 = vrot.slane %v10410, 7
        %v10413 = vshll.u32 %v10110, 16
        %v10415 = vor.u32 %v10412, %v10413
        %v10416 = vsel %vm645, %v10408, %v10415
        %v10417 = vrot.slane %v10412, 4
        %v10419 = vshrl.u32 %v10111, 16
        %v10421 = vrot.slane %v10419, 7
        %v10422 = vshll.u32 %v10111, 16
        %v10424 = vor.u32 %v10421, %v10422
        %v10425 = vsel %vm645, %v10417, %v10424
        %v10427 = vshrl.u32 %v10112, 16
        %v10429 = vrot.slane %v10427, 7
        %v10430 = vrot.slane %v10429, 4
        %v10432 = vshrl.u32 %v10113, 16
        %v10434 = vrot.slane %v10432, 7
        %v10435 = vshll.u32 %v10113, 16
        %v10437 = vor.u32 %v10434, %v10435
        %v10438 = vsel %vm645, %v10430, %v10437
        %v10439 = vrot.slane %v10434, 4
        %v10441 = vshrl.u32 %v10114, 16
        %v10443 = vrot.slane %v10441, 7
        %v10444 = vshll.u32 %v10114, 16
        %v10446 = vor.u32 %v10443, %v10444
        %v10447 = vsel %vm645, %v10439, %v10446
        %v10449 = vshrl.u32 %v10115, 16
        %v10451 = vrot.slane %v10449, 7
        %v10452 = vrot.slane %v10451, 4
        %v10454 = vshrl.u32 %v10116, 16
        %v10456 = vrot.slane %v10454, 7
        %v10457 = vshll.u32 %v10116, 16
        %v10459 = vor.u32 %v10456, %v10457
        %v10460 = vsel %vm645, %v10452, %v10459
        %v10461 = vrot.slane %v10456, 4
        %v10463 = vshrl.u32 %v10117, 16
        %v10465 = vrot.slane %v10463, 7
        %v10466 = vshll.u32 %v10117, 16
        %v10468 = vor.u32 %v10465, %v10466
        %v10469 = vsel %vm645, %v10461, %v10468
        %v10470 = vunpack.c.l.b16 %v10130
        %v10471 = vunpack.c.l.b16 %v10139
        %v10472 = vunpack.c.l.b16 %v10152
        %v10473 = vunpack.c.l.b16 %v10161
        %v10474 = vunpack.c.l.b16 %v10174
        %v10475 = vunpack.c.l.b16 %v10183
        %v10476 = vunpack.c.l.b16 %v10196
        %v10477 = vunpack.c.l.b16 %v10205
        %v10478 = vunpack.c.l.b16 %v10218
        %v10479 = vunpack.c.l.b16 %v10227
        %v10480 = vunpack.c.l.b16 %v10240
        %v10481 = vunpack.c.l.b16 %v10249
        %v10482 = vunpack.c.l.b16 %v10262
        %v10483 = vunpack.c.l.b16 %v10271
        %v10484 = vunpack.c.l.b16 %v10284
        %v10485 = vunpack.c.l.b16 %v10293
        %v10486 = vunpack.c.l.b16 %v10306
        %v10487 = vunpack.c.l.b16 %v10315
        %v10488 = vunpack.c.l.b16 %v10328
        %v10489 = vunpack.c.l.b16 %v10337
        %v10490 = vunpack.c.l.b16 %v10350
        %v10491 = vunpack.c.l.b16 %v10359
        %v10492 = vunpack.c.l.b16 %v10372
        %v10493 = vunpack.c.l.b16 %v10381
        %v10494 = vunpack.c.l.b16 %v10394
        %v10495 = vunpack.c.l.b16 %v10403
        %v10496 = vunpack.c.l.b16 %v10416
        %v10497 = vunpack.c.l.b16 %v10425
        %v10498 = vunpack.c.l.b16 %v10438
        %v10499 = vunpack.c.l.b16 %v10447
        %v10500 = vunpack.c.l.b16 %v10460
        %v10501 = vunpack.c.l.b16 %v10469
        %v10502 = vpack.c.b16 %v10471, %v10470
        %v10503 = vpack.c.b16 %v10473, %v10472
        %v10504 = vpack.c.b16 %v10475, %v10474
        %v10505 = vpack.c.b16 %v10477, %v10476
        %v10506 = vpack.c.b16 %v10479, %v10478
        %v10507 = vpack.c.b16 %v10481, %v10480
        %v10508 = vpack.c.b16 %v10483, %v10482
        %v10509 = vpack.c.b16 %v10485, %v10484
        %v10510 = vpack.c.b16 %v10487, %v10486
        %v10511 = vpack.c.b16 %v10489, %v10488
        %v10512 = vpack.c.b16 %v10491, %v10490
        %v10513 = vpack.c.b16 %v10493, %v10492
        %v10514 = vpack.c.b16 %v10495, %v10494
        %v10515 = vpack.c.b16 %v10497, %v10496
        %v10516 = vpack.c.b16 %v10499, %v10498
        %v10517 = vpack.c.b16 %v10501, %v10500
        %10518 = vrot.lane.b32.xlu0 %v10502, 24
        %v10519 = vpop.permute.xlu0 %10518
        %10520 = vrot.lane.b32.xlu0 %v10503, 24
        %v10521 = vpop.permute.xlu0 %10520
        %10522 = vrot.lane.b32.xlu0 %v10504, 24
        %v10523 = vpop.permute.xlu0 %10522
        %10524 = vrot.lane.b32.xlu0 %v10505, 24
        %v10525 = vpop.permute.xlu0 %10524
        %10526 = vrot.lane.b32.xlu0 %v10506, 24
        %v10527 = vpop.permute.xlu0 %10526
        %10528 = vrot.lane.b32.xlu0 %v10507, 24
        %v10529 = vpop.permute.xlu0 %10528
        %10530 = vrot.lane.b32.xlu0 %v10508, 24
        %v10531 = vpop.permute.xlu0 %10530
        %10532 = vrot.lane.b32.xlu0 %v10509, 24
        %v10533 = vpop.permute.xlu0 %10532
        %10534 = vrot.lane.b32.xlu0 %v10510, 24
        %v10535 = vpop.permute.xlu0 %10534
        %10536 = vrot.lane.b32.xlu0 %v10511, 24
        %v10537 = vpop.permute.xlu0 %10536
        %10538 = vrot.lane.b32.xlu0 %v10512, 24
        %v10539 = vpop.permute.xlu0 %10538
        %10540 = vrot.lane.b32.xlu0 %v10513, 24
        %v10541 = vpop.permute.xlu0 %10540
        %10542 = vrot.lane.b32.xlu0 %v10514, 24
        %v10543 = vpop.permute.xlu0 %10542
        %10544 = vrot.lane.b32.xlu0 %v10515, 24
        %v10545 = vpop.permute.xlu0 %10544
        %10546 = vrot.lane.b32.xlu0 %v10516, 24
        %v10547 = vpop.permute.xlu0 %10546
        %10548 = vrot.lane.b32.xlu0 %v10517, 24
        %v10549 = vpop.permute.xlu0 %10548
        %10566 = vst.msk [vmem:[#allocation4] sm:$0xff] %vm2300, %v10519
        %10567 = vst.msk [vmem:[#allocation4 + $0x8] sm:$0xff] %vm2300, %v10521
        %10568 = vst.msk [vmem:[#allocation4 + $0x10] sm:$0xff] %vm2300, %v10523
        %10569 = vst.msk [vmem:[#allocation4 + $0x18] sm:$0xff] %vm2300, %v10525
        %10570 = vst.msk [vmem:[#allocation4 + $0x20] sm:$0xff] %vm2300, %v10527
        %10571 = vst.msk [vmem:[#allocation4 + $0x28] sm:$0xff] %vm2300, %v10529
        %10572 = vst.msk [vmem:[#allocation4 + $0x30] sm:$0xff] %vm2300, %v10531
        %10573 = vst.msk [vmem:[#allocation4 + $0x38] sm:$0xff] %vm2300, %v10533
        %10574 = vst.msk [vmem:[#allocation4 + $0x40] sm:$0xff] %vm2300, %v10535
        %10575 = vst.msk [vmem:[#allocation4 + $0x48] sm:$0xff] %vm2300, %v10537
        %10576 = vst.msk [vmem:[#allocation4 + $0x50] sm:$0xff] %vm2300, %v10539
        %10577 = vst.msk [vmem:[#allocation4 + $0x58] sm:$0xff] %vm2300, %v10541
        %10578 = vst.msk [vmem:[#allocation4 + $0x60] sm:$0xff] %vm2300, %v10543
        %10579 = vst.msk [vmem:[#allocation4 + $0x68] sm:$0xff] %vm2300, %v10545
        %10580 = vst.msk [vmem:[#allocation4 + $0x70] sm:$0xff] %vm2300, %v10547
        %10581 = vst.msk [vmem:[#allocation4 + $0x78] sm:$0xff] %vm2300, %v10549
        %v10582 = vld [vmem:[%s563 + $0x8] sm:$0xf]
        %v10583 = vld [vmem:[%s563 + $0xc] sm:$0xf]
        %v10584 = vld [vmem:[%s563 + $0x1c] sm:$0xf]
        %v10585 = vld [vmem:[%s563 + $0x20] sm:$0xf]
        %v10586 = vld [vmem:[%s563 + $0x30] sm:$0xf]
        %v10587 = vld [vmem:[%s563 + $0x34] sm:$0xf]
        %v10588 = vld [vmem:[%s563 + $0x44] sm:$0xf]
        %v10589 = vld [vmem:[%s563 + $0x48] sm:$0xf]
        %v10590 = vld [vmem:[%s563 + $0x58] sm:$0xf]
        %v10591 = vld [vmem:[%s563 + $0x5c] sm:$0xf]
        %v10592 = vld [vmem:[%s563 + $0x6c] sm:$0xf]
        %v10593 = vld [vmem:[%s563 + $0x70] sm:$0xf]
        %v10594 = vld [vmem:[%s563 + $0x80] sm:$0xf]
        %v10595 = vld [vmem:[%s563 + $0x84] sm:$0xf]
        %v10596 = vld [vmem:[%s563 + $0x94] sm:$0xf]
        %v10597 = vld [vmem:[%s563 + $0x98] sm:$0xf]
        %v10598 = vld [vmem:[%s563 + $0xa8] sm:$0xf]
        %v10599 = vld [vmem:[%s563 + $0xac] sm:$0xf]
        %v10600 = vld [vmem:[%s563 + $0xbc] sm:$0xf]
        %v10601 = vld [vmem:[%s563 + $0xc0] sm:$0xf]
        %v10602 = vld [vmem:[%s563 + $0xd0] sm:$0xf]
        %v10603 = vld [vmem:[%s563 + $0xd4] sm:$0xf]
        %v10604 = vld [vmem:[%s563 + $0xe4] sm:$0xf]
        %v10605 = vld [vmem:[%s563 + $0xe8] sm:$0xf]
        %v10606 = vld [vmem:[%s563 + $0xf8] sm:$0xf]
        %v10607 = vld [vmem:[%s563 + $0xfc] sm:$0xf]
        %v10608 = vld [vmem:[%s563 + $0x10c] sm:$0xf]
        %v10609 = vld [vmem:[%s563 + $0x110] sm:$0xf]
        %v10610 = vld [vmem:[%s563 + $0x120] sm:$0xf]
        %v10611 = vld [vmem:[%s563 + $0x124] sm:$0xf]
        %v10612 = vld [vmem:[%s563 + $0x134] sm:$0xf]
        %v10613 = vld [vmem:[%s563 + $0x138] sm:$0xf]
        %v10646 = vunpack.c.l.b16 %v10582
        %v10647 = vunpack.c.l.b16 %v10583
        %v10648 = vunpack.c.l.b16 %v10584
        %v10649 = vunpack.c.l.b16 %v10585
        %v10650 = vunpack.c.l.b16 %v10586
        %v10651 = vunpack.c.l.b16 %v10587
        %v10652 = vunpack.c.l.b16 %v10588
        %v10653 = vunpack.c.l.b16 %v10589
        %v10654 = vunpack.c.l.b16 %v10590
        %v10655 = vunpack.c.l.b16 %v10591
        %v10656 = vunpack.c.l.b16 %v10592
        %v10657 = vunpack.c.l.b16 %v10593
        %v10658 = vunpack.c.l.b16 %v10594
        %v10659 = vunpack.c.l.b16 %v10595
        %v10660 = vunpack.c.l.b16 %v10596
        %v10661 = vunpack.c.l.b16 %v10597
        %v10662 = vunpack.c.l.b16 %v10598
        %v10663 = vunpack.c.l.b16 %v10599
        %v10664 = vunpack.c.l.b16 %v10600
        %v10665 = vunpack.c.l.b16 %v10601
        %v10666 = vunpack.c.l.b16 %v10602
        %v10667 = vunpack.c.l.b16 %v10603
        %v10668 = vunpack.c.l.b16 %v10604
        %v10669 = vunpack.c.l.b16 %v10605
        %v10670 = vunpack.c.l.b16 %v10606
        %v10671 = vunpack.c.l.b16 %v10607
        %v10672 = vunpack.c.l.b16 %v10608
        %v10673 = vunpack.c.l.b16 %v10609
        %v10674 = vunpack.c.l.b16 %v10610
        %v10675 = vunpack.c.l.b16 %v10611
        %v10676 = vunpack.c.l.b16 %v10612
        %v10677 = vunpack.c.l.b16 %v10613
        %v10678 = vpack.c.b16 %v10647, %v10646
        %v10679 = vpack.c.b16 %v10649, %v10648
        %v10680 = vpack.c.b16 %v10651, %v10650
        %v10681 = vpack.c.b16 %v10653, %v10652
        %v10682 = vpack.c.b16 %v10655, %v10654
        %v10683 = vpack.c.b16 %v10657, %v10656
        %v10684 = vpack.c.b16 %v10659, %v10658
        %v10685 = vpack.c.b16 %v10661, %v10660
        %v10686 = vpack.c.b16 %v10663, %v10662
        %v10687 = vpack.c.b16 %v10665, %v10664
        %v10688 = vpack.c.b16 %v10667, %v10666
        %v10689 = vpack.c.b16 %v10669, %v10668
        %v10690 = vpack.c.b16 %v10671, %v10670
        %v10691 = vpack.c.b16 %v10673, %v10672
        %v10692 = vpack.c.b16 %v10675, %v10674
        %v10693 = vpack.c.b16 %v10677, %v10676
        %10694 = vrot.lane.b32.xlu0 %v10678, 32
        %v10695 = vpop.permute.xlu0 %10694
        %10696 = vrot.lane.b32.xlu0 %v10679, 32
        %v10697 = vpop.permute.xlu0 %10696
        %10698 = vrot.lane.b32.xlu0 %v10680, 32
        %v10699 = vpop.permute.xlu0 %10698
        %10700 = vrot.lane.b32.xlu0 %v10681, 32
        %v10701 = vpop.permute.xlu0 %10700
        %10702 = vrot.lane.b32.xlu0 %v10682, 32
        %v10703 = vpop.permute.xlu0 %10702
        %10704 = vrot.lane.b32.xlu0 %v10683, 32
        %v10705 = vpop.permute.xlu0 %10704
        %10706 = vrot.lane.b32.xlu0 %v10684, 32
        %v10707 = vpop.permute.xlu0 %10706
        %10708 = vrot.lane.b32.xlu0 %v10685, 32
        %v10709 = vpop.permute.xlu0 %10708
        %10710 = vrot.lane.b32.xlu0 %v10686, 32
        %v10711 = vpop.permute.xlu0 %10710
        %10712 = vrot.lane.b32.xlu0 %v10687, 32
        %v10713 = vpop.permute.xlu0 %10712
        %10714 = vrot.lane.b32.xlu0 %v10688, 32
        %v10715 = vpop.permute.xlu0 %10714
        %10716 = vrot.lane.b32.xlu0 %v10689, 32
        %v10717 = vpop.permute.xlu0 %10716
        %10718 = vrot.lane.b32.xlu0 %v10690, 32
        %v10719 = vpop.permute.xlu0 %10718
        %10720 = vrot.lane.b32.xlu0 %v10691, 32
        %v10721 = vpop.permute.xlu0 %10720
        %10722 = vrot.lane.b32.xlu0 %v10692, 32
        %v10723 = vpop.permute.xlu0 %10722
        %10724 = vrot.lane.b32.xlu0 %v10693, 32
        %v10725 = vpop.permute.xlu0 %10724
        %10742 = vst.msk [vmem:[#allocation4] sm:$0xff] %vm2477, %v10695
        %10743 = vst.msk [vmem:[#allocation4 + $0x8] sm:$0xff] %vm2477, %v10697
        %10744 = vst.msk [vmem:[#allocation4 + $0x10] sm:$0xff] %vm2477, %v10699
        %10745 = vst.msk [vmem:[#allocation4 + $0x18] sm:$0xff] %vm2477, %v10701
        %10746 = vst.msk [vmem:[#allocation4 + $0x20] sm:$0xff] %vm2477, %v10703
        %10747 = vst.msk [vmem:[#allocation4 + $0x28] sm:$0xff] %vm2477, %v10705
        %10748 = vst.msk [vmem:[#allocation4 + $0x30] sm:$0xff] %vm2477, %v10707
        %10749 = vst.msk [vmem:[#allocation4 + $0x38] sm:$0xff] %vm2477, %v10709
        %10750 = vst.msk [vmem:[#allocation4 + $0x40] sm:$0xff] %vm2477, %v10711
        %10751 = vst.msk [vmem:[#allocation4 + $0x48] sm:$0xff] %vm2477, %v10713
        %10752 = vst.msk [vmem:[#allocation4 + $0x50] sm:$0xff] %vm2477, %v10715
        %10753 = vst.msk [vmem:[#allocation4 + $0x58] sm:$0xff] %vm2477, %v10717
        %10754 = vst.msk [vmem:[#allocation4 + $0x60] sm:$0xff] %vm2477, %v10719
        %10755 = vst.msk [vmem:[#allocation4 + $0x68] sm:$0xff] %vm2477, %v10721
        %10756 = vst.msk [vmem:[#allocation4 + $0x70] sm:$0xff] %vm2477, %v10723
        %10757 = vst.msk [vmem:[#allocation4 + $0x78] sm:$0xff] %vm2477, %v10725
        %v10758 = vld [vmem:[%s563 + $0x8] sm:$0xf]
        %v10759 = vld [vmem:[%s563 + $0xc] sm:$0xf]
        %v10760 = vld [vmem:[%s563 + $0x10] sm:$0x1]
        %v10761 = vld [vmem:[%s563 + $0x1c] sm:$0xf]
        %v10762 = vld [vmem:[%s563 + $0x20] sm:$0xf]
        %v10763 = vld [vmem:[%s563 + $0x24] sm:$0x1]
        %v10764 = vld [vmem:[%s563 + $0x30] sm:$0xf]
        %v10765 = vld [vmem:[%s563 + $0x34] sm:$0xf]
        %v10766 = vld [vmem:[%s563 + $0x38] sm:$0x1]
        %v10767 = vld [vmem:[%s563 + $0x44] sm:$0xf]
        %v10768 = vld [vmem:[%s563 + $0x48] sm:$0xf]
        %v10769 = vld [vmem:[%s563 + $0x4c] sm:$0x1]
        %v10770 = vld [vmem:[%s563 + $0x58] sm:$0xf]
        %v10771 = vld [vmem:[%s563 + $0x5c] sm:$0xf]
        %v10772 = vld [vmem:[%s563 + $0x60] sm:$0x1]
        %v10773 = vld [vmem:[%s563 + $0x6c] sm:$0xf]
        %v10774 = vld [vmem:[%s563 + $0x70] sm:$0xf]
        %v10775 = vld [vmem:[%s563 + $0x74] sm:$0x1]
        %v10776 = vld [vmem:[%s563 + $0x80] sm:$0xf]
        %v10777 = vld [vmem:[%s563 + $0x84] sm:$0xf]
        %v10778 = vld [vmem:[%s563 + $0x88] sm:$0x1]
        %v10779 = vld [vmem:[%s563 + $0x94] sm:$0xf]
        %v10780 = vld [vmem:[%s563 + $0x98] sm:$0xf]
        %v10781 = vld [vmem:[%s563 + $0x9c] sm:$0x1]
        %v10782 = vld [vmem:[%s563 + $0xa8] sm:$0xf]
        %v10783 = vld [vmem:[%s563 + $0xac] sm:$0xf]
        %v10784 = vld [vmem:[%s563 + $0xb0] sm:$0x1]
        %v10785 = vld [vmem:[%s563 + $0xbc] sm:$0xf]
        %v10786 = vld [vmem:[%s563 + $0xc0] sm:$0xf]
        %v10787 = vld [vmem:[%s563 + $0xc4] sm:$0x1]
        %v10788 = vld [vmem:[%s563 + $0xd0] sm:$0xf]
        %v10789 = vld [vmem:[%s563 + $0xd4] sm:$0xf]
        %v10790 = vld [vmem:[%s563 + $0xd8] sm:$0x1]
        %v10791 = vld [vmem:[%s563 + $0xe4] sm:$0xf]
        %v10792 = vld [vmem:[%s563 + $0xe8] sm:$0xf]
        %v10793 = vld [vmem:[%s563 + $0xec] sm:$0x1]
        %v10794 = vld [vmem:[%s563 + $0xf8] sm:$0xf]
        %v10795 = vld [vmem:[%s563 + $0xfc] sm:$0xf]
        %v10796 = vld [vmem:[%s563 + $0x100] sm:$0x1]
        %v10797 = vld [vmem:[%s563 + $0x10c] sm:$0xf]
        %v10798 = vld [vmem:[%s563 + $0x110] sm:$0xf]
        %v10799 = vld [vmem:[%s563 + $0x114] sm:$0x1]
        %v10800 = vld [vmem:[%s563 + $0x120] sm:$0xf]
        %v10801 = vld [vmem:[%s563 + $0x124] sm:$0xf]
        %v10802 = vld [vmem:[%s563 + $0x128] sm:$0x1]
        %v10803 = vld [vmem:[%s563 + $0x134] sm:$0xf]
        %v10804 = vld [vmem:[%s563 + $0x138] sm:$0xf]
        %v10805 = vld [vmem:[%s563 + $0x13c] sm:$0x1]
        %v10807 = vshrl.u32 %v10758, 16
        %v10809 = vrot.slane %v10807, 4
        %v10810 = vshll.u32 %v10758, 16
        %v10812 = vrot.slane %v10810, 5
        %v10813 = vor.u32 %v10809, %v10812
        %v10814 = vrot.slane %v10813, 4
        %v10816 = vshll.u32 %v10759, 16
        %v10818 = vrot.slane %v10816, 5
        %v10819 = vsel %vm1306, %v10814, %v10818
        %v10820 = vshrl.u32 %v10759, 16
        %v10822 = vrot.slane %v10820, 4
        %v10823 = vor.u32 %v10822, %v10818
        %v10824 = vrot.slane %v10823, 4
        %v10826 = vshll.u32 %v10760, 16
        %v10828 = vrot.slane %v10826, 5
        %v10829 = vsel %vm1306, %v10824, %v10828
        %v10831 = vshrl.u32 %v10761, 16
        %v10833 = vrot.slane %v10831, 4
        %v10834 = vshll.u32 %v10761, 16
        %v10836 = vrot.slane %v10834, 5
        %v10837 = vor.u32 %v10833, %v10836
        %v10838 = vrot.slane %v10837, 4
        %v10840 = vshll.u32 %v10762, 16
        %v10842 = vrot.slane %v10840, 5
        %v10843 = vsel %vm1306, %v10838, %v10842
        %v10844 = vshrl.u32 %v10762, 16
        %v10846 = vrot.slane %v10844, 4
        %v10847 = vor.u32 %v10846, %v10842
        %v10848 = vrot.slane %v10847, 4
        %v10850 = vshll.u32 %v10763, 16
        %v10852 = vrot.slane %v10850, 5
        %v10853 = vsel %vm1306, %v10848, %v10852
        %v10855 = vshrl.u32 %v10764, 16
        %v10857 = vrot.slane %v10855, 4
        %v10858 = vshll.u32 %v10764, 16
        %v10860 = vrot.slane %v10858, 5
        %v10861 = vor.u32 %v10857, %v10860
        %v10862 = vrot.slane %v10861, 4
        %v10864 = vshll.u32 %v10765, 16
        %v10866 = vrot.slane %v10864, 5
        %v10867 = vsel %vm1306, %v10862, %v10866
        %v10868 = vshrl.u32 %v10765, 16
        %v10870 = vrot.slane %v10868, 4
        %v10871 = vor.u32 %v10870, %v10866
        %v10872 = vrot.slane %v10871, 4
        %v10874 = vshll.u32 %v10766, 16
        %v10876 = vrot.slane %v10874, 5
        %v10877 = vsel %vm1306, %v10872, %v10876
        %v10879 = vshrl.u32 %v10767, 16
        %v10881 = vrot.slane %v10879, 4
        %v10882 = vshll.u32 %v10767, 16
        %v10884 = vrot.slane %v10882, 5
        %v10885 = vor.u32 %v10881, %v10884
        %v10886 = vrot.slane %v10885, 4
        %v10888 = vshll.u32 %v10768, 16
        %v10890 = vrot.slane %v10888, 5
        %v10891 = vsel %vm1306, %v10886, %v10890
        %v10892 = vshrl.u32 %v10768, 16
        %v10894 = vrot.slane %v10892, 4
        %v10895 = vor.u32 %v10894, %v10890
        %v10896 = vrot.slane %v10895, 4
        %v10898 = vshll.u32 %v10769, 16
        %v10900 = vrot.slane %v10898, 5
        %v10901 = vsel %vm1306, %v10896, %v10900
        %v10903 = vshrl.u32 %v10770, 16
        %v10905 = vrot.slane %v10903, 4
        %v10906 = vshll.u32 %v10770, 16
        %v10908 = vrot.slane %v10906, 5
        %v10909 = vor.u32 %v10905, %v10908
        %v10910 = vrot.slane %v10909, 4
        %v10912 = vshll.u32 %v10771, 16
        %v10914 = vrot.slane %v10912, 5
        %v10915 = vsel %vm1306, %v10910, %v10914
        %v10916 = vshrl.u32 %v10771, 16
        %v10918 = vrot.slane %v10916, 4
        %v10919 = vor.u32 %v10918, %v10914
        %v10920 = vrot.slane %v10919, 4
        %v10922 = vshll.u32 %v10772, 16
        %v10924 = vrot.slane %v10922, 5
        %v10925 = vsel %vm1306, %v10920, %v10924
        %v10927 = vshrl.u32 %v10773, 16
        %v10929 = vrot.slane %v10927, 4
        %v10930 = vshll.u32 %v10773, 16
        %v10932 = vrot.slane %v10930, 5
        %v10933 = vor.u32 %v10929, %v10932
        %v10934 = vrot.slane %v10933, 4
        %v10936 = vshll.u32 %v10774, 16
        %v10938 = vrot.slane %v10936, 5
        %v10939 = vsel %vm1306, %v10934, %v10938
        %v10940 = vshrl.u32 %v10774, 16
        %v10942 = vrot.slane %v10940, 4
        %v10943 = vor.u32 %v10942, %v10938
        %v10944 = vrot.slane %v10943, 4
        %v10946 = vshll.u32 %v10775, 16
        %v10948 = vrot.slane %v10946, 5
        %v10949 = vsel %vm1306, %v10944, %v10948
        %v10951 = vshrl.u32 %v10776, 16
        %v10953 = vrot.slane %v10951, 4
        %v10954 = vshll.u32 %v10776, 16
        %v10956 = vrot.slane %v10954, 5
        %v10957 = vor.u32 %v10953, %v10956
        %v10958 = vrot.slane %v10957, 4
        %v10960 = vshll.u32 %v10777, 16
        %v10962 = vrot.slane %v10960, 5
        %v10963 = vsel %vm1306, %v10958, %v10962
        %v10964 = vshrl.u32 %v10777, 16
        %v10966 = vrot.slane %v10964, 4
        %v10967 = vor.u32 %v10966, %v10962
        %v10968 = vrot.slane %v10967, 4
        %v10970 = vshll.u32 %v10778, 16
        %v10972 = vrot.slane %v10970, 5
        %v10973 = vsel %vm1306, %v10968, %v10972
        %v10975 = vshrl.u32 %v10779, 16
        %v10977 = vrot.slane %v10975, 4
        %v10978 = vshll.u32 %v10779, 16
        %v10980 = vrot.slane %v10978, 5
        %v10981 = vor.u32 %v10977, %v10980
        %v10982 = vrot.slane %v10981, 4
        %v10984 = vshll.u32 %v10780, 16
        %v10986 = vrot.slane %v10984, 5
        %v10987 = vsel %vm1306, %v10982, %v10986
        %v10988 = vshrl.u32 %v10780, 16
        %v10990 = vrot.slane %v10988, 4
        %v10991 = vor.u32 %v10990, %v10986
        %v10992 = vrot.slane %v10991, 4
        %v10994 = vshll.u32 %v10781, 16
        %v10996 = vrot.slane %v10994, 5
        %v10997 = vsel %vm1306, %v10992, %v10996
        %v10999 = vshrl.u32 %v10782, 16
        %v11001 = vrot.slane %v10999, 4
        %v11002 = vshll.u32 %v10782, 16
        %v11004 = vrot.slane %v11002, 5
        %v11005 = vor.u32 %v11001, %v11004
        %v11006 = vrot.slane %v11005, 4
        %v11008 = vshll.u32 %v10783, 16
        %v11010 = vrot.slane %v11008, 5
        %v11011 = vsel %vm1306, %v11006, %v11010
        %v11012 = vshrl.u32 %v10783, 16
        %v11014 = vrot.slane %v11012, 4
        %v11015 = vor.u32 %v11014, %v11010
        %v11016 = vrot.slane %v11015, 4
        %v11018 = vshll.u32 %v10784, 16
        %v11020 = vrot.slane %v11018, 5
        %v11021 = vsel %vm1306, %v11016, %v11020
        %v11023 = vshrl.u32 %v10785, 16
        %v11025 = vrot.slane %v11023, 4
        %v11026 = vshll.u32 %v10785, 16
        %v11028 = vrot.slane %v11026, 5
        %v11029 = vor.u32 %v11025, %v11028
        %v11030 = vrot.slane %v11029, 4
        %v11032 = vshll.u32 %v10786, 16
        %v11034 = vrot.slane %v11032, 5
        %v11035 = vsel %vm1306, %v11030, %v11034
        %v11036 = vshrl.u32 %v10786, 16
        %v11038 = vrot.slane %v11036, 4
        %v11039 = vor.u32 %v11038, %v11034
        %v11040 = vrot.slane %v11039, 4
        %v11042 = vshll.u32 %v10787, 16
        %v11044 = vrot.slane %v11042, 5
        %v11045 = vsel %vm1306, %v11040, %v11044
        %v11047 = vshrl.u32 %v10788, 16
        %v11049 = vrot.slane %v11047, 4
        %v11050 = vshll.u32 %v10788, 16
        %v11052 = vrot.slane %v11050, 5
        %v11053 = vor.u32 %v11049, %v11052
        %v11054 = vrot.slane %v11053, 4
        %v11056 = vshll.u32 %v10789, 16
        %v11058 = vrot.slane %v11056, 5
        %v11059 = vsel %vm1306, %v11054, %v11058
        %v11060 = vshrl.u32 %v10789, 16
        %v11062 = vrot.slane %v11060, 4
        %v11063 = vor.u32 %v11062, %v11058
        %v11064 = vrot.slane %v11063, 4
        %v11066 = vshll.u32 %v10790, 16
        %v11068 = vrot.slane %v11066, 5
        %v11069 = vsel %vm1306, %v11064, %v11068
        %v11071 = vshrl.u32 %v10791, 16
        %v11073 = vrot.slane %v11071, 4
        %v11074 = vshll.u32 %v10791, 16
        %v11076 = vrot.slane %v11074, 5
        %v11077 = vor.u32 %v11073, %v11076
        %v11078 = vrot.slane %v11077, 4
        %v11080 = vshll.u32 %v10792, 16
        %v11082 = vrot.slane %v11080, 5
        %v11083 = vsel %vm1306, %v11078, %v11082
        %v11084 = vshrl.u32 %v10792, 16
        %v11086 = vrot.slane %v11084, 4
        %v11087 = vor.u32 %v11086, %v11082
        %v11088 = vrot.slane %v11087, 4
        %v11090 = vshll.u32 %v10793, 16
        %v11092 = vrot.slane %v11090, 5
        %v11093 = vsel %vm1306, %v11088, %v11092
        %v11095 = vshrl.u32 %v10794, 16
        %v11097 = vrot.slane %v11095, 4
        %v11098 = vshll.u32 %v10794, 16
        %v11100 = vrot.slane %v11098, 5
        %v11101 = vor.u32 %v11097, %v11100
        %v11102 = vrot.slane %v11101, 4
        %v11104 = vshll.u32 %v10795, 16
        %v11106 = vrot.slane %v11104, 5
        %v11107 = vsel %vm1306, %v11102, %v11106
        %v11108 = vshrl.u32 %v10795, 16
        %v11110 = vrot.slane %v11108, 4
        %v11111 = vor.u32 %v11110, %v11106
        %v11112 = vrot.slane %v11111, 4
        %v11114 = vshll.u32 %v10796, 16
        %v11116 = vrot.slane %v11114, 5
        %v11117 = vsel %vm1306, %v11112, %v11116
        %v11119 = vshrl.u32 %v10797, 16
        %v11121 = vrot.slane %v11119, 4
        %v11122 = vshll.u32 %v10797, 16
        %v11124 = vrot.slane %v11122, 5
        %v11125 = vor.u32 %v11121, %v11124
        %v11126 = vrot.slane %v11125, 4
        %v11128 = vshll.u32 %v10798, 16
        %v11130 = vrot.slane %v11128, 5
        %v11131 = vsel %vm1306, %v11126, %v11130
        %v11132 = vshrl.u32 %v10798, 16
        %v11134 = vrot.slane %v11132, 4
        %v11135 = vor.u32 %v11134, %v11130
        %v11136 = vrot.slane %v11135, 4
        %v11138 = vshll.u32 %v10799, 16
        %v11140 = vrot.slane %v11138, 5
        %v11141 = vsel %vm1306, %v11136, %v11140
        %v11143 = vshrl.u32 %v10800, 16
        %v11145 = vrot.slane %v11143, 4
        %v11146 = vshll.u32 %v10800, 16
        %v11148 = vrot.slane %v11146, 5
        %v11149 = vor.u32 %v11145, %v11148
        %v11150 = vrot.slane %v11149, 4
        %v11152 = vshll.u32 %v10801, 16
        %v11154 = vrot.slane %v11152, 5
        %v11155 = vsel %vm1306, %v11150, %v11154
        %v11156 = vshrl.u32 %v10801, 16
        %v11158 = vrot.slane %v11156, 4
        %v11159 = vor.u32 %v11158, %v11154
        %v11160 = vrot.slane %v11159, 4
        %v11162 = vshll.u32 %v10802, 16
        %v11164 = vrot.slane %v11162, 5
        %v11165 = vsel %vm1306, %v11160, %v11164
        %v11167 = vshrl.u32 %v10803, 16
        %v11169 = vrot.slane %v11167, 4
        %v11170 = vshll.u32 %v10803, 16
        %v11172 = vrot.slane %v11170, 5
        %v11173 = vor.u32 %v11169, %v11172
        %v11174 = vrot.slane %v11173, 4
        %v11176 = vshll.u32 %v10804, 16
        %v11178 = vrot.slane %v11176, 5
        %v11179 = vsel %vm1306, %v11174, %v11178
        %v11180 = vshrl.u32 %v10804, 16
        %v11182 = vrot.slane %v11180, 4
        %v11183 = vor.u32 %v11182, %v11178
        %v11184 = vrot.slane %v11183, 4
        %v11186 = vshll.u32 %v10805, 16
        %v11188 = vrot.slane %v11186, 5
        %v11189 = vsel %vm1306, %v11184, %v11188
        %v11190 = vunpack.c.l.b16 %v10819
        %v11191 = vunpack.c.l.b16 %v10829
        %v11192 = vunpack.c.l.b16 %v10843
        %v11193 = vunpack.c.l.b16 %v10853
        %v11194 = vunpack.c.l.b16 %v10867
        %v11195 = vunpack.c.l.b16 %v10877
        %v11196 = vunpack.c.l.b16 %v10891
        %v11197 = vunpack.c.l.b16 %v10901
        %v11198 = vunpack.c.l.b16 %v10915
        %v11199 = vunpack.c.l.b16 %v10925
        %v11200 = vunpack.c.l.b16 %v10939
        %v11201 = vunpack.c.l.b16 %v10949
        %v11202 = vunpack.c.l.b16 %v10963
        %v11203 = vunpack.c.l.b16 %v10973
        %v11204 = vunpack.c.l.b16 %v10987
        %v11205 = vunpack.c.l.b16 %v10997
        %v11206 = vunpack.c.l.b16 %v11011
        %v11207 = vunpack.c.l.b16 %v11021
        %v11208 = vunpack.c.l.b16 %v11035
        %v11209 = vunpack.c.l.b16 %v11045
        %v11210 = vunpack.c.l.b16 %v11059
        %v11211 = vunpack.c.l.b16 %v11069
        %v11212 = vunpack.c.l.b16 %v11083
        %v11213 = vunpack.c.l.b16 %v11093
        %v11214 = vunpack.c.l.b16 %v11107
        %v11215 = vunpack.c.l.b16 %v11117
        %v11216 = vunpack.c.l.b16 %v11131
        %v11217 = vunpack.c.l.b16 %v11141
        %v11218 = vunpack.c.l.b16 %v11155
        %v11219 = vunpack.c.l.b16 %v11165
        %v11220 = vunpack.c.l.b16 %v11179
        %v11221 = vunpack.c.l.b16 %v11189
        %v11222 = vpack.c.b16 %v11191, %v11190
        %v11223 = vpack.c.b16 %v11193, %v11192
        %v11224 = vpack.c.b16 %v11195, %v11194
        %v11225 = vpack.c.b16 %v11197, %v11196
        %v11226 = vpack.c.b16 %v11199, %v11198
        %v11227 = vpack.c.b16 %v11201, %v11200
        %v11228 = vpack.c.b16 %v11203, %v11202
        %v11229 = vpack.c.b16 %v11205, %v11204
        %v11230 = vpack.c.b16 %v11207, %v11206
        %v11231 = vpack.c.b16 %v11209, %v11208
        %v11232 = vpack.c.b16 %v11211, %v11210
        %v11233 = vpack.c.b16 %v11213, %v11212
        %v11234 = vpack.c.b16 %v11215, %v11214
        %v11235 = vpack.c.b16 %v11217, %v11216
        %v11236 = vpack.c.b16 %v11219, %v11218
        %v11237 = vpack.c.b16 %v11221, %v11220
        %11238 = vrot.lane.b32.xlu0 %v11222, 40
        %v11239 = vpop.permute.xlu0 %11238
        %11240 = vrot.lane.b32.xlu0 %v11223, 40
        %v11241 = vpop.permute.xlu0 %11240
        %11242 = vrot.lane.b32.xlu0 %v11224, 40
        %v11243 = vpop.permute.xlu0 %11242
        %11244 = vrot.lane.b32.xlu0 %v11225, 40
        %v11245 = vpop.permute.xlu0 %11244
        %11246 = vrot.lane.b32.xlu0 %v11226, 40
        %v11247 = vpop.permute.xlu0 %11246
        %11248 = vrot.lane.b32.xlu0 %v11227, 40
        %v11249 = vpop.permute.xlu0 %11248
        %11250 = vrot.lane.b32.xlu0 %v11228, 40
        %v11251 = vpop.permute.xlu0 %11250
        %11252 = vrot.lane.b32.xlu0 %v11229, 40
        %v11253 = vpop.permute.xlu0 %11252
        %11254 = vrot.lane.b32.xlu0 %v11230, 40
        %v11255 = vpop.permute.xlu0 %11254
        %11256 = vrot.lane.b32.xlu0 %v11231, 40
        %v11257 = vpop.permute.xlu0 %11256
        %11258 = vrot.lane.b32.xlu0 %v11232, 40
        %v11259 = vpop.permute.xlu0 %11258
        %11260 = vrot.lane.b32.xlu0 %v11233, 40
        %v11261 = vpop.permute.xlu0 %11260
        %11262 = vrot.lane.b32.xlu0 %v11234, 40
        %v11263 = vpop.permute.xlu0 %11262
        %11264 = vrot.lane.b32.xlu0 %v11235, 40
        %v11265 = vpop.permute.xlu0 %11264
        %11266 = vrot.lane.b32.xlu0 %v11236, 40
        %v11267 = vpop.permute.xlu0 %11266
        %11268 = vrot.lane.b32.xlu0 %v11237, 40
        %v11269 = vpop.permute.xlu0 %11268
        %11286 = vst.msk [vmem:[#allocation4] sm:$0xff] %vm3022, %v11239
        %11287 = vst.msk [vmem:[#allocation4 + $0x8] sm:$0xff] %vm3022, %v11241
        %11288 = vst.msk [vmem:[#allocation4 + $0x10] sm:$0xff] %vm3022, %v11243
        %11289 = vst.msk [vmem:[#allocation4 + $0x18] sm:$0xff] %vm3022, %v11245
        %11290 = vst.msk [vmem:[#allocation4 + $0x20] sm:$0xff] %vm3022, %v11247
        %11291 = vst.msk [vmem:[#allocation4 + $0x28] sm:$0xff] %vm3022, %v11249
        %11292 = vst.msk [vmem:[#allocation4 + $0x30] sm:$0xff] %vm3022, %v11251
        %11293 = vst.msk [vmem:[#allocation4 + $0x38] sm:$0xff] %vm3022, %v11253
        %11294 = vst.msk [vmem:[#allocation4 + $0x40] sm:$0xff] %vm3022, %v11255
        %11295 = vst.msk [vmem:[#allocation4 + $0x48] sm:$0xff] %vm3022, %v11257
        %11296 = vst.msk [vmem:[#allocation4 + $0x50] sm:$0xff] %vm3022, %v11259
        %11297 = vst.msk [vmem:[#allocation4 + $0x58] sm:$0xff] %vm3022, %v11261
        %11298 = vst.msk [vmem:[#allocation4 + $0x60] sm:$0xff] %vm3022, %v11263
        %11299 = vst.msk [vmem:[#allocation4 + $0x68] sm:$0xff] %vm3022, %v11265
        %11300 = vst.msk [vmem:[#allocation4 + $0x70] sm:$0xff] %vm3022, %v11267
        %11301 = vst.msk [vmem:[#allocation4 + $0x78] sm:$0xff] %vm3022, %v11269
        %v11302 = vld [vmem:[%s3039 + $0x4] sm:$0x8]
        %v11303 = vld [vmem:[%s3039 + $0x8] sm:$0xf]
        %v11304 = vld [vmem:[%s3039 + $0xc] sm:$0xf]
        %v11305 = vld [vmem:[%s3039 + $0x18] sm:$0x8]
        %v11306 = vld [vmem:[%s3039 + $0x1c] sm:$0xf]
        %v11307 = vld [vmem:[%s3039 + $0x20] sm:$0xf]
        %v11308 = vld [vmem:[%s3039 + $0x2c] sm:$0x8]
        %v11309 = vld [vmem:[%s3039 + $0x30] sm:$0xf]
        %v11310 = vld [vmem:[%s3039 + $0x34] sm:$0xf]
        %v11311 = vld [vmem:[%s3039 + $0x40] sm:$0x8]
        %v11312 = vld [vmem:[%s3039 + $0x44] sm:$0xf]
        %v11313 = vld [vmem:[%s3039 + $0x48] sm:$0xf]
        %v11314 = vld [vmem:[%s3039 + $0x54] sm:$0x8]
        %v11315 = vld [vmem:[%s3039 + $0x58] sm:$0xf]
        %v11316 = vld [vmem:[%s3039 + $0x5c] sm:$0xf]
        %v11317 = vld [vmem:[%s3039 + $0x68] sm:$0x8]
        %v11318 = vld [vmem:[%s3039 + $0x6c] sm:$0xf]
        %v11319 = vld [vmem:[%s3039 + $0x70] sm:$0xf]
        %v11320 = vld [vmem:[%s3039 + $0x7c] sm:$0x8]
        %v11321 = vld [vmem:[%s3039 + $0x80] sm:$0xf]
        %v11322 = vld [vmem:[%s3039 + $0x84] sm:$0xf]
        %v11323 = vld [vmem:[%s3039 + $0x90] sm:$0x8]
        %v11324 = vld [vmem:[%s3039 + $0x94] sm:$0xf]
        %v11325 = vld [vmem:[%s3039 + $0x98] sm:$0xf]
        %v11326 = vld [vmem:[%s3039 + $0xa4] sm:$0x8]
        %v11327 = vld [vmem:[%s3039 + $0xa8] sm:$0xf]
        %v11328 = vld [vmem:[%s3039 + $0xac] sm:$0xf]
        %v11329 = vld [vmem:[%s3039 + $0xb8] sm:$0x8]
        %v11330 = vld [vmem:[%s3039 + $0xbc] sm:$0xf]
        %v11331 = vld [vmem:[%s3039 + $0xc0] sm:$0xf]
        %v11332 = vld [vmem:[%s3039 + $0xcc] sm:$0x8]
        %v11333 = vld [vmem:[%s3039 + $0xd0] sm:$0xf]
        %v11334 = vld [vmem:[%s3039 + $0xd4] sm:$0xf]
        %v11335 = vld [vmem:[%s3039 + $0xe0] sm:$0x8]
        %v11336 = vld [vmem:[%s3039 + $0xe4] sm:$0xf]
        %v11337 = vld [vmem:[%s3039 + $0xe8] sm:$0xf]
        %v11338 = vld [vmem:[%s3039 + $0xf4] sm:$0x8]
        %v11339 = vld [vmem:[%s3039 + $0xf8] sm:$0xf]
        %v11340 = vld [vmem:[%s3039 + $0xfc] sm:$0xf]
        %v11341 = vld [vmem:[%s3039 + $0x108] sm:$0x8]
        %v11342 = vld [vmem:[%s3039 + $0x10c] sm:$0xf]
        %v11343 = vld [vmem:[%s3039 + $0x110] sm:$0xf]
        %v11344 = vld [vmem:[%s3039 + $0x11c] sm:$0x8]
        %v11345 = vld [vmem:[%s3039 + $0x120] sm:$0xf]
        %v11346 = vld [vmem:[%s3039 + $0x124] sm:$0xf]
        %v11347 = vld [vmem:[%s3039 + $0x130] sm:$0x8]
        %v11348 = vld [vmem:[%s3039 + $0x134] sm:$0xf]
        %v11349 = vld [vmem:[%s3039 + $0x138] sm:$0xf]
        %v11351 = vshrl.u32 %v11302, 16
        %v11353 = vrot.slane %v11351, 7
        %v11354 = vrot.slane %v11353, 4
        %v11356 = vshrl.u32 %v11303, 16
        %v11358 = vrot.slane %v11356, 7
        %v11359 = vshll.u32 %v11303, 16
        %v11361 = vor.u32 %v11358, %v11359
        %v11362 = vsel %vm645, %v11354, %v11361
        %v11363 = vrot.slane %v11358, 4
        %v11365 = vshrl.u32 %v11304, 16
        %v11367 = vrot.slane %v11365, 7
        %v11368 = vshll.u32 %v11304, 16
        %v11370 = vor.u32 %v11367, %v11368
        %v11371 = vsel %vm645, %v11363, %v11370
        %v11373 = vshrl.u32 %v11305, 16
        %v11375 = vrot.slane %v11373, 7
        %v11376 = vrot.slane %v11375, 4
        %v11378 = vshrl.u32 %v11306, 16
        %v11380 = vrot.slane %v11378, 7
        %v11381 = vshll.u32 %v11306, 16
        %v11383 = vor.u32 %v11380, %v11381
        %v11384 = vsel %vm645, %v11376, %v11383
        %v11385 = vrot.slane %v11380, 4
        %v11387 = vshrl.u32 %v11307, 16
        %v11389 = vrot.slane %v11387, 7
        %v11390 = vshll.u32 %v11307, 16
        %v11392 = vor.u32 %v11389, %v11390
        %v11393 = vsel %vm645, %v11385, %v11392
        %v11395 = vshrl.u32 %v11308, 16
        %v11397 = vrot.slane %v11395, 7
        %v11398 = vrot.slane %v11397, 4
        %v11400 = vshrl.u32 %v11309, 16
        %v11402 = vrot.slane %v11400, 7
        %v11403 = vshll.u32 %v11309, 16
        %v11405 = vor.u32 %v11402, %v11403
        %v11406 = vsel %vm645, %v11398, %v11405
        %v11407 = vrot.slane %v11402, 4
        %v11409 = vshrl.u32 %v11310, 16
        %v11411 = vrot.slane %v11409, 7
        %v11412 = vshll.u32 %v11310, 16
        %v11414 = vor.u32 %v11411, %v11412
        %v11415 = vsel %vm645, %v11407, %v11414
        %v11417 = vshrl.u32 %v11311, 16
        %v11419 = vrot.slane %v11417, 7
        %v11420 = vrot.slane %v11419, 4
        %v11422 = vshrl.u32 %v11312, 16
        %v11424 = vrot.slane %v11422, 7
        %v11425 = vshll.u32 %v11312, 16
        %v11427 = vor.u32 %v11424, %v11425
        %v11428 = vsel %vm645, %v11420, %v11427
        %v11429 = vrot.slane %v11424, 4
        %v11431 = vshrl.u32 %v11313, 16
        %v11433 = vrot.slane %v11431, 7
        %v11434 = vshll.u32 %v11313, 16
        %v11436 = vor.u32 %v11433, %v11434
        %v11437 = vsel %vm645, %v11429, %v11436
        %v11439 = vshrl.u32 %v11314, 16
        %v11441 = vrot.slane %v11439, 7
        %v11442 = vrot.slane %v11441, 4
        %v11444 = vshrl.u32 %v11315, 16
        %v11446 = vrot.slane %v11444, 7
        %v11447 = vshll.u32 %v11315, 16
        %v11449 = vor.u32 %v11446, %v11447
        %v11450 = vsel %vm645, %v11442, %v11449
        %v11451 = vrot.slane %v11446, 4
        %v11453 = vshrl.u32 %v11316, 16
        %v11455 = vrot.slane %v11453, 7
        %v11456 = vshll.u32 %v11316, 16
        %v11458 = vor.u32 %v11455, %v11456
        %v11459 = vsel %vm645, %v11451, %v11458
        %v11461 = vshrl.u32 %v11317, 16
        %v11463 = vrot.slane %v11461, 7
        %v11464 = vrot.slane %v11463, 4
        %v11466 = vshrl.u32 %v11318, 16
        %v11468 = vrot.slane %v11466, 7
        %v11469 = vshll.u32 %v11318, 16
        %v11471 = vor.u32 %v11468, %v11469
        %v11472 = vsel %vm645, %v11464, %v11471
        %v11473 = vrot.slane %v11468, 4
        %v11475 = vshrl.u32 %v11319, 16
        %v11477 = vrot.slane %v11475, 7
        %v11478 = vshll.u32 %v11319, 16
        %v11480 = vor.u32 %v11477, %v11478
        %v11481 = vsel %vm645, %v11473, %v11480
        %v11483 = vshrl.u32 %v11320, 16
        %v11485 = vrot.slane %v11483, 7
        %v11486 = vrot.slane %v11485, 4
        %v11488 = vshrl.u32 %v11321, 16
        %v11490 = vrot.slane %v11488, 7
        %v11491 = vshll.u32 %v11321, 16
        %v11493 = vor.u32 %v11490, %v11491
        %v11494 = vsel %vm645, %v11486, %v11493
        %v11495 = vrot.slane %v11490, 4
        %v11497 = vshrl.u32 %v11322, 16
        %v11499 = vrot.slane %v11497, 7
        %v11500 = vshll.u32 %v11322, 16
        %v11502 = vor.u32 %v11499, %v11500
        %v11503 = vsel %vm645, %v11495, %v11502
        %v11505 = vshrl.u32 %v11323, 16
        %v11507 = vrot.slane %v11505, 7
        %v11508 = vrot.slane %v11507, 4
        %v11510 = vshrl.u32 %v11324, 16
        %v11512 = vrot.slane %v11510, 7
        %v11513 = vshll.u32 %v11324, 16
        %v11515 = vor.u32 %v11512, %v11513
        %v11516 = vsel %vm645, %v11508, %v11515
        %v11517 = vrot.slane %v11512, 4
        %v11519 = vshrl.u32 %v11325, 16
        %v11521 = vrot.slane %v11519, 7
        %v11522 = vshll.u32 %v11325, 16
        %v11524 = vor.u32 %v11521, %v11522
        %v11525 = vsel %vm645, %v11517, %v11524
        %v11527 = vshrl.u32 %v11326, 16
        %v11529 = vrot.slane %v11527, 7
        %v11530 = vrot.slane %v11529, 4
        %v11532 = vshrl.u32 %v11327, 16
        %v11534 = vrot.slane %v11532, 7
        %v11535 = vshll.u32 %v11327, 16
        %v11537 = vor.u32 %v11534, %v11535
        %v11538 = vsel %vm645, %v11530, %v11537
        %v11539 = vrot.slane %v11534, 4
        %v11541 = vshrl.u32 %v11328, 16
        %v11543 = vrot.slane %v11541, 7
        %v11544 = vshll.u32 %v11328, 16
        %v11546 = vor.u32 %v11543, %v11544
        %v11547 = vsel %vm645, %v11539, %v11546
        %v11549 = vshrl.u32 %v11329, 16
        %v11551 = vrot.slane %v11549, 7
        %v11552 = vrot.slane %v11551, 4
        %v11554 = vshrl.u32 %v11330, 16
        %v11556 = vrot.slane %v11554, 7
        %v11557 = vshll.u32 %v11330, 16
        %v11559 = vor.u32 %v11556, %v11557
        %v11560 = vsel %vm645, %v11552, %v11559
        %v11561 = vrot.slane %v11556, 4
        %v11563 = vshrl.u32 %v11331, 16
        %v11565 = vrot.slane %v11563, 7
        %v11566 = vshll.u32 %v11331, 16
        %v11568 = vor.u32 %v11565, %v11566
        %v11569 = vsel %vm645, %v11561, %v11568
        %v11571 = vshrl.u32 %v11332, 16
        %v11573 = vrot.slane %v11571, 7
        %v11574 = vrot.slane %v11573, 4
        %v11576 = vshrl.u32 %v11333, 16
        %v11578 = vrot.slane %v11576, 7
        %v11579 = vshll.u32 %v11333, 16
        %v11581 = vor.u32 %v11578, %v11579
        %v11582 = vsel %vm645, %v11574, %v11581
        %v11583 = vrot.slane %v11578, 4
        %v11585 = vshrl.u32 %v11334, 16
        %v11587 = vrot.slane %v11585, 7
        %v11588 = vshll.u32 %v11334, 16
        %v11590 = vor.u32 %v11587, %v11588
        %v11591 = vsel %vm645, %v11583, %v11590
        %v11593 = vshrl.u32 %v11335, 16
        %v11595 = vrot.slane %v11593, 7
        %v11596 = vrot.slane %v11595, 4
        %v11598 = vshrl.u32 %v11336, 16
        %v11600 = vrot.slane %v11598, 7
        %v11601 = vshll.u32 %v11336, 16
        %v11603 = vor.u32 %v11600, %v11601
        %v11604 = vsel %vm645, %v11596, %v11603
        %v11605 = vrot.slane %v11600, 4
        %v11607 = vshrl.u32 %v11337, 16
        %v11609 = vrot.slane %v11607, 7
        %v11610 = vshll.u32 %v11337, 16
        %v11612 = vor.u32 %v11609, %v11610
        %v11613 = vsel %vm645, %v11605, %v11612
        %v11615 = vshrl.u32 %v11338, 16
        %v11617 = vrot.slane %v11615, 7
        %v11618 = vrot.slane %v11617, 4
        %v11620 = vshrl.u32 %v11339, 16
        %v11622 = vrot.slane %v11620, 7
        %v11623 = vshll.u32 %v11339, 16
        %v11625 = vor.u32 %v11622, %v11623
        %v11626 = vsel %vm645, %v11618, %v11625
        %v11627 = vrot.slane %v11622, 4
        %v11629 = vshrl.u32 %v11340, 16
        %v11631 = vrot.slane %v11629, 7
        %v11632 = vshll.u32 %v11340, 16
        %v11634 = vor.u32 %v11631, %v11632
        %v11635 = vsel %vm645, %v11627, %v11634
        %v11637 = vshrl.u32 %v11341, 16
        %v11639 = vrot.slane %v11637, 7
        %v11640 = vrot.slane %v11639, 4
        %v11642 = vshrl.u32 %v11342, 16
        %v11644 = vrot.slane %v11642, 7
        %v11645 = vshll.u32 %v11342, 16
        %v11647 = vor.u32 %v11644, %v11645
        %v11648 = vsel %vm645, %v11640, %v11647
        %v11649 = vrot.slane %v11644, 4
        %v11651 = vshrl.u32 %v11343, 16
        %v11653 = vrot.slane %v11651, 7
        %v11654 = vshll.u32 %v11343, 16
        %v11656 = vor.u32 %v11653, %v11654
        %v11657 = vsel %vm645, %v11649, %v11656
        %v11659 = vshrl.u32 %v11344, 16
        %v11661 = vrot.slane %v11659, 7
        %v11662 = vrot.slane %v11661, 4
        %v11664 = vshrl.u32 %v11345, 16
        %v11666 = vrot.slane %v11664, 7
        %v11667 = vshll.u32 %v11345, 16
        %v11669 = vor.u32 %v11666, %v11667
        %v11670 = vsel %vm645, %v11662, %v11669
        %v11671 = vrot.slane %v11666, 4
        %v11673 = vshrl.u32 %v11346, 16
        %v11675 = vrot.slane %v11673, 7
        %v11676 = vshll.u32 %v11346, 16
        %v11678 = vor.u32 %v11675, %v11676
        %v11679 = vsel %vm645, %v11671, %v11678
        %v11681 = vshrl.u32 %v11347, 16
        %v11683 = vrot.slane %v11681, 7
        %v11684 = vrot.slane %v11683, 4
        %v11686 = vshrl.u32 %v11348, 16
        %v11688 = vrot.slane %v11686, 7
        %v11689 = vshll.u32 %v11348, 16
        %v11691 = vor.u32 %v11688, %v11689
        %v11692 = vsel %vm645, %v11684, %v11691
        %v11693 = vrot.slane %v11688, 4
        %v11695 = vshrl.u32 %v11349, 16
        %v11697 = vrot.slane %v11695, 7
        %v11698 = vshll.u32 %v11349, 16
        %v11700 = vor.u32 %v11697, %v11698
        %v11701 = vsel %vm645, %v11693, %v11700
        %v11702 = vunpack.c.l.b16 %v11362
        %v11703 = vunpack.c.l.b16 %v11371
        %v11704 = vunpack.c.l.b16 %v11384
        %v11705 = vunpack.c.l.b16 %v11393
        %v11706 = vunpack.c.l.b16 %v11406
        %v11707 = vunpack.c.l.b16 %v11415
        %v11708 = vunpack.c.l.b16 %v11428
        %v11709 = vunpack.c.l.b16 %v11437
        %v11710 = vunpack.c.l.b16 %v11450
        %v11711 = vunpack.c.l.b16 %v11459
        %v11712 = vunpack.c.l.b16 %v11472
        %v11713 = vunpack.c.l.b16 %v11481
        %v11714 = vunpack.c.l.b16 %v11494
        %v11715 = vunpack.c.l.b16 %v11503
        %v11716 = vunpack.c.l.b16 %v11516
        %v11717 = vunpack.c.l.b16 %v11525
        %v11718 = vunpack.c.l.b16 %v11538
        %v11719 = vunpack.c.l.b16 %v11547
        %v11720 = vunpack.c.l.b16 %v11560
        %v11721 = vunpack.c.l.b16 %v11569
        %v11722 = vunpack.c.l.b16 %v11582
        %v11723 = vunpack.c.l.b16 %v11591
        %v11724 = vunpack.c.l.b16 %v11604
        %v11725 = vunpack.c.l.b16 %v11613
        %v11726 = vunpack.c.l.b16 %v11626
        %v11727 = vunpack.c.l.b16 %v11635
        %v11728 = vunpack.c.l.b16 %v11648
        %v11729 = vunpack.c.l.b16 %v11657
        %v11730 = vunpack.c.l.b16 %v11670
        %v11731 = vunpack.c.l.b16 %v11679
        %v11732 = vunpack.c.l.b16 %v11692
        %v11733 = vunpack.c.l.b16 %v11701
        %v11734 = vpack.c.b16 %v11703, %v11702
        %v11735 = vpack.c.b16 %v11705, %v11704
        %v11736 = vpack.c.b16 %v11707, %v11706
        %v11737 = vpack.c.b16 %v11709, %v11708
        %v11738 = vpack.c.b16 %v11711, %v11710
        %v11739 = vpack.c.b16 %v11713, %v11712
        %v11740 = vpack.c.b16 %v11715, %v11714
        %v11741 = vpack.c.b16 %v11717, %v11716
        %v11742 = vpack.c.b16 %v11719, %v11718
        %v11743 = vpack.c.b16 %v11721, %v11720
        %v11744 = vpack.c.b16 %v11723, %v11722
        %v11745 = vpack.c.b16 %v11725, %v11724
        %v11746 = vpack.c.b16 %v11727, %v11726
        %v11747 = vpack.c.b16 %v11729, %v11728
        %v11748 = vpack.c.b16 %v11731, %v11730
        %v11749 = vpack.c.b16 %v11733, %v11732
        %11750 = vrot.lane.b32.xlu0 %v11734, 48
        %v11751 = vpop.permute.xlu0 %11750
        %11752 = vrot.lane.b32.xlu0 %v11735, 48
        %v11753 = vpop.permute.xlu0 %11752
        %11754 = vrot.lane.b32.xlu0 %v11736, 48
        %v11755 = vpop.permute.xlu0 %11754
        %11756 = vrot.lane.b32.xlu0 %v11737, 48
        %v11757 = vpop.permute.xlu0 %11756
        %11758 = vrot.lane.b32.xlu0 %v11738, 48
        %v11759 = vpop.permute.xlu0 %11758
        %11760 = vrot.lane.b32.xlu0 %v11739, 48
        %v11761 = vpop.permute.xlu0 %11760
        %11762 = vrot.lane.b32.xlu0 %v11740, 48
        %v11763 = vpop.permute.xlu0 %11762
        %11764 = vrot.lane.b32.xlu0 %v11741, 48
        %v11765 = vpop.permute.xlu0 %11764
        %11766 = vrot.lane.b32.xlu0 %v11742, 48
        %v11767 = vpop.permute.xlu0 %11766
        %11768 = vrot.lane.b32.xlu0 %v11743, 48
        %v11769 = vpop.permute.xlu0 %11768
        %11770 = vrot.lane.b32.xlu0 %v11744, 48
        %v11771 = vpop.permute.xlu0 %11770
        %11772 = vrot.lane.b32.xlu0 %v11745, 48
        %v11773 = vpop.permute.xlu0 %11772
        %11774 = vrot.lane.b32.xlu0 %v11746, 48
        %v11775 = vpop.permute.xlu0 %11774
        %11776 = vrot.lane.b32.xlu0 %v11747, 48
        %v11777 = vpop.permute.xlu0 %11776
        %11778 = vrot.lane.b32.xlu0 %v11748, 48
        %v11779 = vpop.permute.xlu0 %11778
        %11780 = vrot.lane.b32.xlu0 %v11749, 48
        %v11781 = vpop.permute.xlu0 %11780
        %11798 = vst.msk [vmem:[#allocation4] sm:$0xff] %vm3536, %v11751
        %11799 = vst.msk [vmem:[#allocation4 + $0x8] sm:$0xff] %vm3536, %v11753
        %11800 = vst.msk [vmem:[#allocation4 + $0x10] sm:$0xff] %vm3536, %v11755
        %11801 = vst.msk [vmem:[#allocation4 + $0x18] sm:$0xff] %vm3536, %v11757
        %11802 = vst.msk [vmem:[#allocation4 + $0x20] sm:$0xff] %vm3536, %v11759
        %11803 = vst.msk [vmem:[#allocation4 + $0x28] sm:$0xff] %vm3536, %v11761
        %11804 = vst.msk [vmem:[#allocation4 + $0x30] sm:$0xff] %vm3536, %v11763
        %11805 = vst.msk [vmem:[#allocation4 + $0x38] sm:$0xff] %vm3536, %v11765
        %11806 = vst.msk [vmem:[#allocation4 + $0x40] sm:$0xff] %vm3536, %v11767
        %11807 = vst.msk [vmem:[#allocation4 + $0x48] sm:$0xff] %vm3536, %v11769
        %11808 = vst.msk [vmem:[#allocation4 + $0x50] sm:$0xff] %vm3536, %v11771
        %11809 = vst.msk [vmem:[#allocation4 + $0x58] sm:$0xff] %vm3536, %v11773
        %11810 = vst.msk [vmem:[#allocation4 + $0x60] sm:$0xff] %vm3536, %v11775
        %11811 = vst.msk [vmem:[#allocation4 + $0x68] sm:$0xff] %vm3536, %v11777
        %11812 = vst.msk [vmem:[#allocation4 + $0x70] sm:$0xff] %vm3536, %v11779
        %11813 = vst.msk [vmem:[#allocation4 + $0x78] sm:$0xff] %vm3536, %v11781
        %v11814 = vld [vmem:[%s3039 + $0x8] sm:$0xf]
        %v11815 = vld [vmem:[%s3039 + $0xc] sm:$0xf]
        %v11816 = vld [vmem:[%s3039 + $0x1c] sm:$0xf]
        %v11817 = vld [vmem:[%s3039 + $0x20] sm:$0xf]
        %v11818 = vld [vmem:[%s3039 + $0x30] sm:$0xf]
        %v11819 = vld [vmem:[%s3039 + $0x34] sm:$0xf]
        %v11820 = vld [vmem:[%s3039 + $0x44] sm:$0xf]
        %v11821 = vld [vmem:[%s3039 + $0x48] sm:$0xf]
        %v11822 = vld [vmem:[%s3039 + $0x58] sm:$0xf]
        %v11823 = vld [vmem:[%s3039 + $0x5c] sm:$0xf]
        %v11824 = vld [vmem:[%s3039 + $0x6c] sm:$0xf]
        %v11825 = vld [vmem:[%s3039 + $0x70] sm:$0xf]
        %v11826 = vld [vmem:[%s3039 + $0x80] sm:$0xf]
        %v11827 = vld [vmem:[%s3039 + $0x84] sm:$0xf]
        %v11828 = vld [vmem:[%s3039 + $0x94] sm:$0xf]
        %v11829 = vld [vmem:[%s3039 + $0x98] sm:$0xf]
        %v11830 = vld [vmem:[%s3039 + $0xa8] sm:$0xf]
        %v11831 = vld [vmem:[%s3039 + $0xac] sm:$0xf]
        %v11832 = vld [vmem:[%s3039 + $0xbc] sm:$0xf]
        %v11833 = vld [vmem:[%s3039 + $0xc0] sm:$0xf]
        %v11834 = vld [vmem:[%s3039 + $0xd0] sm:$0xf]
        %v11835 = vld [vmem:[%s3039 + $0xd4] sm:$0xf]
        %v11836 = vld [vmem:[%s3039 + $0xe4] sm:$0xf]
        %v11837 = vld [vmem:[%s3039 + $0xe8] sm:$0xf]
        %v11838 = vld [vmem:[%s3039 + $0xf8] sm:$0xf]
        %v11839 = vld [vmem:[%s3039 + $0xfc] sm:$0xf]
        %v11840 = vld [vmem:[%s3039 + $0x10c] sm:$0xf]
        %v11841 = vld [vmem:[%s3039 + $0x110] sm:$0xf]
        %v11842 = vld [vmem:[%s3039 + $0x120] sm:$0xf]
        %v11843 = vld [vmem:[%s3039 + $0x124] sm:$0xf]
        %v11844 = vld [vmem:[%s3039 + $0x134] sm:$0xf]
        %v11845 = vld [vmem:[%s3039 + $0x138] sm:$0xf]
        %v11878 = vunpack.c.l.b16 %v11814
        %v11879 = vunpack.c.l.b16 %v11815
        %v11880 = vunpack.c.l.b16 %v11816
        %v11881 = vunpack.c.l.b16 %v11817
        %v11882 = vunpack.c.l.b16 %v11818
        %v11883 = vunpack.c.l.b16 %v11819
        %v11884 = vunpack.c.l.b16 %v11820
        %v11885 = vunpack.c.l.b16 %v11821
        %v11886 = vunpack.c.l.b16 %v11822
        %v11887 = vunpack.c.l.b16 %v11823
        %v11888 = vunpack.c.l.b16 %v11824
        %v11889 = vunpack.c.l.b16 %v11825
        %v11890 = vunpack.c.l.b16 %v11826
        %v11891 = vunpack.c.l.b16 %v11827
        %v11892 = vunpack.c.l.b16 %v11828
        %v11893 = vunpack.c.l.b16 %v11829
        %v11894 = vunpack.c.l.b16 %v11830
        %v11895 = vunpack.c.l.b16 %v11831
        %v11896 = vunpack.c.l.b16 %v11832
        %v11897 = vunpack.c.l.b16 %v11833
        %v11898 = vunpack.c.l.b16 %v11834
        %v11899 = vunpack.c.l.b16 %v11835
        %v11900 = vunpack.c.l.b16 %v11836
        %v11901 = vunpack.c.l.b16 %v11837
        %v11902 = vunpack.c.l.b16 %v11838
        %v11903 = vunpack.c.l.b16 %v11839
        %v11904 = vunpack.c.l.b16 %v11840
        %v11905 = vunpack.c.l.b16 %v11841
        %v11906 = vunpack.c.l.b16 %v11842
        %v11907 = vunpack.c.l.b16 %v11843
        %v11908 = vunpack.c.l.b16 %v11844
        %v11909 = vunpack.c.l.b16 %v11845
        %v11910 = vpack.c.b16 %v11879, %v11878
        %v11911 = vpack.c.b16 %v11881, %v11880
        %v11912 = vpack.c.b16 %v11883, %v11882
        %v11913 = vpack.c.b16 %v11885, %v11884
        %v11914 = vpack.c.b16 %v11887, %v11886
        %v11915 = vpack.c.b16 %v11889, %v11888
        %v11916 = vpack.c.b16 %v11891, %v11890
        %v11917 = vpack.c.b16 %v11893, %v11892
        %v11918 = vpack.c.b16 %v11895, %v11894
        %v11919 = vpack.c.b16 %v11897, %v11896
        %v11920 = vpack.c.b16 %v11899, %v11898
        %v11921 = vpack.c.b16 %v11901, %v11900
        %v11922 = vpack.c.b16 %v11903, %v11902
        %v11923 = vpack.c.b16 %v11905, %v11904
        %v11924 = vpack.c.b16 %v11907, %v11906
        %v11925 = vpack.c.b16 %v11909, %v11908
        %11926 = vrot.lane.b32.xlu0 %v11910, 56
        %v11927 = vpop.permute.xlu0 %11926
        %11928 = vrot.lane.b32.xlu0 %v11911, 56
        %v11929 = vpop.permute.xlu0 %11928
        %11930 = vrot.lane.b32.xlu0 %v11912, 56
        %v11931 = vpop.permute.xlu0 %11930
        %11932 = vrot.lane.b32.xlu0 %v11913, 56
        %v11933 = vpop.permute.xlu0 %11932
        %11934 = vrot.lane.b32.xlu0 %v11914, 56
        %v11935 = vpop.permute.xlu0 %11934
        %11936 = vrot.lane.b32.xlu0 %v11915, 56
        %v11937 = vpop.permute.xlu0 %11936
        %11938 = vrot.lane.b32.xlu0 %v11916, 56
        %v11939 = vpop.permute.xlu0 %11938
        %11940 = vrot.lane.b32.xlu0 %v11917, 56
        %v11941 = vpop.permute.xlu0 %11940
        %11942 = vrot.lane.b32.xlu0 %v11918, 56
        %v11943 = vpop.permute.xlu0 %11942
        %11944 = vrot.lane.b32.xlu0 %v11919, 56
        %v11945 = vpop.permute.xlu0 %11944
        %11946 = vrot.lane.b32.xlu0 %v11920, 56
        %v11947 = vpop.permute.xlu0 %11946
        %11948 = vrot.lane.b32.xlu0 %v11921, 56
        %v11949 = vpop.permute.xlu0 %11948
        %11950 = vrot.lane.b32.xlu0 %v11922, 56
        %v11951 = vpop.permute.xlu0 %11950
        %11952 = vrot.lane.b32.xlu0 %v11923, 56
        %v11953 = vpop.permute.xlu0 %11952
        %11954 = vrot.lane.b32.xlu0 %v11924, 56
        %v11955 = vpop.permute.xlu0 %11954
        %11956 = vrot.lane.b32.xlu0 %v11925, 56
        %v11957 = vpop.permute.xlu0 %11956
        %11974 = vst.msk [vmem:[#allocation4] sm:$0xff] %vm3713, %v11927
        %11975 = vst.msk [vmem:[#allocation4 + $0x8] sm:$0xff] %vm3713, %v11929
        %11976 = vst.msk [vmem:[#allocation4 + $0x10] sm:$0xff] %vm3713, %v11931
        %11977 = vst.msk [vmem:[#allocation4 + $0x18] sm:$0xff] %vm3713, %v11933
        %11978 = vst.msk [vmem:[#allocation4 + $0x20] sm:$0xff] %vm3713, %v11935
        %11979 = vst.msk [vmem:[#allocation4 + $0x28] sm:$0xff] %vm3713, %v11937
        %11980 = vst.msk [vmem:[#allocation4 + $0x30] sm:$0xff] %vm3713, %v11939
        %11981 = vst.msk [vmem:[#allocation4 + $0x38] sm:$0xff] %vm3713, %v11941
        %11982 = vst.msk [vmem:[#allocation4 + $0x40] sm:$0xff] %vm3713, %v11943
        %11983 = vst.msk [vmem:[#allocation4 + $0x48] sm:$0xff] %vm3713, %v11945
        %11984 = vst.msk [vmem:[#allocation4 + $0x50] sm:$0xff] %vm3713, %v11947
        %11985 = vst.msk [vmem:[#allocation4 + $0x58] sm:$0xff] %vm3713, %v11949
        %11986 = vst.msk [vmem:[#allocation4 + $0x60] sm:$0xff] %vm3713, %v11951
        %11987 = vst.msk [vmem:[#allocation4 + $0x68] sm:$0xff] %vm3713, %v11953
        %11988 = vst.msk [vmem:[#allocation4 + $0x70] sm:$0xff] %vm3713, %v11955
        %11989 = vst.msk [vmem:[#allocation4 + $0x78] sm:$0xff] %vm3713, %v11957
        %v11990 = vld [vmem:[%s3039 + $0x8] sm:$0xf]
        %v11991 = vld [vmem:[%s3039 + $0xc] sm:$0xf]
        %v11992 = vld [vmem:[%s3039 + $0x10] sm:$0x1]
        %v11993 = vld [vmem:[%s3039 + $0x1c] sm:$0xf]
        %v11994 = vld [vmem:[%s3039 + $0x20] sm:$0xf]
        %v11995 = vld [vmem:[%s3039 + $0x24] sm:$0x1]
        %v11996 = vld [vmem:[%s3039 + $0x30] sm:$0xf]
        %v11997 = vld [vmem:[%s3039 + $0x34] sm:$0xf]
        %v11998 = vld [vmem:[%s3039 + $0x38] sm:$0x1]
        %v11999 = vld [vmem:[%s3039 + $0x44] sm:$0xf]
        %v12000 = vld [vmem:[%s3039 + $0x48] sm:$0xf]
        %v12001 = vld [vmem:[%s3039 + $0x4c] sm:$0x1]
        %v12002 = vld [vmem:[%s3039 + $0x58] sm:$0xf]
        %v12003 = vld [vmem:[%s3039 + $0x5c] sm:$0xf]
        %v12004 = vld [vmem:[%s3039 + $0x60] sm:$0x1]
        %v12005 = vld [vmem:[%s3039 + $0x6c] sm:$0xf]
        %v12006 = vld [vmem:[%s3039 + $0x70] sm:$0xf]
        %v12007 = vld [vmem:[%s3039 + $0x74] sm:$0x1]
        %v12008 = vld [vmem:[%s3039 + $0x80] sm:$0xf]
        %v12009 = vld [vmem:[%s3039 + $0x84] sm:$0xf]
        %v12010 = vld [vmem:[%s3039 + $0x88] sm:$0x1]
        %v12011 = vld [vmem:[%s3039 + $0x94] sm:$0xf]
        %v12012 = vld [vmem:[%s3039 + $0x98] sm:$0xf]
        %v12013 = vld [vmem:[%s3039 + $0x9c] sm:$0x1]
        %v12014 = vld [vmem:[%s3039 + $0xa8] sm:$0xf]
        %v12015 = vld [vmem:[%s3039 + $0xac] sm:$0xf]
        %v12016 = vld [vmem:[%s3039 + $0xb0] sm:$0x1]
        %v12017 = vld [vmem:[%s3039 + $0xbc] sm:$0xf]
        %v12018 = vld [vmem:[%s3039 + $0xc0] sm:$0xf]
        %v12019 = vld [vmem:[%s3039 + $0xc4] sm:$0x1]
        %v12020 = vld [vmem:[%s3039 + $0xd0] sm:$0xf]
        %v12021 = vld [vmem:[%s3039 + $0xd4] sm:$0xf]
        %v12022 = vld [vmem:[%s3039 + $0xd8] sm:$0x1]
        %v12023 = vld [vmem:[%s3039 + $0xe4] sm:$0xf]
        %v12024 = vld [vmem:[%s3039 + $0xe8] sm:$0xf]
        %v12025 = vld [vmem:[%s3039 + $0xec] sm:$0x1]
        %v12026 = vld [vmem:[%s3039 + $0xf8] sm:$0xf]
        %v12027 = vld [vmem:[%s3039 + $0xfc] sm:$0xf]
        %v12028 = vld [vmem:[%s3039 + $0x100] sm:$0x1]
        %v12029 = vld [vmem:[%s3039 + $0x10c] sm:$0xf]
        %v12030 = vld [vmem:[%s3039 + $0x110] sm:$0xf]
        %v12031 = vld [vmem:[%s3039 + $0x114] sm:$0x1]
        %v12032 = vld [vmem:[%s3039 + $0x120] sm:$0xf]
        %v12033 = vld [vmem:[%s3039 + $0x124] sm:$0xf]
        %v12034 = vld [vmem:[%s3039 + $0x128] sm:$0x1]
        %v12035 = vld [vmem:[%s3039 + $0x134] sm:$0xf]
        %v12036 = vld [vmem:[%s3039 + $0x138] sm:$0xf]
        %v12037 = vld [vmem:[%s3039 + $0x13c] sm:$0x1]
        %v12039 = vshrl.u32 %v11990, 16
        %v12041 = vrot.slane %v12039, 4
        %v12042 = vshll.u32 %v11990, 16
        %v12044 = vrot.slane %v12042, 5
        %v12045 = vor.u32 %v12041, %v12044
        %v12046 = vrot.slane %v12045, 4
        %v12048 = vshll.u32 %v11991, 16
        %v12050 = vrot.slane %v12048, 5
        %v12051 = vsel %vm1306, %v12046, %v12050
        %v12052 = vshrl.u32 %v11991, 16
        %v12054 = vrot.slane %v12052, 4
        %v12055 = vor.u32 %v12054, %v12050
        %v12056 = vrot.slane %v12055, 4
        %v12058 = vshll.u32 %v11992, 16
        %v12060 = vrot.slane %v12058, 5
        %v12061 = vsel %vm1306, %v12056, %v12060
        %v12063 = vshrl.u32 %v11993, 16
        %v12065 = vrot.slane %v12063, 4
        %v12066 = vshll.u32 %v11993, 16
        %v12068 = vrot.slane %v12066, 5
        %v12069 = vor.u32 %v12065, %v12068
        %v12070 = vrot.slane %v12069, 4
        %v12072 = vshll.u32 %v11994, 16
        %v12074 = vrot.slane %v12072, 5
        %v12075 = vsel %vm1306, %v12070, %v12074
        %v12076 = vshrl.u32 %v11994, 16
        %v12078 = vrot.slane %v12076, 4
        %v12079 = vor.u32 %v12078, %v12074
        %v12080 = vrot.slane %v12079, 4
        %v12082 = vshll.u32 %v11995, 16
        %v12084 = vrot.slane %v12082, 5
        %v12085 = vsel %vm1306, %v12080, %v12084
        %v12087 = vshrl.u32 %v11996, 16
        %v12089 = vrot.slane %v12087, 4
        %v12090 = vshll.u32 %v11996, 16
        %v12092 = vrot.slane %v12090, 5
        %v12093 = vor.u32 %v12089, %v12092
        %v12094 = vrot.slane %v12093, 4
        %v12096 = vshll.u32 %v11997, 16
        %v12098 = vrot.slane %v12096, 5
        %v12099 = vsel %vm1306, %v12094, %v12098
        %v12100 = vshrl.u32 %v11997, 16
        %v12102 = vrot.slane %v12100, 4
        %v12103 = vor.u32 %v12102, %v12098
        %v12104 = vrot.slane %v12103, 4
        %v12106 = vshll.u32 %v11998, 16
        %v12108 = vrot.slane %v12106, 5
        %v12109 = vsel %vm1306, %v12104, %v12108
        %v12111 = vshrl.u32 %v11999, 16
        %v12113 = vrot.slane %v12111, 4
        %v12114 = vshll.u32 %v11999, 16
        %v12116 = vrot.slane %v12114, 5
        %v12117 = vor.u32 %v12113, %v12116
        %v12118 = vrot.slane %v12117, 4
        %v12120 = vshll.u32 %v12000, 16
        %v12122 = vrot.slane %v12120, 5
        %v12123 = vsel %vm1306, %v12118, %v12122
        %v12124 = vshrl.u32 %v12000, 16
        %v12126 = vrot.slane %v12124, 4
        %v12127 = vor.u32 %v12126, %v12122
        %v12128 = vrot.slane %v12127, 4
        %v12130 = vshll.u32 %v12001, 16
        %v12132 = vrot.slane %v12130, 5
        %v12133 = vsel %vm1306, %v12128, %v12132
        %v12135 = vshrl.u32 %v12002, 16
        %v12137 = vrot.slane %v12135, 4
        %v12138 = vshll.u32 %v12002, 16
        %v12140 = vrot.slane %v12138, 5
        %v12141 = vor.u32 %v12137, %v12140
        %v12142 = vrot.slane %v12141, 4
        %v12144 = vshll.u32 %v12003, 16
        %v12146 = vrot.slane %v12144, 5
        %v12147 = vsel %vm1306, %v12142, %v12146
        %v12148 = vshrl.u32 %v12003, 16
        %v12150 = vrot.slane %v12148, 4
        %v12151 = vor.u32 %v12150, %v12146
        %v12152 = vrot.slane %v12151, 4
        %v12154 = vshll.u32 %v12004, 16
        %v12156 = vrot.slane %v12154, 5
        %v12157 = vsel %vm1306, %v12152, %v12156
        %v12159 = vshrl.u32 %v12005, 16
        %v12161 = vrot.slane %v12159, 4
        %v12162 = vshll.u32 %v12005, 16
        %v12164 = vrot.slane %v12162, 5
        %v12165 = vor.u32 %v12161, %v12164
        %v12166 = vrot.slane %v12165, 4
        %v12168 = vshll.u32 %v12006, 16
        %v12170 = vrot.slane %v12168, 5
        %v12171 = vsel %vm1306, %v12166, %v12170
        %v12172 = vshrl.u32 %v12006, 16
        %v12174 = vrot.slane %v12172, 4
        %v12175 = vor.u32 %v12174, %v12170
        %v12176 = vrot.slane %v12175, 4
        %v12178 = vshll.u32 %v12007, 16
        %v12180 = vrot.slane %v12178, 5
        %v12181 = vsel %vm1306, %v12176, %v12180
        %v12183 = vshrl.u32 %v12008, 16
        %v12185 = vrot.slane %v12183, 4
        %v12186 = vshll.u32 %v12008, 16
        %v12188 = vrot.slane %v12186, 5
        %v12189 = vor.u32 %v12185, %v12188
        %v12190 = vrot.slane %v12189, 4
        %v12192 = vshll.u32 %v12009, 16
        %v12194 = vrot.slane %v12192, 5
        %v12195 = vsel %vm1306, %v12190, %v12194
        %v12196 = vshrl.u32 %v12009, 16
        %v12198 = vrot.slane %v12196, 4
        %v12199 = vor.u32 %v12198, %v12194
        %v12200 = vrot.slane %v12199, 4
        %v12202 = vshll.u32 %v12010, 16
        %v12204 = vrot.slane %v12202, 5
        %v12205 = vsel %vm1306, %v12200, %v12204
        %v12207 = vshrl.u32 %v12011, 16
        %v12209 = vrot.slane %v12207, 4
        %v12210 = vshll.u32 %v12011, 16
        %v12212 = vrot.slane %v12210, 5
        %v12213 = vor.u32 %v12209, %v12212
        %v12214 = vrot.slane %v12213, 4
        %v12216 = vshll.u32 %v12012, 16
        %v12218 = vrot.slane %v12216, 5
        %v12219 = vsel %vm1306, %v12214, %v12218
        %v12220 = vshrl.u32 %v12012, 16
        %v12222 = vrot.slane %v12220, 4
        %v12223 = vor.u32 %v12222, %v12218
        %v12224 = vrot.slane %v12223, 4
        %v12226 = vshll.u32 %v12013, 16
        %v12228 = vrot.slane %v12226, 5
        %v12229 = vsel %vm1306, %v12224, %v12228
        %v12231 = vshrl.u32 %v12014, 16
        %v12233 = vrot.slane %v12231, 4
        %v12234 = vshll.u32 %v12014, 16
        %v12236 = vrot.slane %v12234, 5
        %v12237 = vor.u32 %v12233, %v12236
        %v12238 = vrot.slane %v12237, 4
        %v12240 = vshll.u32 %v12015, 16
        %v12242 = vrot.slane %v12240, 5
        %v12243 = vsel %vm1306, %v12238, %v12242
        %v12244 = vshrl.u32 %v12015, 16
        %v12246 = vrot.slane %v12244, 4
        %v12247 = vor.u32 %v12246, %v12242
        %v12248 = vrot.slane %v12247, 4
        %v12250 = vshll.u32 %v12016, 16
        %v12252 = vrot.slane %v12250, 5
        %v12253 = vsel %vm1306, %v12248, %v12252
        %v12255 = vshrl.u32 %v12017, 16
        %v12257 = vrot.slane %v12255, 4
        %v12258 = vshll.u32 %v12017, 16
        %v12260 = vrot.slane %v12258, 5
        %v12261 = vor.u32 %v12257, %v12260
        %v12262 = vrot.slane %v12261, 4
        %v12264 = vshll.u32 %v12018, 16
        %v12266 = vrot.slane %v12264, 5
        %v12267 = vsel %vm1306, %v12262, %v12266
        %v12268 = vshrl.u32 %v12018, 16
        %v12270 = vrot.slane %v12268, 4
        %v12271 = vor.u32 %v12270, %v12266
        %v12272 = vrot.slane %v12271, 4
        %v12274 = vshll.u32 %v12019, 16
        %v12276 = vrot.slane %v12274, 5
        %v12277 = vsel %vm1306, %v12272, %v12276
        %v12279 = vshrl.u32 %v12020, 16
        %v12281 = vrot.slane %v12279, 4
        %v12282 = vshll.u32 %v12020, 16
        %v12284 = vrot.slane %v12282, 5
        %v12285 = vor.u32 %v12281, %v12284
        %v12286 = vrot.slane %v12285, 4
        %v12288 = vshll.u32 %v12021, 16
        %v12290 = vrot.slane %v12288, 5
        %v12291 = vsel %vm1306, %v12286, %v12290
        %v12292 = vshrl.u32 %v12021, 16
        %v12294 = vrot.slane %v12292, 4
        %v12295 = vor.u32 %v12294, %v12290
        %v12296 = vrot.slane %v12295, 4
        %v12298 = vshll.u32 %v12022, 16
        %v12300 = vrot.slane %v12298, 5
        %v12301 = vsel %vm1306, %v12296, %v12300
        %v12303 = vshrl.u32 %v12023, 16
        %v12305 = vrot.slane %v12303, 4
        %v12306 = vshll.u32 %v12023, 16
        %v12308 = vrot.slane %v12306, 5
        %v12309 = vor.u32 %v12305, %v12308
        %v12310 = vrot.slane %v12309, 4
        %v12312 = vshll.u32 %v12024, 16
        %v12314 = vrot.slane %v12312, 5
        %v12315 = vsel %vm1306, %v12310, %v12314
        %v12316 = vshrl.u32 %v12024, 16
        %v12318 = vrot.slane %v12316, 4
        %v12319 = vor.u32 %v12318, %v12314
        %v12320 = vrot.slane %v12319, 4
        %v12322 = vshll.u32 %v12025, 16
        %v12324 = vrot.slane %v12322, 5
        %v12325 = vsel %vm1306, %v12320, %v12324
        %v12327 = vshrl.u32 %v12026, 16
        %v12329 = vrot.slane %v12327, 4
        %v12330 = vshll.u32 %v12026, 16
        %v12332 = vrot.slane %v12330, 5
        %v12333 = vor.u32 %v12329, %v12332
        %v12334 = vrot.slane %v12333, 4
        %v12336 = vshll.u32 %v12027, 16
        %v12338 = vrot.slane %v12336, 5
        %v12339 = vsel %vm1306, %v12334, %v12338
        %v12340 = vshrl.u32 %v12027, 16
        %v12342 = vrot.slane %v12340, 4
        %v12343 = vor.u32 %v12342, %v12338
        %v12344 = vrot.slane %v12343, 4
        %v12346 = vshll.u32 %v12028, 16
        %v12348 = vrot.slane %v12346, 5
        %v12349 = vsel %vm1306, %v12344, %v12348
        %v12351 = vshrl.u32 %v12029, 16
        %v12353 = vrot.slane %v12351, 4
        %v12354 = vshll.u32 %v12029, 16
        %v12356 = vrot.slane %v12354, 5
        %v12357 = vor.u32 %v12353, %v12356
        %v12358 = vrot.slane %v12357, 4
        %v12360 = vshll.u32 %v12030, 16
        %v12362 = vrot.slane %v12360, 5
        %v12363 = vsel %vm1306, %v12358, %v12362
        %v12364 = vshrl.u32 %v12030, 16
        %v12366 = vrot.slane %v12364, 4
        %v12367 = vor.u32 %v12366, %v12362
        %v12368 = vrot.slane %v12367, 4
        %v12370 = vshll.u32 %v12031, 16
        %v12372 = vrot.slane %v12370, 5
        %v12373 = vsel %vm1306, %v12368, %v12372
        %v12375 = vshrl.u32 %v12032, 16
        %v12377 = vrot.slane %v12375, 4
        %v12378 = vshll.u32 %v12032, 16
        %v12380 = vrot.slane %v12378, 5
        %v12381 = vor.u32 %v12377, %v12380
        %v12382 = vrot.slane %v12381, 4
        %v12384 = vshll.u32 %v12033, 16
        %v12386 = vrot.slane %v12384, 5
        %v12387 = vsel %vm1306, %v12382, %v12386
        %v12388 = vshrl.u32 %v12033, 16
        %v12390 = vrot.slane %v12388, 4
        %v12391 = vor.u32 %v12390, %v12386
        %v12392 = vrot.slane %v12391, 4
        %v12394 = vshll.u32 %v12034, 16
        %v12396 = vrot.slane %v12394, 5
        %v12397 = vsel %vm1306, %v12392, %v12396
        %v12399 = vshrl.u32 %v12035, 16
        %v12401 = vrot.slane %v12399, 4
        %v12402 = vshll.u32 %v12035, 16
        %v12404 = vrot.slane %v12402, 5
        %v12405 = vor.u32 %v12401, %v12404
        %v12406 = vrot.slane %v12405, 4
        %v12408 = vshll.u32 %v12036, 16
        %v12410 = vrot.slane %v12408, 5
        %v12411 = vsel %vm1306, %v12406, %v12410
        %v12412 = vshrl.u32 %v12036, 16
        %v12414 = vrot.slane %v12412, 4
        %v12415 = vor.u32 %v12414, %v12410
        %v12416 = vrot.slane %v12415, 4
        %v12418 = vshll.u32 %v12037, 16
        %v12420 = vrot.slane %v12418, 5
        %v12421 = vsel %vm1306, %v12416, %v12420
        %v12422 = vunpack.c.l.b16 %v12051
        %v12423 = vunpack.c.l.b16 %v12061
        %v12424 = vunpack.c.l.b16 %v12075
        %v12425 = vunpack.c.l.b16 %v12085
        %v12426 = vunpack.c.l.b16 %v12099
        %v12427 = vunpack.c.l.b16 %v12109
        %v12428 = vunpack.c.l.b16 %v12123
        %v12429 = vunpack.c.l.b16 %v12133
        %v12430 = vunpack.c.l.b16 %v12147
        %v12431 = vunpack.c.l.b16 %v12157
        %v12432 = vunpack.c.l.b16 %v12171
        %v12433 = vunpack.c.l.b16 %v12181
        %v12434 = vunpack.c.l.b16 %v12195
        %v12435 = vunpack.c.l.b16 %v12205
        %v12436 = vunpack.c.l.b16 %v12219
        %v12437 = vunpack.c.l.b16 %v12229
        %v12438 = vunpack.c.l.b16 %v12243
        %v12439 = vunpack.c.l.b16 %v12253
        %v12440 = vunpack.c.l.b16 %v12267
        %v12441 = vunpack.c.l.b16 %v12277
        %v12442 = vunpack.c.l.b16 %v12291
        %v12443 = vunpack.c.l.b16 %v12301
        %v12444 = vunpack.c.l.b16 %v12315
        %v12445 = vunpack.c.l.b16 %v12325
        %v12446 = vunpack.c.l.b16 %v12339
        %v12447 = vunpack.c.l.b16 %v12349
        %v12448 = vunpack.c.l.b16 %v12363
        %v12449 = vunpack.c.l.b16 %v12373
        %v12450 = vunpack.c.l.b16 %v12387
        %v12451 = vunpack.c.l.b16 %v12397
        %v12452 = vunpack.c.l.b16 %v12411
        %v12453 = vunpack.c.l.b16 %v12421
        %v12454 = vpack.c.b16 %v12423, %v12422
        %v12455 = vpack.c.b16 %v12425, %v12424
        %v12456 = vpack.c.b16 %v12427, %v12426
        %v12457 = vpack.c.b16 %v12429, %v12428
        %v12458 = vpack.c.b16 %v12431, %v12430
        %v12459 = vpack.c.b16 %v12433, %v12432
        %v12460 = vpack.c.b16 %v12435, %v12434
        %v12461 = vpack.c.b16 %v12437, %v12436
        %v12462 = vpack.c.b16 %v12439, %v12438
        %v12463 = vpack.c.b16 %v12441, %v12440
        %v12464 = vpack.c.b16 %v12443, %v12442
        %v12465 = vpack.c.b16 %v12445, %v12444
        %v12466 = vpack.c.b16 %v12447, %v12446
        %v12467 = vpack.c.b16 %v12449, %v12448
        %v12468 = vpack.c.b16 %v12451, %v12450
        %v12469 = vpack.c.b16 %v12453, %v12452
        %12470 = vrot.lane.b32.xlu0 %v12454, 64
        %v12471 = vpop.permute.xlu0 %12470
        %12472 = vrot.lane.b32.xlu0 %v12455, 64
        %v12473 = vpop.permute.xlu0 %12472
        %12474 = vrot.lane.b32.xlu0 %v12456, 64
        %v12475 = vpop.permute.xlu0 %12474
        %12476 = vrot.lane.b32.xlu0 %v12457, 64
        %v12477 = vpop.permute.xlu0 %12476
        %12478 = vrot.lane.b32.xlu0 %v12458, 64
        %v12479 = vpop.permute.xlu0 %12478
        %12480 = vrot.lane.b32.xlu0 %v12459, 64
        %v12481 = vpop.permute.xlu0 %12480
        %12482 = vrot.lane.b32.xlu0 %v12460, 64
        %v12483 = vpop.permute.xlu0 %12482
        %12484 = vrot.lane.b32.xlu0 %v12461, 64
        %v12485 = vpop.permute.xlu0 %12484
        %12486 = vrot.lane.b32.xlu0 %v12462, 64
        %v12487 = vpop.permute.xlu0 %12486
        %12488 = vrot.lane.b32.xlu0 %v12463, 64
        %v12489 = vpop.permute.xlu0 %12488
        %12490 = vrot.lane.b32.xlu0 %v12464, 64
        %v12491 = vpop.permute.xlu0 %12490
        %12492 = vrot.lane.b32.xlu0 %v12465, 64
        %v12493 = vpop.permute.xlu0 %12492
        %12494 = vrot.lane.b32.xlu0 %v12466, 64
        %v12495 = vpop.permute.xlu0 %12494
        %12496 = vrot.lane.b32.xlu0 %v12467, 64
        %v12497 = vpop.permute.xlu0 %12496
        %12498 = vrot.lane.b32.xlu0 %v12468, 64
        %v12499 = vpop.permute.xlu0 %12498
        %12500 = vrot.lane.b32.xlu0 %v12469, 64
        %v12501 = vpop.permute.xlu0 %12500
        %12518 = vst.msk [vmem:[#allocation4] sm:$0xff] %vm4258, %v12471
        %12519 = vst.msk [vmem:[#allocation4 + $0x8] sm:$0xff] %vm4258, %v12473
        %12520 = vst.msk [vmem:[#allocation4 + $0x10] sm:$0xff] %vm4258, %v12475
        %12521 = vst.msk [vmem:[#allocation4 + $0x18] sm:$0xff] %vm4258, %v12477
        %12522 = vst.msk [vmem:[#allocation4 + $0x20] sm:$0xff] %vm4258, %v12479
        %12523 = vst.msk [vmem:[#allocation4 + $0x28] sm:$0xff] %vm4258, %v12481
        %12524 = vst.msk [vmem:[#allocation4 + $0x30] sm:$0xff] %vm4258, %v12483
        %12525 = vst.msk [vmem:[#allocation4 + $0x38] sm:$0xff] %vm4258, %v12485
        %12526 = vst.msk [vmem:[#allocation4 + $0x40] sm:$0xff] %vm4258, %v12487
        %12527 = vst.msk [vmem:[#allocation4 + $0x48] sm:$0xff] %vm4258, %v12489
        %12528 = vst.msk [vmem:[#allocation4 + $0x50] sm:$0xff] %vm4258, %v12491
        %12529 = vst.msk [vmem:[#allocation4 + $0x58] sm:$0xff] %vm4258, %v12493
        %12530 = vst.msk [vmem:[#allocation4 + $0x60] sm:$0xff] %vm4258, %v12495
        %12531 = vst.msk [vmem:[#allocation4 + $0x68] sm:$0xff] %vm4258, %v12497
        %12532 = vst.msk [vmem:[#allocation4 + $0x70] sm:$0xff] %vm4258, %v12499
        %12533 = vst.msk [vmem:[#allocation4 + $0x78] sm:$0xff] %vm4258, %v12501
        %v12534 = vld [vmem:[#allocation4] sm:$0xff]
        %v12535 = vld [vmem:[#allocation4 + $0x8] sm:$0xff]
        %v12536 = vld [vmem:[#allocation4 + $0x10] sm:$0xff]
        %v12537 = vld [vmem:[#allocation4 + $0x18] sm:$0xff]
        %v12538 = vld [vmem:[#allocation4 + $0x20] sm:$0xff]
        %v12539 = vld [vmem:[#allocation4 + $0x28] sm:$0xff]
        %v12540 = vld [vmem:[#allocation4 + $0x30] sm:$0xff]
        %v12541 = vld [vmem:[#allocation4 + $0x38] sm:$0xff]
        %v12542 = vld [vmem:[#allocation4 + $0x40] sm:$0xff]
        %v12543 = vld [vmem:[#allocation4 + $0x48] sm:$0xff]
        %v12544 = vld [vmem:[#allocation4 + $0x50] sm:$0xff]
        %v12545 = vld [vmem:[#allocation4 + $0x58] sm:$0xff]
        %v12546 = vld [vmem:[#allocation4 + $0x60] sm:$0xff]
        %v12547 = vld [vmem:[#allocation4 + $0x68] sm:$0xff]
        %v12548 = vld [vmem:[#allocation4 + $0x70] sm:$0xff]
        %v12549 = vld [vmem:[#allocation4 + $0x78] sm:$0xff]
        %v12550 = vld [vmem:[%s6] sm:$0xff]
        %12552 = vset.pattern.permute.xlu0 0
        %12553 = vperm.xlu0 %12552, %v12550
        %v12554 = vpop.permute.xlu0 %12553
        %v12557 = vsel %vm4334, %v8869, 0
        %v12560 = vsel %vm4334, %v12534, 0
        %v12563 = vsel %vm4334, %v12535, 0
        %v12566 = vsel %vm4334, %v12536, 0
        %v12569 = vsel %vm4334, %v12537, 0
        %v12572 = vsel %vm4334, %v12538, 0
        %v12575 = vsel %vm4334, %v12539, 0
        %v12578 = vsel %vm4334, %v12540, 0
        %v12581 = vsel %vm4334, %v12541, 0
        %v12584 = vsel %vm4334, %v12542, 0
        %v12587 = vsel %vm4334, %v12543, 0
        %v12590 = vsel %vm4334, %v12544, 0
        %v12593 = vsel %vm4334, %v12545, 0
        %v12596 = vsel %vm4334, %v12546, 0
        %v12599 = vsel %vm4334, %v12547, 0
        %v12602 = vsel %vm4334, %v12548, 0
        %v12605 = vsel %vm4334, %v12549, 0
        %12607 = vmatprep.subr.bf16.mxu0 0
        %12608 = vmatpush1.bf16.xpose.msra.mxu0 %v12560
        %12609 = vmatprep.subr.bf16.mxu0 0
        %12610 = vmatpush1.bf16.xpose.msra.mxu0 %v12563
        %12611 = vmatprep.subr.bf16.mxu0 0
        %12612 = vmatpush1.bf16.xpose.msra.mxu0 %v12566
        %12613 = vmatprep.subr.bf16.mxu0 0
        %12614 = vmatpush1.bf16.xpose.msra.mxu0 %v12569
        %12615 = vmatprep.subr.bf16.mxu0 0
        %12616 = vmatpush1.bf16.xpose.msra.mxu0 %v12572
        %12617 = vmatprep.subr.bf16.mxu0 0
        %12618 = vmatpush1.bf16.xpose.msra.mxu0 %v12575
        %12619 = vmatprep.subr.bf16.mxu0 0
        %12620 = vmatpush1.bf16.xpose.msra.mxu0 %v12578
        %12621 = vmatprep.subr.bf16.mxu0 0
        %12622 = vmatpush1.bf16.xpose.msra.mxu0 %v12581
        %12623 = vmatprep.subr.bf16.mxu0 0
        %12624 = vmatpush1.bf16.xpose.msra.mxu0 %v12584
        %12625 = vmatprep.subr.bf16.mxu0 0
        %12626 = vmatpush1.bf16.xpose.msra.mxu0 %v12587
        %12627 = vmatprep.subr.bf16.mxu0 0
        %12628 = vmatpush1.bf16.xpose.msra.mxu0 %v12590
        %12629 = vmatprep.subr.bf16.mxu0 0
        %12630 = vmatpush1.bf16.xpose.msra.mxu0 %v12593
        %12631 = vmatprep.subr.bf16.mxu0 0
        %12632 = vmatpush1.bf16.xpose.msra.mxu0 %v12596
        %12633 = vmatprep.subr.bf16.mxu0 0
        %12634 = vmatpush1.bf16.xpose.msra.mxu0 %v12599
        %12635 = vmatprep.subr.bf16.mxu0 0
        %12636 = vmatpush1.bf16.xpose.msra.mxu0 %v12602
        %12637 = vmatprep.subr.bf16.mxu0 0
        %12638 = vmatpush1.bf16.xpose.msra.mxu0 %v12605
        %12639 = vmatprep.mubr.bf16.mxu0 0
        %12640 = vmatmul.mubr.bf16.gmra.mrb[0].mxu0 %v12557
        %v12641 = vpop.f32.mrb[0].mxu0
        %v12642 = vadd.f32 %v12554, %v12641
        %v12643 = vpop.f32.mrb[0].mxu0
        %v12644 = vadd.f32 %v12554, %v12643
        %v12645 = vpop.f32.mrb[0].mxu0
        %v12646 = vpop.f32.mrb[0].mxu0
        %12647 = vdwg.mxu0
        %v12648 = vmax.f32 %v12642, 0.0
        %v12649 = vmax.f32 %v12644, 0.0
        %12650 = vst [vmem:[%s271] sm:$0xff] %v12648
        %12651 = vst [vmem:[%s271 + $0x8] sm:$0xff] %v12649
        %s12652 = sand.u32 %s181, 1
        %s12653 = scalar_lea.sflag [#allocation6], %s12652
        %s12654 = sand.u32 %s181, 1
        %s12655 = smul.addr %s12654, 16
        %s12656 = scalar_lea.vmem [#allocation5], %s12655
        // Predicated region
        $region49: #{tpu_custom_call.1} parent=47 // pred_check
          %p12657 = pneg %p191
        $region50: #{tpu_custom_call.1} parent=47 // pred_check_branch
          %12659 = sbr.rel (%p12657) target = $region52
        $region51: #{tpu_custom_call.1} parent=47 // pred_region
          %s12661 = ssub.s32 256, 256
          %12662 = vsyncadd %s12653, %s12661
          %s12663 = smul.addr %s21, 2
          %s12664 = smul.addr %s12663, 128
          %s12665 = scalar_lea.hbm %s7, %s12664
          %s12667 = sshll.u32 %s12656, 4
          %s12668 = int_to_ptr.vmem [resolvable:$true] %s12667
          %12670 = dma.vmem_to_hbm [thread:$0]  %s12668, 256, %s12665, %s12653
        $region52: #{tpu_custom_call.1} parent=47 // pred_fallthru
          _
      $region48: #{tpu_custom_call.1} parent=5 // pred_fallthru
        _
      %p12671 = scmp.le.s32.totalorder 2, %s16
      // Predicated region
      $region53: #{tpu_custom_call.1} parent=5 // pred_check
        %p12672 = pneg %p12671
      $region54: #{tpu_custom_call.1} parent=5 // pred_check_branch
        %12674 = sbr.rel (%p12672) target = $region56
      $region55: #{tpu_custom_call.1} parent=5 // pred_region
        %s12675 = ssub.s32 %s16, 2
        // Predicated region
        $region57: #{tpu_custom_call.1} parent=55 // pred_check
          %p12676 = pneg %p197
        $region58: #{tpu_custom_call.1} parent=55 // pred_check_branch
          %12678 = sbr.rel (%p12676) target = $region60
        $region59: #{tpu_custom_call.1} parent=55 // pred_region
          %s12679 = sand.u32 %s182, 1
          %s12680 = scalar_lea.sflag [#allocation6], %s12679
          %s12681 = sand.u32 %s182, 1
          %s12682 = smul.addr %s12681, 16
          %s12683 = scalar_lea.vmem [#allocation5], %s12682
          %12684 = dma.done %s12680, 256
        $region60: #{tpu_custom_call.1} parent=55 // pred_fallthru
          _
      $region56: #{tpu_custom_call.1} parent=5 // pred_fallthru
        _
    $region6: #{tpu_custom_call.1} parent=1 // loop_footer
      %s20 = sadd.s32 1, %s16
    $region7: #{tpu_custom_call.1} parent=1 // loop_footer_branch
      %15 = sbr.rel target = $region3
    $region8: #{tpu_custom_call.1} parent=1 // loop_exit
      _
    %12685 = vsyncpa [#allocation6], 1
    %s12686 = scalar_lea.sflag [#allocation6], 1
    %12687 = vsyncpa %s12686, 1

</llo_original>
